<compile_context>
chip_gen: v7x
topology: tpu7x:2x2x1
jax: 0.10.0
libtpu: 0.0.40
codegen_flags: <defaults>
</compile_context>

<pallas_src>
import functools
import numpy as np
import jax
import jax.numpy as jnp
from jax import lax
from jax.experimental import pallas as pl
from jax.experimental.pallas import tpu as pltpu


# ----------------------------------------------------------------------------
# Generic row-tiled linear / layernorm kernels
# ----------------------------------------------------------------------------

def _linear_kernel(x_ref, w_ref, b_ref, o_ref, *, relu):
    y = lax.dot_general(x_ref[...], w_ref[...], (((1,), (0,)), ((), ())),
                        preferred_element_type=jnp.float32)
    y = y + b_ref[...]
    if relu:
        y = jnp.maximum(y, 0.0)
    o_ref[...] = y


def pallas_linear(x, w, b=None, relu=False, block_rows=512):
    """Row-tiled y = x @ w + b.  x: (M, Fin), w: (Fin, Fout), b: (Fout,) -> (M, Fout)."""
    M, Fin = x.shape
    Fout = w.shape[1]
    if b is None:
        b = jnp.zeros((Fout,), jnp.float32)
    tm = M if M <= block_rows else block_rows
    return pl.pallas_call(
        functools.partial(_linear_kernel, relu=relu),
        out_shape=jax.ShapeDtypeStruct((M, Fout), jnp.float32),
        grid=(pl.cdiv(M, tm),),
        in_specs=[pl.BlockSpec((tm, Fin), lambda i: (i, 0)),
                  pl.BlockSpec((Fin, Fout), lambda i: (0, 0)),
                  pl.BlockSpec((1, Fout), lambda i: (0, 0))],
        out_specs=pl.BlockSpec((tm, Fout), lambda i: (i, 0)),
        compiler_params=pltpu.CompilerParams(dimension_semantics=("parallel",)),
    )(x.astype(jnp.float32), w.astype(jnp.float32),
      b.reshape(1, Fout).astype(jnp.float32))


def _layernorm_kernel(x_ref, g_ref, b_ref, o_ref, *, eps):
    x = x_ref[...]
    mu = jnp.mean(x, axis=-1, keepdims=True)
    xc = x - mu
    var = jnp.mean(xc * xc, axis=-1, keepdims=True)
    o_ref[...] = xc * lax.rsqrt(var + eps) * g_ref[...] + b_ref[...]


def pallas_layernorm(x, g, b, eps=1e-5, block_rows=512):
    M, F = x.shape
    tm = M if M <= block_rows else block_rows
    return pl.pallas_call(
        functools.partial(_layernorm_kernel, eps=eps),
        out_shape=jax.ShapeDtypeStruct((M, F), jnp.float32),
        grid=(pl.cdiv(M, tm),),
        in_specs=[pl.BlockSpec((tm, F), lambda i: (i, 0)),
                  pl.BlockSpec((1, F), lambda i: (0, 0)),
                  pl.BlockSpec((1, F), lambda i: (0, 0))],
        out_specs=pl.BlockSpec((tm, F), lambda i: (i, 0)),
        compiler_params=pltpu.CompilerParams(dimension_semantics=("parallel",)),
    )(x.astype(jnp.float32), g.reshape(1, F).astype(jnp.float32),
      b.reshape(1, F).astype(jnp.float32))


# ----------------------------------------------------------------------------
# Fused multi-head geometric attention kernel
# ----------------------------------------------------------------------------

def _ga_attention_kernel(ratio_sm, coef_sm,
                         q_ref, k_ref, v_ref, qp_ref, kp_ref, vp_ref,
                         lp_ref, z_ref, im_ref, om_ref,
                         fn_ref, fp_ref, fs_ref, alpha_scr,
                         *, heads, hidden, p3, inv_sqrt_c, inv_sqrt_3, inf=100000.0):
    """One (batch n, query-tile qi) step; all heads processed inside."""
    H, C, P3 = heads, hidden, p3
    n = pl.program_id(0)

    # Resident tiles.
    q = q_ref[0]        # (TQ, H*C)
    k = k_ref[0]        # (L,  H*C)
    v = v_ref[0]        # (L,  H*C)
    qp = qp_ref[0]      # (TQ, H*P3)  global query points
    kp = kp_ref[0]      # (L,  H*P3)  global key points
    vp = vp_ref[0]      # (L,  H*P3)  global value points
    lp = lp_ref[0]      # (H, TQ, L)  pair-bias logits
    z = z_ref[0]        # (TQ, L, Fp)
    im = im_ref[0]      # (TQ, L)  intra mask {0,1}
    om = om_ref[0]      # (TQ, L)  inter mask {0,1}

    union = jnp.maximum(im, om)
    neg_bias = (1.0 - union) * inf          # additive -inf surrogate (matches reference)

    ratio = ratio_sm[n]                     # SMEM scalar
    one_minus_ratio = 1.0 - ratio
    ones_row = jnp.ones((1, P3), jnp.float32)
    Fp = z.shape[-1]

    for h in range(H):                      # static unroll over heads
        # ---- logits --------------------------------------------------------
        q_h = q[:, h * C:(h + 1) * C]                       # (TQ, C)
        k_h = k[:, h * C:(h + 1) * C]                       # (L, C)
        logits_node = lax.dot_general(
            q_h, k_h, (((1,), (1,)), ((), ())),
            preferred_element_type=jnp.float32) * inv_sqrt_c          # (TQ, L)

        qp_h = qp[:, h * P3:(h + 1) * P3]                   # (TQ, P3)
        kp_h = kp[:, h * P3:(h + 1) * P3]                   # (L, P3)
        # ||qp - kp||^2 = |qp|^2 + |kp|^2 - 2 qp.kp   (dominant term on the MXU)
        qk = lax.dot_general(qp_h, kp_h, (((1,), (1,)), ((), ())),
                             preferred_element_type=jnp.float32)      # (TQ, L)
        qp_sq = jnp.sum(qp_h * qp_h, axis=1, keepdims=True)           # (TQ, 1)
        kp_sq = lax.dot_general(ones_row, kp_h * kp_h, (((1,), (1,)), ((), ())),
                                preferred_element_type=jnp.float32)   # (1, L)
        ssd = qp_sq + kp_sq - 2.0 * qk

        logits = (logits_node + lp[h] + ssd * coef_sm[h]) * inv_sqrt_3

        # ---- dual masked softmax with a single exp over the union mask ------
        ml = logits - neg_bias
        mx = jnp.max(ml, axis=-1, keepdims=True)
        e = jnp.exp(ml - mx)
        e_im = e * im
        e_om = e * om
        s_im = jnp.sum(e_im, axis=-1, keepdims=True)
        s_om = jnp.sum(e_om, axis=-1, keepdims=True)
        inv_im = pl.reciprocal(jnp.where(s_im > 0.0, s_im, 1.0), approx=True)
        inv_om = pl.reciprocal(jnp.where(s_om > 0.0, s_om, 1.0), approx=True)
        alpha = e_im * (inv_im * ratio) + e_om * (inv_om * one_minus_ratio)   # (TQ, L)
        alpha_scr[:, h, :] = alpha

        # ---- node / point aggregation (MXU) ---------------------------------
        v_h = v[:, h * C:(h + 1) * C]
        fn_ref[0, :, h * C:(h + 1) * C] = lax.dot_general(
            alpha, v_h, (((1,), (0,)), ((), ())), preferred_element_type=jnp.float32)

        vp_h = vp[:, h * P3:(h + 1) * P3]
        fs_ref[0, :, h * P3:(h + 1) * P3] = lax.dot_general(
            alpha, vp_h, (((1,), (0,)), ((), ())), preferred_element_type=jnp.float32)

    # ---- pair aggregation for all heads: (TQ, H, L) x (TQ, L, Fp) -> (TQ, H, Fp)
    fp_all = lax.dot_general(alpha_scr[...], z, (((2,), (1,)), ((0,), (0,))),
                             preferred_element_type=jnp.float32)
    for h in range(H):
        fp_ref[0, :, h * Fp:(h + 1) * Fp] = fp_all[:, h, :]


def _pick_q_tile(L, max_tile=128):
    if L <= max_tile:
        return L
    for t in range(max_tile, 7, -8):
        if L % t == 0:
            return t
    return L


def ga_attention(Q, K, V, QP, KP, VP, LP, Z, IM, OM, ratio, coef, *, heads, hidden, points):
    """Core attention + aggregation. Grid over (batch, query tile); all heads fused."""
    N, L, HC = Q.shape
    H, C, P = heads, hidden, points
    P3 = 3 * P
    HP3 = H * P3
    Fp = Z.shape[-1]
    TQ = _pick_q_tile(L)
    n_q = L // TQ

    kernel = functools.partial(
        _ga_attention_kernel, heads=H, hidden=C, p3=P3,
        inv_sqrt_c=float(1.0 / np.sqrt(C)), inv_sqrt_3=float(np.sqrt(1.0 / 3.0)))

    grid_spec = pltpu.PrefetchScalarGridSpec(
        num_scalar_prefetch=2,                      # ratio (N,), coef (H,) live in SMEM
        grid=(N, n_q),
        in_specs=[
            pl.BlockSpec((1, TQ, HC), lambda n, qi, *_: (n, qi, 0)),       # Q
            pl.BlockSpec((1, L, HC), lambda n, qi, *_: (n, 0, 0)),         # K
            pl.BlockSpec((1, L, HC), lambda n, qi, *_: (n, 0, 0)),         # V
            pl.BlockSpec((1, TQ, HP3), lambda n, qi, *_: (n, qi, 0)),      # QP (global)
            pl.BlockSpec((1, L, HP3), lambda n, qi, *_: (n, 0, 0)),        # KP (global)
            pl.BlockSpec((1, L, HP3), lambda n, qi, *_: (n, 0, 0)),        # VP (global)
            pl.BlockSpec((1, H, TQ, L), lambda n, qi, *_: (n, 0, qi, 0)),  # pair logits
            pl.BlockSpec((1, TQ, L, Fp), lambda n, qi, *_: (n, qi, 0, 0)), # pair features
            pl.BlockSpec((1, TQ, L), lambda n, qi, *_: (n, qi, 0)),        # intra mask
            pl.BlockSpec((1, TQ, L), lambda n, qi, *_: (n, qi, 0)),        # inter mask
        ],
        out_specs=(
            pl.BlockSpec((1, TQ, HC), lambda n, qi, *_: (n, qi, 0)),       # feat_node
            pl.BlockSpec((1, TQ, H * Fp), lambda n, qi, *_: (n, qi, 0)),   # feat_pair
            pl.BlockSpec((1, TQ, HP3), lambda n, qi, *_: (n, qi, 0)),      # feat_spatial (global)
        ),
        scratch_shapes=[pltpu.VMEM((TQ, H, L), jnp.float32)],
    )
    return pl.pallas_call(
        kernel,
        out_shape=(jax.ShapeDtypeStruct((N, L, HC), jnp.float32),
                   jax.ShapeDtypeStruct((N, L, H * Fp), jnp.float32),
                   jax.ShapeDtypeStruct((N, L, HP3), jnp.float32)),
        grid_spec=grid_spec,
        compiler_params=pltpu.CompilerParams(
            dimension_semantics=("parallel", "arbitrary")),
    )(ratio, coef, Q, K, V, QP, KP, VP, LP, Z, IM, OM)


# ----------------------------------------------------------------------------
# Plain-JAX glue: geometry, masks, parameter handling
# ----------------------------------------------------------------------------

# BBHeavyAtom indices (diffab convention)
ATOM_N, ATOM_CA, ATOM_C = 0, 1, 2


def _normalize(v, eps=1e-6):
    return v / (jnp.linalg.norm(v, axis=-1, keepdims=True) + eps)


def construct_3d_basis(center, p1, p2):
    v1 = p1 - center
    e1 = _normalize(v1)
    v2 = p2 - center
    u2 = v2 - jnp.sum(v2 * e1, axis=-1, keepdims=True) * e1
    e2 = _normalize(u2)
    e3 = jnp.cross(e1, e2)
    return jnp.stack([e1, e2, e3], axis=-1)          # (N, L, 3, 3)


def local_to_global(R, t, p):
    # p: (N, L, M, 3)
    return jnp.einsum('nlij,nlmj->nlmi', R, p) + t[:, :, None, :]


def global_to_local(R, t, q):
    # q: (N, L, H, P, 3)
    return jnp.einsum('nlji,nlhpj->nlhpi', R, q - t[:, :, None, None, :])


def edge_construction(mask_atoms, chain_nb, res_nb, pos_atoms, cutoff, K):
    mask_res = mask_atoms[:, :, ATOM_CA]
    mask_pair = mask_res[:, :, None] & mask_res[:, None, :]
    same_chain = chain_nb[:, :, None] == chain_nb[:, None, :]
    diff_chain = ~same_chain
    seq_dis = jnp.abs(res_nb[:, :, None] - res_nb[:, None, :])
    seq_mask = (seq_dis == 1) | (seq_dis == 2)
    ca = pos_atoms[:, :, ATOM_CA]
    d = jnp.linalg.norm(ca[:, :, None, :] - ca[:, None, :, :], axis=-1)
    rball = d < cutoff
    thr = jnp.sort(d, axis=-1)[:, :, K:K + 1]        # (K+1)-th smallest distance (as reference)
    knn = d < thr
    intra = (rball | knn | seq_mask) & same_chain & mask_pair
    inter = (rball | knn) & diff_chain & mask_pair
    return intra, inter


def init_ga_block(key, node_dim, pair_dim, codebook_head=1,
                  hidden=32, points=8, heads=8):
    ks = jax.random.split(key, 12)

    def w(k, fin, fout):
        return jax.random.normal(k, (fin, fout), jnp.float32) / np.sqrt(fin)

    agg_dim = heads * hidden + heads * pair_dim + heads * points
    p = {
        'Wq': w(ks[0], node_dim, hidden * heads),
        'Wk': w(ks[1], node_dim, hidden * heads),
        'Wv': w(ks[2], node_dim, hidden * heads),
        'Wpair': w(ks[3], pair_dim, heads),
        'spatial_coef': jnp.full((heads,), float(np.log(np.exp(1.0) - 1.0)), jnp.float32),
        'Wqp': w(ks[4], node_dim, points * heads * 3),
        'Wkp': w(ks[5], node_dim, points * heads * 3),
        'Wvp': w(ks[6], node_dim, points * heads * 3),
        'W1': w(ks[7], agg_dim, node_dim),
        'b1': jnp.zeros((node_dim,), jnp.float32),
        'ln1_g': jnp.ones((node_dim,), jnp.float32),
        'ln1_b': jnp.zeros((node_dim,), jnp.float32),
        'Wm1': w(ks[8], node_dim, node_dim),
        'bm1': jnp.zeros((node_dim,), jnp.float32),
        'Wm2': w(ks[9], node_dim, node_dim),
        'bm2': jnp.zeros((node_dim,), jnp.float32),
        'Wm3': w(ks[10], node_dim, node_dim * codebook_head),
        'bm3': jnp.zeros((node_dim * codebook_head,), jnp.float32),
        'ln2_g': jnp.ones((node_dim * codebook_head,), jnp.float32),
        'ln2_b': jnp.zeros((node_dim * codebook_head,), jnp.float32),
    }
    return p


def ga_block_apply(p, R, t, x, z, intra_f, inter_f, ratio, *,
                   hidden=32, points=8, heads=8):
    N, L, F = x.shape
    Fp = z.shape[-1]
    H, C, P = heads, hidden, points
    HC, P3 = H * C, 3 * P
    HP3 = H * P3
    x2 = x.reshape(N * L, F).astype(jnp.float32)

    # Fused node projections: one matmul streams x once (K=node_dim is small).
    Wcat = jnp.concatenate([p['Wq'], p['Wk'], p['Wv'], p['Wqp'], p['Wkp'], p['Wvp']], axis=1)
    proj = pallas_linear(x2, Wcat)                      # (N*L, 3*HC + 3*HP3)
    q = proj[:, 0 * HC:1 * HC].reshape(N, L, HC)
    k = proj[:, 1 * HC:2 * HC].reshape(N, L, HC)
    v = proj[:, 2 * HC:3 * HC].reshape(N, L, HC)
    off = 3 * HC
    qp = proj[:, off + 0 * HP3:off + 1 * HP3].reshape(N, L, H * P, 3)
    kp = proj[:, off + 1 * HP3:off + 2 * HP3].reshape(N, L, H * P, 3)
    vp = proj[:, off + 2 * HP3:off + 3 * HP3].reshape(N, L, H * P, 3)
    qp_g = local_to_global(R, t, qp).reshape(N, L, HP3)
    kp_g = local_to_global(R, t, kp).reshape(N, L, HP3)
    vp_g = local_to_global(R, t, vp).reshape(N, L, HP3)

    # Pair-bias logits, head-major for the attention kernel.
    lp = pallas_linear(z.reshape(N * L * L, Fp).astype(jnp.float32),
                       p['Wpair']).reshape(N, L, L, H)
    lp = jnp.transpose(lp, (0, 3, 1, 2))                # (N, H, L, L)

    gamma = jax.nn.softplus(p['spatial_coef'])          # (H,)
    coef = (-gamma * np.sqrt(2.0 / (9.0 * P)) * 0.5).astype(jnp.float32)   # (H,)

    fn, fpr, fsv = ga_attention(q, k, v, qp_g, kp_g, vp_g, lp,
                                z.astype(jnp.float32), intra_f, inter_f,
                                ratio, coef, heads=H, hidden=C, points=P)

    feat_node = fn.reshape(N, L, HC)
    feat_pair = fpr.reshape(N, L, H * Fp)
    fs_local = global_to_local(R, t, fsv.reshape(N, L, H, P, 3))
    feat_spatial = jnp.linalg.norm(fs_local, axis=-1).reshape(N, L, H * P)

    agg = jnp.concatenate([feat_node, feat_pair, feat_spatial], axis=-1)

    y1 = pallas_linear(agg.reshape(N * L, -1), p['W1'], p['b1'])
    feats = pallas_layernorm(x2 + y1, p['ln1_g'], p['ln1_b'])

    h1 = pallas_linear(feats, p['Wm1'], p['bm1'], relu=True)
    h2 = pallas_linear(h1, p['Wm2'], p['bm2'], relu=True)
    h3 = pallas_linear(h2, p['Wm3'], p['bm3'])

    if feats.shape[-1] == h3.shape[-1]:
        out = pallas_layernorm(feats + h3, p['ln2_g'], p['ln2_b'])
    else:
        out = pallas_layernorm(h3, p['ln2_g'], p['ln2_b'])
    return out.reshape(N, L, -1)


def ga_encoder_apply(params_list, batch, res_feat, pair_feat, *, cutoff, knn):
    pos_atoms = batch['pos_atoms']
    R = construct_3d_basis(pos_atoms[:, :, ATOM_CA],
                           pos_atoms[:, :, ATOM_C],
                           pos_atoms[:, :, ATOM_N])
    t = pos_atoms[:, :, ATOM_CA] / 10.0                              # angstrom_to_nm
    intra, inter = edge_construction(batch['mask_atoms'], batch['chain_nb'],
                                     batch['res_nb'], pos_atoms, cutoff, knn)
    intra_f = intra.astype(jnp.float32)
    inter_f = inter.astype(jnp.float32)
    intra_s = jnp.sum(intra_f, axis=(1, 2))
    inter_s = jnp.sum(inter_f, axis=(1, 2))
    ratio = (intra_s / jnp.maximum(intra_s + inter_s, 1e-6)).astype(jnp.float32)   # (N,)

    x = res_feat.astype(jnp.float32)
    z = pair_feat.astype(jnp.float32)
    for p in params_list:
        x = ga_block_apply(p, R, t, x, z, intra_f, inter_f, ratio)
    return x


# ----------------------------------------------------------------------------
# Driver
# ----------------------------------------------------------------------------

if __name__ == "__main__":
    key = jax.random.PRNGKey(0)
    N, L = 2, 8
    node_dim, pair_dim = 32, 16
    num_layers = 2
    num_atoms = 5  # N, CA, C, O, CB

    k_pos, k_res, k_pair, k_params = jax.random.split(key, 4)

    pos_atoms = jax.random.uniform(k_pos, (N, L, num_atoms, 3), jnp.float32, 0.0, 10.0)
    mask_atoms = jnp.ones((N, L, num_atoms), dtype=bool)
    chain_nb = jnp.concatenate([jnp.zeros((N, L // 2), jnp.int32),
                                jnp.ones((N, L - L // 2), jnp.int32)], axis=1)
    res_nb = jnp.tile(jnp.arange(L, dtype=jnp.int32)[None, :], (N, 1))
    batch = {'pos_atoms': pos_atoms, 'mask_atoms': mask_atoms,
             'chain_nb': chain_nb, 'res_nb': res_nb}

    res_feat = jax.random.normal(k_res, (N, L, node_dim), jnp.float32)
    pair_feat = jax.random.normal(k_pair, (N, L, L, pair_dim), jnp.float32)

    block_keys = jax.random.split(k_params, num_layers)
    params_list = [init_ga_block(block_keys[i], node_dim, pair_dim, codebook_head=1)
                   for i in range(num_layers)]

    fwd = jax.jit(functools.partial(ga_encoder_apply, cutoff=15.0, knn=3))
    out = fwd(params_list, batch, res_feat, pair_feat)
    out = jax.block_until_ready(out)

    assert out.shape == (N, L, node_dim), out.shape
    assert bool(jnp.all(jnp.isfinite(out)))
    print("KERNEL_OK")
</pallas_src>

<mosaic_0001>
module attributes {stable_mosaic.version = 11 : i64} {
  func.func @_linear_kernel(%arg0: i32, %arg1: memref<16x32xf32, #tpu.memory_space<vmem>>, %arg2: memref<32x1344xf32, #tpu.memory_space<vmem>>, %arg3: memref<1x1344xf32, #tpu.memory_space<vmem>>, %arg4: memref<16x1344xf32, #tpu.memory_space<vmem>>) attributes {dimension_semantics = [#tpu.dimension_semantics<parallel>], iteration_bounds = array<i64: 1>, scalar_prefetch = 0 : i64, scratch_operands = 0 : i64, tpu.core_type = #tpu.core_type<tc>, window_params = [{transform_indices = @transform_0, window_bounds = array<i64: 16, 32>}, {pipeline_mode = #tpu.pipeline_mode<synchronous>, transform_indices = @transform_1, window_bounds = array<i64: 32, 1344>}, {pipeline_mode = #tpu.pipeline_mode<synchronous>, transform_indices = @transform_2, window_bounds = array<i64: 1, 1344>}, {transform_indices = @transform_3, window_bounds = array<i64: 16, 1344>}]} {
    %c0 = arith.constant 0 : index
    %c0_0 = arith.constant 0 : index
    %0 = vector.load %arg1[%c0, %c0_0] : memref<16x32xf32, #tpu.memory_space<vmem>>, vector<16x32xf32>
    %c0_1 = arith.constant 0 : index
    %c0_2 = arith.constant 0 : index
    %1 = vector.load %arg2[%c0_1, %c0_2] : memref<32x1344xf32, #tpu.memory_space<vmem>>, vector<32x1344xf32>
    %cst = arith.constant dense<0.000000e+00> : vector<16x1344xf32>
    %2 = tpu.matmul %0, %1, %cst {dimension_numbers = #tpu.dot_dimension_numbers<[1], [0], [0], [1], [0, 0, 1, 1], [], []>} : vector<16x32xf32>, vector<32x1344xf32>, vector<16x1344xf32> -> vector<16x1344xf32>
    %c0_3 = arith.constant 0 : index
    %c0_4 = arith.constant 0 : index
    %3 = vector.load %arg3[%c0_3, %c0_4] : memref<1x1344xf32, #tpu.memory_space<vmem>>, vector<1x1344xf32>
    %4 = vector.broadcast %3 : vector<1x1344xf32> to vector<16x1344xf32>
    %5 = arith.addf %2, %4 : vector<16x1344xf32>
    %c0_5 = arith.constant 0 : index
    %c0_6 = arith.constant 0 : index
    %6 = vector.load %arg4[%c0_5, %c0_6] : memref<16x1344xf32, #tpu.memory_space<vmem>>, vector<16x1344xf32>
    tpu.vector_store %arg4[%c0_5, %c0_6], %5 {strides = array<i32>} : memref<16x1344xf32, #tpu.memory_space<vmem>>, vector<16x1344xf32>,
    return
  }
  func.func @transform_0(%arg0: i32) -> (i32, i32) {
    %c0_i32 = arith.constant 0 : i32
    %c0_i32_0 = arith.constant 0 : i32
    return %arg0, %c0_i32 : i32, i32
  }
  func.func @transform_1(%arg0: i32) -> (i32, i32) {
    %c0_i32 = arith.constant 0 : i32
    %c0_i32_0 = arith.constant 0 : i32
    %c0_i32_1 = arith.constant 0 : i32
    return %c0_i32, %c0_i32_0 : i32, i32
  }
  func.func @transform_2(%arg0: i32) -> (i32, i32) {
    %c0_i32 = arith.constant 0 : i32
    %c0_i32_0 = arith.constant 0 : i32
    %c0_i32_1 = arith.constant 0 : i32
    return %c0_i32, %c0_i32_0 : i32, i32
  }
  func.func @transform_3(%arg0: i32) -> (i32, i32) {
    %c0_i32 = arith.constant 0 : i32
    %c0_i32_0 = arith.constant 0 : i32
    return %arg0, %c0_i32 : i32, i32
  }
}

module attributes {stable_mosaic.version = 11 : i64} {
  func.func @_linear_kernel(%arg0: i32, %arg1: memref<128x16xf32, #tpu.memory_space<vmem>>, %arg2: memref<16x8xf32, #tpu.memory_space<vmem>>, %arg3: memref<1x8xf32, #tpu.memory_space<vmem>>, %arg4: memref<128x8xf32, #tpu.memory_space<vmem>>) attributes {dimension_semantics = [#tpu.dimension_semantics<parallel>], iteration_bounds = array<i64: 1>, scalar_prefetch = 0 : i64, scratch_operands = 0 : i64, tpu.core_type = #tpu.core_type<tc>, window_params = [{transform_indices = @transform_0, window_bounds = array<i64: 128, 16>}, {pipeline_mode = #tpu.pipeline_mode<synchronous>, transform_indices = @transform_1, window_bounds = array<i64: 16, 8>}, {pipeline_mode = #tpu.pipeline_mode<synchronous>, transform_indices = @transform_2, window_bounds = array<i64: 1, 8>}, {transform_indices = @transform_3, window_bounds = array<i64: 128, 8>}]} {
    %c0 = arith.constant 0 : index
    %c0_0 = arith.constant 0 : index
    %0 = vector.load %arg1[%c0, %c0_0] : memref<128x16xf32, #tpu.memory_space<vmem>>, vector<128x16xf32>
    %c0_1 = arith.constant 0 : index
    %c0_2 = arith.constant 0 : index
    %1 = vector.load %arg2[%c0_1, %c0_2] : memref<16x8xf32, #tpu.memory_space<vmem>>, vector<16x8xf32>
    %cst = arith.constant dense<0.000000e+00> : vector<128x8xf32>
    %2 = tpu.matmul %0, %1, %cst {dimension_numbers = #tpu.dot_dimension_numbers<[1], [0], [0], [1], [0, 0, 1, 1], [], []>} : vector<128x16xf32>, vector<16x8xf32>, vector<128x8xf32> -> vector<128x8xf32>
    %c0_3 = arith.constant 0 : index
    %c0_4 = arith.constant 0 : index
    %3 = vector.load %arg3[%c0_3, %c0_4] : memref<1x8xf32, #tpu.memory_space<vmem>>, vector<1x8xf32>
    %4 = vector.broadcast %3 : vector<1x8xf32> to vector<128x8xf32>
    %5 = arith.addf %2, %4 : vector<128x8xf32>
    %c0_5 = arith.constant 0 : index
    %c0_6 = arith.constant 0 : index
    %6 = vector.load %arg4[%c0_5, %c0_6] : memref<128x8xf32, #tpu.memory_space<vmem>>, vector<128x8xf32>
    tpu.vector_store %arg4[%c0_5, %c0_6], %5 {strides = array<i32>} : memref<128x8xf32, #tpu.memory_space<vmem>>, vector<128x8xf32>,
    return
  }
  func.func @transform_0(%arg0: i32) -> (i32, i32) {
    %c0_i32 = arith.constant 0 : i32
    %c0_i32_0 = arith.constant 0 : i32
    return %arg0, %c0_i32 : i32, i32
  }
  func.func @transform_1(%arg0: i32) -> (i32, i32) {
    %c0_i32 = arith.constant 0 : i32
    %c0_i32_0 = arith.constant 0 : i32
    %c0_i32_1 = arith.constant 0 : i32
    return %c0_i32, %c0_i32_0 : i32, i32
  }
  func.func @transform_2(%arg0: i32) -> (i32, i32) {
    %c0_i32 = arith.constant 0 : i32
    %c0_i32_0 = arith.constant 0 : i32
    %c0_i32_1 = arith.constant 0 : i32
    return %c0_i32, %c0_i32_0 : i32, i32
  }
  func.func @transform_3(%arg0: i32) -> (i32, i32) {
    %c0_i32 = arith.constant 0 : i32
    %c0_i32_0 = arith.constant 0 : i32
    return %arg0, %c0_i32 : i32, i32
  }
}

module attributes {stable_mosaic.version = 11 : i64} {
  func.func @_ga_attention_kernel(%arg0: i32, %arg1: i32, %arg2: memref<2xf32, #tpu.memory_space<smem>>, %arg3: memref<8xf32, #tpu.memory_space<smem>>, %arg4: memref<1x8x256xf32, #tpu.memory_space<vmem>>, %arg5: memref<1x8x256xf32, #tpu.memory_space<vmem>>, %arg6: memref<1x8x256xf32, #tpu.memory_space<vmem>>, %arg7: memref<1x8x192xf32, #tpu.memory_space<vmem>>, %arg8: memref<1x8x192xf32, #tpu.memory_space<vmem>>, %arg9: memref<1x8x192xf32, #tpu.memory_space<vmem>>, %arg10: memref<1x8x8x8xf32, #tpu.memory_space<vmem>>, %arg11: memref<1x8x8x16xf32, #tpu.memory_space<vmem>>, %arg12: memref<1x8x8xf32, #tpu.memory_space<vmem>>, %arg13: memref<1x8x8xf32, #tpu.memory_space<vmem>>, %arg14: memref<1x8x256xf32, #tpu.memory_space<vmem>>, %arg15: memref<1x8x128xf32, #tpu.memory_space<vmem>>, %arg16: memref<1x8x192xf32, #tpu.memory_space<vmem>>, %arg17: memref<8x8x8xf32, #tpu.memory_space<vmem>>) attributes {dimension_semantics = [#tpu.dimension_semantics<parallel>, #tpu.dimension_semantics<arbitrary>], iteration_bounds = array<i64: 2, 1>, scalar_prefetch = 2 : i64, scratch_operands = 1 : i64, tpu.core_type = #tpu.core_type<tc>, window_params = [{transform_indices = @transform_0, window_bounds = array<i64: 1, 8, 256>}, {transform_indices = @transform_1, window_bounds = array<i64: 1, 8, 256>}, {transform_indices = @transform_2, window_bounds = array<i64: 1, 8, 256>}, {transform_indices = @transform_3, window_bounds = array<i64: 1, 8, 192>}, {transform_indices = @transform_4, window_bounds = array<i64: 1, 8, 192>}, {transform_indices = @transform_5, window_bounds = array<i64: 1, 8, 192>}, {transform_indices = @transform_6, window_bounds = array<i64: 1, 8, 8, 8>}, {transform_indices = @transform_7, window_bounds = array<i64: 1, 8, 8, 16>}, {transform_indices = @transform_8, window_bounds = array<i64: 1, 8, 8>}, {transform_indices = @transform_9, window_bounds = array<i64: 1, 8, 8>}, {transform_indices = @transform_10, window_bounds = array<i64: 1, 8, 256>}, {transform_indices = @transform_11, window_bounds = array<i64: 1, 8, 128>}, {transform_indices = @transform_12, window_bounds = array<i64: 1, 8, 192>}]} {
    %c0 = arith.constant 0 : index
    %c0_0 = arith.constant 0 : index
    %c0_1 = arith.constant 0 : index
    %0 = vector.load %arg4[%c0, %c0_0, %c0_1] : memref<1x8x256xf32, #tpu.memory_space<vmem>>, vector<1x8x256xf32>
    %1 = vector.shape_cast %0 : vector<1x8x256xf32> to vector<8x256xf32>
    %c0_2 = arith.constant 0 : index
    %c0_3 = arith.constant 0 : index
    %c0_4 = arith.constant 0 : index
    %2 = vector.load %arg5[%c0_2, %c0_3, %c0_4] : memref<1x8x256xf32, #tpu.memory_space<vmem>>, vector<1x8x256xf32>
    %3 = vector.shape_cast %2 : vector<1x8x256xf32> to vector<8x256xf32>
    %c0_5 = arith.constant 0 : index
    %c0_6 = arith.constant 0 : index
    %c0_7 = arith.constant 0 : index
    %4 = vector.load %arg6[%c0_5, %c0_6, %c0_7] : memref<1x8x256xf32, #tpu.memory_space<vmem>>, vector<1x8x256xf32>
    %5 = vector.shape_cast %4 : vector<1x8x256xf32> to vector<8x256xf32>
    %c0_8 = arith.constant 0 : index
    %c0_9 = arith.constant 0 : index
    %c0_10 = arith.constant 0 : index
    %6 = vector.load %arg7[%c0_8, %c0_9, %c0_10] : memref<1x8x192xf32, #tpu.memory_space<vmem>>, vector<1x8x192xf32>
    %7 = vector.shape_cast %6 : vector<1x8x192xf32> to vector<8x192xf32>
    %c0_11 = arith.constant 0 : index
    %c0_12 = arith.constant 0 : index
    %c0_13 = arith.constant 0 : index
    %8 = vector.load %arg8[%c0_11, %c0_12, %c0_13] : memref<1x8x192xf32, #tpu.memory_space<vmem>>, vector<1x8x192xf32>
    %9 = vector.shape_cast %8 : vector<1x8x192xf32> to vector<8x192xf32>
    %c0_14 = arith.constant 0 : index
    %c0_15 = arith.constant 0 : index
    %c0_16 = arith.constant 0 : index
    %10 = vector.load %arg9[%c0_14, %c0_15, %c0_16] : memref<1x8x192xf32, #tpu.memory_space<vmem>>, vector<1x8x192xf32>
    %11 = vector.shape_cast %10 : vector<1x8x192xf32> to vector<8x192xf32>
    %c0_17 = arith.constant 0 : index
    %c0_18 = arith.constant 0 : index
    %c0_19 = arith.constant 0 : index
    %c0_20 = arith.constant 0 : index
    %12 = vector.load %arg10[%c0_17, %c0_18, %c0_19, %c0_20] : memref<1x8x8x8xf32, #tpu.memory_space<vmem>>, vector<1x8x8x8xf32>
    %13 = vector.shape_cast %12 : vector<1x8x8x8xf32> to vector<8x8x8xf32>
    %c0_21 = arith.constant 0 : index
    %c0_22 = arith.constant 0 : index
    %c0_23 = arith.constant 0 : index
    %c0_24 = arith.constant 0 : index
    %14 = vector.load %arg11[%c0_21, %c0_22, %c0_23, %c0_24] : memref<1x8x8x16xf32, #tpu.memory_space<vmem>>, vector<1x8x8x16xf32>
    %15 = vector.shape_cast %14 : vector<1x8x8x16xf32> to vector<8x8x16xf32>
    %c0_25 = arith.constant 0 : index
    %c0_26 = arith.constant 0 : index
    %c0_27 = arith.constant 0 : index
    %16 = vector.load %arg12[%c0_25, %c0_26, %c0_27] : memref<1x8x8xf32, #tpu.memory_space<vmem>>, vector<1x8x8xf32>
    %17 = vector.shape_cast %16 : vector<1x8x8xf32> to vector<8x8xf32>
    %c0_28 = arith.constant 0 : index
    %c0_29 = arith.constant 0 : index
    %c0_30 = arith.constant 0 : index
    %18 = vector.load %arg13[%c0_28, %c0_29, %c0_30] : memref<1x8x8xf32, #tpu.memory_space<vmem>>, vector<1x8x8xf32>
    %19 = vector.shape_cast %18 : vector<1x8x8xf32> to vector<8x8xf32>
    %20 = arith.maximumf %17, %19 : vector<8x8xf32>
    %cst = arith.constant 1.000000e+00 : f32
    %21 = vector.broadcast %cst : f32 to vector<8x8xf32>
    %22 = arith.subf %21, %20 : vector<8x8xf32>
    %cst_31 = arith.constant 1.000000e+05 : f32
    %23 = vector.broadcast %cst_31 : f32 to vector<8x8xf32>
    %24 = arith.mulf %22, %23 : vector<8x8xf32>
    %25 = arith.index_cast %arg0 : i32 to index
    %26 = memref.load %arg2[%25] : memref<2xf32, #tpu.memory_space<smem>>
    %cst_32 = arith.constant 1.000000e+00 : f32
    %27 = arith.subf %cst_32, %26 : f32
    %cst_33 = arith.constant 1.000000e+00 : f32
    %28 = vector.broadcast %cst_33 : f32 to vector<1x24xf32>
    %29 = vector.extract_strided_slice %1 {offsets = [0, 0], sizes = [8, 32], strides = [1, 1]} : vector<8x256xf32> to vector<8x32xf32>
    %30 = vector.extract_strided_slice %3 {offsets = [0, 0], sizes = [8, 32], strides = [1, 1]} : vector<8x256xf32> to vector<8x32xf32>
    %cst_34 = arith.constant dense<0.000000e+00> : vector<8x8xf32>
    %31 = tpu.matmul %29, %30, %cst_34 {dimension_numbers = #tpu.dot_dimension_numbers<[1], [1], [0], [0], [0, 0, 1, 0], [], []>} : vector<8x32xf32>, vector<8x32xf32>, vector<8x8xf32> -> vector<8x8xf32>
    %cst_35 = arith.constant 0.176776692 : f32
    %32 = vector.broadcast %cst_35 : f32 to vector<8x8xf32>
    %33 = arith.mulf %31, %32 : vector<8x8xf32>
    %34 = vector.extract_strided_slice %7 {offsets = [0, 0], sizes = [8, 24], strides = [1, 1]} : vector<8x192xf32> to vector<8x24xf32>
    %35 = vector.extract_strided_slice %9 {offsets = [0, 0], sizes = [8, 24], strides = [1, 1]} : vector<8x192xf32> to vector<8x24xf32>
    %cst_36 = arith.constant dense<0.000000e+00> : vector<8x8xf32>
    %36 = tpu.matmul %34, %35, %cst_36 {dimension_numbers = #tpu.dot_dimension_numbers<[1], [1], [0], [0], [0, 0, 1, 0], [], []>} : vector<8x24xf32>, vector<8x24xf32>, vector<8x8xf32> -> vector<8x8xf32>
    %37 = arith.mulf %34, %34 : vector<8x24xf32>
    %cst_37 = arith.constant dense<0.000000e+00> : vector<8xf32>
    %38 = vector.multi_reduction <add>, %37, %cst_37 [1] : vector<8x24xf32> to vector<8xf32>
    %39 = vector.shape_cast %38 : vector<8xf32> to vector<8x1xf32>
    %40 = arith.mulf %35, %35 : vector<8x24xf32>
    %cst_38 = arith.constant dense<0.000000e+00> : vector<1x8xf32>
    %41 = tpu.matmul %28, %40, %cst_38 {dimension_numbers = #tpu.dot_dimension_numbers<[1], [1], [0], [0], [0, 0, 1, 0], [], []>} : vector<1x24xf32>, vector<8x24xf32>, vector<1x8xf32> -> vector<1x8xf32>
    %42 = vector.broadcast %39 : vector<8x1xf32> to vector<8x8xf32>
    %43 = vector.broadcast %41 : vector<1x8xf32> to vector<8x8xf32>
    %44 = arith.addf %42, %43 : vector<8x8xf32>
    %cst_39 = arith.constant 2.000000e+00 : f32
    %45 = vector.broadcast %cst_39 : f32 to vector<8x8xf32>
    %46 = arith.mulf %45, %36 : vector<8x8xf32>
    %47 = arith.subf %44, %46 : vector<8x8xf32>
    %48 = vector.extract_strided_slice %13 {offsets = [0, 0, 0], sizes = [1, 8, 8], strides = [1, 1, 1]} : vector<8x8x8xf32> to vector<1x8x8xf32>
    %49 = vector.shape_cast %48 : vector<1x8x8xf32> to vector<8x8xf32>
    %50 = arith.addf %33, %49 : vector<8x8xf32>
    %c0_40 = arith.constant 0 : index
    %51 = memref.load %arg3[%c0_40] : memref<8xf32, #tpu.memory_space<smem>>
    %52 = vector.broadcast %51 : f32 to vector<8x8xf32>
    %53 = arith.mulf %47, %52 : vector<8x8xf32>
    %54 = arith.addf %50, %53 : vector<8x8xf32>
    %cst_41 = arith.constant 0.577350259 : f32
    %55 = vector.broadcast %cst_41 : f32 to vector<8x8xf32>
    %56 = arith.mulf %54, %55 : vector<8x8xf32>
    %57 = arith.subf %56, %24 : vector<8x8xf32>
    %cst_42 = arith.constant dense<0xFF800000> : vector<8xf32>
    %58 = vector.multi_reduction <maximumf>, %57, %cst_42 [1] : vector<8x8xf32> to vector<8xf32>
    %59 = vector.shape_cast %58 : vector<8xf32> to vector<8x1xf32>
    %60 = vector.broadcast %59 : vector<8x1xf32> to vector<8x8xf32>
    %61 = arith.subf %57, %60 : vector<8x8xf32>
    %62 = math.exp %61 : vector<8x8xf32>
    %63 = arith.mulf %62, %17 : vector<8x8xf32>
    %64 = arith.mulf %62, %19 : vector<8x8xf32>
    %cst_43 = arith.constant dense<0.000000e+00> : vector<8xf32>
    %65 = vector.multi_reduction <add>, %63, %cst_43 [1] : vector<8x8xf32> to vector<8xf32>
    %66 = vector.shape_cast %65 : vector<8xf32> to vector<8x1xf32>
    %cst_44 = arith.constant dense<0.000000e+00> : vector<8xf32>
    %67 = vector.multi_reduction <add>, %64, %cst_44 [1] : vector<8x8xf32> to vector<8xf32>
    %68 = vector.shape_cast %67 : vector<8xf32> to vector<8x1xf32>
    %cst_45 = arith.constant 0.000000e+00 : f32
    %69 = vector.broadcast %cst_45 : f32 to vector<8x1xf32>
    %70 = arith.cmpf ogt, %66, %69 : vector<8x1xf32>
    %cst_46 = arith.constant 1.000000e+00 : f32
    %71 = vector.broadcast %cst_46 : f32 to vector<8x1xf32>
    %72 = arith.select %70, %66, %71 : vector<8x1xi1>, vector<8x1xf32>
    %73 = tpu.reciprocal %72 {approx = true} : vector<8x1xf32> -> vector<8x1xf32>
    %cst_47 = arith.constant 0.000000e+00 : f32
    %74 = vector.broadcast %cst_47 : f32 to vector<8x1xf32>
    %75 = arith.cmpf ogt, %68, %74 : vector<8x1xf32>
    %cst_48 = arith.constant 1.000000e+00 : f32
    %76 = vector.broadcast %cst_48 : f32 to vector<8x1xf32>
    %77 = arith.select %75, %68, %76 : vector<8x1xi1>, vector<8x1xf32>
    %78 = tpu.reciprocal %77 {approx = true} : vector<8x1xf32> -> vector<8x1xf32>
    %79 = vector.broadcast %26 : f32 to vector<8x1xf32>
    %80 = arith.mulf %73, %79 : vector<8x1xf32>
    %81 = vector.broadcast %80 : vector<8x1xf32> to vector<8x8xf32>
    %82 = arith.mulf %63, %81 : vector<8x8xf32>
    %83 = vector.broadcast %27 : f32 to vector<8x1xf32>
    %84 = arith.mulf %78, %83 : vector<8x1xf32>
    %85 = vector.broadcast %84 : vector<8x1xf32> to vector<8x8xf32>
    %86 = arith.mulf %64, %85 : vector<8x8xf32>
    %87 = arith.addf %82, %86 : vector<8x8xf32>
    %c0_49 = arith.constant 0 : index
    %c0_50 = arith.constant 0 : index
    %c0_51 = arith.constant 0 : index
    %88 = vector.load %arg17[%c0_49, %c0_50, %c0_51] : memref<8x8x8xf32, #tpu.memory_space<vmem>>, vector<8x1x8xf32>
    %89 = vector.shape_cast %88 : vector<8x1x8xf32> to vector<8x8xf32>
    %90 = vector.shape_cast %87 : vector<8x8xf32> to vector<8x1x8xf32>
    tpu.vector_store %arg17[%c0_49, %c0_50, %c0_51], %90 {strides = array<i32>} : memref<8x8x8xf32, #tpu.memory_space<vmem>>, vector<8x1x8xf32>,
    %91 = vector.extract_strided_slice %5 {offsets = [0, 0], sizes = [8, 32], strides = [1, 1]} : vector<8x256xf32> to vector<8x32xf32>
    %cst_52 = arith.constant dense<0.000000e+00> : vector<8x32xf32>
    %92 = tpu.matmul %87, %91, %cst_52 {dimension_numbers = #tpu.dot_dimension_numbers<[1], [0], [0], [1], [0, 0, 1, 1], [], []>} : vector<8x8xf32>, vector<8x32xf32>, vector<8x32xf32> -> vector<8x32xf32>
    %c0_53 = arith.constant 0 : index
    %c0_54 = arith.constant 0 : index
    %c0_55 = arith.constant 0 : index
    %93 = vector.load %arg14[%c0_53, %c0_54, %c0_55] : memref<1x8x256xf32, #tpu.memory_space<vmem>>, vector<1x8x32xf32>
    %94 = vector.shape_cast %93 : vector<1x8x32xf32> to vector<8x32xf32>
    %95 = vector.shape_cast %92 : vector<8x32xf32> to vector<1x8x32xf32>
    tpu.vector_store %arg14[%c0_53, %c0_54, %c0_55], %95 {strides = array<i32>} : memref<1x8x256xf32, #tpu.memory_space<vmem>>, vector<1x8x32xf32>,
    %96 = vector.extract_strided_slice %11 {offsets = [0, 0], sizes = [8, 24], strides = [1, 1]} : vector<8x192xf32> to vector<8x24xf32>
    %cst_56 = arith.constant dense<0.000000e+00> : vector<8x24xf32>
    %97 = tpu.matmul %87, %96, %cst_56 {dimension_numbers = #tpu.dot_dimension_numbers<[1], [0], [0], [1], [0, 0, 1, 1], [], []>} : vector<8x8xf32>, vector<8x24xf32>, vector<8x24xf32> -> vector<8x24xf32>
    %c0_57 = arith.constant 0 : index
    %c0_58 = arith.constant 0 : index
    %c0_59 = arith.constant 0 : index
    %98 = vector.load %arg16[%c0_57, %c0_58, %c0_59] : memref<1x8x192xf32, #tpu.memory_space<vmem>>, vector<1x8x24xf32>
    %99 = vector.shape_cast %98 : vector<1x8x24xf32> to vector<8x24xf32>
    %100 = vector.shape_cast %97 : vector<8x24xf32> to vector<1x8x24xf32>
    tpu.vector_store %arg16[%c0_57, %c0_58, %c0_59], %100 {strides = array<i32>} : memref<1x8x192xf32, #tpu.memory_space<vmem>>, vector<1x8x24xf32>,
    %101 = vector.extract_strided_slice %1 {offsets = [0, 32], sizes = [8, 32], strides = [1, 1]} : vector<8x256xf32> to vector<8x32xf32>
    %102 = vector.extract_strided_slice %3 {offsets = [0, 32], sizes = [8, 32], strides = [1, 1]} : vector<8x256xf32> to vector<8x32xf32>
    %cst_60 = arith.constant dense<0.000000e+00> : vector<8x8xf32>
    %103 = tpu.matmul %101, %102, %cst_60 {dimension_numbers = #tpu.dot_dimension_numbers<[1], [1], [0], [0], [0, 0, 1, 0], [], []>} : vector<8x32xf32>, vector<8x32xf32>, vector<8x8xf32> -> vector<8x8xf32>
    %cst_61 = arith.constant 0.176776692 : f32
    %104 = vector.broadcast %cst_61 : f32 to vector<8x8xf32>
    %105 = arith.mulf %103, %104 : vector<8x8xf32>
    %106 = vector.extract_strided_slice %7 {offsets = [0, 24], sizes = [8, 24], strides = [1, 1]} : vector<8x192xf32> to vector<8x24xf32>
    %107 = vector.extract_strided_slice %9 {offsets = [0, 24], sizes = [8, 24], strides = [1, 1]} : vector<8x192xf32> to vector<8x24xf32>
    %cst_62 = arith.constant dense<0.000000e+00> : vector<8x8xf32>
    %108 = tpu.matmul %106, %107, %cst_62 {dimension_numbers = #tpu.dot_dimension_numbers<[1], [1], [0], [0], [0, 0, 1, 0], [], []>} : vector<8x24xf32>, vector<8x24xf32>, vector<8x8xf32> -> vector<8x8xf32>
    %109 = arith.mulf %106, %106 : vector<8x24xf32>
    %cst_63 = arith.constant dense<0.000000e+00> : vector<8xf32>
    %110 = vector.multi_reduction <add>, %109, %cst_63 [1] : vector<8x24xf32> to vector<8xf32>
    %111 = vector.shape_cast %110 : vector<8xf32> to vector<8x1xf32>
    %112 = arith.mulf %107, %107 : vector<8x24xf32>
    %cst_64 = arith.constant dense<0.000000e+00> : vector<1x8xf32>
    %113 = tpu.matmul %28, %112, %cst_64 {dimension_numbers = #tpu.dot_dimension_numbers<[1], [1], [0], [0], [0, 0, 1, 0], [], []>} : vector<1x24xf32>, vector<8x24xf32>, vector<1x8xf32> -> vector<1x8xf32>
    %114 = vector.broadcast %111 : vector<8x1xf32> to vector<8x8xf32>
    %115 = vector.broadcast %113 : vector<1x8xf32> to vector<8x8xf32>
    %116 = arith.addf %114, %115 : vector<8x8xf32>
    %cst_65 = arith.constant 2.000000e+00 : f32
    %117 = vector.broadcast %cst_65 : f32 to vector<8x8xf32>
    %118 = arith.mulf %117, %108 : vector<8x8xf32>
    %119 = arith.subf %116, %118 : vector<8x8xf32>
    %120 = vector.extract_strided_slice %13 {offsets = [1, 0, 0], sizes = [1, 8, 8], strides = [1, 1, 1]} : vector<8x8x8xf32> to vector<1x8x8xf32>
    %121 = vector.shape_cast %120 : vector<1x8x8xf32> to vector<8x8xf32>
    %122 = arith.addf %105, %121 : vector<8x8xf32>
    %c1 = arith.constant 1 : index
    %123 = memref.load %arg3[%c1] : memref<8xf32, #tpu.memory_space<smem>>
    %124 = vector.broadcast %123 : f32 to vector<8x8xf32>
    %125 = arith.mulf %119, %124 : vector<8x8xf32>
    %126 = arith.addf %122, %125 : vector<8x8xf32>
    %cst_66 = arith.constant 0.577350259 : f32
    %127 = vector.broadcast %cst_66 : f32 to vector<8x8xf32>
    %128 = arith.mulf %126, %127 : vector<8x8xf32>
    %129 = arith.subf %128, %24 : vector<8x8xf32>
    %cst_67 = arith.constant dense<0xFF800000> : vector<8xf32>
    %130 = vector.multi_reduction <maximumf>, %129, %cst_67 [1] : vector<8x8xf32> to vector<8xf32>
    %131 = vector.shape_cast %130 : vector<8xf32> to vector<8x1xf32>
    %132 = vector.broadcast %131 : vector<8x1xf32> to vector<8x8xf32>
    %133 = arith.subf %129, %132 : vector<8x8xf32>
    %134 = math.exp %133 : vector<8x8xf32>
    %135 = arith.mulf %134, %17 : vector<8x8xf32>
    %136 = arith.mulf %134, %19 : vector<8x8xf32>
    %cst_68 = arith.constant dense<0.000000e+00> : vector<8xf32>
    %137 = vector.multi_reduction <add>, %135, %cst_68 [1] : vector<8x8xf32> to vector<8xf32>
    %138 = vector.shape_cast %137 : vector<8xf32> to vector<8x1xf32>
    %cst_69 = arith.constant dense<0.000000e+00> : vector<8xf32>
    %139 = vector.multi_reduction <add>, %136, %cst_69 [1] : vector<8x8xf32> to vector<8xf32>
    %140 = vector.shape_cast %139 : vector<8xf32> to vector<8x1xf32>
    %cst_70 = arith.constant 0.000000e+00 : f32
    %141 = vector.broadcast %cst_70 : f32 to vector<8x1xf32>
    %142 = arith.cmpf ogt, %138, %141 : vector<8x1xf32>
    %cst_71 = arith.constant 1.000000e+00 : f32
    %143 = vector.broadcast %cst_71 : f32 to vector<8x1xf32>
    %144 = arith.select %142, %138, %143 : vector<8x1xi1>, vector<8x1xf32>
    %145 = tpu.reciprocal %144 {approx = true} : vector<8x1xf32> -> vector<8x1xf32>
    %cst_72 = arith.constant 0.000000e+00 : f32
    %146 = vector.broadcast %cst_72 : f32 to vector<8x1xf32>
    %147 = arith.cmpf ogt, %140, %146 : vector<8x1xf32>
    %cst_73 = arith.constant 1.000000e+00 : f32
    %148 = vector.broadcast %cst_73 : f32 to vector<8x1xf32>
    %149 = arith.select %147, %140, %148 : vector<8x1xi1>, vector<8x1xf32>
    %150 = tpu.reciprocal %149 {approx = true} : vector<8x1xf32> -> vector<8x1xf32>
    %151 = vector.broadcast %26 : f32 to vector<8x1xf32>
    %152 = arith.mulf %145, %151 : vector<8x1xf32>
    %153 = vector.broadcast %152 : vector<8x1xf32> to vector<8x8xf32>
    %154 = arith.mulf %135, %153 : vector<8x8xf32>
    %155 = vector.broadcast %27 : f32 to vector<8x1xf32>
    %156 = arith.mulf %150, %155 : vector<8x1xf32>
    %157 = vector.broadcast %156 : vector<8x1xf32> to vector<8x8xf32>
    %158 = arith.mulf %136, %157 : vector<8x8xf32>
    %159 = arith.addf %154, %158 : vector<8x8xf32>
    %c0_74 = arith.constant 0 : index
    %c1_75 = arith.constant 1 : index
    %c0_76 = arith.constant 0 : index
    %160 = vector.load %arg17[%c0_74, %c1_75, %c0_76] : memref<8x8x8xf32, #tpu.memory_space<vmem>>, vector<8x1x8xf32>
    %161 = vector.shape_cast %160 : vector<8x1x8xf32> to vector<8x8xf32>
    %162 = vector.shape_cast %159 : vector<8x8xf32> to vector<8x1x8xf32>
    tpu.vector_store %arg17[%c0_74, %c1_75, %c0_76], %162 {strides = array<i32>} : memref<8x8x8xf32, #tpu.memory_space<vmem>>, vector<8x1x8xf32>,
    %163 = vector.extract_strided_slice %5 {offsets = [0, 32], sizes = [8, 32], strides = [1, 1]} : vector<8x256xf32> to vector<8x32xf32>
    %cst_77 = arith.constant dense<0.000000e+00> : vector<8x32xf32>
    %164 = tpu.matmul %159, %163, %cst_77 {dimension_numbers = #tpu.dot_dimension_numbers<[1], [0], [0], [1], [0, 0, 1, 1], [], []>} : vector<8x8xf32>, vector<8x32xf32>, vector<8x32xf32> -> vector<8x32xf32>
    %c0_78 = arith.constant 0 : index
    %c0_79 = arith.constant 0 : index
    %c32 = arith.constant 32 : index
    %165 = vector.load %arg14[%c0_78, %c0_79, %c32] : memref<1x8x256xf32, #tpu.memory_space<vmem>>, vector<1x8x32xf32>
    %166 = vector.shape_cast %165 : vector<1x8x32xf32> to vector<8x32xf32>
    %167 = vector.shape_cast %164 : vector<8x32xf32> to vector<1x8x32xf32>
    tpu.vector_store %arg14[%c0_78, %c0_79, %c32], %167 {strides = array<i32>} : memref<1x8x256xf32, #tpu.memory_space<vmem>>, vector<1x8x32xf32>,
    %168 = vector.extract_strided_slice %11 {offsets = [0, 24], sizes = [8, 24], strides = [1, 1]} : vector<8x192xf32> to vector<8x24xf32>
    %cst_80 = arith.constant dense<0.000000e+00> : vector<8x24xf32>
    %169 = tpu.matmul %159, %168, %cst_80 {dimension_numbers = #tpu.dot_dimension_numbers<[1], [0], [0], [1], [0, 0, 1, 1], [], []>} : vector<8x8xf32>, vector<8x24xf32>, vector<8x24xf32> -> vector<8x24xf32>
    %c0_81 = arith.constant 0 : index
    %c0_82 = arith.constant 0 : index
    %c24 = arith.constant 24 : index
    %170 = vector.load %arg16[%c0_81, %c0_82, %c24] : memref<1x8x192xf32, #tpu.memory_space<vmem>>, vector<1x8x24xf32>
    %171 = vector.shape_cast %170 : vector<1x8x24xf32> to vector<8x24xf32>
    %172 = vector.shape_cast %169 : vector<8x24xf32> to vector<1x8x24xf32>
    tpu.vector_store %arg16[%c0_81, %c0_82, %c24], %172 {strides = array<i32>} : memref<1x8x192xf32, #tpu.memory_space<vmem>>, vector<1x8x24xf32>,
    %173 = vector.extract_strided_slice %1 {offsets = [0, 64], sizes = [8, 32], strides = [1, 1]} : vector<8x256xf32> to vector<8x32xf32>
    %174 = vector.extract_strided_slice %3 {offsets = [0, 64], sizes = [8, 32], strides = [1, 1]} : vector<8x256xf32> to vector<8x32xf32>
    %cst_83 = arith.constant dense<0.000000e+00> : vector<8x8xf32>
    %175 = tpu.matmul %173, %174, %cst_83 {dimension_numbers = #tpu.dot_dimension_numbers<[1], [1], [0], [0], [0, 0, 1, 0], [], []>} : vector<8x32xf32>, vector<8x32xf32>, vector<8x8xf32> -> vector<8x8xf32>
    %cst_84 = arith.constant 0.176776692 : f32
    %176 = vector.broadcast %cst_84 : f32 to vector<8x8xf32>
    %177 = arith.mulf %175, %176 : vector<8x8xf32>
    %178 = vector.extract_strided_slice %7 {offsets = [0, 48], sizes = [8, 24], strides = [1, 1]} : vector<8x192xf32> to vector<8x24xf32>
    %179 = vector.extract_strided_slice %9 {offsets = [0, 48], sizes = [8, 24], strides = [1, 1]} : vector<8x192xf32> to vector<8x24xf32>
    %cst_85 = arith.constant dense<0.000000e+00> : vector<8x8xf32>
    %180 = tpu.matmul %178, %179, %cst_85 {dimension_numbers = #tpu.dot_dimension_numbers<[1], [1], [0], [0], [0, 0, 1, 0], [], []>} : vector<8x24xf32>, vector<8x24xf32>, vector<8x8xf32> -> vector<8x8xf32>
    %181 = arith.mulf %178, %178 : vector<8x24xf32>
    %cst_86 = arith.constant dense<0.000000e+00> : vector<8xf32>
    %182 = vector.multi_reduction <add>, %181, %cst_86 [1] : vector<8x24xf32> to vector<8xf32>
    %183 = vector.shape_cast %182 : vector<8xf32> to vector<8x1xf32>
    %184 = arith.mulf %179, %179 : vector<8x24xf32>
    %cst_87 = arith.constant dense<0.000000e+00> : vector<1x8xf32>
    %185 = tpu.matmul %28, %184, %cst_87 {dimension_numbers = #tpu.dot_dimension_numbers<[1], [1], [0], [0], [0, 0, 1, 0], [], []>} : vector<1x24xf32>, vector<8x24xf32>, vector<1x8xf32> -> vector<1x8xf32>
    %186 = vector.broadcast %183 : vector<8x1xf32> to vector<8x8xf32>
    %187 = vector.broadcast %185 : vector<1x8xf32> to vector<8x8xf32>
    %188 = arith.addf %186, %187 : vector<8x8xf32>
    %cst_88 = arith.constant 2.000000e+00 : f32
    %189 = vector.broadcast %cst_88 : f32 to vector<8x8xf32>
    %190 = arith.mulf %189, %180 : vector<8x8xf32>
    %191 = arith.subf %188, %190 : vector<8x8xf32>
    %192 = vector.extract_strided_slice %13 {offsets = [2, 0, 0], sizes = [1, 8, 8], strides = [1, 1, 1]} : vector<8x8x8xf32> to vector<1x8x8xf32>
    %193 = vector.shape_cast %192 : vector<1x8x8xf32> to vector<8x8xf32>
    %194 = arith.addf %177, %193 : vector<8x8xf32>
    %c2 = arith.constant 2 : index
    %195 = memref.load %arg3[%c2] : memref<8xf32, #tpu.memory_space<smem>>
    %196 = vector.broadcast %195 : f32 to vector<8x8xf32>
    %197 = arith.mulf %191, %196 : vector<8x8xf32>
    %198 = arith.addf %194, %197 : vector<8x8xf32>
    %cst_89 = arith.constant 0.577350259 : f32
    %199 = vector.broadcast %cst_89 : f32 to vector<8x8xf32>
    %200 = arith.mulf %198, %199 : vector<8x8xf32>
    %201 = arith.subf %200, %24 : vector<8x8xf32>
    %cst_90 = arith.constant dense<0xFF800000> : vector<8xf32>
    %202 = vector.multi_reduction <maximumf>, %201, %cst_90 [1] : vector<8x8xf32> to vector<8xf32>
    %203 = vector.shape_cast %202 : vector<8xf32> to vector<8x1xf32>
    %204 = vector.broadcast %203 : vector<8x1xf32> to vector<8x8xf32>
    %205 = arith.subf %201, %204 : vector<8x8xf32>
    %206 = math.exp %205 : vector<8x8xf32>
    %207 = arith.mulf %206, %17 : vector<8x8xf32>
    %208 = arith.mulf %206, %19 : vector<8x8xf32>
    %cst_91 = arith.constant dense<0.000000e+00> : vector<8xf32>
    %209 = vector.multi_reduction <add>, %207, %cst_91 [1] : vector<8x8xf32> to vector<8xf32>
    %210 = vector.shape_cast %209 : vector<8xf32> to vector<8x1xf32>
    %cst_92 = arith.constant dense<0.000000e+00> : vector<8xf32>
    %211 = vector.multi_reduction <add>, %208, %cst_92 [1] : vector<8x8xf32> to vector<8xf32>
    %212 = vector.shape_cast %211 : vector<8xf32> to vector<8x1xf32>
    %cst_93 = arith.constant 0.000000e+00 : f32
    %213 = vector.broadcast %cst_93 : f32 to vector<8x1xf32>
    %214 = arith.cmpf ogt, %210, %213 : vector<8x1xf32>
    %cst_94 = arith.constant 1.000000e+00 : f32
    %215 = vector.broadcast %cst_94 : f32 to vector<8x1xf32>
    %216 = arith.select %214, %210, %215 : vector<8x1xi1>, vector<8x1xf32>
    %217 = tpu.reciprocal %216 {approx = true} : vector<8x1xf32> -> vector<8x1xf32>
    %cst_95 = arith.constant 0.000000e+00 : f32
    %218 = vector.broadcast %cst_95 : f32 to vector<8x1xf32>
    %219 = arith.cmpf ogt, %212, %218 : vector<8x1xf32>
    %cst_96 = arith.constant 1.000000e+00 : f32
    %220 = vector.broadcast %cst_96 : f32 to vector<8x1xf32>
    %221 = arith.select %219, %212, %220 : vector<8x1xi1>, vector<8x1xf32>
    %222 = tpu.reciprocal %221 {approx = true} : vector<8x1xf32> -> vector<8x1xf32>
    %223 = vector.broadcast %26 : f32 to vector<8x1xf32>
    %224 = arith.mulf %217, %223 : vector<8x1xf32>
    %225 = vector.broadcast %224 : vector<8x1xf32> to vector<8x8xf32>
    %226 = arith.mulf %207, %225 : vector<8x8xf32>
    %227 = vector.broadcast %27 : f32 to vector<8x1xf32>
    %228 = arith.mulf %222, %227 : vector<8x1xf32>
    %229 = vector.broadcast %228 : vector<8x1xf32> to vector<8x8xf32>
    %230 = arith.mulf %208, %229 : vector<8x8xf32>
    %231 = arith.addf %226, %230 : vector<8x8xf32>
    %c0_97 = arith.constant 0 : index
    %c2_98 = arith.constant 2 : index
    %c0_99 = arith.constant 0 : index
    %232 = vector.load %arg17[%c0_97, %c2_98, %c0_99] : memref<8x8x8xf32, #tpu.memory_space<vmem>>, vector<8x1x8xf32>
    %233 = vector.shape_cast %232 : vector<8x1x8xf32> to vector<8x8xf32>
    %234 = vector.shape_cast %231 : vector<8x8xf32> to vector<8x1x8xf32>
    tpu.vector_store %arg17[%c0_97, %c2_98, %c0_99], %234 {strides = array<i32>} : memref<8x8x8xf32, #tpu.memory_space<vmem>>, vector<8x1x8xf32>,
    %235 = vector.extract_strided_slice %5 {offsets = [0, 64], sizes = [8, 32], strides = [1, 1]} : vector<8x256xf32> to vector<8x32xf32>
    %cst_100 = arith.constant dense<0.000000e+00> : vector<8x32xf32>
    %236 = tpu.matmul %231, %235, %cst_100 {dimension_numbers = #tpu.dot_dimension_numbers<[1], [0], [0], [1], [0, 0, 1, 1], [], []>} : vector<8x8xf32>, vector<8x32xf32>, vector<8x32xf32> -> vector<8x32xf32>
    %c0_101 = arith.constant 0 : index
    %c0_102 = arith.constant 0 : index
    %c64 = arith.constant 64 : index
    %237 = vector.load %arg14[%c0_101, %c0_102, %c64] : memref<1x8x256xf32, #tpu.memory_space<vmem>>, vector<1x8x32xf32>
    %238 = vector.shape_cast %237 : vector<1x8x32xf32> to vector<8x32xf32>
    %239 = vector.shape_cast %236 : vector<8x32xf32> to vector<1x8x32xf32>
    tpu.vector_store %arg14[%c0_101, %c0_102, %c64], %239 {strides = array<i32>} : memref<1x8x256xf32, #tpu.memory_space<vmem>>, vector<1x8x32xf32>,
    %240 = vector.extract_strided_slice %11 {offsets = [0, 48], sizes = [8, 24], strides = [1, 1]} : vector<8x192xf32> to vector<8x24xf32>
    %cst_103 = arith.constant dense<0.000000e+00> : vector<8x24xf32>
    %241 = tpu.matmul %231, %240, %cst_103 {dimension_numbers = #tpu.dot_dimension_numbers<[1], [0], [0], [1], [0, 0, 1, 1], [], []>} : vector<8x8xf32>, vector<8x24xf32>, vector<8x24xf32> -> vector<8x24xf32>
    %c0_104 = arith.constant 0 : index
    %c0_105 = arith.constant 0 : index
    %c48 = arith.constant 48 : index
    %242 = vector.load %arg16[%c0_104, %c0_105, %c48] : memref<1x8x192xf32, #tpu.memory_space<vmem>>, vector<1x8x24xf32>
    %243 = vector.shape_cast %242 : vector<1x8x24xf32> to vector<8x24xf32>
    %244 = vector.shape_cast %241 : vector<8x24xf32> to vector<1x8x24xf32>
    tpu.vector_store %arg16[%c0_104, %c0_105, %c48], %244 {strides = array<i32>} : memref<1x8x192xf32, #tpu.memory_space<vmem>>, vector<1x8x24xf32>,
    %245 = vector.extract_strided_slice %1 {offsets = [0, 96], sizes = [8, 32], strides = [1, 1]} : vector<8x256xf32> to vector<8x32xf32>
    %246 = vector.extract_strided_slice %3 {offsets = [0, 96], sizes = [8, 32], strides = [1, 1]} : vector<8x256xf32> to vector<8x32xf32>
    %cst_106 = arith.constant dense<0.000000e+00> : vector<8x8xf32>
    %247 = tpu.matmul %245, %246, %cst_106 {dimension_numbers = #tpu.dot_dimension_numbers<[1], [1], [0], [0], [0, 0, 1, 0], [], []>} : vector<8x32xf32>, vector<8x32xf32>, vector<8x8xf32> -> vector<8x8xf32>
    %cst_107 = arith.constant 0.176776692 : f32
    %248 = vector.broadcast %cst_107 : f32 to vector<8x8xf32>
    %249 = arith.mulf %247, %248 : vector<8x8xf32>
    %250 = vector.extract_strided_slice %7 {offsets = [0, 72], sizes = [8, 24], strides = [1, 1]} : vector<8x192xf32> to vector<8x24xf32>
    %251 = vector.extract_strided_slice %9 {offsets = [0, 72], sizes = [8, 24], strides = [1, 1]} : vector<8x192xf32> to vector<8x24xf32>
    %cst_108 = arith.constant dense<0.000000e+00> : vector<8x8xf32>
    %252 = tpu.matmul %250, %251, %cst_108 {dimension_numbers = #tpu.dot_dimension_numbers<[1], [1], [0], [0], [0, 0, 1, 0], [], []>} : vector<8x24xf32>, vector<8x24xf32>, vector<8x8xf32> -> vector<8x8xf32>
    %253 = arith.mulf %250, %250 : vector<8x24xf32>
    %cst_109 = arith.constant dense<0.000000e+00> : vector<8xf32>
    %254 = vector.multi_reduction <add>, %253, %cst_109 [1] : vector<8x24xf32> to vector<8xf32>
    %255 = vector.shape_cast %254 : vector<8xf32> to vector<8x1xf32>
    %256 = arith.mulf %251, %251 : vector<8x24xf32>
    %cst_110 = arith.constant dense<0.000000e+00> : vector<1x8xf32>
    %257 = tpu.matmul %28, %256, %cst_110 {dimension_numbers = #tpu.dot_dimension_numbers<[1], [1], [0], [0], [0, 0, 1, 0], [], []>} : vector<1x24xf32>, vector<8x24xf32>, vector<1x8xf32> -> vector<1x8xf32>
    %258 = vector.broadcast %255 : vector<8x1xf32> to vector<8x8xf32>
    %259 = vector.broadcast %257 : vector<1x8xf32> to vector<8x8xf32>
    %260 = arith.addf %258, %259 : vector<8x8xf32>
    %cst_111 = arith.constant 2.000000e+00 : f32
    %261 = vector.broadcast %cst_111 : f32 to vector<8x8xf32>
    %262 = arith.mulf %261, %252 : vector<8x8xf32>
    %263 = arith.subf %260, %262 : vector<8x8xf32>
    %264 = vector.extract_strided_slice %13 {offsets = [3, 0, 0], sizes = [1, 8, 8], strides = [1, 1, 1]} : vector<8x8x8xf32> to vector<1x8x8xf32>
    %265 = vector.shape_cast %264 : vector<1x8x8xf32> to vector<8x8xf32>
    %266 = arith.addf %249, %265 : vector<8x8xf32>
    %c3 = arith.constant 3 : index
    %267 = memref.load %arg3[%c3] : memref<8xf32, #tpu.memory_space<smem>>
    %268 = vector.broadcast %267 : f32 to vector<8x8xf32>
    %269 = arith.mulf %263, %268 : vector<8x8xf32>
    %270 = arith.addf %266, %269 : vector<8x8xf32>
    %cst_112 = arith.constant 0.577350259 : f32
    %271 = vector.broadcast %cst_112 : f32 to vector<8x8xf32>
    %272 = arith.mulf %270, %271 : vector<8x8xf32>
    %273 = arith.subf %272, %24 : vector<8x8xf32>
    %cst_113 = arith.constant dense<0xFF800000> : vector<8xf32>
    %274 = vector.multi_reduction <maximumf>, %273, %cst_113 [1] : vector<8x8xf32> to vector<8xf32>
    %275 = vector.shape_cast %274 : vector<8xf32> to vector<8x1xf32>
    %276 = vector.broadcast %275 : vector<8x1xf32> to vector<8x8xf32>
    %277 = arith.subf %273, %276 : vector<8x8xf32>
    %278 = math.exp %277 : vector<8x8xf32>
    %279 = arith.mulf %278, %17 : vector<8x8xf32>
    %280 = arith.mulf %278, %19 : vector<8x8xf32>
    %cst_114 = arith.constant dense<0.000000e+00> : vector<8xf32>
    %281 = vector.multi_reduction <add>, %279, %cst_114 [1] : vector<8x8xf32> to vector<8xf32>
    %282 = vector.shape_cast %281 : vector<8xf32> to vector<8x1xf32>
    %cst_115 = arith.constant dense<0.000000e+00> : vector<8xf32>
    %283 = vector.multi_reduction <add>, %280, %cst_115 [1] : vector<8x8xf32> to vector<8xf32>
    %284 = vector.shape_cast %283 : vector<8xf32> to vector<8x1xf32>
    %cst_116 = arith.constant 0.000000e+00 : f32
    %285 = vector.broadcast %cst_116 : f32 to vector<8x1xf32>
    %286 = arith.cmpf ogt, %282, %285 : vector<8x1xf32>
    %cst_117 = arith.constant 1.000000e+00 : f32
    %287 = vector.broadcast %cst_117 : f32 to vector<8x1xf32>
    %288 = arith.select %286, %282, %287 : vector<8x1xi1>, vector<8x1xf32>
    %289 = tpu.reciprocal %288 {approx = true} : vector<8x1xf32> -> vector<8x1xf32>
    %cst_118 = arith.constant 0.000000e+00 : f32
    %290 = vector.broadcast %cst_118 : f32 to vector<8x1xf32>
    %291 = arith.cmpf ogt, %284, %290 : vector<8x1xf32>
    %cst_119 = arith.constant 1.000000e+00 : f32
    %292 = vector.broadcast %cst_119 : f32 to vector<8x1xf32>
    %293 = arith.select %291, %284, %292 : vector<8x1xi1>, vector<8x1xf32>
    %294 = tpu.reciprocal %293 {approx = true} : vector<8x1xf32> -> vector<8x1xf32>
    %295 = vector.broadcast %26 : f32 to vector<8x1xf32>
    %296 = arith.mulf %289, %295 : vector<8x1xf32>
    %297 = vector.broadcast %296 : vector<8x1xf32> to vector<8x8xf32>
    %298 = arith.mulf %279, %297 : vector<8x8xf32>
    %299 = vector.broadcast %27 : f32 to vector<8x1xf32>
    %300 = arith.mulf %294, %299 : vector<8x1xf32>
    %301 = vector.broadcast %300 : vector<8x1xf32> to vector<8x8xf32>
    %302 = arith.mulf %280, %301 : vector<8x8xf32>
    %303 = arith.addf %298, %302 : vector<8x8xf32>
    %c0_120 = arith.constant 0 : index
    %c3_121 = arith.constant 3 : index
    %c0_122 = arith.constant 0 : index
    %304 = vector.load %arg17[%c0_120, %c3_121, %c0_122] : memref<8x8x8xf32, #tpu.memory_space<vmem>>, vector<8x1x8xf32>
    %305 = vector.shape_cast %304 : vector<8x1x8xf32> to vector<8x8xf32>
    %306 = vector.shape_cast %303 : vector<8x8xf32> to vector<8x1x8xf32>
    tpu.vector_store %arg17[%c0_120, %c3_121, %c0_122], %306 {strides = array<i32>} : memref<8x8x8xf32, #tpu.memory_space<vmem>>, vector<8x1x8xf32>,
    %307 = vector.extract_strided_slice %5 {offsets = [0, 96], sizes = [8, 32], strides = [1, 1]} : vector<8x256xf32> to vector<8x32xf32>
    %cst_123 = arith.constant dense<0.000000e+00> : vector<8x32xf32>
    %308 = tpu.matmul %303, %307, %cst_123 {dimension_numbers = #tpu.dot_dimension_numbers<[1], [0], [0], [1], [0, 0, 1, 1], [], []>} : vector<8x8xf32>, vector<8x32xf32>, vector<8x32xf32> -> vector<8x32xf32>
    %c0_124 = arith.constant 0 : index
    %c0_125 = arith.constant 0 : index
    %c96 = arith.constant 96 : index
    %309 = vector.load %arg14[%c0_124, %c0_125, %c96] : memref<1x8x256xf32, #tpu.memory_space<vmem>>, vector<1x8x32xf32>
    %310 = vector.shape_cast %309 : vector<1x8x32xf32> to vector<8x32xf32>
    %311 = vector.shape_cast %308 : vector<8x32xf32> to vector<1x8x32xf32>
    tpu.vector_store %arg14[%c0_124, %c0_125, %c96], %311 {strides = array<i32>} : memref<1x8x256xf32, #tpu.memory_space<vmem>>, vector<1x8x32xf32>,
    %312 = vector.extract_strided_slice %11 {offsets = [0, 72], sizes = [8, 24], strides = [1, 1]} : vector<8x192xf32> to vector<8x24xf32>
    %cst_126 = arith.constant dense<0.000000e+00> : vector<8x24xf32>
    %313 = tpu.matmul %303, %312, %cst_126 {dimension_numbers = #tpu.dot_dimension_numbers<[1], [0], [0], [1], [0, 0, 1, 1], [], []>} : vector<8x8xf32>, vector<8x24xf32>, vector<8x24xf32> -> vector<8x24xf32>
    %c0_127 = arith.constant 0 : index
    %c0_128 = arith.constant 0 : index
    %c72 = arith.constant 72 : index
    %314 = vector.load %arg16[%c0_127, %c0_128, %c72] : memref<1x8x192xf32, #tpu.memory_space<vmem>>, vector<1x8x24xf32>
    %315 = vector.shape_cast %314 : vector<1x8x24xf32> to vector<8x24xf32>
    %316 = vector.shape_cast %313 : vector<8x24xf32> to vector<1x8x24xf32>
    tpu.vector_store %arg16[%c0_127, %c0_128, %c72], %316 {strides = array<i32>} : memref<1x8x192xf32, #tpu.memory_space<vmem>>, vector<1x8x24xf32>,
    %317 = vector.extract_strided_slice %1 {offsets = [0, 128], sizes = [8, 32], strides = [1, 1]} : vector<8x256xf32> to vector<8x32xf32>
    %318 = vector.extract_strided_slice %3 {offsets = [0, 128], sizes = [8, 32], strides = [1, 1]} : vector<8x256xf32> to vector<8x32xf32>
    %cst_129 = arith.constant dense<0.000000e+00> : vector<8x8xf32>
    %319 = tpu.matmul %317, %318, %cst_129 {dimension_numbers = #tpu.dot_dimension_numbers<[1], [1], [0], [0], [0, 0, 1, 0], [], []>} : vector<8x32xf32>, vector<8x32xf32>, vector<8x8xf32> -> vector<8x8xf32>
    %cst_130 = arith.constant 0.176776692 : f32
    %320 = vector.broadcast %cst_130 : f32 to vector<8x8xf32>
    %321 = arith.mulf %319, %320 : vector<8x8xf32>
    %322 = vector.extract_strided_slice %7 {offsets = [0, 96], sizes = [8, 24], strides = [1, 1]} : vector<8x192xf32> to vector<8x24xf32>
    %323 = vector.extract_strided_slice %9 {offsets = [0, 96], sizes = [8, 24], strides = [1, 1]} : vector<8x192xf32> to vector<8x24xf32>
    %cst_131 = arith.constant dense<0.000000e+00> : vector<8x8xf32>
    %324 = tpu.matmul %322, %323, %cst_131 {dimension_numbers = #tpu.dot_dimension_numbers<[1], [1], [0], [0], [0, 0, 1, 0], [], []>} : vector<8x24xf32>, vector<8x24xf32>, vector<8x8xf32> -> vector<8x8xf32>
    %325 = arith.mulf %322, %322 : vector<8x24xf32>
    %cst_132 = arith.constant dense<0.000000e+00> : vector<8xf32>
    %326 = vector.multi_reduction <add>, %325, %cst_132 [1] : vector<8x24xf32> to vector<8xf32>
    %327 = vector.shape_cast %326 : vector<8xf32> to vector<8x1xf32>
    %328 = arith.mulf %323, %323 : vector<8x24xf32>
    %cst_133 = arith.constant dense<0.000000e+00> : vector<1x8xf32>
    %329 = tpu.matmul %28, %328, %cst_133 {dimension_numbers = #tpu.dot_dimension_numbers<[1], [1], [0], [0], [0, 0, 1, 0], [], []>} : vector<1x24xf32>, vector<8x24xf32>, vector<1x8xf32> -> vector<1x8xf32>
    %330 = vector.broadcast %327 : vector<8x1xf32> to vector<8x8xf32>
    %331 = vector.broadcast %329 : vector<1x8xf32> to vector<8x8xf32>
    %332 = arith.addf %330, %331 : vector<8x8xf32>
    %cst_134 = arith.constant 2.000000e+00 : f32
    %333 = vector.broadcast %cst_134 : f32 to vector<8x8xf32>
    %334 = arith.mulf %333, %324 : vector<8x8xf32>
    %335 = arith.subf %332, %334 : vector<8x8xf32>
    %336 = vector.extract_strided_slice %13 {offsets = [4, 0, 0], sizes = [1, 8, 8], strides = [1, 1, 1]} : vector<8x8x8xf32> to vector<1x8x8xf32>
    %337 = vector.shape_cast %336 : vector<1x8x8xf32> to vector<8x8xf32>
    %338 = arith.addf %321, %337 : vector<8x8xf32>
    %c4 = arith.constant 4 : index
    %339 = memref.load %arg3[%c4] : memref<8xf32, #tpu.memory_space<smem>>
    %340 = vector.broadcast %339 : f32 to vector<8x8xf32>
    %341 = arith.mulf %335, %340 : vector<8x8xf32>
    %342 = arith.addf %338, %341 : vector<8x8xf32>
    %cst_135 = arith.constant 0.577350259 : f32
    %343 = vector.broadcast %cst_135 : f32 to vector<8x8xf32>
    %344 = arith.mulf %342, %343 : vector<8x8xf32>
    %345 = arith.subf %344, %24 : vector<8x8xf32>
    %cst_136 = arith.constant dense<0xFF800000> : vector<8xf32>
    %346 = vector.multi_reduction <maximumf>, %345, %cst_136 [1] : vector<8x8xf32> to vector<8xf32>
    %347 = vector.shape_cast %346 : vector<8xf32> to vector<8x1xf32>
    %348 = vector.broadcast %347 : vector<8x1xf32> to vector<8x8xf32>
    %349 = arith.subf %345, %348 : vector<8x8xf32>
    %350 = math.exp %349 : vector<8x8xf32>
    %351 = arith.mulf %350, %17 : vector<8x8xf32>
    %352 = arith.mulf %350, %19 : vector<8x8xf32>
    %cst_137 = arith.constant dense<0.000000e+00> : vector<8xf32>
    %353 = vector.multi_reduction <add>, %351, %cst_137 [1] : vector<8x8xf32> to vector<8xf32>
    %354 = vector.shape_cast %353 : vector<8xf32> to vector<8x1xf32>
    %cst_138 = arith.constant dense<0.000000e+00> : vector<8xf32>
    %355 = vector.multi_reduction <add>, %352, %cst_138 [1] : vector<8x8xf32> to vector<8xf32>
    %356 = vector.shape_cast %355 : vector<8xf32> to vector<8x1xf32>
    %cst_139 = arith.constant 0.000000e+00 : f32
    %357 = vector.broadcast %cst_139 : f32 to vector<8x1xf32>
    %358 = arith.cmpf ogt, %354, %357 : vector<8x1xf32>
    %cst_140 = arith.constant 1.000000e+00 : f32
    %359 = vector.broadcast %cst_140 : f32 to vector<8x1xf32>
    %360 = arith.select %358, %354, %359 : vector<8x1xi1>, vector<8x1xf32>
    %361 = tpu.reciprocal %360 {approx = true} : vector<8x1xf32> -> vector<8x1xf32>
    %cst_141 = arith.constant 0.000000e+00 : f32
    %362 = vector.broadcast %cst_141 : f32 to vector<8x1xf32>
    %363 = arith.cmpf ogt, %356, %362 : vector<8x1xf32>
    %cst_142 = arith.constant 1.000000e+00 : f32
    %364 = vector.broadcast %cst_142 : f32 to vector<8x1xf32>
    %365 = arith.select %363, %356, %364 : vector<8x1xi1>, vector<8x1xf32>
    %366 = tpu.reciprocal %365 {approx = true} : vector<8x1xf32> -> vector<8x1xf32>
    %367 = vector.broadcast %26 : f32 to vector<8x1xf32>
    %368 = arith.mulf %361, %367 : vector<8x1xf32>
    %369 = vector.broadcast %368 : vector<8x1xf32> to vector<8x8xf32>
    %370 = arith.mulf %351, %369 : vector<8x8xf32>
    %371 = vector.broadcast %27 : f32 to vector<8x1xf32>
    %372 = arith.mulf %366, %371 : vector<8x1xf32>
    %373 = vector.broadcast %372 : vector<8x1xf32> to vector<8x8xf32>
    %374 = arith.mulf %352, %373 : vector<8x8xf32>
    %375 = arith.addf %370, %374 : vector<8x8xf32>
    %c0_143 = arith.constant 0 : index
    %c4_144 = arith.constant 4 : index
    %c0_145 = arith.constant 0 : index
    %376 = vector.load %arg17[%c0_143, %c4_144, %c0_145] : memref<8x8x8xf32, #tpu.memory_space<vmem>>, vector<8x1x8xf32>
    %377 = vector.shape_cast %376 : vector<8x1x8xf32> to vector<8x8xf32>
    %378 = vector.shape_cast %375 : vector<8x8xf32> to vector<8x1x8xf32>
    tpu.vector_store %arg17[%c0_143, %c4_144, %c0_145], %378 {strides = array<i32>} : memref<8x8x8xf32, #tpu.memory_space<vmem>>, vector<8x1x8xf32>,
    %379 = vector.extract_strided_slice %5 {offsets = [0, 128], sizes = [8, 32], strides = [1, 1]} : vector<8x256xf32> to vector<8x32xf32>
    %cst_146 = arith.constant dense<0.000000e+00> : vector<8x32xf32>
    %380 = tpu.matmul %375, %379, %cst_146 {dimension_numbers = #tpu.dot_dimension_numbers<[1], [0], [0], [1], [0, 0, 1, 1], [], []>} : vector<8x8xf32>, vector<8x32xf32>, vector<8x32xf32> -> vector<8x32xf32>
    %c0_147 = arith.constant 0 : index
    %c0_148 = arith.constant 0 : index
    %c128 = arith.constant 128 : index
    %381 = vector.load %arg14[%c0_147, %c0_148, %c128] : memref<1x8x256xf32, #tpu.memory_space<vmem>>, vector<1x8x32xf32>
    %382 = vector.shape_cast %381 : vector<1x8x32xf32> to vector<8x32xf32>
    %383 = vector.shape_cast %380 : vector<8x32xf32> to vector<1x8x32xf32>
    tpu.vector_store %arg14[%c0_147, %c0_148, %c128], %383 {strides = array<i32>} : memref<1x8x256xf32, #tpu.memory_space<vmem>>, vector<1x8x32xf32>,
    %384 = vector.extract_strided_slice %11 {offsets = [0, 96], sizes = [8, 24], strides = [1, 1]} : vector<8x192xf32> to vector<8x24xf32>
    %cst_149 = arith.constant dense<0.000000e+00> : vector<8x24xf32>
    %385 = tpu.matmul %375, %384, %cst_149 {dimension_numbers = #tpu.dot_dimension_numbers<[1], [0], [0], [1], [0, 0, 1, 1], [], []>} : vector<8x8xf32>, vector<8x24xf32>, vector<8x24xf32> -> vector<8x24xf32>
    %c0_150 = arith.constant 0 : index
    %c0_151 = arith.constant 0 : index
    %c96_152 = arith.constant 96 : index
    %386 = vector.load %arg16[%c0_150, %c0_151, %c96_152] : memref<1x8x192xf32, #tpu.memory_space<vmem>>, vector<1x8x24xf32>
    %387 = vector.shape_cast %386 : vector<1x8x24xf32> to vector<8x24xf32>
    %388 = vector.shape_cast %385 : vector<8x24xf32> to vector<1x8x24xf32>
    tpu.vector_store %arg16[%c0_150, %c0_151, %c96_152], %388 {strides = array<i32>} : memref<1x8x192xf32, #tpu.memory_space<vmem>>, vector<1x8x24xf32>,
    %389 = vector.extract_strided_slice %1 {offsets = [0, 160], sizes = [8, 32], strides = [1, 1]} : vector<8x256xf32> to vector<8x32xf32>
    %390 = vector.extract_strided_slice %3 {offsets = [0, 160], sizes = [8, 32], strides = [1, 1]} : vector<8x256xf32> to vector<8x32xf32>
    %cst_153 = arith.constant dense<0.000000e+00> : vector<8x8xf32>
    %391 = tpu.matmul %389, %390, %cst_153 {dimension_numbers = #tpu.dot_dimension_numbers<[1], [1], [0], [0], [0, 0, 1, 0], [], []>} : vector<8x32xf32>, vector<8x32xf32>, vector<8x8xf32> -> vector<8x8xf32>
    %cst_154 = arith.constant 0.176776692 : f32
    %392 = vector.broadcast %cst_154 : f32 to vector<8x8xf32>
    %393 = arith.mulf %391, %392 : vector<8x8xf32>
    %394 = vector.extract_strided_slice %7 {offsets = [0, 120], sizes = [8, 24], strides = [1, 1]} : vector<8x192xf32> to vector<8x24xf32>
    %395 = vector.extract_strided_slice %9 {offsets = [0, 120], sizes = [8, 24], strides = [1, 1]} : vector<8x192xf32> to vector<8x24xf32>
    %cst_155 = arith.constant dense<0.000000e+00> : vector<8x8xf32>
    %396 = tpu.matmul %394, %395, %cst_155 {dimension_numbers = #tpu.dot_dimension_numbers<[1], [1], [0], [0], [0, 0, 1, 0], [], []>} : vector<8x24xf32>, vector<8x24xf32>, vector<8x8xf32> -> vector<8x8xf32>
    %397 = arith.mulf %394, %394 : vector<8x24xf32>
    %cst_156 = arith.constant dense<0.000000e+00> : vector<8xf32>
    %398 = vector.multi_reduction <add>, %397, %cst_156 [1] : vector<8x24xf32> to vector<8xf32>
    %399 = vector.shape_cast %398 : vector<8xf32> to vector<8x1xf32>
    %400 = arith.mulf %395, %395 : vector<8x24xf32>
    %cst_157 = arith.constant dense<0.000000e+00> : vector<1x8xf32>
    %401 = tpu.matmul %28, %400, %cst_157 {dimension_numbers = #tpu.dot_dimension_numbers<[1], [1], [0], [0], [0, 0, 1, 0], [], []>} : vector<1x24xf32>, vector<8x24xf32>, vector<1x8xf32> -> vector<1x8xf32>
    %402 = vector.broadcast %399 : vector<8x1xf32> to vector<8x8xf32>
    %403 = vector.broadcast %401 : vector<1x8xf32> to vector<8x8xf32>
    %404 = arith.addf %402, %403 : vector<8x8xf32>
    %cst_158 = arith.constant 2.000000e+00 : f32
    %405 = vector.broadcast %cst_158 : f32 to vector<8x8xf32>
    %406 = arith.mulf %405, %396 : vector<8x8xf32>
    %407 = arith.subf %404, %406 : vector<8x8xf32>
    %408 = vector.extract_strided_slice %13 {offsets = [5, 0, 0], sizes = [1, 8, 8], strides = [1, 1, 1]} : vector<8x8x8xf32> to vector<1x8x8xf32>
    %409 = vector.shape_cast %408 : vector<1x8x8xf32> to vector<8x8xf32>
    %410 = arith.addf %393, %409 : vector<8x8xf32>
    %c5 = arith.constant 5 : index
    %411 = memref.load %arg3[%c5] : memref<8xf32, #tpu.memory_space<smem>>
    %412 = vector.broadcast %411 : f32 to vector<8x8xf32>
    %413 = arith.mulf %407, %412 : vector<8x8xf32>
    %414 = arith.addf %410, %413 : vector<8x8xf32>
    %cst_159 = arith.constant 0.577350259 : f32
    %415 = vector.broadcast %cst_159 : f32 to vector<8x8xf32>
    %416 = arith.mulf %414, %415 : vector<8x8xf32>
    %417 = arith.subf %416, %24 : vector<8x8xf32>
    %cst_160 = arith.constant dense<0xFF800000> : vector<8xf32>
    %418 = vector.multi_reduction <maximumf>, %417, %cst_160 [1] : vector<8x8xf32> to vector<8xf32>
    %419 = vector.shape_cast %418 : vector<8xf32> to vector<8x1xf32>
    %420 = vector.broadcast %419 : vector<8x1xf32> to vector<8x8xf32>
    %421 = arith.subf %417, %420 : vector<8x8xf32>
    %422 = math.exp %421 : vector<8x8xf32>
    %423 = arith.mulf %422, %17 : vector<8x8xf32>
    %424 = arith.mulf %422, %19 : vector<8x8xf32>
    %cst_161 = arith.constant dense<0.000000e+00> : vector<8xf32>
    %425 = vector.multi_reduction <add>, %423, %cst_161 [1] : vector<8x8xf32> to vector<8xf32>
    %426 = vector.shape_cast %425 : vector<8xf32> to vector<8x1xf32>
    %cst_162 = arith.constant dense<0.000000e+00> : vector<8xf32>
    %427 = vector.multi_reduction <add>, %424, %cst_162 [1] : vector<8x8xf32> to vector<8xf32>
    %428 = vector.shape_cast %427 : vector<8xf32> to vector<8x1xf32>
    %cst_163 = arith.constant 0.000000e+00 : f32
    %429 = vector.broadcast %cst_163 : f32 to vector<8x1xf32>
    %430 = arith.cmpf ogt, %426, %429 : vector<8x1xf32>
    %cst_164 = arith.constant 1.000000e+00 : f32
    %431 = vector.broadcast %cst_164 : f32 to vector<8x1xf32>
    %432 = arith.select %430, %426, %431 : vector<8x1xi1>, vector<8x1xf32>
    %433 = tpu.reciprocal %432 {approx = true} : vector<8x1xf32> -> vector<8x1xf32>
    %cst_165 = arith.constant 0.000000e+00 : f32
    %434 = vector.broadcast %cst_165 : f32 to vector<8x1xf32>
    %435 = arith.cmpf ogt, %428, %434 : vector<8x1xf32>
    %cst_166 = arith.constant 1.000000e+00 : f32
    %436 = vector.broadcast %cst_166 : f32 to vector<8x1xf32>
    %437 = arith.select %435, %428, %436 : vector<8x1xi1>, vector<8x1xf32>
    %438 = tpu.reciprocal %437 {approx = true} : vector<8x1xf32> -> vector<8x1xf32>
    %439 = vector.broadcast %26 : f32 to vector<8x1xf32>
    %440 = arith.mulf %433, %439 : vector<8x1xf32>
    %441 = vector.broadcast %440 : vector<8x1xf32> to vector<8x8xf32>
    %442 = arith.mulf %423, %441 : vector<8x8xf32>
    %443 = vector.broadcast %27 : f32 to vector<8x1xf32>
    %444 = arith.mulf %438, %443 : vector<8x1xf32>
    %445 = vector.broadcast %444 : vector<8x1xf32> to vector<8x8xf32>
    %446 = arith.mulf %424, %445 : vector<8x8xf32>
    %447 = arith.addf %442, %446 : vector<8x8xf32>
    %c0_167 = arith.constant 0 : index
    %c5_168 = arith.constant 5 : index
    %c0_169 = arith.constant 0 : index
    %448 = vector.load %arg17[%c0_167, %c5_168, %c0_169] : memref<8x8x8xf32, #tpu.memory_space<vmem>>, vector<8x1x8xf32>
    %449 = vector.shape_cast %448 : vector<8x1x8xf32> to vector<8x8xf32>
    %450 = vector.shape_cast %447 : vector<8x8xf32> to vector<8x1x8xf32>
    tpu.vector_store %arg17[%c0_167, %c5_168, %c0_169], %450 {strides = array<i32>} : memref<8x8x8xf32, #tpu.memory_space<vmem>>, vector<8x1x8xf32>,
    %451 = vector.extract_strided_slice %5 {offsets = [0, 160], sizes = [8, 32], strides = [1, 1]} : vector<8x256xf32> to vector<8x32xf32>
    %cst_170 = arith.constant dense<0.000000e+00> : vector<8x32xf32>
    %452 = tpu.matmul %447, %451, %cst_170 {dimension_numbers = #tpu.dot_dimension_numbers<[1], [0], [0], [1], [0, 0, 1, 1], [], []>} : vector<8x8xf32>, vector<8x32xf32>, vector<8x32xf32> -> vector<8x32xf32>
    %c0_171 = arith.constant 0 : index
    %c0_172 = arith.constant 0 : index
    %c160 = arith.constant 160 : index
    %453 = vector.load %arg14[%c0_171, %c0_172, %c160] : memref<1x8x256xf32, #tpu.memory_space<vmem>>, vector<1x8x32xf32>
    %454 = vector.shape_cast %453 : vector<1x8x32xf32> to vector<8x32xf32>
    %455 = vector.shape_cast %452 : vector<8x32xf32> to vector<1x8x32xf32>
    tpu.vector_store %arg14[%c0_171, %c0_172, %c160], %455 {strides = array<i32>} : memref<1x8x256xf32, #tpu.memory_space<vmem>>, vector<1x8x32xf32>,
    %456 = vector.extract_strided_slice %11 {offsets = [0, 120], sizes = [8, 24], strides = [1, 1]} : vector<8x192xf32> to vector<8x24xf32>
    %cst_173 = arith.constant dense<0.000000e+00> : vector<8x24xf32>
    %457 = tpu.matmul %447, %456, %cst_173 {dimension_numbers = #tpu.dot_dimension_numbers<[1], [0], [0], [1], [0, 0, 1, 1], [], []>} : vector<8x8xf32>, vector<8x24xf32>, vector<8x24xf32> -> vector<8x24xf32>
    %c0_174 = arith.constant 0 : index
    %c0_175 = arith.constant 0 : index
    %c120 = arith.constant 120 : index
    %458 = vector.load %arg16[%c0_174, %c0_175, %c120] : memref<1x8x192xf32, #tpu.memory_space<vmem>>, vector<1x8x24xf32>
    %459 = vector.shape_cast %458 : vector<1x8x24xf32> to vector<8x24xf32>
    %460 = vector.shape_cast %457 : vector<8x24xf32> to vector<1x8x24xf32>
    tpu.vector_store %arg16[%c0_174, %c0_175, %c120], %460 {strides = array<i32>} : memref<1x8x192xf32, #tpu.memory_space<vmem>>, vector<1x8x24xf32>,
    %461 = vector.extract_strided_slice %1 {offsets = [0, 192], sizes = [8, 32], strides = [1, 1]} : vector<8x256xf32> to vector<8x32xf32>
    %462 = vector.extract_strided_slice %3 {offsets = [0, 192], sizes = [8, 32], strides = [1, 1]} : vector<8x256xf32> to vector<8x32xf32>
    %cst_176 = arith.constant dense<0.000000e+00> : vector<8x8xf32>
    %463 = tpu.matmul %461, %462, %cst_176 {dimension_numbers = #tpu.dot_dimension_numbers<[1], [1], [0], [0], [0, 0, 1, 0], [], []>} : vector<8x32xf32>, vector<8x32xf32>, vector<8x8xf32> -> vector<8x8xf32>
    %cst_177 = arith.constant 0.176776692 : f32
    %464 = vector.broadcast %cst_177 : f32 to vector<8x8xf32>
    %465 = arith.mulf %463, %464 : vector<8x8xf32>
    %466 = vector.extract_strided_slice %7 {offsets = [0, 144], sizes = [8, 24], strides = [1, 1]} : vector<8x192xf32> to vector<8x24xf32>
    %467 = vector.extract_strided_slice %9 {offsets = [0, 144], sizes = [8, 24], strides = [1, 1]} : vector<8x192xf32> to vector<8x24xf32>
    %cst_178 = arith.constant dense<0.000000e+00> : vector<8x8xf32>
    %468 = tpu.matmul %466, %467, %cst_178 {dimension_numbers = #tpu.dot_dimension_numbers<[1], [1], [0], [0], [0, 0, 1, 0], [], []>} : vector<8x24xf32>, vector<8x24xf32>, vector<8x8xf32> -> vector<8x8xf32>
    %469 = arith.mulf %466, %466 : vector<8x24xf32>
    %cst_179 = arith.constant dense<0.000000e+00> : vector<8xf32>
    %470 = vector.multi_reduction <add>, %469, %cst_179 [1] : vector<8x24xf32> to vector<8xf32>
    %471 = vector.shape_cast %470 : vector<8xf32> to vector<8x1xf32>
    %472 = arith.mulf %467, %467 : vector<8x24xf32>
    %cst_180 = arith.constant dense<0.000000e+00> : vector<1x8xf32>
    %473 = tpu.matmul %28, %472, %cst_180 {dimension_numbers = #tpu.dot_dimension_numbers<[1], [1], [0], [0], [0, 0, 1, 0], [], []>} : vector<1x24xf32>, vector<8x24xf32>, vector<1x8xf32> -> vector<1x8xf32>
    %474 = vector.broadcast %471 : vector<8x1xf32> to vector<8x8xf32>
    %475 = vector.broadcast %473 : vector<1x8xf32> to vector<8x8xf32>
    %476 = arith.addf %474, %475 : vector<8x8xf32>
    %cst_181 = arith.constant 2.000000e+00 : f32
    %477 = vector.broadcast %cst_181 : f32 to vector<8x8xf32>
    %478 = arith.mulf %477, %468 : vector<8x8xf32>
    %479 = arith.subf %476, %478 : vector<8x8xf32>
    %480 = vector.extract_strided_slice %13 {offsets = [6, 0, 0], sizes = [1, 8, 8], strides = [1, 1, 1]} : vector<8x8x8xf32> to vector<1x8x8xf32>
    %481 = vector.shape_cast %480 : vector<1x8x8xf32> to vector<8x8xf32>
    %482 = arith.addf %465, %481 : vector<8x8xf32>
    %c6 = arith.constant 6 : index
    %483 = memref.load %arg3[%c6] : memref<8xf32, #tpu.memory_space<smem>>
    %484 = vector.broadcast %483 : f32 to vector<8x8xf32>
    %485 = arith.mulf %479, %484 : vector<8x8xf32>
    %486 = arith.addf %482, %485 : vector<8x8xf32>
    %cst_182 = arith.constant 0.577350259 : f32
    %487 = vector.broadcast %cst_182 : f32 to vector<8x8xf32>
    %488 = arith.mulf %486, %487 : vector<8x8xf32>
    %489 = arith.subf %488, %24 : vector<8x8xf32>
    %cst_183 = arith.constant dense<0xFF800000> : vector<8xf32>
    %490 = vector.multi_reduction <maximumf>, %489, %cst_183 [1] : vector<8x8xf32> to vector<8xf32>
    %491 = vector.shape_cast %490 : vector<8xf32> to vector<8x1xf32>
    %492 = vector.broadcast %491 : vector<8x1xf32> to vector<8x8xf32>
    %493 = arith.subf %489, %492 : vector<8x8xf32>
    %494 = math.exp %493 : vector<8x8xf32>
    %495 = arith.mulf %494, %17 : vector<8x8xf32>
    %496 = arith.mulf %494, %19 : vector<8x8xf32>
    %cst_184 = arith.constant dense<0.000000e+00> : vector<8xf32>
    %497 = vector.multi_reduction <add>, %495, %cst_184 [1] : vector<8x8xf32> to vector<8xf32>
    %498 = vector.shape_cast %497 : vector<8xf32> to vector<8x1xf32>
    %cst_185 = arith.constant dense<0.000000e+00> : vector<8xf32>
    %499 = vector.multi_reduction <add>, %496, %cst_185 [1] : vector<8x8xf32> to vector<8xf32>
    %500 = vector.shape_cast %499 : vector<8xf32> to vector<8x1xf32>
    %cst_186 = arith.constant 0.000000e+00 : f32
    %501 = vector.broadcast %cst_186 : f32 to vector<8x1xf32>
    %502 = arith.cmpf ogt, %498, %501 : vector<8x1xf32>
    %cst_187 = arith.constant 1.000000e+00 : f32
    %503 = vector.broadcast %cst_187 : f32 to vector<8x1xf32>
    %504 = arith.select %502, %498, %503 : vector<8x1xi1>, vector<8x1xf32>
    %505 = tpu.reciprocal %504 {approx = true} : vector<8x1xf32> -> vector<8x1xf32>
    %cst_188 = arith.constant 0.000000e+00 : f32
    %506 = vector.broadcast %cst_188 : f32 to vector<8x1xf32>
    %507 = arith.cmpf ogt, %500, %506 : vector<8x1xf32>
    %cst_189 = arith.constant 1.000000e+00 : f32
    %508 = vector.broadcast %cst_189 : f32 to vector<8x1xf32>
    %509 = arith.select %507, %500, %508 : vector<8x1xi1>, vector<8x1xf32>
    %510 = tpu.reciprocal %509 {approx = true} : vector<8x1xf32> -> vector<8x1xf32>
    %511 = vector.broadcast %26 : f32 to vector<8x1xf32>
    %512 = arith.mulf %505, %511 : vector<8x1xf32>
    %513 = vector.broadcast %512 : vector<8x1xf32> to vector<8x8xf32>
    %514 = arith.mulf %495, %513 : vector<8x8xf32>
    %515 = vector.broadcast %27 : f32 to vector<8x1xf32>
    %516 = arith.mulf %510, %515 : vector<8x1xf32>
    %517 = vector.broadcast %516 : vector<8x1xf32> to vector<8x8xf32>
    %518 = arith.mulf %496, %517 : vector<8x8xf32>
    %519 = arith.addf %514, %518 : vector<8x8xf32>
    %c0_190 = arith.constant 0 : index
    %c6_191 = arith.constant 6 : index
    %c0_192 = arith.constant 0 : index
    %520 = vector.load %arg17[%c0_190, %c6_191, %c0_192] : memref<8x8x8xf32, #tpu.memory_space<vmem>>, vector<8x1x8xf32>
    %521 = vector.shape_cast %520 : vector<8x1x8xf32> to vector<8x8xf32>
    %522 = vector.shape_cast %519 : vector<8x8xf32> to vector<8x1x8xf32>
    tpu.vector_store %arg17[%c0_190, %c6_191, %c0_192], %522 {strides = array<i32>} : memref<8x8x8xf32, #tpu.memory_space<vmem>>, vector<8x1x8xf32>,
    %523 = vector.extract_strided_slice %5 {offsets = [0, 192], sizes = [8, 32], strides = [1, 1]} : vector<8x256xf32> to vector<8x32xf32>
    %cst_193 = arith.constant dense<0.000000e+00> : vector<8x32xf32>
    %524 = tpu.matmul %519, %523, %cst_193 {dimension_numbers = #tpu.dot_dimension_numbers<[1], [0], [0], [1], [0, 0, 1, 1], [], []>} : vector<8x8xf32>, vector<8x32xf32>, vector<8x32xf32> -> vector<8x32xf32>
    %c0_194 = arith.constant 0 : index
    %c0_195 = arith.constant 0 : index
    %c192 = arith.constant 192 : index
    %525 = vector.load %arg14[%c0_194, %c0_195, %c192] : memref<1x8x256xf32, #tpu.memory_space<vmem>>, vector<1x8x32xf32>
    %526 = vector.shape_cast %525 : vector<1x8x32xf32> to vector<8x32xf32>
    %527 = vector.shape_cast %524 : vector<8x32xf32> to vector<1x8x32xf32>
    tpu.vector_store %arg14[%c0_194, %c0_195, %c192], %527 {strides = array<i32>} : memref<1x8x256xf32, #tpu.memory_space<vmem>>, vector<1x8x32xf32>,
    %528 = vector.extract_strided_slice %11 {offsets = [0, 144], sizes = [8, 24], strides = [1, 1]} : vector<8x192xf32> to vector<8x24xf32>
    %cst_196 = arith.constant dense<0.000000e+00> : vector<8x24xf32>
    %529 = tpu.matmul %519, %528, %cst_196 {dimension_numbers = #tpu.dot_dimension_numbers<[1], [0], [0], [1], [0, 0, 1, 1], [], []>} : vector<8x8xf32>, vector<8x24xf32>, vector<8x24xf32> -> vector<8x24xf32>
    %c0_197 = arith.constant 0 : index
    %c0_198 = arith.constant 0 : index
    %c144 = arith.constant 144 : index
    %530 = vector.load %arg16[%c0_197, %c0_198, %c144] : memref<1x8x192xf32, #tpu.memory_space<vmem>>, vector<1x8x24xf32>
    %531 = vector.shape_cast %530 : vector<1x8x24xf32> to vector<8x24xf32>
    %532 = vector.shape_cast %529 : vector<8x24xf32> to vector<1x8x24xf32>
    tpu.vector_store %arg16[%c0_197, %c0_198, %c144], %532 {strides = array<i32>} : memref<1x8x192xf32, #tpu.memory_space<vmem>>, vector<1x8x24xf32>,
    %533 = vector.extract_strided_slice %1 {offsets = [0, 224], sizes = [8, 32], strides = [1, 1]} : vector<8x256xf32> to vector<8x32xf32>
    %534 = vector.extract_strided_slice %3 {offsets = [0, 224], sizes = [8, 32], strides = [1, 1]} : vector<8x256xf32> to vector<8x32xf32>
    %cst_199 = arith.constant dense<0.000000e+00> : vector<8x8xf32>
    %535 = tpu.matmul %533, %534, %cst_199 {dimension_numbers = #tpu.dot_dimension_numbers<[1], [1], [0], [0], [0, 0, 1, 0], [], []>} : vector<8x32xf32>, vector<8x32xf32>, vector<8x8xf32> -> vector<8x8xf32>
    %cst_200 = arith.constant 0.176776692 : f32
    %536 = vector.broadcast %cst_200 : f32 to vector<8x8xf32>
    %537 = arith.mulf %535, %536 : vector<8x8xf32>
    %538 = vector.extract_strided_slice %7 {offsets = [0, 168], sizes = [8, 24], strides = [1, 1]} : vector<8x192xf32> to vector<8x24xf32>
    %539 = vector.extract_strided_slice %9 {offsets = [0, 168], sizes = [8, 24], strides = [1, 1]} : vector<8x192xf32> to vector<8x24xf32>
    %cst_201 = arith.constant dense<0.000000e+00> : vector<8x8xf32>
    %540 = tpu.matmul %538, %539, %cst_201 {dimension_numbers = #tpu.dot_dimension_numbers<[1], [1], [0], [0], [0, 0, 1, 0], [], []>} : vector<8x24xf32>, vector<8x24xf32>, vector<8x8xf32> -> vector<8x8xf32>
    %541 = arith.mulf %538, %538 : vector<8x24xf32>
    %cst_202 = arith.constant dense<0.000000e+00> : vector<8xf32>
    %542 = vector.multi_reduction <add>, %541, %cst_202 [1] : vector<8x24xf32> to vector<8xf32>
    %543 = vector.shape_cast %542 : vector<8xf32> to vector<8x1xf32>
    %544 = arith.mulf %539, %539 : vector<8x24xf32>
    %cst_203 = arith.constant dense<0.000000e+00> : vector<1x8xf32>
    %545 = tpu.matmul %28, %544, %cst_203 {dimension_numbers = #tpu.dot_dimension_numbers<[1], [1], [0], [0], [0, 0, 1, 0], [], []>} : vector<1x24xf32>, vector<8x24xf32>, vector<1x8xf32> -> vector<1x8xf32>
    %546 = vector.broadcast %543 : vector<8x1xf32> to vector<8x8xf32>
    %547 = vector.broadcast %545 : vector<1x8xf32> to vector<8x8xf32>
    %548 = arith.addf %546, %547 : vector<8x8xf32>
    %cst_204 = arith.constant 2.000000e+00 : f32
    %549 = vector.broadcast %cst_204 : f32 to vector<8x8xf32>
    %550 = arith.mulf %549, %540 : vector<8x8xf32>
    %551 = arith.subf %548, %550 : vector<8x8xf32>
    %552 = vector.extract_strided_slice %13 {offsets = [7, 0, 0], sizes = [1, 8, 8], strides = [1, 1, 1]} : vector<8x8x8xf32> to vector<1x8x8xf32>
    %553 = vector.shape_cast %552 : vector<1x8x8xf32> to vector<8x8xf32>
    %554 = arith.addf %537, %553 : vector<8x8xf32>
    %c7 = arith.constant 7 : index
    %555 = memref.load %arg3[%c7] : memref<8xf32, #tpu.memory_space<smem>>
    %556 = vector.broadcast %555 : f32 to vector<8x8xf32>
    %557 = arith.mulf %551, %556 : vector<8x8xf32>
    %558 = arith.addf %554, %557 : vector<8x8xf32>
    %cst_205 = arith.constant 0.577350259 : f32
    %559 = vector.broadcast %cst_205 : f32 to vector<8x8xf32>
    %560 = arith.mulf %558, %559 : vector<8x8xf32>
    %561 = arith.subf %560, %24 : vector<8x8xf32>
    %cst_206 = arith.constant dense<0xFF800000> : vector<8xf32>
    %562 = vector.multi_reduction <maximumf>, %561, %cst_206 [1] : vector<8x8xf32> to vector<8xf32>
    %563 = vector.shape_cast %562 : vector<8xf32> to vector<8x1xf32>
    %564 = vector.broadcast %563 : vector<8x1xf32> to vector<8x8xf32>
    %565 = arith.subf %561, %564 : vector<8x8xf32>
    %566 = math.exp %565 : vector<8x8xf32>
    %567 = arith.mulf %566, %17 : vector<8x8xf32>
    %568 = arith.mulf %566, %19 : vector<8x8xf32>
    %cst_207 = arith.constant dense<0.000000e+00> : vector<8xf32>
    %569 = vector.multi_reduction <add>, %567, %cst_207 [1] : vector<8x8xf32> to vector<8xf32>
    %570 = vector.shape_cast %569 : vector<8xf32> to vector<8x1xf32>
    %cst_208 = arith.constant dense<0.000000e+00> : vector<8xf32>
    %571 = vector.multi_reduction <add>, %568, %cst_208 [1] : vector<8x8xf32> to vector<8xf32>
    %572 = vector.shape_cast %571 : vector<8xf32> to vector<8x1xf32>
    %cst_209 = arith.constant 0.000000e+00 : f32
    %573 = vector.broadcast %cst_209 : f32 to vector<8x1xf32>
    %574 = arith.cmpf ogt, %570, %573 : vector<8x1xf32>
    %cst_210 = arith.constant 1.000000e+00 : f32
    %575 = vector.broadcast %cst_210 : f32 to vector<8x1xf32>
    %576 = arith.select %574, %570, %575 : vector<8x1xi1>, vector<8x1xf32>
    %577 = tpu.reciprocal %576 {approx = true} : vector<8x1xf32> -> vector<8x1xf32>
    %cst_211 = arith.constant 0.000000e+00 : f32
    %578 = vector.broadcast %cst_211 : f32 to vector<8x1xf32>
    %579 = arith.cmpf ogt, %572, %578 : vector<8x1xf32>
    %cst_212 = arith.constant 1.000000e+00 : f32
    %580 = vector.broadcast %cst_212 : f32 to vector<8x1xf32>
    %581 = arith.select %579, %572, %580 : vector<8x1xi1>, vector<8x1xf32>
    %582 = tpu.reciprocal %581 {approx = true} : vector<8x1xf32> -> vector<8x1xf32>
    %583 = vector.broadcast %26 : f32 to vector<8x1xf32>
    %584 = arith.mulf %577, %583 : vector<8x1xf32>
    %585 = vector.broadcast %584 : vector<8x1xf32> to vector<8x8xf32>
    %586 = arith.mulf %567, %585 : vector<8x8xf32>
    %587 = vector.broadcast %27 : f32 to vector<8x1xf32>
    %588 = arith.mulf %582, %587 : vector<8x1xf32>
    %589 = vector.broadcast %588 : vector<8x1xf32> to vector<8x8xf32>
    %590 = arith.mulf %568, %589 : vector<8x8xf32>
    %591 = arith.addf %586, %590 : vector<8x8xf32>
    %c0_213 = arith.constant 0 : index
    %c7_214 = arith.constant 7 : index
    %c0_215 = arith.constant 0 : index
    %592 = vector.load %arg17[%c0_213, %c7_214, %c0_215] : memref<8x8x8xf32, #tpu.memory_space<vmem>>, vector<8x1x8xf32>
    %593 = vector.shape_cast %592 : vector<8x1x8xf32> to vector<8x8xf32>
    %594 = vector.shape_cast %591 : vector<8x8xf32> to vector<8x1x8xf32>
    tpu.vector_store %arg17[%c0_213, %c7_214, %c0_215], %594 {strides = array<i32>} : memref<8x8x8xf32, #tpu.memory_space<vmem>>, vector<8x1x8xf32>,
    %595 = vector.extract_strided_slice %5 {offsets = [0, 224], sizes = [8, 32], strides = [1, 1]} : vector<8x256xf32> to vector<8x32xf32>
    %cst_216 = arith.constant dense<0.000000e+00> : vector<8x32xf32>
    %596 = tpu.matmul %591, %595, %cst_216 {dimension_numbers = #tpu.dot_dimension_numbers<[1], [0], [0], [1], [0, 0, 1, 1], [], []>} : vector<8x8xf32>, vector<8x32xf32>, vector<8x32xf32> -> vector<8x32xf32>
    %c0_217 = arith.constant 0 : index
    %c0_218 = arith.constant 0 : index
    %c224 = arith.constant 224 : index
    %597 = vector.load %arg14[%c0_217, %c0_218, %c224] : memref<1x8x256xf32, #tpu.memory_space<vmem>>, vector<1x8x32xf32>
    %598 = vector.shape_cast %597 : vector<1x8x32xf32> to vector<8x32xf32>
    %599 = vector.shape_cast %596 : vector<8x32xf32> to vector<1x8x32xf32>
    tpu.vector_store %arg14[%c0_217, %c0_218, %c224], %599 {strides = array<i32>} : memref<1x8x256xf32, #tpu.memory_space<vmem>>, vector<1x8x32xf32>,
    %600 = vector.extract_strided_slice %11 {offsets = [0, 168], sizes = [8, 24], strides = [1, 1]} : vector<8x192xf32> to vector<8x24xf32>
    %cst_219 = arith.constant dense<0.000000e+00> : vector<8x24xf32>
    %601 = tpu.matmul %591, %600, %cst_219 {dimension_numbers = #tpu.dot_dimension_numbers<[1], [0], [0], [1], [0, 0, 1, 1], [], []>} : vector<8x8xf32>, vector<8x24xf32>, vector<8x24xf32> -> vector<8x24xf32>
    %c0_220 = arith.constant 0 : index
    %c0_221 = arith.constant 0 : index
    %c168 = arith.constant 168 : index
    %602 = vector.load %arg16[%c0_220, %c0_221, %c168] : memref<1x8x192xf32, #tpu.memory_space<vmem>>, vector<1x8x24xf32>
    %603 = vector.shape_cast %602 : vector<1x8x24xf32> to vector<8x24xf32>
    %604 = vector.shape_cast %601 : vector<8x24xf32> to vector<1x8x24xf32>
    tpu.vector_store %arg16[%c0_220, %c0_221, %c168], %604 {strides = array<i32>} : memref<1x8x192xf32, #tpu.memory_space<vmem>>, vector<1x8x24xf32>,
    %c0_222 = arith.constant 0 : index
    %c0_223 = arith.constant 0 : index
    %c0_224 = arith.constant 0 : index
    %605 = vector.load %arg17[%c0_222, %c0_223, %c0_224] : memref<8x8x8xf32, #tpu.memory_space<vmem>>, vector<8x8x8xf32>
    %cst_225 = arith.constant dense<0.000000e+00> : vector<8x8x16xf32>
    %606 = tpu.matmul %605, %15, %cst_225 {dimension_numbers = #tpu.dot_dimension_numbers<[2], [1], [1], [2], [0, 0, 0, 1, 1, 2], [0], [0]>} : vector<8x8x8xf32>, vector<8x8x16xf32>, vector<8x8x16xf32> -> vector<8x8x16xf32>
    %607 = vector.extract_strided_slice %606 {offsets = [0, 0, 0], sizes = [8, 1, 16], strides = [1, 1, 1]} : vector<8x8x16xf32> to vector<8x1x16xf32>
    %608 = vector.shape_cast %607 : vector<8x1x16xf32> to vector<8x16xf32>
    %c0_226 = arith.constant 0 : index
    %c0_227 = arith.constant 0 : index
    %c0_228 = arith.constant 0 : index
    %609 = vector.load %arg15[%c0_226, %c0_227, %c0_228] : memref<1x8x128xf32, #tpu.memory_space<vmem>>, vector<1x8x16xf32>
    %610 = vector.shape_cast %609 : vector<1x8x16xf32> to vector<8x16xf32>
    %611 = vector.shape_cast %608 : vector<8x16xf32> to vector<1x8x16xf32>
    tpu.vector_store %arg15[%c0_226, %c0_227, %c0_228], %611 {strides = array<i32>} : memref<1x8x128xf32, #tpu.memory_space<vmem>>, vector<1x8x16xf32>,
    %612 = vector.extract_strided_slice %606 {offsets = [0, 1, 0], sizes = [8, 1, 16], strides = [1, 1, 1]} : vector<8x8x16xf32> to vector<8x1x16xf32>
    %613 = vector.shape_cast %612 : vector<8x1x16xf32> to vector<8x16xf32>
    %c0_229 = arith.constant 0 : index
    %c0_230 = arith.constant 0 : index
    %c16 = arith.constant 16 : index
    %614 = vector.load %arg15[%c0_229, %c0_230, %c16] : memref<1x8x128xf32, #tpu.memory_space<vmem>>, vector<1x8x16xf32>
    %615 = vector.shape_cast %614 : vector<1x8x16xf32> to vector<8x16xf32>
    %616 = vector.shape_cast %613 : vector<8x16xf32> to vector<1x8x16xf32>
    tpu.vector_store %arg15[%c0_229, %c0_230, %c16], %616 {strides = array<i32>} : memref<1x8x128xf32, #tpu.memory_space<vmem>>, vector<1x8x16xf32>,
    %617 = vector.extract_strided_slice %606 {offsets = [0, 2, 0], sizes = [8, 1, 16], strides = [1, 1, 1]} : vector<8x8x16xf32> to vector<8x1x16xf32>
    %618 = vector.shape_cast %617 : vector<8x1x16xf32> to vector<8x16xf32>
    %c0_231 = arith.constant 0 : index
    %c0_232 = arith.constant 0 : index
    %c32_233 = arith.constant 32 : index
    %619 = vector.load %arg15[%c0_231, %c0_232, %c32_233] : memref<1x8x128xf32, #tpu.memory_space<vmem>>, vector<1x8x16xf32>
    %620 = vector.shape_cast %619 : vector<1x8x16xf32> to vector<8x16xf32>
    %621 = vector.shape_cast %618 : vector<8x16xf32> to vector<1x8x16xf32>
    tpu.vector_store %arg15[%c0_231, %c0_232, %c32_233], %621 {strides = array<i32>} : memref<1x8x128xf32, #tpu.memory_space<vmem>>, vector<1x8x16xf32>,
    %622 = vector.extract_strided_slice %606 {offsets = [0, 3, 0], sizes = [8, 1, 16], strides = [1, 1, 1]} : vector<8x8x16xf32> to vector<8x1x16xf32>
    %623 = vector.shape_cast %622 : vector<8x1x16xf32> to vector<8x16xf32>
    %c0_234 = arith.constant 0 : index
    %c0_235 = arith.constant 0 : index
    %c48_236 = arith.constant 48 : index
    %624 = vector.load %arg15[%c0_234, %c0_235, %c48_236] : memref<1x8x128xf32, #tpu.memory_space<vmem>>, vector<1x8x16xf32>
    %625 = vector.shape_cast %624 : vector<1x8x16xf32> to vector<8x16xf32>
    %626 = vector.shape_cast %623 : vector<8x16xf32> to vector<1x8x16xf32>
    tpu.vector_store %arg15[%c0_234, %c0_235, %c48_236], %626 {strides = array<i32>} : memref<1x8x128xf32, #tpu.memory_space<vmem>>, vector<1x8x16xf32>,
    %627 = vector.extract_strided_slice %606 {offsets = [0, 4, 0], sizes = [8, 1, 16], strides = [1, 1, 1]} : vector<8x8x16xf32> to vector<8x1x16xf32>
    %628 = vector.shape_cast %627 : vector<8x1x16xf32> to vector<8x16xf32>
    %c0_237 = arith.constant 0 : index
    %c0_238 = arith.constant 0 : index
    %c64_239 = arith.constant 64 : index
    %629 = vector.load %arg15[%c0_237, %c0_238, %c64_239] : memref<1x8x128xf32, #tpu.memory_space<vmem>>, vector<1x8x16xf32>
    %630 = vector.shape_cast %629 : vector<1x8x16xf32> to vector<8x16xf32>
    %631 = vector.shape_cast %628 : vector<8x16xf32> to vector<1x8x16xf32>
    tpu.vector_store %arg15[%c0_237, %c0_238, %c64_239], %631 {strides = array<i32>} : memref<1x8x128xf32, #tpu.memory_space<vmem>>, vector<1x8x16xf32>,
    %632 = vector.extract_strided_slice %606 {offsets = [0, 5, 0], sizes = [8, 1, 16], strides = [1, 1, 1]} : vector<8x8x16xf32> to vector<8x1x16xf32>
    %633 = vector.shape_cast %632 : vector<8x1x16xf32> to vector<8x16xf32>
    %c0_240 = arith.constant 0 : index
    %c0_241 = arith.constant 0 : index
    %c80 = arith.constant 80 : index
    %634 = vector.load %arg15[%c0_240, %c0_241, %c80] : memref<1x8x128xf32, #tpu.memory_space<vmem>>, vector<1x8x16xf32>
    %635 = vector.shape_cast %634 : vector<1x8x16xf32> to vector<8x16xf32>
    %636 = vector.shape_cast %633 : vector<8x16xf32> to vector<1x8x16xf32>
    tpu.vector_store %arg15[%c0_240, %c0_241, %c80], %636 {strides = array<i32>} : memref<1x8x128xf32, #tpu.memory_space<vmem>>, vector<1x8x16xf32>,
    %637 = vector.extract_strided_slice %606 {offsets = [0, 6, 0], sizes = [8, 1, 16], strides = [1, 1, 1]} : vector<8x8x16xf32> to vector<8x1x16xf32>
    %638 = vector.shape_cast %637 : vector<8x1x16xf32> to vector<8x16xf32>
    %c0_242 = arith.constant 0 : index
    %c0_243 = arith.constant 0 : index
    %c96_244 = arith.constant 96 : index
    %639 = vector.load %arg15[%c0_242, %c0_243, %c96_244] : memref<1x8x128xf32, #tpu.memory_space<vmem>>, vector<1x8x16xf32>
    %640 = vector.shape_cast %639 : vector<1x8x16xf32> to vector<8x16xf32>
    %641 = vector.shape_cast %638 : vector<8x16xf32> to vector<1x8x16xf32>
    tpu.vector_store %arg15[%c0_242, %c0_243, %c96_244], %641 {strides = array<i32>} : memref<1x8x128xf32, #tpu.memory_space<vmem>>, vector<1x8x16xf32>,
    %642 = vector.extract_strided_slice %606 {offsets = [0, 7, 0], sizes = [8, 1, 16], strides = [1, 1, 1]} : vector<8x8x16xf32> to vector<8x1x16xf32>
    %643 = vector.shape_cast %642 : vector<8x1x16xf32> to vector<8x16xf32>
    %c0_245 = arith.constant 0 : index
    %c0_246 = arith.constant 0 : index
    %c112 = arith.constant 112 : index
    %644 = vector.load %arg15[%c0_245, %c0_246, %c112] : memref<1x8x128xf32, #tpu.memory_space<vmem>>, vector<1x8x16xf32>
    %645 = vector.shape_cast %644 : vector<1x8x16xf32> to vector<8x16xf32>
    %646 = vector.shape_cast %643 : vector<8x16xf32> to vector<1x8x16xf32>
    tpu.vector_store %arg15[%c0_245, %c0_246, %c112], %646 {strides = array<i32>} : memref<1x8x128xf32, #tpu.memory_space<vmem>>, vector<1x8x16xf32>,
    return
  }
  func.func @transform_0(%arg0: i32, %arg1: i32, %arg2: memref<2xf32, #tpu.memory_space<smem>>, %arg3: memref<8xf32, #tpu.memory_space<smem>>) -> (i32, i32, i32) {
    %c0_i32 = arith.constant 0 : i32
    %c0_i32_0 = arith.constant 0 : i32
    return %arg0, %arg1, %c0_i32 : i32, i32, i32
  }
  func.func @transform_1(%arg0: i32, %arg1: i32, %arg2: memref<2xf32, #tpu.memory_space<smem>>, %arg3: memref<8xf32, #tpu.memory_space<smem>>) -> (i32, i32, i32) {
    %c0_i32 = arith.constant 0 : i32
    %c0_i32_0 = arith.constant 0 : i32
    %c0_i32_1 = arith.constant 0 : i32
    return %arg0, %c0_i32, %c0_i32_0 : i32, i32, i32
  }
  func.func @transform_2(%arg0: i32, %arg1: i32, %arg2: memref<2xf32, #tpu.memory_space<smem>>, %arg3: memref<8xf32, #tpu.memory_space<smem>>) -> (i32, i32, i32) {
    %c0_i32 = arith.constant 0 : i32
    %c0_i32_0 = arith.constant 0 : i32
    %c0_i32_1 = arith.constant 0 : i32
    return %arg0, %c0_i32, %c0_i32_0 : i32, i32, i32
  }
  func.func @transform_3(%arg0: i32, %arg1: i32, %arg2: memref<2xf32, #tpu.memory_space<smem>>, %arg3: memref<8xf32, #tpu.memory_space<smem>>) -> (i32, i32, i32) {
    %c0_i32 = arith.constant 0 : i32
    %c0_i32_0 = arith.constant 0 : i32
    return %arg0, %arg1, %c0_i32 : i32, i32, i32
  }
  func.func @transform_4(%arg0: i32, %arg1: i32, %arg2: memref<2xf32, #tpu.memory_space<smem>>, %arg3: memref<8xf32, #tpu.memory_space<smem>>) -> (i32, i32, i32) {
    %c0_i32 = arith.constant 0 : i32
    %c0_i32_0 = arith.constant 0 : i32
    %c0_i32_1 = arith.constant 0 : i32
    return %arg0, %c0_i32, %c0_i32_0 : i32, i32, i32
  }
  func.func @transform_5(%arg0: i32, %arg1: i32, %arg2: memref<2xf32, #tpu.memory_space<smem>>, %arg3: memref<8xf32, #tpu.memory_space<smem>>) -> (i32, i32, i32) {
    %c0_i32 = arith.constant 0 : i32
    %c0_i32_0 = arith.constant 0 : i32
    %c0_i32_1 = arith.constant 0 : i32
    return %arg0, %c0_i32, %c0_i32_0 : i32, i32, i32
  }
  func.func @transform_6(%arg0: i32, %arg1: i32, %arg2: memref<2xf32, #tpu.memory_space<smem>>, %arg3: memref<8xf32, #tpu.memory_space<smem>>) -> (i32, i32, i32, i32) {
    %c0_i32 = arith.constant 0 : i32
    %c0_i32_0 = arith.constant 0 : i32
    %c0_i32_1 = arith.constant 0 : i32
    return %arg0, %c0_i32, %arg1, %c0_i32_0 : i32, i32, i32, i32
  }
  func.func @transform_7(%arg0: i32, %arg1: i32, %arg2: memref<2xf32, #tpu.memory_space<smem>>, %arg3: memref<8xf32, #tpu.memory_space<smem>>) -> (i32, i32, i32, i32) {
    %c0_i32 = arith.constant 0 : i32
    %c0_i32_0 = arith.constant 0 : i32
    %c0_i32_1 = arith.constant 0 : i32
    return %arg0, %arg1, %c0_i32, %c0_i32_0 : i32, i32, i32, i32
  }
  func.func @transform_8(%arg0: i32, %arg1: i32, %arg2: memref<2xf32, #tpu.memory_space<smem>>, %arg3: memref<8xf32, #tpu.memory_space<smem>>) -> (i32, i32, i32) {
    %c0_i32 = arith.constant 0 : i32
    %c0_i32_0 = arith.constant 0 : i32
    return %arg0, %arg1, %c0_i32 : i32, i32, i32
  }
  func.func @transform_9(%arg0: i32, %arg1: i32, %arg2: memref<2xf32, #tpu.memory_space<smem>>, %arg3: memref<8xf32, #tpu.memory_space<smem>>) -> (i32, i32, i32) {
    %c0_i32 = arith.constant 0 : i32
    %c0_i32_0 = arith.constant 0 : i32
    return %arg0, %arg1, %c0_i32 : i32, i32, i32
  }
  func.func @transform_10(%arg0: i32, %arg1: i32, %arg2: memref<2xf32, #tpu.memory_space<smem>>, %arg3: memref<8xf32, #tpu.memory_space<smem>>) -> (i32, i32, i32) {
    %c0_i32 = arith.constant 0 : i32
    %c0_i32_0 = arith.constant 0 : i32
    return %arg0, %arg1, %c0_i32 : i32, i32, i32
  }
  func.func @transform_11(%arg0: i32, %arg1: i32, %arg2: memref<2xf32, #tpu.memory_space<smem>>, %arg3: memref<8xf32, #tpu.memory_space<smem>>) -> (i32, i32, i32) {
    %c0_i32 = arith.constant 0 : i32
    %c0_i32_0 = arith.constant 0 : i32
    return %arg0, %arg1, %c0_i32 : i32, i32, i32
  }
  func.func @transform_12(%arg0: i32, %arg1: i32, %arg2: memref<2xf32, #tpu.memory_space<smem>>, %arg3: memref<8xf32, #tpu.memory_space<smem>>) -> (i32, i32, i32) {
    %c0_i32 = arith.constant 0 : i32
    %c0_i32_0 = arith.constant 0 : i32
    return %arg0, %arg1, %c0_i32 : i32, i32, i32
  }
}

module attributes {stable_mosaic.version = 11 : i64} {
  func.func @_linear_kernel(%arg0: i32, %arg1: memref<16x448xf32, #tpu.memory_space<vmem>>, %arg2: memref<448x32xf32, #tpu.memory_space<vmem>>, %arg3: memref<1x32xf32, #tpu.memory_space<vmem>>, %arg4: memref<16x32xf32, #tpu.memory_space<vmem>>) attributes {dimension_semantics = [#tpu.dimension_semantics<parallel>], iteration_bounds = array<i64: 1>, scalar_prefetch = 0 : i64, scratch_operands = 0 : i64, tpu.core_type = #tpu.core_type<tc>, window_params = [{transform_indices = @transform_0, window_bounds = array<i64: 16, 448>}, {pipeline_mode = #tpu.pipeline_mode<synchronous>, transform_indices = @transform_1, window_bounds = array<i64: 448, 32>}, {pipeline_mode = #tpu.pipeline_mode<synchronous>, transform_indices = @transform_2, window_bounds = array<i64: 1, 32>}, {transform_indices = @transform_3, window_bounds = array<i64: 16, 32>}]} {
    %c0 = arith.constant 0 : index
    %c0_0 = arith.constant 0 : index
    %0 = vector.load %arg1[%c0, %c0_0] : memref<16x448xf32, #tpu.memory_space<vmem>>, vector<16x448xf32>
    %c0_1 = arith.constant 0 : index
    %c0_2 = arith.constant 0 : index
    %1 = vector.load %arg2[%c0_1, %c0_2] : memref<448x32xf32, #tpu.memory_space<vmem>>, vector<448x32xf32>
    %cst = arith.constant dense<0.000000e+00> : vector<16x32xf32>
    %2 = tpu.matmul %0, %1, %cst {dimension_numbers = #tpu.dot_dimension_numbers<[1], [0], [0], [1], [0, 0, 1, 1], [], []>} : vector<16x448xf32>, vector<448x32xf32>, vector<16x32xf32> -> vector<16x32xf32>
    %c0_3 = arith.constant 0 : index
    %c0_4 = arith.constant 0 : index
    %3 = vector.load %arg3[%c0_3, %c0_4] : memref<1x32xf32, #tpu.memory_space<vmem>>, vector<1x32xf32>
    %4 = vector.broadcast %3 : vector<1x32xf32> to vector<16x32xf32>
    %5 = arith.addf %2, %4 : vector<16x32xf32>
    %c0_5 = arith.constant 0 : index
    %c0_6 = arith.constant 0 : index
    %6 = vector.load %arg4[%c0_5, %c0_6] : memref<16x32xf32, #tpu.memory_space<vmem>>, vector<16x32xf32>
    tpu.vector_store %arg4[%c0_5, %c0_6], %5 {strides = array<i32>} : memref<16x32xf32, #tpu.memory_space<vmem>>, vector<16x32xf32>,
    return
  }
  func.func @transform_0(%arg0: i32) -> (i32, i32) {
    %c0_i32 = arith.constant 0 : i32
    %c0_i32_0 = arith.constant 0 : i32
    return %arg0, %c0_i32 : i32, i32
  }
  func.func @transform_1(%arg0: i32) -> (i32, i32) {
    %c0_i32 = arith.constant 0 : i32
    %c0_i32_0 = arith.constant 0 : i32
    %c0_i32_1 = arith.constant 0 : i32
    return %c0_i32, %c0_i32_0 : i32, i32
  }
  func.func @transform_2(%arg0: i32) -> (i32, i32) {
    %c0_i32 = arith.constant 0 : i32
    %c0_i32_0 = arith.constant 0 : i32
    %c0_i32_1 = arith.constant 0 : i32
    return %c0_i32, %c0_i32_0 : i32, i32
  }
  func.func @transform_3(%arg0: i32) -> (i32, i32) {
    %c0_i32 = arith.constant 0 : i32
    %c0_i32_0 = arith.constant 0 : i32
    return %arg0, %c0_i32 : i32, i32
  }
}

module attributes {stable_mosaic.version = 11 : i64} {
  func.func @_layernorm_kernel(%arg0: i32, %arg1: memref<16x32xf32, #tpu.memory_space<vmem>>, %arg2: memref<1x32xf32, #tpu.memory_space<vmem>>, %arg3: memref<1x32xf32, #tpu.memory_space<vmem>>, %arg4: memref<16x32xf32, #tpu.memory_space<vmem>>) attributes {dimension_semantics = [#tpu.dimension_semantics<parallel>], iteration_bounds = array<i64: 1>, scalar_prefetch = 0 : i64, scratch_operands = 0 : i64, tpu.core_type = #tpu.core_type<tc>, window_params = [{transform_indices = @transform_0, window_bounds = array<i64: 16, 32>}, {pipeline_mode = #tpu.pipeline_mode<synchronous>, transform_indices = @transform_1, window_bounds = array<i64: 1, 32>}, {pipeline_mode = #tpu.pipeline_mode<synchronous>, transform_indices = @transform_2, window_bounds = array<i64: 1, 32>}, {transform_indices = @transform_3, window_bounds = array<i64: 16, 32>}]} {
    %c0 = arith.constant 0 : index
    %c0_0 = arith.constant 0 : index
    %0 = vector.load %arg1[%c0, %c0_0] : memref<16x32xf32, #tpu.memory_space<vmem>>, vector<16x32xf32>
    %cst = arith.constant dense<0.000000e+00> : vector<16xf32>
    %1 = vector.multi_reduction <add>, %0, %cst [1] : vector<16x32xf32> to vector<16xf32>
    %2 = vector.shape_cast %1 : vector<16xf32> to vector<16x1xf32>
    %cst_1 = arith.constant 3.200000e+01 : f32
    %3 = vector.broadcast %cst_1 : f32 to vector<16x1xf32>
    %4 = arith.divf %2, %3 : vector<16x1xf32>
    %5 = vector.broadcast %4 : vector<16x1xf32> to vector<16x32xf32>
    %6 = arith.subf %0, %5 : vector<16x32xf32>
    %7 = arith.mulf %6, %6 : vector<16x32xf32>
    %cst_2 = arith.constant dense<0.000000e+00> : vector<16xf32>
    %8 = vector.multi_reduction <add>, %7, %cst_2 [1] : vector<16x32xf32> to vector<16xf32>
    %9 = vector.shape_cast %8 : vector<16xf32> to vector<16x1xf32>
    %cst_3 = arith.constant 3.200000e+01 : f32
    %10 = vector.broadcast %cst_3 : f32 to vector<16x1xf32>
    %11 = arith.divf %9, %10 : vector<16x1xf32>
    %cst_4 = arith.constant 9.99999974E-6 : f32
    %12 = vector.broadcast %cst_4 : f32 to vector<16x1xf32>
    %13 = arith.addf %11, %12 : vector<16x1xf32>
    %14 = math.rsqrt %13 : vector<16x1xf32>
    %15 = vector.broadcast %14 : vector<16x1xf32> to vector<16x32xf32>
    %16 = arith.mulf %6, %15 : vector<16x32xf32>
    %c0_5 = arith.constant 0 : index
    %c0_6 = arith.constant 0 : index
    %17 = vector.load %arg2[%c0_5, %c0_6] : memref<1x32xf32, #tpu.memory_space<vmem>>, vector<1x32xf32>
    %18 = vector.broadcast %17 : vector<1x32xf32> to vector<16x32xf32>
    %19 = arith.mulf %16, %18 : vector<16x32xf32>
    %c0_7 = arith.constant 0 : index
    %c0_8 = arith.constant 0 : index
    %20 = vector.load %arg3[%c0_7, %c0_8] : memref<1x32xf32, #tpu.memory_space<vmem>>, vector<1x32xf32>
    %21 = vector.broadcast %20 : vector<1x32xf32> to vector<16x32xf32>
    %22 = arith.addf %19, %21 : vector<16x32xf32>
    %c0_9 = arith.constant 0 : index
    %c0_10 = arith.constant 0 : index
    %23 = vector.load %arg4[%c0_9, %c0_10] : memref<16x32xf32, #tpu.memory_space<vmem>>, vector<16x32xf32>
    tpu.vector_store %arg4[%c0_9, %c0_10], %22 {strides = array<i32>} : memref<16x32xf32, #tpu.memory_space<vmem>>, vector<16x32xf32>,
    return
  }
  func.func @transform_0(%arg0: i32) -> (i32, i32) {
    %c0_i32 = arith.constant 0 : i32
    %c0_i32_0 = arith.constant 0 : i32
    return %arg0, %c0_i32 : i32, i32
  }
  func.func @transform_1(%arg0: i32) -> (i32, i32) {
    %c0_i32 = arith.constant 0 : i32
    %c0_i32_0 = arith.constant 0 : i32
    %c0_i32_1 = arith.constant 0 : i32
    return %c0_i32, %c0_i32_0 : i32, i32
  }
  func.func @transform_2(%arg0: i32) -> (i32, i32) {
    %c0_i32 = arith.constant 0 : i32
    %c0_i32_0 = arith.constant 0 : i32
    %c0_i32_1 = arith.constant 0 : i32
    return %c0_i32, %c0_i32_0 : i32, i32
  }
  func.func @transform_3(%arg0: i32) -> (i32, i32) {
    %c0_i32 = arith.constant 0 : i32
    %c0_i32_0 = arith.constant 0 : i32
    return %arg0, %c0_i32 : i32, i32
  }
}

module attributes {stable_mosaic.version = 11 : i64} {
  func.func @_linear_kernel(%arg0: i32, %arg1: memref<16x32xf32, #tpu.memory_space<vmem>>, %arg2: memref<32x32xf32, #tpu.memory_space<vmem>>, %arg3: memref<1x32xf32, #tpu.memory_space<vmem>>, %arg4: memref<16x32xf32, #tpu.memory_space<vmem>>) attributes {dimension_semantics = [#tpu.dimension_semantics<parallel>], iteration_bounds = array<i64: 1>, scalar_prefetch = 0 : i64, scratch_operands = 0 : i64, tpu.core_type = #tpu.core_type<tc>, window_params = [{transform_indices = @transform_0, window_bounds = array<i64: 16, 32>}, {pipeline_mode = #tpu.pipeline_mode<synchronous>, transform_indices = @transform_1, window_bounds = array<i64: 32, 32>}, {pipeline_mode = #tpu.pipeline_mode<synchronous>, transform_indices = @transform_2, window_bounds = array<i64: 1, 32>}, {transform_indices = @transform_3, window_bounds = array<i64: 16, 32>}]} {
    %c0 = arith.constant 0 : index
    %c0_0 = arith.constant 0 : index
    %0 = vector.load %arg1[%c0, %c0_0] : memref<16x32xf32, #tpu.memory_space<vmem>>, vector<16x32xf32>
    %c0_1 = arith.constant 0 : index
    %c0_2 = arith.constant 0 : index
    %1 = vector.load %arg2[%c0_1, %c0_2] : memref<32x32xf32, #tpu.memory_space<vmem>>, vector<32x32xf32>
    %cst = arith.constant dense<0.000000e+00> : vector<16x32xf32>
    %2 = tpu.matmul %0, %1, %cst {dimension_numbers = #tpu.dot_dimension_numbers<[1], [0], [0], [1], [0, 0, 1, 1], [], []>} : vector<16x32xf32>, vector<32x32xf32>, vector<16x32xf32> -> vector<16x32xf32>
    %c0_3 = arith.constant 0 : index
    %c0_4 = arith.constant 0 : index
    %3 = vector.load %arg3[%c0_3, %c0_4] : memref<1x32xf32, #tpu.memory_space<vmem>>, vector<1x32xf32>
    %4 = vector.broadcast %3 : vector<1x32xf32> to vector<16x32xf32>
    %5 = arith.addf %2, %4 : vector<16x32xf32>
    %cst_5 = arith.constant 0.000000e+00 : f32
    %6 = vector.broadcast %cst_5 : f32 to vector<16x32xf32>
    %7 = arith.maximumf %5, %6 : vector<16x32xf32>
    %c0_6 = arith.constant 0 : index
    %c0_7 = arith.constant 0 : index
    %8 = vector.load %arg4[%c0_6, %c0_7] : memref<16x32xf32, #tpu.memory_space<vmem>>, vector<16x32xf32>
    tpu.vector_store %arg4[%c0_6, %c0_7], %7 {strides = array<i32>} : memref<16x32xf32, #tpu.memory_space<vmem>>, vector<16x32xf32>,
    return
  }
  func.func @transform_0(%arg0: i32) -> (i32, i32) {
    %c0_i32 = arith.constant 0 : i32
    %c0_i32_0 = arith.constant 0 : i32
    return %arg0, %c0_i32 : i32, i32
  }
  func.func @transform_1(%arg0: i32) -> (i32, i32) {
    %c0_i32 = arith.constant 0 : i32
    %c0_i32_0 = arith.constant 0 : i32
    %c0_i32_1 = arith.constant 0 : i32
    return %c0_i32, %c0_i32_0 : i32, i32
  }
  func.func @transform_2(%arg0: i32) -> (i32, i32) {
    %c0_i32 = arith.constant 0 : i32
    %c0_i32_0 = arith.constant 0 : i32
    %c0_i32_1 = arith.constant 0 : i32
    return %c0_i32, %c0_i32_0 : i32, i32
  }
  func.func @transform_3(%arg0: i32) -> (i32, i32) {
    %c0_i32 = arith.constant 0 : i32
    %c0_i32_0 = arith.constant 0 : i32
    return %arg0, %c0_i32 : i32, i32
  }
}

module attributes {stable_mosaic.version = 11 : i64} {
  func.func @_linear_kernel(%arg0: i32, %arg1: memref<16x32xf32, #tpu.memory_space<vmem>>, %arg2: memref<32x32xf32, #tpu.memory_space<vmem>>, %arg3: memref<1x32xf32, #tpu.memory_space<vmem>>, %arg4: memref<16x32xf32, #tpu.memory_space<vmem>>) attributes {dimension_semantics = [#tpu.dimension_semantics<parallel>], iteration_bounds = array<i64: 1>, scalar_prefetch = 0 : i64, scratch_operands = 0 : i64, tpu.core_type = #tpu.core_type<tc>, window_params = [{transform_indices = @transform_0, window_bounds = array<i64: 16, 32>}, {pipeline_mode = #tpu.pipeline_mode<synchronous>, transform_indices = @transform_1, window_bounds = array<i64: 32, 32>}, {pipeline_mode = #tpu.pipeline_mode<synchronous>, transform_indices = @transform_2, window_bounds = array<i64: 1, 32>}, {transform_indices = @transform_3, window_bounds = array<i64: 16, 32>}]} {
    %c0 = arith.constant 0 : index
    %c0_0 = arith.constant 0 : index
    %0 = vector.load %arg1[%c0, %c0_0] : memref<16x32xf32, #tpu.memory_space<vmem>>, vector<16x32xf32>
    %c0_1 = arith.constant 0 : index
    %c0_2 = arith.constant 0 : index
    %1 = vector.load %arg2[%c0_1, %c0_2] : memref<32x32xf32, #tpu.memory_space<vmem>>, vector<32x32xf32>
    %cst = arith.constant dense<0.000000e+00> : vector<16x32xf32>
    %2 = tpu.matmul %0, %1, %cst {dimension_numbers = #tpu.dot_dimension_numbers<[1], [0], [0], [1], [0, 0, 1, 1], [], []>} : vector<16x32xf32>, vector<32x32xf32>, vector<16x32xf32> -> vector<16x32xf32>
    %c0_3 = arith.constant 0 : index
    %c0_4 = arith.constant 0 : index
    %3 = vector.load %arg3[%c0_3, %c0_4] : memref<1x32xf32, #tpu.memory_space<vmem>>, vector<1x32xf32>
    %4 = vector.broadcast %3 : vector<1x32xf32> to vector<16x32xf32>
    %5 = arith.addf %2, %4 : vector<16x32xf32>
    %c0_5 = arith.constant 0 : index
    %c0_6 = arith.constant 0 : index
    %6 = vector.load %arg4[%c0_5, %c0_6] : memref<16x32xf32, #tpu.memory_space<vmem>>, vector<16x32xf32>
    tpu.vector_store %arg4[%c0_5, %c0_6], %5 {strides = array<i32>} : memref<16x32xf32, #tpu.memory_space<vmem>>, vector<16x32xf32>,
    return
  }
  func.func @transform_0(%arg0: i32) -> (i32, i32) {
    %c0_i32 = arith.constant 0 : i32
    %c0_i32_0 = arith.constant 0 : i32
    return %arg0, %c0_i32 : i32, i32
  }
  func.func @transform_1(%arg0: i32) -> (i32, i32) {
    %c0_i32 = arith.constant 0 : i32
    %c0_i32_0 = arith.constant 0 : i32
    %c0_i32_1 = arith.constant 0 : i32
    return %c0_i32, %c0_i32_0 : i32, i32
  }
  func.func @transform_2(%arg0: i32) -> (i32, i32) {
    %c0_i32 = arith.constant 0 : i32
    %c0_i32_0 = arith.constant 0 : i32
    %c0_i32_1 = arith.constant 0 : i32
    return %c0_i32, %c0_i32_0 : i32, i32
  }
  func.func @transform_3(%arg0: i32) -> (i32, i32) {
    %c0_i32 = arith.constant 0 : i32
    %c0_i32_0 = arith.constant 0 : i32
    return %arg0, %c0_i32 : i32, i32
  }
}

module attributes {stable_mosaic.version = 11 : i64} {
  func.func @_layernorm_kernel(%arg0: i32, %arg1: memref<16x32xf32, #tpu.memory_space<vmem>>, %arg2: memref<1x32xf32, #tpu.memory_space<vmem>>, %arg3: memref<1x32xf32, #tpu.memory_space<vmem>>, %arg4: memref<16x32xf32, #tpu.memory_space<vmem>>) attributes {dimension_semantics = [#tpu.dimension_semantics<parallel>], iteration_bounds = array<i64: 1>, scalar_prefetch = 0 : i64, scratch_operands = 0 : i64, tpu.core_type = #tpu.core_type<tc>, window_params = [{transform_indices = @transform_0, window_bounds = array<i64: 16, 32>}, {pipeline_mode = #tpu.pipeline_mode<synchronous>, transform_indices = @transform_1, window_bounds = array<i64: 1, 32>}, {pipeline_mode = #tpu.pipeline_mode<synchronous>, transform_indices = @transform_2, window_bounds = array<i64: 1, 32>}, {transform_indices = @transform_3, window_bounds = array<i64: 16, 32>}]} {
    %c0 = arith.constant 0 : index
    %c0_0 = arith.constant 0 : index
    %0 = vector.load %arg1[%c0, %c0_0] : memref<16x32xf32, #tpu.memory_space<vmem>>, vector<16x32xf32>
    %cst = arith.constant dense<0.000000e+00> : vector<16xf32>
    %1 = vector.multi_reduction <add>, %0, %cst [1] : vector<16x32xf32> to vector<16xf32>
    %2 = vector.shape_cast %1 : vector<16xf32> to vector<16x1xf32>
    %cst_1 = arith.constant 3.200000e+01 : f32
    %3 = vector.broadcast %cst_1 : f32 to vector<16x1xf32>
    %4 = arith.divf %2, %3 : vector<16x1xf32>
    %5 = vector.broadcast %4 : vector<16x1xf32> to vector<16x32xf32>
    %6 = arith.subf %0, %5 : vector<16x32xf32>
    %7 = arith.mulf %6, %6 : vector<16x32xf32>
    %cst_2 = arith.constant dense<0.000000e+00> : vector<16xf32>
    %8 = vector.multi_reduction <add>, %7, %cst_2 [1] : vector<16x32xf32> to vector<16xf32>
    %9 = vector.shape_cast %8 : vector<16xf32> to vector<16x1xf32>
    %cst_3 = arith.constant 3.200000e+01 : f32
    %10 = vector.broadcast %cst_3 : f32 to vector<16x1xf32>
    %11 = arith.divf %9, %10 : vector<16x1xf32>
    %cst_4 = arith.constant 9.99999974E-6 : f32
    %12 = vector.broadcast %cst_4 : f32 to vector<16x1xf32>
    %13 = arith.addf %11, %12 : vector<16x1xf32>
    %14 = math.rsqrt %13 : vector<16x1xf32>
    %15 = vector.broadcast %14 : vector<16x1xf32> to vector<16x32xf32>
    %16 = arith.mulf %6, %15 : vector<16x32xf32>
    %c0_5 = arith.constant 0 : index
    %c0_6 = arith.constant 0 : index
    %17 = vector.load %arg2[%c0_5, %c0_6] : memref<1x32xf32, #tpu.memory_space<vmem>>, vector<1x32xf32>
    %18 = vector.broadcast %17 : vector<1x32xf32> to vector<16x32xf32>
    %19 = arith.mulf %16, %18 : vector<16x32xf32>
    %c0_7 = arith.constant 0 : index
    %c0_8 = arith.constant 0 : index
    %20 = vector.load %arg3[%c0_7, %c0_8] : memref<1x32xf32, #tpu.memory_space<vmem>>, vector<1x32xf32>
    %21 = vector.broadcast %20 : vector<1x32xf32> to vector<16x32xf32>
    %22 = arith.addf %19, %21 : vector<16x32xf32>
    %c0_9 = arith.constant 0 : index
    %c0_10 = arith.constant 0 : index
    %23 = vector.load %arg4[%c0_9, %c0_10] : memref<16x32xf32, #tpu.memory_space<vmem>>, vector<16x32xf32>
    tpu.vector_store %arg4[%c0_9, %c0_10], %22 {strides = array<i32>} : memref<16x32xf32, #tpu.memory_space<vmem>>, vector<16x32xf32>,
    return
  }
  func.func @transform_0(%arg0: i32) -> (i32, i32) {
    %c0_i32 = arith.constant 0 : i32
    %c0_i32_0 = arith.constant 0 : i32
    return %arg0, %c0_i32 : i32, i32
  }
  func.func @transform_1(%arg0: i32) -> (i32, i32) {
    %c0_i32 = arith.constant 0 : i32
    %c0_i32_0 = arith.constant 0 : i32
    %c0_i32_1 = arith.constant 0 : i32
    return %c0_i32, %c0_i32_0 : i32, i32
  }
  func.func @transform_2(%arg0: i32) -> (i32, i32) {
    %c0_i32 = arith.constant 0 : i32
    %c0_i32_0 = arith.constant 0 : i32
    %c0_i32_1 = arith.constant 0 : i32
    return %c0_i32, %c0_i32_0 : i32, i32
  }
  func.func @transform_3(%arg0: i32) -> (i32, i32) {
    %c0_i32 = arith.constant 0 : i32
    %c0_i32_0 = arith.constant 0 : i32
    return %arg0, %c0_i32 : i32, i32
  }
}

</mosaic_0001>

<llo_original>
// kernel: ga_encoder_apply.18
$region0: #{ga_encoder_apply.18}
  #allocation0 [shape = 'u32[]', space=smem, size = 0x4, offset = 0x4, fixed_abs, tag = 'smem constant byte address 0x4 - core index']
  #allocation1 [shape = 'u32[144,128]{1,0:T(1,128)}', space=vmem, size = 0x12000, scoped, tag = 'internal scratch']
  %s0 = inlined_call_operand.vmem [shape: f32[16,32], index: 0, kind: input, shape index: {}]
  %s1 = inlined_call_operand.vmem [shape: f32[32,1344], index: 1, kind: input, shape index: {}]
  %s2 = inlined_call_operand.vmem [shape: f32[1,1344], index: 2, kind: input, shape index: {}]
  %s3 = inlined_call_operand.vmem [shape: f32[16,1344], index: 3, kind: output, shape index: {}]
  %s4 = sld [smem:[#allocation0]]
  $region22: #{ga_encoder_apply.18} parent=0
    _
  %s6 = ssub.s32 1, %s4
  %s7 = scalar_select 0, %s6, %s4
  // Predicated region
  $region2: #{ga_encoder_apply.18} parent=0 // pred_check
    _
  $region3: #{ga_encoder_apply.18} parent=0 // pred_check_branch
    %9 = sbr.rel (0) target = $region5
  $region4: #{ga_encoder_apply.18} parent=0 // pred_region
    _
  $region5: #{ga_encoder_apply.18} parent=0 // pred_fallthru
    _
  // Predicated region
  $region6: #{ga_encoder_apply.18} parent=0 // pred_check
    _
  $region7: #{ga_encoder_apply.18} parent=0 // pred_check_branch
    %11 = sbr.rel (0) target = $region9
  $region8: #{ga_encoder_apply.18} parent=0 // pred_region
    _
  $region9: #{ga_encoder_apply.18} parent=0 // pred_fallthru
    _
  // Predicated region
  $region10: #{ga_encoder_apply.18} parent=0 // pred_check
    _
  $region11: #{ga_encoder_apply.18} parent=0 // pred_check_branch
    %13 = sbr.rel (0) target = $region13
  $region12: #{ga_encoder_apply.18} parent=0 // pred_region
    _
  $region13: #{ga_encoder_apply.18} parent=0 // pred_fallthru
    _
  %v14 = vld [vmem:[%s0] sm:$0xff]
  %v15 = vld [vmem:[%s0 + $0x8] sm:$0xff]
  %v16 = vld [vmem:[%s1] sm:$0xff]
  %v17 = vld [vmem:[%s1 + $0x8] sm:$0xff]
  %v18 = vld [vmem:[%s1 + $0x10] sm:$0xff]
  %v19 = vld [vmem:[%s1 + $0x18] sm:$0xff]
  %v20 = vld [vmem:[%s1 + $0x20] sm:$0xff]
  %v21 = vld [vmem:[%s1 + $0x28] sm:$0xff]
  %v22 = vld [vmem:[%s1 + $0x30] sm:$0xff]
  %v23 = vld [vmem:[%s1 + $0x38] sm:$0xff]
  %v24 = vld [vmem:[%s1 + $0x40] sm:$0xff]
  %v25 = vld [vmem:[%s1 + $0x48] sm:$0xff]
  %v26 = vld [vmem:[%s1 + $0x50] sm:$0xff]
  %v27 = vld [vmem:[%s1 + $0x58] sm:$0xff]
  %v28 = vld [vmem:[%s1 + $0x60] sm:$0xff]
  %v29 = vld [vmem:[%s1 + $0x68] sm:$0xff]
  %v30 = vld [vmem:[%s1 + $0x70] sm:$0xff]
  %v31 = vld [vmem:[%s1 + $0x78] sm:$0xff]
  %v32 = vld [vmem:[%s1 + $0x80] sm:$0xff]
  %v33 = vld [vmem:[%s1 + $0x88] sm:$0xff]
  %v34 = vld [vmem:[%s1 + $0x90] sm:$0xff]
  %v35 = vld [vmem:[%s1 + $0x98] sm:$0xff]
  %v36 = vld [vmem:[%s1 + $0xa0] sm:$0xff]
  %v37 = vld [vmem:[%s1 + $0xa8] sm:$0xff]
  %v38 = vld [vmem:[%s1 + $0xb0] sm:$0xff]
  %v39 = vld [vmem:[%s1 + $0xb8] sm:$0xff]
  %v40 = vld [vmem:[%s1 + $0xc0] sm:$0xff]
  %v41 = vld [vmem:[%s1 + $0xc8] sm:$0xff]
  %v42 = vld [vmem:[%s1 + $0xd0] sm:$0xff]
  %v43 = vld [vmem:[%s1 + $0xd8] sm:$0xff]
  %v44 = vld [vmem:[%s1 + $0xe0] sm:$0xff]
  %v45 = vld [vmem:[%s1 + $0xe8] sm:$0xff]
  %v46 = vld [vmem:[%s1 + $0xf0] sm:$0xff]
  %v47 = vld [vmem:[%s1 + $0xf8] sm:$0xff]
  %v48 = vld [vmem:[%s1 + $0x100] sm:$0xff]
  %v49 = vld [vmem:[%s1 + $0x108] sm:$0xff]
  %v50 = vld [vmem:[%s1 + $0x110] sm:$0xff]
  %v51 = vld [vmem:[%s1 + $0x118] sm:$0xff]
  %v52 = vld [vmem:[%s1 + $0x120] sm:$0xff]
  %v53 = vld [vmem:[%s1 + $0x128] sm:$0xff]
  %v54 = vld [vmem:[%s1 + $0x130] sm:$0xff]
  %v55 = vld [vmem:[%s1 + $0x138] sm:$0xff]
  %v56 = vld [vmem:[%s1 + $0x140] sm:$0xff]
  %v57 = vld [vmem:[%s1 + $0x148] sm:$0xff]
  %v58 = vld [vmem:[%s1 + $0x150] sm:$0xff]
  %v59 = vld [vmem:[%s1 + $0x158] sm:$0xff]
  %v60 = vld [vmem:[%s2] sm:$0xff]
  %v61 = vld [vmem:[%s2 + $0x8] sm:$0x7]
  %v64 = vlaneseq
  %v65 = vshrl.u32 %v64, 7
  %v66 = vsub.s32 0, %v65
  %v67 = vrot.slane %v60, %v66
  %v68 = vlaneseq
  %v69 = vshrl.u32 %v68, 7
  %v70 = vsub.s32 1, %v69
  %v71 = vrot.slane %v60, %v70
  %v72 = vlaneseq
  %v73 = vshrl.u32 %v72, 7
  %v74 = vsub.s32 2, %v73
  %v75 = vrot.slane %v60, %v74
  %v76 = vlaneseq
  %v77 = vshrl.u32 %v76, 7
  %v78 = vsub.s32 3, %v77
  %v79 = vrot.slane %v60, %v78
  %v80 = vlaneseq
  %v81 = vshrl.u32 %v80, 7
  %v82 = vsub.s32 4, %v81
  %v83 = vrot.slane %v60, %v82
  %v84 = vlaneseq
  %v85 = vshrl.u32 %v84, 7
  %v86 = vsub.s32 5, %v85
  %v87 = vrot.slane %v60, %v86
  %v88 = vlaneseq
  %v89 = vshrl.u32 %v88, 7
  %v90 = vsub.s32 6, %v89
  %v91 = vrot.slane %v60, %v90
  %v92 = vlaneseq
  %v93 = vshrl.u32 %v92, 7
  %v94 = vsub.s32 7, %v93
  %v95 = vrot.slane %v60, %v94
  %v96 = vlaneseq
  %v97 = vshrl.u32 %v96, 7
  %v98 = vsub.s32 0, %v97
  %v99 = vrot.slane %v61, %v98
  %v100 = vlaneseq
  %v101 = vshrl.u32 %v100, 7
  %v102 = vsub.s32 1, %v101
  %v103 = vrot.slane %v61, %v102
  %v104 = vlaneseq
  %v105 = vshrl.u32 %v104, 7
  %v106 = vsub.s32 2, %v105
  %v107 = vrot.slane %v61, %v106
  %vm119 = vcmask 261120
  %v121 = vsel %vm119, %v14, 0
  %v124 = vsel %vm119, %v15, 0
  %126 = vmatprep.subr.mxu0 %v17
  %127 = vmatpush1.msra.mxu0 %v16
  %128 = vmatprep.subr.mxu0 %v28
  %129 = vmatpush1.msra.mxu0 %v27
  %130 = vmatprep.subr.mxu0 %v39
  %131 = vmatpush1.msra.mxu0 %v38
  %132 = vmatprep.subr.mxu0 %v50
  %133 = vmatpush1.msra.mxu0 %v49
  %134 = vmatprep.subr.mxu0 0.0
  %135 = vmatpush1.msra.mxu0 0.0
  %136 = vmatprep.subr.mxu0 0.0
  %137 = vmatpush1.msra.mxu0 0.0
  %138 = vmatprep.subr.mxu0 0.0
  %139 = vmatpush1.msra.mxu0 0.0
  %140 = vmatprep.subr.mxu0 0.0
  %141 = vmatpush1.msra.mxu0 0.0
  %142 = vmatprep.subr.mxu0 0.0
  %143 = vmatpush1.msra.mxu0 0.0
  %144 = vmatprep.subr.mxu0 0.0
  %145 = vmatpush1.msra.mxu0 0.0
  %146 = vmatprep.subr.mxu0 0.0
  %147 = vmatpush1.msra.mxu0 0.0
  %148 = vmatprep.subr.mxu0 0.0
  %149 = vmatpush1.msra.mxu0 0.0
  %150 = vmatprep.subr.mxu0 0.0
  %151 = vmatpush1.msra.mxu0 0.0
  %152 = vmatprep.subr.mxu0 0.0
  %153 = vmatpush1.msra.mxu0 0.0
  %154 = vmatprep.subr.mxu0 0.0
  %155 = vmatpush1.msra.mxu0 0.0
  %156 = vmatprep.subr.mxu0 0.0
  %157 = vmatpush1.msra.mxu0 0.0
  %158 = vmatprep.subr.mxu0 0.0
  %159 = vmatpush1.msra.mxu0 0.0
  %160 = vmatprep.subr.mxu0 0.0
  %161 = vmatpush1.msra.mxu0 0.0
  %162 = vmatprep.subr.mxu0 0.0
  %163 = vmatpush1.msra.mxu0 0.0
  %164 = vmatprep.subr.mxu0 0.0
  %165 = vmatpush1.msra.mxu0 0.0
  %166 = vmatprep.subr.mxu0 0.0
  %167 = vmatpush1.msra.mxu0 0.0
  %168 = vmatprep.subr.mxu0 0.0
  %169 = vmatpush1.msra.mxu0 0.0
  %170 = vmatprep.subr.mxu0 0.0
  %171 = vmatpush1.msra.mxu0 0.0
  %172 = vmatprep.subr.mxu0 0.0
  %173 = vmatpush1.msra.mxu0 0.0
  %174 = vmatprep.subr.mxu0 0.0
  %175 = vmatpush1.msra.mxu0 0.0
  %176 = vmatprep.subr.mxu0 0.0
  %177 = vmatpush1.msra.mxu0 0.0
  %178 = vmatprep.subr.mxu0 0.0
  %179 = vmatpush1.msra.mxu0 0.0
  %180 = vmatprep.subr.mxu0 0.0
  %181 = vmatpush1.msra.mxu0 0.0
  %182 = vmatprep.subr.mxu0 0.0
  %183 = vmatpush1.msra.mxu0 0.0
  %184 = vmatprep.subr.mxu0 0.0
  %185 = vmatpush1.msra.mxu0 0.0
  %186 = vmatprep.subr.mxu0 0.0
  %187 = vmatpush1.msra.mxu0 0.0
  %188 = vmatprep.subr.mxu0 0.0
  %189 = vmatpush1.msra.mxu0 0.0
  %190 = vmatprep.mubr.f32.mxu0 0.0
  %191 = vmatmul.mubr.f32.gmra.mrb[0].mxu0 %v121
  %v192 = vpop.f32.mrb[0].mxu0
  %v193 = vadd.f32 %v67, %v192
  %v194 = vpop.f32.mrb[0].mxu0
  %v195 = vadd.f32 %v71, %v194
  %196 = vmatprep.mubr.f32.mxu0 0.0
  %197 = vmatmul.mubr.f32.gmra.mrb[0].mxu0 %v124
  %v198 = vpop.f32.mrb[0].mxu0
  %v199 = vadd.f32 %v67, %v198
  %v200 = vpop.f32.mrb[0].mxu0
  %v201 = vadd.f32 %v71, %v200
  %202 = vdwg.mxu0
  %203 = vmatprep.subr.mxu0 %v19
  %204 = vmatpush1.msra.mxu0 %v18
  %205 = vmatprep.subr.mxu0 %v30
  %206 = vmatpush1.msra.mxu0 %v29
  %207 = vmatprep.subr.mxu0 %v41
  %208 = vmatpush1.msra.mxu0 %v40
  %209 = vmatprep.subr.mxu0 %v52
  %210 = vmatpush1.msra.mxu0 %v51
  %211 = vmatprep.subr.mxu0 0.0
  %212 = vmatpush1.msra.mxu0 0.0
  %213 = vmatprep.subr.mxu0 0.0
  %214 = vmatpush1.msra.mxu0 0.0
  %215 = vmatprep.subr.mxu0 0.0
  %216 = vmatpush1.msra.mxu0 0.0
  %217 = vmatprep.subr.mxu0 0.0
  %218 = vmatpush1.msra.mxu0 0.0
  %219 = vmatprep.subr.mxu0 0.0
  %220 = vmatpush1.msra.mxu0 0.0
  %221 = vmatprep.subr.mxu0 0.0
  %222 = vmatpush1.msra.mxu0 0.0
  %223 = vmatprep.subr.mxu0 0.0
  %224 = vmatpush1.msra.mxu0 0.0
  %225 = vmatprep.subr.mxu0 0.0
  %226 = vmatpush1.msra.mxu0 0.0
  %227 = vmatprep.subr.mxu0 0.0
  %228 = vmatpush1.msra.mxu0 0.0
  %229 = vmatprep.subr.mxu0 0.0
  %230 = vmatpush1.msra.mxu0 0.0
  %231 = vmatprep.subr.mxu0 0.0
  %232 = vmatpush1.msra.mxu0 0.0
  %233 = vmatprep.subr.mxu0 0.0
  %234 = vmatpush1.msra.mxu0 0.0
  %235 = vmatprep.subr.mxu0 0.0
  %236 = vmatpush1.msra.mxu0 0.0
  %237 = vmatprep.subr.mxu0 0.0
  %238 = vmatpush1.msra.mxu0 0.0
  %239 = vmatprep.subr.mxu0 0.0
  %240 = vmatpush1.msra.mxu0 0.0
  %241 = vmatprep.subr.mxu0 0.0
  %242 = vmatpush1.msra.mxu0 0.0
  %243 = vmatprep.subr.mxu0 0.0
  %244 = vmatpush1.msra.mxu0 0.0
  %245 = vmatprep.subr.mxu0 0.0
  %246 = vmatpush1.msra.mxu0 0.0
  %247 = vmatprep.subr.mxu0 0.0
  %248 = vmatpush1.msra.mxu0 0.0
  %249 = vmatprep.subr.mxu0 0.0
  %250 = vmatpush1.msra.mxu0 0.0
  %251 = vmatprep.subr.mxu0 0.0
  %252 = vmatpush1.msra.mxu0 0.0
  %253 = vmatprep.subr.mxu0 0.0
  %254 = vmatpush1.msra.mxu0 0.0
  %255 = vmatprep.subr.mxu0 0.0
  %256 = vmatpush1.msra.mxu0 0.0
  %257 = vmatprep.subr.mxu0 0.0
  %258 = vmatpush1.msra.mxu0 0.0
  %259 = vmatprep.subr.mxu0 0.0
  %260 = vmatpush1.msra.mxu0 0.0
  %261 = vmatprep.subr.mxu0 0.0
  %262 = vmatpush1.msra.mxu0 0.0
  %263 = vmatprep.subr.mxu0 0.0
  %264 = vmatpush1.msra.mxu0 0.0
  %265 = vmatprep.subr.mxu0 0.0
  %266 = vmatpush1.msra.mxu0 0.0
  %267 = vmatprep.mubr.f32.mxu0 0.0
  %268 = vmatmul.mubr.f32.gmra.mrb[0].mxu0 %v121
  %v269 = vpop.f32.mrb[0].mxu0
  %v270 = vadd.f32 %v75, %v269
  %v271 = vpop.f32.mrb[0].mxu0
  %v272 = vadd.f32 %v79, %v271
  %273 = vmatprep.mubr.f32.mxu0 0.0
  %274 = vmatmul.mubr.f32.gmra.mrb[0].mxu0 %v124
  %v275 = vpop.f32.mrb[0].mxu0
  %v276 = vadd.f32 %v75, %v275
  %v277 = vpop.f32.mrb[0].mxu0
  %v278 = vadd.f32 %v79, %v277
  %279 = vdwg.mxu0
  %280 = vmatprep.subr.mxu0 %v21
  %281 = vmatpush1.msra.mxu0 %v20
  %282 = vmatprep.subr.mxu0 %v32
  %283 = vmatpush1.msra.mxu0 %v31
  %284 = vmatprep.subr.mxu0 %v43
  %285 = vmatpush1.msra.mxu0 %v42
  %286 = vmatprep.subr.mxu0 %v54
  %287 = vmatpush1.msra.mxu0 %v53
  %288 = vmatprep.subr.mxu0 0.0
  %289 = vmatpush1.msra.mxu0 0.0
  %290 = vmatprep.subr.mxu0 0.0
  %291 = vmatpush1.msra.mxu0 0.0
  %292 = vmatprep.subr.mxu0 0.0
  %293 = vmatpush1.msra.mxu0 0.0
  %294 = vmatprep.subr.mxu0 0.0
  %295 = vmatpush1.msra.mxu0 0.0
  %296 = vmatprep.subr.mxu0 0.0
  %297 = vmatpush1.msra.mxu0 0.0
  %298 = vmatprep.subr.mxu0 0.0
  %299 = vmatpush1.msra.mxu0 0.0
  %300 = vmatprep.subr.mxu0 0.0
  %301 = vmatpush1.msra.mxu0 0.0
  %302 = vmatprep.subr.mxu0 0.0
  %303 = vmatpush1.msra.mxu0 0.0
  %304 = vmatprep.subr.mxu0 0.0
  %305 = vmatpush1.msra.mxu0 0.0
  %306 = vmatprep.subr.mxu0 0.0
  %307 = vmatpush1.msra.mxu0 0.0
  %308 = vmatprep.subr.mxu0 0.0
  %309 = vmatpush1.msra.mxu0 0.0
  %310 = vmatprep.subr.mxu0 0.0
  %311 = vmatpush1.msra.mxu0 0.0
  %312 = vmatprep.subr.mxu0 0.0
  %313 = vmatpush1.msra.mxu0 0.0
  %314 = vmatprep.subr.mxu0 0.0
  %315 = vmatpush1.msra.mxu0 0.0
  %316 = vmatprep.subr.mxu0 0.0
  %317 = vmatpush1.msra.mxu0 0.0
  %318 = vmatprep.subr.mxu0 0.0
  %319 = vmatpush1.msra.mxu0 0.0
  %320 = vmatprep.subr.mxu0 0.0
  %321 = vmatpush1.msra.mxu0 0.0
  %322 = vmatprep.subr.mxu0 0.0
  %323 = vmatpush1.msra.mxu0 0.0
  %324 = vmatprep.subr.mxu0 0.0
  %325 = vmatpush1.msra.mxu0 0.0
  %326 = vmatprep.subr.mxu0 0.0
  %327 = vmatpush1.msra.mxu0 0.0
  %328 = vmatprep.subr.mxu0 0.0
  %329 = vmatpush1.msra.mxu0 0.0
  %330 = vmatprep.subr.mxu0 0.0
  %331 = vmatpush1.msra.mxu0 0.0
  %332 = vmatprep.subr.mxu0 0.0
  %333 = vmatpush1.msra.mxu0 0.0
  %334 = vmatprep.subr.mxu0 0.0
  %335 = vmatpush1.msra.mxu0 0.0
  %336 = vmatprep.subr.mxu0 0.0
  %337 = vmatpush1.msra.mxu0 0.0
  %338 = vmatprep.subr.mxu0 0.0
  %339 = vmatpush1.msra.mxu0 0.0
  %340 = vmatprep.subr.mxu0 0.0
  %341 = vmatpush1.msra.mxu0 0.0
  %342 = vmatprep.subr.mxu0 0.0
  %343 = vmatpush1.msra.mxu0 0.0
  %344 = vmatprep.mubr.f32.mxu0 0.0
  %345 = vmatmul.mubr.f32.gmra.mrb[0].mxu0 %v121
  %v346 = vpop.f32.mrb[0].mxu0
  %v347 = vadd.f32 %v83, %v346
  %v348 = vpop.f32.mrb[0].mxu0
  %v349 = vadd.f32 %v87, %v348
  %350 = vmatprep.mubr.f32.mxu0 0.0
  %351 = vmatmul.mubr.f32.gmra.mrb[0].mxu0 %v124
  %v352 = vpop.f32.mrb[0].mxu0
  %v353 = vadd.f32 %v83, %v352
  %v354 = vpop.f32.mrb[0].mxu0
  %v355 = vadd.f32 %v87, %v354
  %356 = vdwg.mxu0
  %357 = vmatprep.subr.mxu0 %v23
  %358 = vmatpush1.msra.mxu0 %v22
  %359 = vmatprep.subr.mxu0 %v34
  %360 = vmatpush1.msra.mxu0 %v33
  %361 = vmatprep.subr.mxu0 %v45
  %362 = vmatpush1.msra.mxu0 %v44
  %363 = vmatprep.subr.mxu0 %v56
  %364 = vmatpush1.msra.mxu0 %v55
  %365 = vmatprep.subr.mxu0 0.0
  %366 = vmatpush1.msra.mxu0 0.0
  %367 = vmatprep.subr.mxu0 0.0
  %368 = vmatpush1.msra.mxu0 0.0
  %369 = vmatprep.subr.mxu0 0.0
  %370 = vmatpush1.msra.mxu0 0.0
  %371 = vmatprep.subr.mxu0 0.0
  %372 = vmatpush1.msra.mxu0 0.0
  %373 = vmatprep.subr.mxu0 0.0
  %374 = vmatpush1.msra.mxu0 0.0
  %375 = vmatprep.subr.mxu0 0.0
  %376 = vmatpush1.msra.mxu0 0.0
  %377 = vmatprep.subr.mxu0 0.0
  %378 = vmatpush1.msra.mxu0 0.0
  %379 = vmatprep.subr.mxu0 0.0
  %380 = vmatpush1.msra.mxu0 0.0
  %381 = vmatprep.subr.mxu0 0.0
  %382 = vmatpush1.msra.mxu0 0.0
  %383 = vmatprep.subr.mxu0 0.0
  %384 = vmatpush1.msra.mxu0 0.0
  %385 = vmatprep.subr.mxu0 0.0
  %386 = vmatpush1.msra.mxu0 0.0
  %387 = vmatprep.subr.mxu0 0.0
  %388 = vmatpush1.msra.mxu0 0.0
  %389 = vmatprep.subr.mxu0 0.0
  %390 = vmatpush1.msra.mxu0 0.0
  %391 = vmatprep.subr.mxu0 0.0
  %392 = vmatpush1.msra.mxu0 0.0
  %393 = vmatprep.subr.mxu0 0.0
  %394 = vmatpush1.msra.mxu0 0.0
  %395 = vmatprep.subr.mxu0 0.0
  %396 = vmatpush1.msra.mxu0 0.0
  %397 = vmatprep.subr.mxu0 0.0
  %398 = vmatpush1.msra.mxu0 0.0
  %399 = vmatprep.subr.mxu0 0.0
  %400 = vmatpush1.msra.mxu0 0.0
  %401 = vmatprep.subr.mxu0 0.0
  %402 = vmatpush1.msra.mxu0 0.0
  %403 = vmatprep.subr.mxu0 0.0
  %404 = vmatpush1.msra.mxu0 0.0
  %405 = vmatprep.subr.mxu0 0.0
  %406 = vmatpush1.msra.mxu0 0.0
  %407 = vmatprep.subr.mxu0 0.0
  %408 = vmatpush1.msra.mxu0 0.0
  %409 = vmatprep.subr.mxu0 0.0
  %410 = vmatpush1.msra.mxu0 0.0
  %411 = vmatprep.subr.mxu0 0.0
  %412 = vmatpush1.msra.mxu0 0.0
  %413 = vmatprep.subr.mxu0 0.0
  %414 = vmatpush1.msra.mxu0 0.0
  %415 = vmatprep.subr.mxu0 0.0
  %416 = vmatpush1.msra.mxu0 0.0
  %417 = vmatprep.subr.mxu0 0.0
  %418 = vmatpush1.msra.mxu0 0.0
  %419 = vmatprep.subr.mxu0 0.0
  %420 = vmatpush1.msra.mxu0 0.0
  %421 = vmatprep.mubr.f32.mxu0 0.0
  %422 = vmatmul.mubr.f32.gmra.mrb[0].mxu0 %v121
  %v423 = vpop.f32.mrb[0].mxu0
  %v424 = vadd.f32 %v91, %v423
  %v425 = vpop.f32.mrb[0].mxu0
  %v426 = vadd.f32 %v95, %v425
  %427 = vmatprep.mubr.f32.mxu0 0.0
  %428 = vmatmul.mubr.f32.gmra.mrb[0].mxu0 %v124
  %v429 = vpop.f32.mrb[0].mxu0
  %v430 = vadd.f32 %v91, %v429
  %v431 = vpop.f32.mrb[0].mxu0
  %v432 = vadd.f32 %v95, %v431
  %433 = vdwg.mxu0
  %434 = vmatprep.subr.mxu0 %v25
  %435 = vmatpush1.msra.mxu0 %v24
  %436 = vmatprep.subr.mxu0 %v36
  %437 = vmatpush1.msra.mxu0 %v35
  %438 = vmatprep.subr.mxu0 %v47
  %439 = vmatpush1.msra.mxu0 %v46
  %440 = vmatprep.subr.mxu0 %v58
  %441 = vmatpush1.msra.mxu0 %v57
  %442 = vmatprep.subr.mxu0 0.0
  %443 = vmatpush1.msra.mxu0 0.0
  %444 = vmatprep.subr.mxu0 0.0
  %445 = vmatpush1.msra.mxu0 0.0
  %446 = vmatprep.subr.mxu0 0.0
  %447 = vmatpush1.msra.mxu0 0.0
  %448 = vmatprep.subr.mxu0 0.0
  %449 = vmatpush1.msra.mxu0 0.0
  %450 = vmatprep.subr.mxu0 0.0
  %451 = vmatpush1.msra.mxu0 0.0
  %452 = vmatprep.subr.mxu0 0.0
  %453 = vmatpush1.msra.mxu0 0.0
  %454 = vmatprep.subr.mxu0 0.0
  %455 = vmatpush1.msra.mxu0 0.0
  %456 = vmatprep.subr.mxu0 0.0
  %457 = vmatpush1.msra.mxu0 0.0
  %458 = vmatprep.subr.mxu0 0.0
  %459 = vmatpush1.msra.mxu0 0.0
  %460 = vmatprep.subr.mxu0 0.0
  %461 = vmatpush1.msra.mxu0 0.0
  %462 = vmatprep.subr.mxu0 0.0
  %463 = vmatpush1.msra.mxu0 0.0
  %464 = vmatprep.subr.mxu0 0.0
  %465 = vmatpush1.msra.mxu0 0.0
  %466 = vmatprep.subr.mxu0 0.0
  %467 = vmatpush1.msra.mxu0 0.0
  %468 = vmatprep.subr.mxu0 0.0
  %469 = vmatpush1.msra.mxu0 0.0
  %470 = vmatprep.subr.mxu0 0.0
  %471 = vmatpush1.msra.mxu0 0.0
  %472 = vmatprep.subr.mxu0 0.0
  %473 = vmatpush1.msra.mxu0 0.0
  %474 = vmatprep.subr.mxu0 0.0
  %475 = vmatpush1.msra.mxu0 0.0
  %476 = vmatprep.subr.mxu0 0.0
  %477 = vmatpush1.msra.mxu0 0.0
  %478 = vmatprep.subr.mxu0 0.0
  %479 = vmatpush1.msra.mxu0 0.0
  %480 = vmatprep.subr.mxu0 0.0
  %481 = vmatpush1.msra.mxu0 0.0
  %482 = vmatprep.subr.mxu0 0.0
  %483 = vmatpush1.msra.mxu0 0.0
  %484 = vmatprep.subr.mxu0 0.0
  %485 = vmatpush1.msra.mxu0 0.0
  %486 = vmatprep.subr.mxu0 0.0
  %487 = vmatpush1.msra.mxu0 0.0
  %488 = vmatprep.subr.mxu0 0.0
  %489 = vmatpush1.msra.mxu0 0.0
  %490 = vmatprep.subr.mxu0 0.0
  %491 = vmatpush1.msra.mxu0 0.0
  %492 = vmatprep.subr.mxu0 0.0
  %493 = vmatpush1.msra.mxu0 0.0
  %494 = vmatprep.subr.mxu0 0.0
  %495 = vmatpush1.msra.mxu0 0.0
  %496 = vmatprep.subr.mxu0 0.0
  %497 = vmatpush1.msra.mxu0 0.0
  %498 = vmatprep.mubr.f32.mxu0 0.0
  %499 = vmatmul.mubr.f32.gmra.mrb[0].mxu0 %v121
  %v500 = vpop.f32.mrb[0].mxu0
  %v501 = vadd.f32 %v99, %v500
  %v502 = vpop.f32.mrb[0].mxu0
  %v503 = vadd.f32 %v103, %v502
  %504 = vmatprep.mubr.f32.mxu0 0.0
  %505 = vmatmul.mubr.f32.gmra.mrb[0].mxu0 %v124
  %v506 = vpop.f32.mrb[0].mxu0
  %v507 = vadd.f32 %v99, %v506
  %v508 = vpop.f32.mrb[0].mxu0
  %v509 = vadd.f32 %v103, %v508
  %510 = vdwg.mxu0
  %511 = vmatprep.subr.mxu0 0.0
  %512 = vmatpush1.msra.mxu0 %v26
  %513 = vmatprep.subr.mxu0 0.0
  %514 = vmatpush1.msra.mxu0 %v37
  %515 = vmatprep.subr.mxu0 0.0
  %516 = vmatpush1.msra.mxu0 %v48
  %517 = vmatprep.subr.mxu0 0.0
  %518 = vmatpush1.msra.mxu0 %v59
  %519 = vmatprep.subr.mxu0 0.0
  %520 = vmatpush1.msra.mxu0 0.0
  %521 = vmatprep.subr.mxu0 0.0
  %522 = vmatpush1.msra.mxu0 0.0
  %523 = vmatprep.subr.mxu0 0.0
  %524 = vmatpush1.msra.mxu0 0.0
  %525 = vmatprep.subr.mxu0 0.0
  %526 = vmatpush1.msra.mxu0 0.0
  %527 = vmatprep.subr.mxu0 0.0
  %528 = vmatpush1.msra.mxu0 0.0
  %529 = vmatprep.subr.mxu0 0.0
  %530 = vmatpush1.msra.mxu0 0.0
  %531 = vmatprep.subr.mxu0 0.0
  %532 = vmatpush1.msra.mxu0 0.0
  %533 = vmatprep.subr.mxu0 0.0
  %534 = vmatpush1.msra.mxu0 0.0
  %535 = vmatprep.subr.mxu0 0.0
  %536 = vmatpush1.msra.mxu0 0.0
  %537 = vmatprep.subr.mxu0 0.0
  %538 = vmatpush1.msra.mxu0 0.0
  %539 = vmatprep.subr.mxu0 0.0
  %540 = vmatpush1.msra.mxu0 0.0
  %541 = vmatprep.subr.mxu0 0.0
  %542 = vmatpush1.msra.mxu0 0.0
  %543 = vmatprep.subr.mxu0 0.0
  %544 = vmatpush1.msra.mxu0 0.0
  %545 = vmatprep.subr.mxu0 0.0
  %546 = vmatpush1.msra.mxu0 0.0
  %547 = vmatprep.subr.mxu0 0.0
  %548 = vmatpush1.msra.mxu0 0.0
  %549 = vmatprep.subr.mxu0 0.0
  %550 = vmatpush1.msra.mxu0 0.0
  %551 = vmatprep.subr.mxu0 0.0
  %552 = vmatpush1.msra.mxu0 0.0
  %553 = vmatprep.subr.mxu0 0.0
  %554 = vmatpush1.msra.mxu0 0.0
  %555 = vmatprep.subr.mxu0 0.0
  %556 = vmatpush1.msra.mxu0 0.0
  %557 = vmatprep.subr.mxu0 0.0
  %558 = vmatpush1.msra.mxu0 0.0
  %559 = vmatprep.subr.mxu0 0.0
  %560 = vmatpush1.msra.mxu0 0.0
  %561 = vmatprep.subr.mxu0 0.0
  %562 = vmatpush1.msra.mxu0 0.0
  %563 = vmatprep.subr.mxu0 0.0
  %564 = vmatpush1.msra.mxu0 0.0
  %565 = vmatprep.subr.mxu0 0.0
  %566 = vmatpush1.msra.mxu0 0.0
  %567 = vmatprep.subr.mxu0 0.0
  %568 = vmatpush1.msra.mxu0 0.0
  %569 = vmatprep.subr.mxu0 0.0
  %570 = vmatpush1.msra.mxu0 0.0
  %571 = vmatprep.subr.mxu0 0.0
  %572 = vmatpush1.msra.mxu0 0.0
  %573 = vmatprep.subr.mxu0 0.0
  %574 = vmatpush1.msra.mxu0 0.0
  %575 = vmatprep.mubr.f32.mxu0 0.0
  %576 = vmatmul.mubr.f32.gmra.mrb[0].mxu0 %v121
  %v577 = vpop.f32.mrb[0].mxu0
  %v578 = vadd.f32 %v107, %v577
  %v579 = vpop.f32.mrb[0].mxu0
  %580 = vmatprep.mubr.f32.mxu0 0.0
  %581 = vmatmul.mubr.f32.gmra.mrb[0].mxu0 %v124
  %v582 = vpop.f32.mrb[0].mxu0
  %v583 = vadd.f32 %v107, %v582
  %v584 = vpop.f32.mrb[0].mxu0
  %585 = vdwg.mxu0
  %586 = vst [vmem:[%s3] sm:$0xff] %v193
  %587 = vst [vmem:[%s3 + $0x8] sm:$0xff] %v195
  %588 = vst [vmem:[%s3 + $0x10] sm:$0xff] %v270
  %589 = vst [vmem:[%s3 + $0x18] sm:$0xff] %v272
  %590 = vst [vmem:[%s3 + $0x20] sm:$0xff] %v347
  %591 = vst [vmem:[%s3 + $0x28] sm:$0xff] %v349
  %592 = vst [vmem:[%s3 + $0x30] sm:$0xff] %v424
  %593 = vst [vmem:[%s3 + $0x38] sm:$0xff] %v426
  %594 = vst [vmem:[%s3 + $0x40] sm:$0xff] %v501
  %595 = vst [vmem:[%s3 + $0x48] sm:$0xff] %v503
  %vm596 = vcmask 523264
  %597 = vst.msk [vmem:[%s3 + $0x50] sm:$0xff] %vm596, %v578
  %598 = vst [vmem:[%s3 + $0x58] sm:$0xff] %v199
  %599 = vst [vmem:[%s3 + $0x60] sm:$0xff] %v201
  %600 = vst [vmem:[%s3 + $0x68] sm:$0xff] %v276
  %601 = vst [vmem:[%s3 + $0x70] sm:$0xff] %v278
  %602 = vst [vmem:[%s3 + $0x78] sm:$0xff] %v353
  %603 = vst [vmem:[%s3 + $0x80] sm:$0xff] %v355
  %604 = vst [vmem:[%s3 + $0x88] sm:$0xff] %v430
  %605 = vst [vmem:[%s3 + $0x90] sm:$0xff] %v432
  %606 = vst [vmem:[%s3 + $0x98] sm:$0xff] %v507
  %607 = vst [vmem:[%s3 + $0xa0] sm:$0xff] %v509
  %608 = vst.msk [vmem:[%s3 + $0xa8] sm:$0xff] %vm596, %v583
  // Predicated region
  $region14: #{ga_encoder_apply.18} parent=0 // pred_check
    _
  $region15: #{ga_encoder_apply.18} parent=0 // pred_check_branch
    %610 = sbr.rel (0) target = $region17
  $region16: #{ga_encoder_apply.18} parent=0 // pred_region
    _
  $region17: #{ga_encoder_apply.18} parent=0 // pred_fallthru
    _
  // Predicated region
  $region18: #{ga_encoder_apply.18} parent=0 // pred_check
    _
  $region19: #{ga_encoder_apply.18} parent=0 // pred_check_branch
    %612 = sbr.rel (0) target = $region21
  $region20: #{ga_encoder_apply.18} parent=0 // pred_region
    _
  $region21: #{ga_encoder_apply.18} parent=0 // pred_fallthru
    _

// kernel: ga_encoder_apply.19
$region0: #{ga_encoder_apply.19}
  #allocation0 [shape = 'u32[]', space=smem, size = 0x4, offset = 0x4, fixed_abs, tag = 'smem constant byte address 0x4 - core index']
  #allocation1 [shape = 'u32[144,128]{1,0:T(1,128)}', space=vmem, size = 0x12000, scoped, tag = 'internal scratch']
  %s0 = inlined_call_operand.vmem [shape: f32[128,16], index: 0, kind: input, shape index: {}]
  %s1 = inlined_call_operand.vmem [shape: f32[16,8], index: 1, kind: input, shape index: {}]
  %s2 = inlined_call_operand.vmem [shape: f32[1,8], index: 2, kind: input, shape index: {}]
  %s3 = inlined_call_operand.vmem [shape: f32[128,8], index: 3, kind: output, shape index: {}]
  %s4 = sld [smem:[#allocation0]]
  $region22: #{ga_encoder_apply.19} parent=0
    _
  %s6 = ssub.s32 1, %s4
  %s7 = scalar_select 0, %s6, %s4
  // Predicated region
  $region2: #{ga_encoder_apply.19} parent=0 // pred_check
    _
  $region3: #{ga_encoder_apply.19} parent=0 // pred_check_branch
    %9 = sbr.rel (0) target = $region5
  $region4: #{ga_encoder_apply.19} parent=0 // pred_region
    _
  $region5: #{ga_encoder_apply.19} parent=0 // pred_fallthru
    _
  // Predicated region
  $region6: #{ga_encoder_apply.19} parent=0 // pred_check
    _
  $region7: #{ga_encoder_apply.19} parent=0 // pred_check_branch
    %11 = sbr.rel (0) target = $region9
  $region8: #{ga_encoder_apply.19} parent=0 // pred_region
    _
  $region9: #{ga_encoder_apply.19} parent=0 // pred_fallthru
    _
  // Predicated region
  $region10: #{ga_encoder_apply.19} parent=0 // pred_check
    _
  $region11: #{ga_encoder_apply.19} parent=0 // pred_check_branch
    %13 = sbr.rel (0) target = $region13
  $region12: #{ga_encoder_apply.19} parent=0 // pred_region
    _
  $region13: #{ga_encoder_apply.19} parent=0 // pred_fallthru
    _
  %v14 = vld [vmem:[%s0] sm:$0xff]
  %v15 = vld [vmem:[%s0 + $0x8] sm:$0xff]
  %v16 = vld [vmem:[%s0 + $0x10] sm:$0xff]
  %v17 = vld [vmem:[%s0 + $0x18] sm:$0xff]
  %v18 = vld [vmem:[%s0 + $0x20] sm:$0xff]
  %v19 = vld [vmem:[%s0 + $0x28] sm:$0xff]
  %v20 = vld [vmem:[%s0 + $0x30] sm:$0xff]
  %v21 = vld [vmem:[%s0 + $0x38] sm:$0xff]
  %v22 = vld [vmem:[%s0 + $0x40] sm:$0xff]
  %v23 = vld [vmem:[%s0 + $0x48] sm:$0xff]
  %v24 = vld [vmem:[%s0 + $0x50] sm:$0xff]
  %v25 = vld [vmem:[%s0 + $0x58] sm:$0xff]
  %v26 = vld [vmem:[%s0 + $0x60] sm:$0xff]
  %v27 = vld [vmem:[%s0 + $0x68] sm:$0xff]
  %v28 = vld [vmem:[%s0 + $0x70] sm:$0xff]
  %v29 = vld [vmem:[%s0 + $0x78] sm:$0xff]
  %v30 = vld [vmem:[%s1] sm:$0xff]
  %v31 = vld [vmem:[%s1 + $0x8] sm:$0xff]
  %v32 = vld [vmem:[%s2] sm:$0x1]
  %v34 = vlaneseq
  %v35 = vshrl.u32 %v34, 7
  %v36 = vsub.s32 0, %v35
  %v37 = vrot.slane %v32, %v36
  %vm39 = vcmask 130048
  %v41 = vsel %vm39, %v14, 0
  %v44 = vsel %vm39, %v15, 0
  %v47 = vsel %vm39, %v16, 0
  %v50 = vsel %vm39, %v17, 0
  %v53 = vsel %vm39, %v18, 0
  %v56 = vsel %vm39, %v19, 0
  %v59 = vsel %vm39, %v20, 0
  %v62 = vsel %vm39, %v21, 0
  %v65 = vsel %vm39, %v22, 0
  %v68 = vsel %vm39, %v23, 0
  %v71 = vsel %vm39, %v24, 0
  %v74 = vsel %vm39, %v25, 0
  %v77 = vsel %vm39, %v26, 0
  %v80 = vsel %vm39, %v27, 0
  %v83 = vsel %vm39, %v28, 0
  %v86 = vsel %vm39, %v29, 0
  %88 = vmatprep.subr.mxu0 0.0
  %89 = vmatpush1.msra.mxu0 %v30
  %90 = vmatprep.subr.mxu0 0.0
  %91 = vmatpush1.msra.mxu0 %v31
  %92 = vmatprep.subr.mxu0 0.0
  %93 = vmatpush1.msra.mxu0 0.0
  %94 = vmatprep.subr.mxu0 0.0
  %95 = vmatpush1.msra.mxu0 0.0
  %96 = vmatprep.subr.mxu0 0.0
  %97 = vmatpush1.msra.mxu0 0.0
  %98 = vmatprep.subr.mxu0 0.0
  %99 = vmatpush1.msra.mxu0 0.0
  %100 = vmatprep.subr.mxu0 0.0
  %101 = vmatpush1.msra.mxu0 0.0
  %102 = vmatprep.subr.mxu0 0.0
  %103 = vmatpush1.msra.mxu0 0.0
  %104 = vmatprep.subr.mxu0 0.0
  %105 = vmatpush1.msra.mxu0 0.0
  %106 = vmatprep.subr.mxu0 0.0
  %107 = vmatpush1.msra.mxu0 0.0
  %108 = vmatprep.subr.mxu0 0.0
  %109 = vmatpush1.msra.mxu0 0.0
  %110 = vmatprep.subr.mxu0 0.0
  %111 = vmatpush1.msra.mxu0 0.0
  %112 = vmatprep.subr.mxu0 0.0
  %113 = vmatpush1.msra.mxu0 0.0
  %114 = vmatprep.subr.mxu0 0.0
  %115 = vmatpush1.msra.mxu0 0.0
  %116 = vmatprep.subr.mxu0 0.0
  %117 = vmatpush1.msra.mxu0 0.0
  %118 = vmatprep.subr.mxu0 0.0
  %119 = vmatpush1.msra.mxu0 0.0
  %120 = vmatprep.subr.mxu0 0.0
  %121 = vmatpush1.msra.mxu0 0.0
  %122 = vmatprep.subr.mxu0 0.0
  %123 = vmatpush1.msra.mxu0 0.0
  %124 = vmatprep.subr.mxu0 0.0
  %125 = vmatpush1.msra.mxu0 0.0
  %126 = vmatprep.subr.mxu0 0.0
  %127 = vmatpush1.msra.mxu0 0.0
  %128 = vmatprep.subr.mxu0 0.0
  %129 = vmatpush1.msra.mxu0 0.0
  %130 = vmatprep.subr.mxu0 0.0
  %131 = vmatpush1.msra.mxu0 0.0
  %132 = vmatprep.subr.mxu0 0.0
  %133 = vmatpush1.msra.mxu0 0.0
  %134 = vmatprep.subr.mxu0 0.0
  %135 = vmatpush1.msra.mxu0 0.0
  %136 = vmatprep.subr.mxu0 0.0
  %137 = vmatpush1.msra.mxu0 0.0
  %138 = vmatprep.subr.mxu0 0.0
  %139 = vmatpush1.msra.mxu0 0.0
  %140 = vmatprep.subr.mxu0 0.0
  %141 = vmatpush1.msra.mxu0 0.0
  %142 = vmatprep.subr.mxu0 0.0
  %143 = vmatpush1.msra.mxu0 0.0
  %144 = vmatprep.subr.mxu0 0.0
  %145 = vmatpush1.msra.mxu0 0.0
  %146 = vmatprep.subr.mxu0 0.0
  %147 = vmatpush1.msra.mxu0 0.0
  %148 = vmatprep.subr.mxu0 0.0
  %149 = vmatpush1.msra.mxu0 0.0
  %150 = vmatprep.subr.mxu0 0.0
  %151 = vmatpush1.msra.mxu0 0.0
  %152 = vmatprep.mubr.f32.mxu0 0.0
  %153 = vmatmul.mubr.f32.gmra.mrb[0].mxu0 %v41
  %v154 = vpop.f32.mrb[0].mxu0
  %v155 = vadd.f32 %v37, %v154
  %v156 = vpop.f32.mrb[0].mxu0
  %157 = vmatprep.mubr.f32.mxu0 0.0
  %158 = vmatmul.mubr.f32.gmra.mrb[0].mxu0 %v44
  %v159 = vpop.f32.mrb[0].mxu0
  %v160 = vadd.f32 %v37, %v159
  %v161 = vpop.f32.mrb[0].mxu0
  %162 = vmatprep.mubr.f32.mxu0 0.0
  %163 = vmatmul.mubr.f32.gmra.mrb[0].mxu0 %v47
  %v164 = vpop.f32.mrb[0].mxu0
  %v165 = vadd.f32 %v37, %v164
  %v166 = vpop.f32.mrb[0].mxu0
  %167 = vmatprep.mubr.f32.mxu0 0.0
  %168 = vmatmul.mubr.f32.gmra.mrb[0].mxu0 %v50
  %v169 = vpop.f32.mrb[0].mxu0
  %v170 = vadd.f32 %v37, %v169
  %v171 = vpop.f32.mrb[0].mxu0
  %172 = vmatprep.mubr.f32.mxu0 0.0
  %173 = vmatmul.mubr.f32.gmra.mrb[0].mxu0 %v53
  %v174 = vpop.f32.mrb[0].mxu0
  %v175 = vadd.f32 %v37, %v174
  %v176 = vpop.f32.mrb[0].mxu0
  %177 = vmatprep.mubr.f32.mxu0 0.0
  %178 = vmatmul.mubr.f32.gmra.mrb[0].mxu0 %v56
  %v179 = vpop.f32.mrb[0].mxu0
  %v180 = vadd.f32 %v37, %v179
  %v181 = vpop.f32.mrb[0].mxu0
  %182 = vmatprep.mubr.f32.mxu0 0.0
  %183 = vmatmul.mubr.f32.gmra.mrb[0].mxu0 %v59
  %v184 = vpop.f32.mrb[0].mxu0
  %v185 = vadd.f32 %v37, %v184
  %v186 = vpop.f32.mrb[0].mxu0
  %187 = vmatprep.mubr.f32.mxu0 0.0
  %188 = vmatmul.mubr.f32.gmra.mrb[0].mxu0 %v62
  %v189 = vpop.f32.mrb[0].mxu0
  %v190 = vadd.f32 %v37, %v189
  %v191 = vpop.f32.mrb[0].mxu0
  %192 = vmatprep.mubr.f32.mxu0 0.0
  %193 = vmatmul.mubr.f32.gmra.mrb[0].mxu0 %v65
  %v194 = vpop.f32.mrb[0].mxu0
  %v195 = vadd.f32 %v37, %v194
  %v196 = vpop.f32.mrb[0].mxu0
  %197 = vmatprep.mubr.f32.mxu0 0.0
  %198 = vmatmul.mubr.f32.gmra.mrb[0].mxu0 %v68
  %v199 = vpop.f32.mrb[0].mxu0
  %v200 = vadd.f32 %v37, %v199
  %v201 = vpop.f32.mrb[0].mxu0
  %202 = vmatprep.mubr.f32.mxu0 0.0
  %203 = vmatmul.mubr.f32.gmra.mrb[0].mxu0 %v71
  %v204 = vpop.f32.mrb[0].mxu0
  %v205 = vadd.f32 %v37, %v204
  %v206 = vpop.f32.mrb[0].mxu0
  %207 = vmatprep.mubr.f32.mxu0 0.0
  %208 = vmatmul.mubr.f32.gmra.mrb[0].mxu0 %v74
  %v209 = vpop.f32.mrb[0].mxu0
  %v210 = vadd.f32 %v37, %v209
  %v211 = vpop.f32.mrb[0].mxu0
  %212 = vmatprep.mubr.f32.mxu0 0.0
  %213 = vmatmul.mubr.f32.gmra.mrb[0].mxu0 %v77
  %v214 = vpop.f32.mrb[0].mxu0
  %v215 = vadd.f32 %v37, %v214
  %v216 = vpop.f32.mrb[0].mxu0
  %217 = vmatprep.mubr.f32.mxu0 0.0
  %218 = vmatmul.mubr.f32.gmra.mrb[0].mxu0 %v80
  %v219 = vpop.f32.mrb[0].mxu0
  %v220 = vadd.f32 %v37, %v219
  %v221 = vpop.f32.mrb[0].mxu0
  %222 = vmatprep.mubr.f32.mxu0 0.0
  %223 = vmatmul.mubr.f32.gmra.mrb[0].mxu0 %v83
  %v224 = vpop.f32.mrb[0].mxu0
  %v225 = vadd.f32 %v37, %v224
  %v226 = vpop.f32.mrb[0].mxu0
  %227 = vmatprep.mubr.f32.mxu0 0.0
  %228 = vmatmul.mubr.f32.gmra.mrb[0].mxu0 %v86
  %v229 = vpop.f32.mrb[0].mxu0
  %v230 = vadd.f32 %v37, %v229
  %v231 = vpop.f32.mrb[0].mxu0
  %232 = vdwg.mxu0
  %vm233 = vcmask 64512
  %234 = vst.msk [vmem:[%s3] sm:$0xff] %vm233, %v155
  %235 = vst.msk [vmem:[%s3 + $0x8] sm:$0xff] %vm233, %v160
  %236 = vst.msk [vmem:[%s3 + $0x10] sm:$0xff] %vm233, %v165
  %237 = vst.msk [vmem:[%s3 + $0x18] sm:$0xff] %vm233, %v170
  %238 = vst.msk [vmem:[%s3 + $0x20] sm:$0xff] %vm233, %v175
  %239 = vst.msk [vmem:[%s3 + $0x28] sm:$0xff] %vm233, %v180
  %240 = vst.msk [vmem:[%s3 + $0x30] sm:$0xff] %vm233, %v185
  %241 = vst.msk [vmem:[%s3 + $0x38] sm:$0xff] %vm233, %v190
  %242 = vst.msk [vmem:[%s3 + $0x40] sm:$0xff] %vm233, %v195
  %243 = vst.msk [vmem:[%s3 + $0x48] sm:$0xff] %vm233, %v200
  %244 = vst.msk [vmem:[%s3 + $0x50] sm:$0xff] %vm233, %v205
  %245 = vst.msk [vmem:[%s3 + $0x58] sm:$0xff] %vm233, %v210
  %246 = vst.msk [vmem:[%s3 + $0x60] sm:$0xff] %vm233, %v215
  %247 = vst.msk [vmem:[%s3 + $0x68] sm:$0xff] %vm233, %v220
  %248 = vst.msk [vmem:[%s3 + $0x70] sm:$0xff] %vm233, %v225
  %249 = vst.msk [vmem:[%s3 + $0x78] sm:$0xff] %vm233, %v230
  // Predicated region
  $region14: #{ga_encoder_apply.19} parent=0 // pred_check
    _
  $region15: #{ga_encoder_apply.19} parent=0 // pred_check_branch
    %251 = sbr.rel (0) target = $region17
  $region16: #{ga_encoder_apply.19} parent=0 // pred_region
    _
  $region17: #{ga_encoder_apply.19} parent=0 // pred_fallthru
    _
  // Predicated region
  $region18: #{ga_encoder_apply.19} parent=0 // pred_check
    _
  $region19: #{ga_encoder_apply.19} parent=0 // pred_check_branch
    %253 = sbr.rel (0) target = $region21
  $region20: #{ga_encoder_apply.19} parent=0 // pred_region
    _
  $region21: #{ga_encoder_apply.19} parent=0 // pred_fallthru
    _

// kernel: ga_encoder_apply.21
$region0: #{ga_encoder_apply.21}
  #allocation0 [shape = 'u32[]', space=smem, size = 0x4, offset = 0x4, fixed_abs, tag = 'smem constant byte address 0x4 - core index']
  #allocation1 [shape = 'u32[144,128]{1,0:T(1,128)}', space=vmem, size = 0x12000, scoped, tag = 'internal scratch']
  %s0 = inlined_call_operand.vmem [shape: f32[16,448], index: 0, kind: input, shape index: {}]
  %s1 = inlined_call_operand.vmem [shape: f32[448,32], index: 1, kind: input, shape index: {}]
  %s2 = inlined_call_operand.vmem [shape: f32[1,32], index: 2, kind: input, shape index: {}]
  %s3 = inlined_call_operand.vmem [shape: f32[16,32], index: 3, kind: output, shape index: {}]
  %s4 = sld [smem:[#allocation0]]
  $region22: #{ga_encoder_apply.21} parent=0
    _
  %s6 = ssub.s32 1, %s4
  %s7 = scalar_select 0, %s6, %s4
  // Predicated region
  $region2: #{ga_encoder_apply.21} parent=0 // pred_check
    _
  $region3: #{ga_encoder_apply.21} parent=0 // pred_check_branch
    %9 = sbr.rel (0) target = $region5
  $region4: #{ga_encoder_apply.21} parent=0 // pred_region
    _
  $region5: #{ga_encoder_apply.21} parent=0 // pred_fallthru
    _
  // Predicated region
  $region6: #{ga_encoder_apply.21} parent=0 // pred_check
    _
  $region7: #{ga_encoder_apply.21} parent=0 // pred_check_branch
    %11 = sbr.rel (0) target = $region9
  $region8: #{ga_encoder_apply.21} parent=0 // pred_region
    _
  $region9: #{ga_encoder_apply.21} parent=0 // pred_fallthru
    _
  // Predicated region
  $region10: #{ga_encoder_apply.21} parent=0 // pred_check
    _
  $region11: #{ga_encoder_apply.21} parent=0 // pred_check_branch
    %13 = sbr.rel (0) target = $region13
  $region12: #{ga_encoder_apply.21} parent=0 // pred_region
    _
  $region13: #{ga_encoder_apply.21} parent=0 // pred_fallthru
    _
  %v14 = vld [vmem:[%s0] sm:$0xff]
  %v15 = vld [vmem:[%s0 + $0x8] sm:$0xff]
  %v16 = vld [vmem:[%s0 + $0x10] sm:$0xff]
  %v17 = vld [vmem:[%s0 + $0x18] sm:$0xff]
  %v18 = vld [vmem:[%s0 + $0x20] sm:$0xff]
  %v19 = vld [vmem:[%s0 + $0x28] sm:$0xff]
  %v20 = vld [vmem:[%s0 + $0x30] sm:$0xff]
  %v21 = vld [vmem:[%s0 + $0x38] sm:$0xff]
  %v22 = vld [vmem:[%s1] sm:$0xff]
  %v23 = vld [vmem:[%s1 + $0x8] sm:$0xff]
  %v24 = vld [vmem:[%s1 + $0x10] sm:$0xff]
  %v25 = vld [vmem:[%s1 + $0x18] sm:$0xff]
  %v26 = vld [vmem:[%s1 + $0x20] sm:$0xff]
  %v27 = vld [vmem:[%s1 + $0x28] sm:$0xff]
  %v28 = vld [vmem:[%s1 + $0x30] sm:$0xff]
  %v29 = vld [vmem:[%s1 + $0x38] sm:$0xff]
  %v30 = vld [vmem:[%s1 + $0x40] sm:$0xff]
  %v31 = vld [vmem:[%s1 + $0x48] sm:$0xff]
  %v32 = vld [vmem:[%s1 + $0x50] sm:$0xff]
  %v33 = vld [vmem:[%s1 + $0x58] sm:$0xff]
  %v34 = vld [vmem:[%s1 + $0x60] sm:$0xff]
  %v35 = vld [vmem:[%s1 + $0x68] sm:$0xff]
  %v36 = vld [vmem:[%s1 + $0x70] sm:$0xff]
  %v37 = vld [vmem:[%s1 + $0x78] sm:$0xff]
  %v38 = vld [vmem:[%s1 + $0x80] sm:$0xff]
  %v39 = vld [vmem:[%s1 + $0x88] sm:$0xff]
  %v40 = vld [vmem:[%s1 + $0x90] sm:$0xff]
  %v41 = vld [vmem:[%s1 + $0x98] sm:$0xff]
  %v42 = vld [vmem:[%s1 + $0xa0] sm:$0xff]
  %v43 = vld [vmem:[%s1 + $0xa8] sm:$0xff]
  %v44 = vld [vmem:[%s1 + $0xb0] sm:$0xff]
  %v45 = vld [vmem:[%s1 + $0xb8] sm:$0xff]
  %v46 = vld [vmem:[%s1 + $0xc0] sm:$0xff]
  %v47 = vld [vmem:[%s1 + $0xc8] sm:$0xff]
  %v48 = vld [vmem:[%s1 + $0xd0] sm:$0xff]
  %v49 = vld [vmem:[%s1 + $0xd8] sm:$0xff]
  %v50 = vld [vmem:[%s1 + $0xe0] sm:$0xff]
  %v51 = vld [vmem:[%s1 + $0xe8] sm:$0xff]
  %v52 = vld [vmem:[%s1 + $0xf0] sm:$0xff]
  %v53 = vld [vmem:[%s1 + $0xf8] sm:$0xff]
  %v54 = vld [vmem:[%s1 + $0x100] sm:$0xff]
  %v55 = vld [vmem:[%s1 + $0x108] sm:$0xff]
  %v56 = vld [vmem:[%s1 + $0x110] sm:$0xff]
  %v57 = vld [vmem:[%s1 + $0x118] sm:$0xff]
  %v58 = vld [vmem:[%s1 + $0x120] sm:$0xff]
  %v59 = vld [vmem:[%s1 + $0x128] sm:$0xff]
  %v60 = vld [vmem:[%s1 + $0x130] sm:$0xff]
  %v61 = vld [vmem:[%s1 + $0x138] sm:$0xff]
  %v62 = vld [vmem:[%s1 + $0x140] sm:$0xff]
  %v63 = vld [vmem:[%s1 + $0x148] sm:$0xff]
  %v64 = vld [vmem:[%s1 + $0x150] sm:$0xff]
  %v65 = vld [vmem:[%s1 + $0x158] sm:$0xff]
  %v66 = vld [vmem:[%s1 + $0x160] sm:$0xff]
  %v67 = vld [vmem:[%s1 + $0x168] sm:$0xff]
  %v68 = vld [vmem:[%s1 + $0x170] sm:$0xff]
  %v69 = vld [vmem:[%s1 + $0x178] sm:$0xff]
  %v70 = vld [vmem:[%s1 + $0x180] sm:$0xff]
  %v71 = vld [vmem:[%s1 + $0x188] sm:$0xff]
  %v72 = vld [vmem:[%s1 + $0x190] sm:$0xff]
  %v73 = vld [vmem:[%s1 + $0x198] sm:$0xff]
  %v74 = vld [vmem:[%s1 + $0x1a0] sm:$0xff]
  %v75 = vld [vmem:[%s1 + $0x1a8] sm:$0xff]
  %v76 = vld [vmem:[%s1 + $0x1b0] sm:$0xff]
  %v77 = vld [vmem:[%s1 + $0x1b8] sm:$0xff]
  %v78 = vld [vmem:[%s2] sm:$0x1]
  %v80 = vlaneseq
  %v81 = vshrl.u32 %v80, 7
  %v82 = vsub.s32 0, %v81
  %v83 = vrot.slane %v78, %v82
  %vm85 = vcmask 523264
  %v87 = vsel %vm85, %v17, 0
  %v90 = vsel %vm85, %v21, 0
  %92 = vmatprep.subr.mxu0 0.0
  %93 = vmatpush1.msra.mxu0 %v22
  %94 = vmatprep.subr.mxu0 0.0
  %95 = vmatpush1.msra.mxu0 %v23
  %96 = vmatprep.subr.mxu0 0.0
  %97 = vmatpush1.msra.mxu0 %v24
  %98 = vmatprep.subr.mxu0 0.0
  %99 = vmatpush1.msra.mxu0 %v25
  %100 = vmatprep.subr.mxu0 0.0
  %101 = vmatpush1.msra.mxu0 %v26
  %102 = vmatprep.subr.mxu0 0.0
  %103 = vmatpush1.msra.mxu0 %v27
  %104 = vmatprep.subr.mxu0 0.0
  %105 = vmatpush1.msra.mxu0 %v28
  %106 = vmatprep.subr.mxu0 0.0
  %107 = vmatpush1.msra.mxu0 %v29
  %108 = vmatprep.subr.mxu0 0.0
  %109 = vmatpush1.msra.mxu0 %v30
  %110 = vmatprep.subr.mxu0 0.0
  %111 = vmatpush1.msra.mxu0 %v31
  %112 = vmatprep.subr.mxu0 0.0
  %113 = vmatpush1.msra.mxu0 %v32
  %114 = vmatprep.subr.mxu0 0.0
  %115 = vmatpush1.msra.mxu0 %v33
  %116 = vmatprep.subr.mxu0 0.0
  %117 = vmatpush1.msra.mxu0 %v34
  %118 = vmatprep.subr.mxu0 0.0
  %119 = vmatpush1.msra.mxu0 %v35
  %120 = vmatprep.subr.mxu0 0.0
  %121 = vmatpush1.msra.mxu0 %v36
  %122 = vmatprep.subr.mxu0 0.0
  %123 = vmatpush1.msra.mxu0 %v37
  %124 = vmatprep.subr.mxu0 0.0
  %125 = vmatpush1.msra.mxu0 %v38
  %126 = vmatprep.subr.mxu0 0.0
  %127 = vmatpush1.msra.mxu0 %v39
  %128 = vmatprep.subr.mxu0 0.0
  %129 = vmatpush1.msra.mxu0 %v40
  %130 = vmatprep.subr.mxu0 0.0
  %131 = vmatpush1.msra.mxu0 %v41
  %132 = vmatprep.subr.mxu0 0.0
  %133 = vmatpush1.msra.mxu0 %v42
  %134 = vmatprep.subr.mxu0 0.0
  %135 = vmatpush1.msra.mxu0 %v43
  %136 = vmatprep.subr.mxu0 0.0
  %137 = vmatpush1.msra.mxu0 %v44
  %138 = vmatprep.subr.mxu0 0.0
  %139 = vmatpush1.msra.mxu0 %v45
  %140 = vmatprep.subr.mxu0 0.0
  %141 = vmatpush1.msra.mxu0 %v46
  %142 = vmatprep.subr.mxu0 0.0
  %143 = vmatpush1.msra.mxu0 %v47
  %144 = vmatprep.subr.mxu0 0.0
  %145 = vmatpush1.msra.mxu0 %v48
  %146 = vmatprep.subr.mxu0 0.0
  %147 = vmatpush1.msra.mxu0 %v49
  %148 = vmatprep.subr.mxu0 0.0
  %149 = vmatpush1.msra.mxu0 %v50
  %150 = vmatprep.subr.mxu0 0.0
  %151 = vmatpush1.msra.mxu0 %v51
  %152 = vmatprep.subr.mxu0 0.0
  %153 = vmatpush1.msra.mxu0 %v52
  %154 = vmatprep.subr.mxu0 0.0
  %155 = vmatpush1.msra.mxu0 %v53
  %156 = vmatprep.mubr.f32.mxu0 %v15
  %157 = vmatmul.mubr.f32.gmra.mrb[0].mxu0 %v14
  %v158 = vpop.f32.mrb[0].mxu0
  %v159 = vadd.f32 %v83, %v158
  %v160 = vpop.f32.mrb[0].mxu0
  %161 = vmatprep.mubr.f32.mxu0 %v19
  %162 = vmatmul.mubr.f32.gmra.mrb[0].mxu0 %v18
  %v163 = vpop.f32.mrb[0].mxu0
  %v164 = vadd.f32 %v83, %v163
  %v165 = vpop.f32.mrb[0].mxu0
  %166 = vdwg.mxu0
  %167 = vmatprep.subr.mxu0 0.0
  %168 = vmatpush1.msra.mxu0 %v54
  %169 = vmatprep.subr.mxu0 0.0
  %170 = vmatpush1.msra.mxu0 %v55
  %171 = vmatprep.subr.mxu0 0.0
  %172 = vmatpush1.msra.mxu0 %v56
  %173 = vmatprep.subr.mxu0 0.0
  %174 = vmatpush1.msra.mxu0 %v57
  %175 = vmatprep.subr.mxu0 0.0
  %176 = vmatpush1.msra.mxu0 %v58
  %177 = vmatprep.subr.mxu0 0.0
  %178 = vmatpush1.msra.mxu0 %v59
  %179 = vmatprep.subr.mxu0 0.0
  %180 = vmatpush1.msra.mxu0 %v60
  %181 = vmatprep.subr.mxu0 0.0
  %182 = vmatpush1.msra.mxu0 %v61
  %183 = vmatprep.subr.mxu0 0.0
  %184 = vmatpush1.msra.mxu0 %v62
  %185 = vmatprep.subr.mxu0 0.0
  %186 = vmatpush1.msra.mxu0 %v63
  %187 = vmatprep.subr.mxu0 0.0
  %188 = vmatpush1.msra.mxu0 %v64
  %189 = vmatprep.subr.mxu0 0.0
  %190 = vmatpush1.msra.mxu0 %v65
  %191 = vmatprep.subr.mxu0 0.0
  %192 = vmatpush1.msra.mxu0 %v66
  %193 = vmatprep.subr.mxu0 0.0
  %194 = vmatpush1.msra.mxu0 %v67
  %195 = vmatprep.subr.mxu0 0.0
  %196 = vmatpush1.msra.mxu0 %v68
  %197 = vmatprep.subr.mxu0 0.0
  %198 = vmatpush1.msra.mxu0 %v69
  %199 = vmatprep.subr.mxu0 0.0
  %200 = vmatpush1.msra.mxu0 %v70
  %201 = vmatprep.subr.mxu0 0.0
  %202 = vmatpush1.msra.mxu0 %v71
  %203 = vmatprep.subr.mxu0 0.0
  %204 = vmatpush1.msra.mxu0 %v72
  %205 = vmatprep.subr.mxu0 0.0
  %206 = vmatpush1.msra.mxu0 %v73
  %207 = vmatprep.subr.mxu0 0.0
  %208 = vmatpush1.msra.mxu0 %v74
  %209 = vmatprep.subr.mxu0 0.0
  %210 = vmatpush1.msra.mxu0 %v75
  %211 = vmatprep.subr.mxu0 0.0
  %212 = vmatpush1.msra.mxu0 %v76
  %213 = vmatprep.subr.mxu0 0.0
  %214 = vmatpush1.msra.mxu0 %v77
  %215 = vmatprep.subr.mxu0 0.0
  %216 = vmatpush1.msra.mxu0 0.0
  %217 = vmatprep.subr.mxu0 0.0
  %218 = vmatpush1.msra.mxu0 0.0
  %219 = vmatprep.subr.mxu0 0.0
  %220 = vmatpush1.msra.mxu0 0.0
  %221 = vmatprep.subr.mxu0 0.0
  %222 = vmatpush1.msra.mxu0 0.0
  %223 = vmatprep.subr.mxu0 0.0
  %224 = vmatpush1.msra.mxu0 0.0
  %225 = vmatprep.subr.mxu0 0.0
  %226 = vmatpush1.msra.mxu0 0.0
  %227 = vmatprep.subr.mxu0 0.0
  %228 = vmatpush1.msra.mxu0 0.0
  %229 = vmatprep.subr.mxu0 0.0
  %230 = vmatpush1.msra.mxu0 0.0
  %231 = vmatprep.mubr.f32.mxu0 %v87
  %232 = vmatmul.mubr.f32.gmra.mrb[0].mxu0 %v16
  %v233 = vpop.f32.mrb[0].mxu0
  %v234 = vadd.f32 %v159, %v233
  %v235 = vpop.f32.mrb[0].mxu0
  %236 = vmatprep.mubr.f32.mxu0 %v90
  %237 = vmatmul.mubr.f32.gmra.mrb[0].mxu0 %v20
  %v238 = vpop.f32.mrb[0].mxu0
  %v239 = vadd.f32 %v164, %v238
  %v240 = vpop.f32.mrb[0].mxu0
  %241 = vdwg.mxu0
  %vm242 = vcmask 261120
  %243 = vst.msk [vmem:[%s3] sm:$0xff] %vm242, %v234
  %244 = vst.msk [vmem:[%s3 + $0x8] sm:$0xff] %vm242, %v239
  // Predicated region
  $region14: #{ga_encoder_apply.21} parent=0 // pred_check
    _
  $region15: #{ga_encoder_apply.21} parent=0 // pred_check_branch
    %246 = sbr.rel (0) target = $region17
  $region16: #{ga_encoder_apply.21} parent=0 // pred_region
    _
  $region17: #{ga_encoder_apply.21} parent=0 // pred_fallthru
    _
  // Predicated region
  $region18: #{ga_encoder_apply.21} parent=0 // pred_check
    _
  $region19: #{ga_encoder_apply.21} parent=0 // pred_check_branch
    %248 = sbr.rel (0) target = $region21
  $region20: #{ga_encoder_apply.21} parent=0 // pred_region
    _
  $region21: #{ga_encoder_apply.21} parent=0 // pred_fallthru
    _

// kernel: ga_encoder_apply.22
$region0: #{ga_encoder_apply.22}
  #allocation0 [shape = 'u32[]', space=smem, size = 0x4, offset = 0x4, fixed_abs, tag = 'smem constant byte address 0x4 - core index']
  #allocation1 [shape = 'u32[144,128]{1,0:T(1,128)}', space=vmem, size = 0x12000, scoped, tag = 'internal scratch']
  %s0 = inlined_call_operand.vmem [shape: f32[16,32], index: 0, kind: input, shape index: {}]
  %s1 = inlined_call_operand.vmem [shape: f32[1,32], index: 1, kind: input, shape index: {}]
  %s2 = inlined_call_operand.vmem [shape: f32[1,32], index: 2, kind: input, shape index: {}]
  %s3 = inlined_call_operand.vmem [shape: f32[16,32], index: 3, kind: output, shape index: {}]
  %s4 = sld [smem:[#allocation0]]
  $region22: #{ga_encoder_apply.22} parent=0
    _
  %s6 = ssub.s32 1, %s4
  %s7 = scalar_select 0, %s6, %s4
  // Predicated region
  $region2: #{ga_encoder_apply.22} parent=0 // pred_check
    _
  $region3: #{ga_encoder_apply.22} parent=0 // pred_check_branch
    %9 = sbr.rel (0) target = $region5
  $region4: #{ga_encoder_apply.22} parent=0 // pred_region
    _
  $region5: #{ga_encoder_apply.22} parent=0 // pred_fallthru
    _
  // Predicated region
  $region6: #{ga_encoder_apply.22} parent=0 // pred_check
    _
  $region7: #{ga_encoder_apply.22} parent=0 // pred_check_branch
    %11 = sbr.rel (0) target = $region9
  $region8: #{ga_encoder_apply.22} parent=0 // pred_region
    _
  $region9: #{ga_encoder_apply.22} parent=0 // pred_fallthru
    _
  // Predicated region
  $region10: #{ga_encoder_apply.22} parent=0 // pred_check
    _
  $region11: #{ga_encoder_apply.22} parent=0 // pred_check_branch
    %13 = sbr.rel (0) target = $region13
  $region12: #{ga_encoder_apply.22} parent=0 // pred_region
    _
  $region13: #{ga_encoder_apply.22} parent=0 // pred_fallthru
    _
  %v14 = vld [vmem:[%s0] sm:$0xff]
  %v15 = vld [vmem:[%s0 + $0x8] sm:$0xff]
  %vm16 = vcmask 261120
  %v17 = vsel %vm16, %v14, 0.0
  %18 = vadd.xlane.f32.xlu0 %v17
  %v19 = vpop.xlane.xlu0 %18
  %v20 = vsel %vm16, %v15, 0.0
  %21 = vadd.xlane.f32.xlu0 %v20
  %v22 = vpop.xlane.xlu0 %21
  %v23 = vrcp.pop 32.0
  %v24 = vmul.f32 %v19, %v23
  %v25 = vmul.f32 %v22, %v23
  %v26 = vsub.f32 %v14, %v24
  %v27 = vsub.f32 %v15, %v25
  %v28 = vmul.f32 %v26, %v26
  %v29 = vmul.f32 %v27, %v27
  %v30 = vsel %vm16, %v28, 0.0
  %31 = vadd.xlane.f32.xlu0 %v30
  %v32 = vpop.xlane.xlu0 %31
  %v33 = vsel %vm16, %v29, 0.0
  %34 = vadd.xlane.f32.xlu0 %v33
  %v35 = vpop.xlane.xlu0 %34
  %v36 = vmul.f32 %v32, %v23
  %v37 = vmul.f32 %v35, %v23
  %v38 = vadd.f32 %v36, 1e-05
  %v39 = vadd.f32 %v37, 1e-05
  %v40 = vrsqrt.pop %v38
  %v41 = vrsqrt.pop %v39
  %v42 = vmul.f32 %v26, %v40
  %v43 = vmul.f32 %v27, %v41
  %v44 = vld [vmem:[%s1] sm:$0x1]
  %v46 = vlaneseq
  %v47 = vshrl.u32 %v46, 7
  %v48 = vsub.s32 0, %v47
  %v49 = vrot.slane %v44, %v48
  %v51 = vmul.f32 %v42, %v49
  %v52 = vmul.f32 %v43, %v49
  %v53 = vld [vmem:[%s2] sm:$0x1]
  %v55 = vlaneseq
  %v56 = vshrl.u32 %v55, 7
  %v57 = vsub.s32 0, %v56
  %v58 = vrot.slane %v53, %v57
  %v60 = vadd.f32 %v51, %v58
  %v61 = vadd.f32 %v52, %v58
  %62 = vst.msk [vmem:[%s3] sm:$0xff] %vm16, %v60
  %63 = vst.msk [vmem:[%s3 + $0x8] sm:$0xff] %vm16, %v61
  // Predicated region
  $region14: #{ga_encoder_apply.22} parent=0 // pred_check
    _
  $region15: #{ga_encoder_apply.22} parent=0 // pred_check_branch
    %65 = sbr.rel (0) target = $region17
  $region16: #{ga_encoder_apply.22} parent=0 // pred_region
    _
  $region17: #{ga_encoder_apply.22} parent=0 // pred_fallthru
    _
  // Predicated region
  $region18: #{ga_encoder_apply.22} parent=0 // pred_check
    _
  $region19: #{ga_encoder_apply.22} parent=0 // pred_check_branch
    %67 = sbr.rel (0) target = $region21
  $region20: #{ga_encoder_apply.22} parent=0 // pred_region
    _
  $region21: #{ga_encoder_apply.22} parent=0 // pred_fallthru
    _

// kernel: ga_encoder_apply.23
$region0: #{ga_encoder_apply.23}
  #allocation0 [shape = 'u32[]', space=smem, size = 0x4, offset = 0x4, fixed_abs, tag = 'smem constant byte address 0x4 - core index']
  #allocation1 [shape = 'u32[144,128]{1,0:T(1,128)}', space=vmem, size = 0x12000, scoped, tag = 'internal scratch']
  %s0 = inlined_call_operand.vmem [shape: f32[16,32], index: 0, kind: input, shape index: {}]
  %s1 = inlined_call_operand.vmem [shape: f32[32,32], index: 1, kind: input, shape index: {}]
  %s2 = inlined_call_operand.vmem [shape: f32[1,32], index: 2, kind: input, shape index: {}]
  %s3 = inlined_call_operand.vmem [shape: f32[16,32], index: 3, kind: output, shape index: {}]
  %s4 = sld [smem:[#allocation0]]
  $region22: #{ga_encoder_apply.23} parent=0
    _
  %s6 = ssub.s32 1, %s4
  %s7 = scalar_select 0, %s6, %s4
  // Predicated region
  $region2: #{ga_encoder_apply.23} parent=0 // pred_check
    _
  $region3: #{ga_encoder_apply.23} parent=0 // pred_check_branch
    %9 = sbr.rel (0) target = $region5
  $region4: #{ga_encoder_apply.23} parent=0 // pred_region
    _
  $region5: #{ga_encoder_apply.23} parent=0 // pred_fallthru
    _
  // Predicated region
  $region6: #{ga_encoder_apply.23} parent=0 // pred_check
    _
  $region7: #{ga_encoder_apply.23} parent=0 // pred_check_branch
    %11 = sbr.rel (0) target = $region9
  $region8: #{ga_encoder_apply.23} parent=0 // pred_region
    _
  $region9: #{ga_encoder_apply.23} parent=0 // pred_fallthru
    _
  // Predicated region
  $region10: #{ga_encoder_apply.23} parent=0 // pred_check
    _
  $region11: #{ga_encoder_apply.23} parent=0 // pred_check_branch
    %13 = sbr.rel (0) target = $region13
  $region12: #{ga_encoder_apply.23} parent=0 // pred_region
    _
  $region13: #{ga_encoder_apply.23} parent=0 // pred_fallthru
    _
  %v14 = vld [vmem:[%s0] sm:$0xff]
  %v15 = vld [vmem:[%s0 + $0x8] sm:$0xff]
  %v16 = vld [vmem:[%s1] sm:$0xff]
  %v17 = vld [vmem:[%s1 + $0x8] sm:$0xff]
  %v18 = vld [vmem:[%s1 + $0x10] sm:$0xff]
  %v19 = vld [vmem:[%s1 + $0x18] sm:$0xff]
  %v20 = vld [vmem:[%s2] sm:$0x1]
  %v22 = vlaneseq
  %v23 = vshrl.u32 %v22, 7
  %v24 = vsub.s32 0, %v23
  %v25 = vrot.slane %v20, %v24
  %vm27 = vcmask 261120
  %v29 = vsel %vm27, %v14, 0
  %v32 = vsel %vm27, %v15, 0
  %34 = vmatprep.subr.mxu0 0.0
  %35 = vmatpush1.msra.mxu0 %v16
  %36 = vmatprep.subr.mxu0 0.0
  %37 = vmatpush1.msra.mxu0 %v17
  %38 = vmatprep.subr.mxu0 0.0
  %39 = vmatpush1.msra.mxu0 %v18
  %40 = vmatprep.subr.mxu0 0.0
  %41 = vmatpush1.msra.mxu0 %v19
  %42 = vmatprep.subr.mxu0 0.0
  %43 = vmatpush1.msra.mxu0 0.0
  %44 = vmatprep.subr.mxu0 0.0
  %45 = vmatpush1.msra.mxu0 0.0
  %46 = vmatprep.subr.mxu0 0.0
  %47 = vmatpush1.msra.mxu0 0.0
  %48 = vmatprep.subr.mxu0 0.0
  %49 = vmatpush1.msra.mxu0 0.0
  %50 = vmatprep.subr.mxu0 0.0
  %51 = vmatpush1.msra.mxu0 0.0
  %52 = vmatprep.subr.mxu0 0.0
  %53 = vmatpush1.msra.mxu0 0.0
  %54 = vmatprep.subr.mxu0 0.0
  %55 = vmatpush1.msra.mxu0 0.0
  %56 = vmatprep.subr.mxu0 0.0
  %57 = vmatpush1.msra.mxu0 0.0
  %58 = vmatprep.subr.mxu0 0.0
  %59 = vmatpush1.msra.mxu0 0.0
  %60 = vmatprep.subr.mxu0 0.0
  %61 = vmatpush1.msra.mxu0 0.0
  %62 = vmatprep.subr.mxu0 0.0
  %63 = vmatpush1.msra.mxu0 0.0
  %64 = vmatprep.subr.mxu0 0.0
  %65 = vmatpush1.msra.mxu0 0.0
  %66 = vmatprep.subr.mxu0 0.0
  %67 = vmatpush1.msra.mxu0 0.0
  %68 = vmatprep.subr.mxu0 0.0
  %69 = vmatpush1.msra.mxu0 0.0
  %70 = vmatprep.subr.mxu0 0.0
  %71 = vmatpush1.msra.mxu0 0.0
  %72 = vmatprep.subr.mxu0 0.0
  %73 = vmatpush1.msra.mxu0 0.0
  %74 = vmatprep.subr.mxu0 0.0
  %75 = vmatpush1.msra.mxu0 0.0
  %76 = vmatprep.subr.mxu0 0.0
  %77 = vmatpush1.msra.mxu0 0.0
  %78 = vmatprep.subr.mxu0 0.0
  %79 = vmatpush1.msra.mxu0 0.0
  %80 = vmatprep.subr.mxu0 0.0
  %81 = vmatpush1.msra.mxu0 0.0
  %82 = vmatprep.subr.mxu0 0.0
  %83 = vmatpush1.msra.mxu0 0.0
  %84 = vmatprep.subr.mxu0 0.0
  %85 = vmatpush1.msra.mxu0 0.0
  %86 = vmatprep.subr.mxu0 0.0
  %87 = vmatpush1.msra.mxu0 0.0
  %88 = vmatprep.subr.mxu0 0.0
  %89 = vmatpush1.msra.mxu0 0.0
  %90 = vmatprep.subr.mxu0 0.0
  %91 = vmatpush1.msra.mxu0 0.0
  %92 = vmatprep.subr.mxu0 0.0
  %93 = vmatpush1.msra.mxu0 0.0
  %94 = vmatprep.subr.mxu0 0.0
  %95 = vmatpush1.msra.mxu0 0.0
  %96 = vmatprep.subr.mxu0 0.0
  %97 = vmatpush1.msra.mxu0 0.0
  %98 = vmatprep.mubr.f32.mxu0 0.0
  %99 = vmatmul.mubr.f32.gmra.mrb[0].mxu0 %v29
  %v100 = vpop.f32.mrb[0].mxu0
  %v101 = vadd.f32 %v25, %v100
  %v102 = vpop.f32.mrb[0].mxu0
  %103 = vmatprep.mubr.f32.mxu0 0.0
  %104 = vmatmul.mubr.f32.gmra.mrb[0].mxu0 %v32
  %v105 = vpop.f32.mrb[0].mxu0
  %v106 = vadd.f32 %v25, %v105
  %v107 = vpop.f32.mrb[0].mxu0
  %108 = vdwg.mxu0
  %v109 = vmax.f32 %v101, 0.0
  %v110 = vmax.f32 %v106, 0.0
  %111 = vst.msk [vmem:[%s3] sm:$0xff] %vm27, %v109
  %112 = vst.msk [vmem:[%s3 + $0x8] sm:$0xff] %vm27, %v110
  // Predicated region
  $region14: #{ga_encoder_apply.23} parent=0 // pred_check
    _
  $region15: #{ga_encoder_apply.23} parent=0 // pred_check_branch
    %114 = sbr.rel (0) target = $region17
  $region16: #{ga_encoder_apply.23} parent=0 // pred_region
    _
  $region17: #{ga_encoder_apply.23} parent=0 // pred_fallthru
    _
  // Predicated region
  $region18: #{ga_encoder_apply.23} parent=0 // pred_check
    _
  $region19: #{ga_encoder_apply.23} parent=0 // pred_check_branch
    %116 = sbr.rel (0) target = $region21
  $region20: #{ga_encoder_apply.23} parent=0 // pred_region
    _
  $region21: #{ga_encoder_apply.23} parent=0 // pred_fallthru
    _

// kernel: ga_encoder_apply.25
$region0: #{ga_encoder_apply.25}
  #allocation0 [shape = 'u32[]', space=smem, size = 0x4, offset = 0x4, fixed_abs, tag = 'smem constant byte address 0x4 - core index']
  #allocation1 [shape = 'u32[144,128]{1,0:T(1,128)}', space=vmem, size = 0x12000, scoped, tag = 'internal scratch']
  %s0 = inlined_call_operand.vmem [shape: f32[16,32], index: 0, kind: input, shape index: {}]
  %s1 = inlined_call_operand.vmem [shape: f32[32,32], index: 1, kind: input, shape index: {}]
  %s2 = inlined_call_operand.vmem [shape: f32[1,32], index: 2, kind: input, shape index: {}]
  %s3 = inlined_call_operand.vmem [shape: f32[16,32], index: 3, kind: output, shape index: {}]
  %s4 = sld [smem:[#allocation0]]
  $region22: #{ga_encoder_apply.25} parent=0
    _
  %s6 = ssub.s32 1, %s4
  %s7 = scalar_select 0, %s6, %s4
  // Predicated region
  $region2: #{ga_encoder_apply.25} parent=0 // pred_check
    _
  $region3: #{ga_encoder_apply.25} parent=0 // pred_check_branch
    %9 = sbr.rel (0) target = $region5
  $region4: #{ga_encoder_apply.25} parent=0 // pred_region
    _
  $region5: #{ga_encoder_apply.25} parent=0 // pred_fallthru
    _
  // Predicated region
  $region6: #{ga_encoder_apply.25} parent=0 // pred_check
    _
  $region7: #{ga_encoder_apply.25} parent=0 // pred_check_branch
    %11 = sbr.rel (0) target = $region9
  $region8: #{ga_encoder_apply.25} parent=0 // pred_region
    _
  $region9: #{ga_encoder_apply.25} parent=0 // pred_fallthru
    _
  // Predicated region
  $region10: #{ga_encoder_apply.25} parent=0 // pred_check
    _
  $region11: #{ga_encoder_apply.25} parent=0 // pred_check_branch
    %13 = sbr.rel (0) target = $region13
  $region12: #{ga_encoder_apply.25} parent=0 // pred_region
    _
  $region13: #{ga_encoder_apply.25} parent=0 // pred_fallthru
    _
  %v14 = vld [vmem:[%s0] sm:$0xff]
  %v15 = vld [vmem:[%s0 + $0x8] sm:$0xff]
  %v16 = vld [vmem:[%s1] sm:$0xff]
  %v17 = vld [vmem:[%s1 + $0x8] sm:$0xff]
  %v18 = vld [vmem:[%s1 + $0x10] sm:$0xff]
  %v19 = vld [vmem:[%s1 + $0x18] sm:$0xff]
  %v20 = vld [vmem:[%s2] sm:$0x1]
  %v22 = vlaneseq
  %v23 = vshrl.u32 %v22, 7
  %v24 = vsub.s32 0, %v23
  %v25 = vrot.slane %v20, %v24
  %vm27 = vcmask 261120
  %v29 = vsel %vm27, %v14, 0
  %v32 = vsel %vm27, %v15, 0
  %34 = vmatprep.subr.mxu0 0.0
  %35 = vmatpush1.msra.mxu0 %v16
  %36 = vmatprep.subr.mxu0 0.0
  %37 = vmatpush1.msra.mxu0 %v17
  %38 = vmatprep.subr.mxu0 0.0
  %39 = vmatpush1.msra.mxu0 %v18
  %40 = vmatprep.subr.mxu0 0.0
  %41 = vmatpush1.msra.mxu0 %v19
  %42 = vmatprep.subr.mxu0 0.0
  %43 = vmatpush1.msra.mxu0 0.0
  %44 = vmatprep.subr.mxu0 0.0
  %45 = vmatpush1.msra.mxu0 0.0
  %46 = vmatprep.subr.mxu0 0.0
  %47 = vmatpush1.msra.mxu0 0.0
  %48 = vmatprep.subr.mxu0 0.0
  %49 = vmatpush1.msra.mxu0 0.0
  %50 = vmatprep.subr.mxu0 0.0
  %51 = vmatpush1.msra.mxu0 0.0
  %52 = vmatprep.subr.mxu0 0.0
  %53 = vmatpush1.msra.mxu0 0.0
  %54 = vmatprep.subr.mxu0 0.0
  %55 = vmatpush1.msra.mxu0 0.0
  %56 = vmatprep.subr.mxu0 0.0
  %57 = vmatpush1.msra.mxu0 0.0
  %58 = vmatprep.subr.mxu0 0.0
  %59 = vmatpush1.msra.mxu0 0.0
  %60 = vmatprep.subr.mxu0 0.0
  %61 = vmatpush1.msra.mxu0 0.0
  %62 = vmatprep.subr.mxu0 0.0
  %63 = vmatpush1.msra.mxu0 0.0
  %64 = vmatprep.subr.mxu0 0.0
  %65 = vmatpush1.msra.mxu0 0.0
  %66 = vmatprep.subr.mxu0 0.0
  %67 = vmatpush1.msra.mxu0 0.0
  %68 = vmatprep.subr.mxu0 0.0
  %69 = vmatpush1.msra.mxu0 0.0
  %70 = vmatprep.subr.mxu0 0.0
  %71 = vmatpush1.msra.mxu0 0.0
  %72 = vmatprep.subr.mxu0 0.0
  %73 = vmatpush1.msra.mxu0 0.0
  %74 = vmatprep.subr.mxu0 0.0
  %75 = vmatpush1.msra.mxu0 0.0
  %76 = vmatprep.subr.mxu0 0.0
  %77 = vmatpush1.msra.mxu0 0.0
  %78 = vmatprep.subr.mxu0 0.0
  %79 = vmatpush1.msra.mxu0 0.0
  %80 = vmatprep.subr.mxu0 0.0
  %81 = vmatpush1.msra.mxu0 0.0
  %82 = vmatprep.subr.mxu0 0.0
  %83 = vmatpush1.msra.mxu0 0.0
  %84 = vmatprep.subr.mxu0 0.0
  %85 = vmatpush1.msra.mxu0 0.0
  %86 = vmatprep.subr.mxu0 0.0
  %87 = vmatpush1.msra.mxu0 0.0
  %88 = vmatprep.subr.mxu0 0.0
  %89 = vmatpush1.msra.mxu0 0.0
  %90 = vmatprep.subr.mxu0 0.0
  %91 = vmatpush1.msra.mxu0 0.0
  %92 = vmatprep.subr.mxu0 0.0
  %93 = vmatpush1.msra.mxu0 0.0
  %94 = vmatprep.subr.mxu0 0.0
  %95 = vmatpush1.msra.mxu0 0.0
  %96 = vmatprep.subr.mxu0 0.0
  %97 = vmatpush1.msra.mxu0 0.0
  %98 = vmatprep.mubr.f32.mxu0 0.0
  %99 = vmatmul.mubr.f32.gmra.mrb[0].mxu0 %v29
  %v100 = vpop.f32.mrb[0].mxu0
  %v101 = vadd.f32 %v25, %v100
  %v102 = vpop.f32.mrb[0].mxu0
  %103 = vmatprep.mubr.f32.mxu0 0.0
  %104 = vmatmul.mubr.f32.gmra.mrb[0].mxu0 %v32
  %v105 = vpop.f32.mrb[0].mxu0
  %v106 = vadd.f32 %v25, %v105
  %v107 = vpop.f32.mrb[0].mxu0
  %108 = vdwg.mxu0
  %109 = vst.msk [vmem:[%s3] sm:$0xff] %vm27, %v101
  %110 = vst.msk [vmem:[%s3 + $0x8] sm:$0xff] %vm27, %v106
  // Predicated region
  $region14: #{ga_encoder_apply.25} parent=0 // pred_check
    _
  $region15: #{ga_encoder_apply.25} parent=0 // pred_check_branch
    %112 = sbr.rel (0) target = $region17
  $region16: #{ga_encoder_apply.25} parent=0 // pred_region
    _
  $region17: #{ga_encoder_apply.25} parent=0 // pred_fallthru
    _
  // Predicated region
  $region18: #{ga_encoder_apply.25} parent=0 // pred_check
    _
  $region19: #{ga_encoder_apply.25} parent=0 // pred_check_branch
    %114 = sbr.rel (0) target = $region21
  $region20: #{ga_encoder_apply.25} parent=0 // pred_region
    _
  $region21: #{ga_encoder_apply.25} parent=0 // pred_fallthru
    _

// kernel: ga_encoder_apply.35
$region0: #{ga_encoder_apply.35}
  #allocation0 [shape = 'u32[]', space=smem, size = 0x4, offset = 0x4, fixed_abs, tag = 'smem constant byte address 0x4 - core index']
  #allocation1 [shape = 'u32[144,128]{1,0:T(1,128)}', space=vmem, size = 0x12000, scoped, tag = 'internal scratch']
  %s0 = inlined_call_operand.vmem [shape: f32[16,32], index: 0, kind: input, shape index: {}]
  %s1 = inlined_call_operand.vmem [shape: f32[1,32], index: 1, kind: input, shape index: {}]
  %s2 = inlined_call_operand.vmem [shape: f32[1,32], index: 2, kind: input, shape index: {}]
  %s3 = inlined_call_operand.hbm [shape: f32[16,32], index: 3, kind: output, shape index: {}]
  %s4 = sld [smem:[#allocation0]]
  $region22: #{ga_encoder_apply.35} parent=0
    _
  %s6 = ssub.s32 1, %s4
  %s7 = scalar_select 0, %s6, %s4
  $region1: #{ga_encoder_apply.35} parent=0
    #allocation2 [shape = 'u8[8192]{0}', space=vmem, size = 0x2000, scoped, tag = 'output window, operand 0, single buffered']
    #allocation3 [shape = 's32[1]{0}', space=sflag, size = 0x4, scoped, tag = 'scoped memory for ga_encoder_apply.35']
    %8 = vsyncpa [#allocation3], 0
    // Predicated region
    $region2: #{ga_encoder_apply.35} parent=1 // pred_check
      _
    $region3: #{ga_encoder_apply.35} parent=1 // pred_check_branch
      %10 = sbr.rel (0) target = $region5
    $region4: #{ga_encoder_apply.35} parent=1 // pred_region
      _
    $region5: #{ga_encoder_apply.35} parent=1 // pred_fallthru
      _
    // Predicated region
    $region6: #{ga_encoder_apply.35} parent=1 // pred_check
      _
    $region7: #{ga_encoder_apply.35} parent=1 // pred_check_branch
      %12 = sbr.rel (0) target = $region9
    $region8: #{ga_encoder_apply.35} parent=1 // pred_region
      _
    $region9: #{ga_encoder_apply.35} parent=1 // pred_fallthru
      _
    // Predicated region
    $region10: #{ga_encoder_apply.35} parent=1 // pred_check
      _
    $region11: #{ga_encoder_apply.35} parent=1 // pred_check_branch
      %14 = sbr.rel (0) target = $region13
    $region12: #{ga_encoder_apply.35} parent=1 // pred_region
      _
    $region13: #{ga_encoder_apply.35} parent=1 // pred_fallthru
      _
    %v15 = vld [vmem:[%s0] sm:$0xff]
    %v16 = vld [vmem:[%s0 + $0x8] sm:$0xff]
    %vm17 = vcmask 261120
    %v18 = vsel %vm17, %v15, 0.0
    %19 = vadd.xlane.f32.xlu0 %v18
    %v20 = vpop.xlane.xlu0 %19
    %v21 = vsel %vm17, %v16, 0.0
    %22 = vadd.xlane.f32.xlu0 %v21
    %v23 = vpop.xlane.xlu0 %22
    %v24 = vrcp.pop 32.0
    %v25 = vmul.f32 %v20, %v24
    %v26 = vmul.f32 %v23, %v24
    %v27 = vsub.f32 %v15, %v25
    %v28 = vsub.f32 %v16, %v26
    %v29 = vmul.f32 %v27, %v27
    %v30 = vmul.f32 %v28, %v28
    %v31 = vsel %vm17, %v29, 0.0
    %32 = vadd.xlane.f32.xlu0 %v31
    %v33 = vpop.xlane.xlu0 %32
    %v34 = vsel %vm17, %v30, 0.0
    %35 = vadd.xlane.f32.xlu0 %v34
    %v36 = vpop.xlane.xlu0 %35
    %v37 = vmul.f32 %v33, %v24
    %v38 = vmul.f32 %v36, %v24
    %v39 = vadd.f32 %v37, 1e-05
    %v40 = vadd.f32 %v38, 1e-05
    %v41 = vrsqrt.pop %v39
    %v42 = vrsqrt.pop %v40
    %v43 = vmul.f32 %v27, %v41
    %v44 = vmul.f32 %v28, %v42
    %v45 = vld [vmem:[%s1] sm:$0x1]
    %v47 = vlaneseq
    %v48 = vshrl.u32 %v47, 7
    %v49 = vsub.s32 0, %v48
    %v50 = vrot.slane %v45, %v49
    %v52 = vmul.f32 %v43, %v50
    %v53 = vmul.f32 %v44, %v50
    %v54 = vld [vmem:[%s2] sm:$0x1]
    %v56 = vlaneseq
    %v57 = vshrl.u32 %v56, 7
    %v58 = vsub.s32 0, %v57
    %v59 = vrot.slane %v54, %v58
    %v61 = vadd.f32 %v52, %v59
    %v62 = vadd.f32 %v53, %v59
    %63 = vst.msk [vmem:[#allocation2] sm:$0xff] %vm17, %v61
    %64 = vst.msk [vmem:[#allocation2 + $0x8] sm:$0xff] %vm17, %v62
    // Predicated region
    $region14: #{ga_encoder_apply.35} parent=1 // pred_check
      _
    $region15: #{ga_encoder_apply.35} parent=1 // pred_check_branch
      %66 = sbr.rel (0) target = $region17
    $region16: #{ga_encoder_apply.35} parent=1 // pred_region
      %s68 = ssub.s32 256, 256
      %69 = vsyncadd [#allocation3], %s68
      %s70 = sshll.u32 [#allocation2], 4
      %s71 = int_to_ptr.vmem [resolvable:$true] %s70
      %76 = dma.vmem_to_hbm [thread:$0]  %s71, 256, %s3, [#allocation3], 128, 128, 8
    $region17: #{ga_encoder_apply.35} parent=1 // pred_fallthru
      _
    // Predicated region
    $region18: #{ga_encoder_apply.35} parent=1 // pred_check
      _
    $region19: #{ga_encoder_apply.35} parent=1 // pred_check_branch
      %78 = sbr.rel (0) target = $region21
    $region20: #{ga_encoder_apply.35} parent=1 // pred_region
      %79 = dma.done [#allocation3], 256
    $region21: #{ga_encoder_apply.35} parent=1 // pred_fallthru
      _
    %80 = vsyncpa [#allocation3], 1

// kernel: ga_encoder_apply.20
$region0: #{ga_encoder_apply.20}
  #allocation0 [shape = 'u32[]', space=smem, size = 0x4, offset = 0x4, fixed_abs, tag = 'smem constant byte address 0x4 - core index']
  #allocation1 [shape = 'u32[144,128]{1,0:T(1,128)}', space=vmem, size = 0x12000, scoped, tag = 'internal scratch']
  #allocation2 [shape = 'f32[8,8,8]{2,1,0:T(8,128)}', space=vmem, size = 0x8000, scoped, tag = 'scratch operand']
  #allocation3 [shape = 's32[1]{0}', space=sflag, size = 0x4, scoped, tag = 'scoped memory for ga_encoder_apply.20']
  #allocation4 [shape = 'u8[512]{0}', space=smem, size = 0x200, scoped, tag = 'prefetched SMEM operand 0']
  #allocation5 [shape = 'u8[512]{0}', space=smem, size = 0x200, scoped, tag = 'prefetched SMEM operand 1']
  %s0 = inlined_call_operand.vmem [shape: f32[2], index: 0, kind: input, shape index: {}]
  %s1 = inlined_call_operand.vmem [shape: f32[8], index: 1, kind: input, shape index: {}]
  %s2 = inlined_call_operand.vmem [shape: f32[2,8,256], index: 2, kind: input, shape index: {}]
  %s3 = inlined_call_operand.vmem [shape: f32[2,8,256], index: 3, kind: input, shape index: {}]
  %s4 = inlined_call_operand.vmem [shape: f32[2,8,256], index: 4, kind: input, shape index: {}]
  %s5 = inlined_call_operand.vmem [shape: f32[2,8,192], index: 5, kind: input, shape index: {}]
  %s6 = inlined_call_operand.vmem [shape: f32[2,8,192], index: 6, kind: input, shape index: {}]
  %s7 = inlined_call_operand.vmem [shape: f32[2,8,192], index: 7, kind: input, shape index: {}]
  %s8 = inlined_call_operand.vmem [shape: f32[2,8,8,8], index: 8, kind: input, shape index: {}]
  %s9 = inlined_call_operand.vmem [shape: f32[2,8,8,16], index: 9, kind: input, shape index: {}]
  %s10 = inlined_call_operand.vmem [shape: f32[2,8,8], index: 10, kind: input, shape index: {}]
  %s11 = inlined_call_operand.vmem [shape: f32[2,8,8], index: 11, kind: input, shape index: {}]
  %s12 = inlined_call_operand.vmem [shape: f32[2,8,256], index: 12, kind: output, shape index: {0}]
  %s13 = inlined_call_operand.vmem [shape: f32[2,8,128], index: 13, kind: output, shape index: {1}]
  %s14 = inlined_call_operand.vmem [shape: f32[2,8,192], index: 14, kind: output, shape index: {2}]
  %15 = xla_tuple %s12, %s13, %s14
  %s16 = sld [smem:[#allocation0]]
  $region89: #{ga_encoder_apply.20} parent=0
    _
  %s18 = ssub.s32 1, %s16
  %s19 = scalar_select 0, %s18, %s16
  %s20 = sshll.u32 %s0, 4
  %s21 = int_to_ptr.vmem [resolvable:$true] %s20
  %23 = dma.vmem_to_smem %s21, 16, [#allocation4], [#allocation3]
  %s24 = sshll.u32 %s1, 4
  %s25 = int_to_ptr.vmem [resolvable:$true] %s24
  %27 = dma.vmem_to_smem %s25, 16, [#allocation5], [#allocation3]
  %28 = dma.done [#allocation3], 32
  %29 = sfence
  loop: start=0, step=1, limit=4
  $region2: #{ga_encoder_apply.20} parent=0 // loop_pre_header
    _
  $region3: #{ga_encoder_apply.20} parent=0 // loop_header
    %s31 = sphi 0, %s35
    %p32 = scmp.ge.s32.totalorder %s31, 4
    %s38 = sphi 0, %s50
    %s39 = sphi 0, %s46
    %s40 = sphi 0, %s38
    %s41 = sphi 0, %s39
    %s42 = sphi 0, %s40
    %s43 = sphi 0, %s41
    %s55 = sphi 0, %s57
    %s58 = sphi 0, %s55
    %s59 = sphi 0, %s58
    %s75 = sphi 0, %s59
    %s81 = sphi 0, %s83
    %s84 = sphi 0, %s81
    %s85 = sphi 0, %s84
    %s101 = sphi 0, %s85
    %s107 = sphi 0, %s109
    %s110 = sphi 0, %s107
    %s111 = sphi 0, %s110
    %s127 = sphi 0, %s111
    %s135 = sphi 0, %s137
    %s138 = sphi 0, %s135
    %s139 = sphi 0, %s138
    %s155 = sphi 0, %s139
    %s161 = sphi 0, %s163
    %s164 = sphi 0, %s161
    %s165 = sphi 0, %s164
    %s181 = sphi 0, %s165
    %s187 = sphi 0, %s189
    %s190 = sphi 0, %s187
    %s191 = sphi 0, %s190
    %s207 = sphi 0, %s191
    %s215 = sphi 0, %s217
    %s218 = sphi 0, %s215
    %s219 = sphi 0, %s218
    %s235 = sphi 0, %s219
    %s243 = sphi 0, %s245
    %s246 = sphi 0, %s243
    %s247 = sphi 0, %s246
    %s263 = sphi 0, %s247
    %s271 = sphi 0, %s273
    %s274 = sphi 0, %s271
    %s275 = sphi 0, %s274
    %s291 = sphi 0, %s275
    %s299 = sphi 0, %s301
    %s302 = sphi 0, %s299
    %s303 = sphi 0, %s302
    %s319 = sphi 0, %s303
    %s327 = sphi 0, %s329
    %s330 = sphi 0, %s327
    %s331 = sphi 0, %s330
    %s347 = sphi 0, %s331
    %s355 = sphi 0, %s357
    %s358 = sphi 0, %s355
    %s359 = sphi 0, %s358
    %s375 = sphi 0, %s359
    %s383 = sphi 0, %s385
    %s386 = sphi 0, %s383
    %s387 = sphi 0, %s386
    %s403 = sphi 0, %s387
  $region4: #{ga_encoder_apply.20} parent=0 // loop_header_branch
    %34 = sbr.rel (%p32) target = $region8
  $region5: #{ga_encoder_apply.20} parent=0 // loop_body
    %s36 = ssub.s32 %s31, 1
    %s37 = ssub.s32 %s31, 2
    %s44 = sadd.s32 1, %s39
    %p45 = scmp.ge.s32.totalorder %s44, 1
    %s46 = scalar_select %p45, 0, %s44
    %s47 = sadd.s32 1, %s38
    %s48 = scalar_select %p45, %s47, %s38
    %p49 = scmp.ge.s32.totalorder %s48, 2
    %s50 = scalar_select %p49, 0, %s48
    %s51 = ssub.s32 %s38, %s50
    %s52 = ssub.s32 %s39, %s46
    %s53 = sor.u32 %s51, %s52
    %p54 = scmp.eq.s32.totalorder %s53, 0
    %s56 = sadd.s32 %s55, 1
    %s57 = scalar_select %p54, %s55, %s56
    %p60 = pneg %p54
    %p61 = scmp.eq.s32.totalorder %s31, 1
    %p62 = por %p60, %p61
    %p63 = scmp.ne.s32.totalorder %s55, %s58
    %p64 = scmp.eq.s32.totalorder %s31, 0
    %p65 = por %p63, %p64
    %p66 = scmp.ne.s32.totalorder %s55, %s58
    %p67 = scmp.eq.s32.totalorder %s36, 1
    %p68 = por %p66, %p67
    %p69 = scmp.ne.s32.totalorder %s58, %s59
    %p70 = scmp.eq.s32.totalorder %s36, 0
    %p71 = por %p69, %p70
    %p72 = scmp.ne.s32.totalorder %s58, %s59
    %p73 = scmp.eq.s32.totalorder %s37, 1
    %p74 = por %p72, %p73
    %p76 = scmp.ne.s32.totalorder %s59, %s75
    %p77 = scmp.eq.s32.totalorder %s37, 0
    %p78 = por %p76, %p77
    %s79 = ssub.s32 %s38, %s50
    %p80 = scmp.eq.s32.totalorder %s79, 0
    %s82 = sadd.s32 %s81, 1
    %s83 = scalar_select %p80, %s81, %s82
    %p86 = pneg %p80
    %p87 = scmp.eq.s32.totalorder %s31, 1
    %p88 = por %p86, %p87
    %p89 = scmp.ne.s32.totalorder %s81, %s84
    %p90 = scmp.eq.s32.totalorder %s31, 0
    %p91 = por %p89, %p90
    %p92 = scmp.ne.s32.totalorder %s81, %s84
    %p93 = scmp.eq.s32.totalorder %s36, 1
    %p94 = por %p92, %p93
    %p95 = scmp.ne.s32.totalorder %s84, %s85
    %p96 = scmp.eq.s32.totalorder %s36, 0
    %p97 = por %p95, %p96
    %p98 = scmp.ne.s32.totalorder %s84, %s85
    %p99 = scmp.eq.s32.totalorder %s37, 1
    %p100 = por %p98, %p99
    %p102 = scmp.ne.s32.totalorder %s85, %s101
    %p103 = scmp.eq.s32.totalorder %s37, 0
    %p104 = por %p102, %p103
    %s105 = ssub.s32 %s38, %s50
    %p106 = scmp.eq.s32.totalorder %s105, 0
    %s108 = sadd.s32 %s107, 1
    %s109 = scalar_select %p106, %s107, %s108
    %p112 = pneg %p106
    %p113 = scmp.eq.s32.totalorder %s31, 1
    %p114 = por %p112, %p113
    %p115 = scmp.ne.s32.totalorder %s107, %s110
    %p116 = scmp.eq.s32.totalorder %s31, 0
    %p117 = por %p115, %p116
    %p118 = scmp.ne.s32.totalorder %s107, %s110
    %p119 = scmp.eq.s32.totalorder %s36, 1
    %p120 = por %p118, %p119
    %p121 = scmp.ne.s32.totalorder %s110, %s111
    %p122 = scmp.eq.s32.totalorder %s36, 0
    %p123 = por %p121, %p122
    %p124 = scmp.ne.s32.totalorder %s110, %s111
    %p125 = scmp.eq.s32.totalorder %s37, 1
    %p126 = por %p124, %p125
    %p128 = scmp.ne.s32.totalorder %s111, %s127
    %p129 = scmp.eq.s32.totalorder %s37, 0
    %p130 = por %p128, %p129
    %s131 = ssub.s32 %s38, %s50
    %s132 = ssub.s32 %s39, %s46
    %s133 = sor.u32 %s131, %s132
    %p134 = scmp.eq.s32.totalorder %s133, 0
    %s136 = sadd.s32 %s135, 1
    %s137 = scalar_select %p134, %s135, %s136
    %p140 = pneg %p134
    %p141 = scmp.eq.s32.totalorder %s31, 1
    %p142 = por %p140, %p141
    %p143 = scmp.ne.s32.totalorder %s135, %s138
    %p144 = scmp.eq.s32.totalorder %s31, 0
    %p145 = por %p143, %p144
    %p146 = scmp.ne.s32.totalorder %s135, %s138
    %p147 = scmp.eq.s32.totalorder %s36, 1
    %p148 = por %p146, %p147
    %p149 = scmp.ne.s32.totalorder %s138, %s139
    %p150 = scmp.eq.s32.totalorder %s36, 0
    %p151 = por %p149, %p150
    %p152 = scmp.ne.s32.totalorder %s138, %s139
    %p153 = scmp.eq.s32.totalorder %s37, 1
    %p154 = por %p152, %p153
    %p156 = scmp.ne.s32.totalorder %s139, %s155
    %p157 = scmp.eq.s32.totalorder %s37, 0
    %p158 = por %p156, %p157
    %s159 = ssub.s32 %s38, %s50
    %p160 = scmp.eq.s32.totalorder %s159, 0
    %s162 = sadd.s32 %s161, 1
    %s163 = scalar_select %p160, %s161, %s162
    %p166 = pneg %p160
    %p167 = scmp.eq.s32.totalorder %s31, 1
    %p168 = por %p166, %p167
    %p169 = scmp.ne.s32.totalorder %s161, %s164
    %p170 = scmp.eq.s32.totalorder %s31, 0
    %p171 = por %p169, %p170
    %p172 = scmp.ne.s32.totalorder %s161, %s164
    %p173 = scmp.eq.s32.totalorder %s36, 1
    %p174 = por %p172, %p173
    %p175 = scmp.ne.s32.totalorder %s164, %s165
    %p176 = scmp.eq.s32.totalorder %s36, 0
    %p177 = por %p175, %p176
    %p178 = scmp.ne.s32.totalorder %s164, %s165
    %p179 = scmp.eq.s32.totalorder %s37, 1
    %p180 = por %p178, %p179
    %p182 = scmp.ne.s32.totalorder %s165, %s181
    %p183 = scmp.eq.s32.totalorder %s37, 0
    %p184 = por %p182, %p183
    %s185 = ssub.s32 %s38, %s50
    %p186 = scmp.eq.s32.totalorder %s185, 0
    %s188 = sadd.s32 %s187, 1
    %s189 = scalar_select %p186, %s187, %s188
    %p192 = pneg %p186
    %p193 = scmp.eq.s32.totalorder %s31, 1
    %p194 = por %p192, %p193
    %p195 = scmp.ne.s32.totalorder %s187, %s190
    %p196 = scmp.eq.s32.totalorder %s31, 0
    %p197 = por %p195, %p196
    %p198 = scmp.ne.s32.totalorder %s187, %s190
    %p199 = scmp.eq.s32.totalorder %s36, 1
    %p200 = por %p198, %p199
    %p201 = scmp.ne.s32.totalorder %s190, %s191
    %p202 = scmp.eq.s32.totalorder %s36, 0
    %p203 = por %p201, %p202
    %p204 = scmp.ne.s32.totalorder %s190, %s191
    %p205 = scmp.eq.s32.totalorder %s37, 1
    %p206 = por %p204, %p205
    %p208 = scmp.ne.s32.totalorder %s191, %s207
    %p209 = scmp.eq.s32.totalorder %s37, 0
    %p210 = por %p208, %p209
    %s211 = ssub.s32 %s38, %s50
    %s212 = ssub.s32 %s39, %s46
    %s213 = sor.u32 %s211, %s212
    %p214 = scmp.eq.s32.totalorder %s213, 0
    %s216 = sadd.s32 %s215, 1
    %s217 = scalar_select %p214, %s215, %s216
    %p220 = pneg %p214
    %p221 = scmp.eq.s32.totalorder %s31, 1
    %p222 = por %p220, %p221
    %p223 = scmp.ne.s32.totalorder %s215, %s218
    %p224 = scmp.eq.s32.totalorder %s31, 0
    %p225 = por %p223, %p224
    %p226 = scmp.ne.s32.totalorder %s215, %s218
    %p227 = scmp.eq.s32.totalorder %s36, 1
    %p228 = por %p226, %p227
    %p229 = scmp.ne.s32.totalorder %s218, %s219
    %p230 = scmp.eq.s32.totalorder %s36, 0
    %p231 = por %p229, %p230
    %p232 = scmp.ne.s32.totalorder %s218, %s219
    %p233 = scmp.eq.s32.totalorder %s37, 1
    %p234 = por %p232, %p233
    %p236 = scmp.ne.s32.totalorder %s219, %s235
    %p237 = scmp.eq.s32.totalorder %s37, 0
    %p238 = por %p236, %p237
    %s239 = ssub.s32 %s38, %s50
    %s240 = ssub.s32 %s39, %s46
    %s241 = sor.u32 %s239, %s240
    %p242 = scmp.eq.s32.totalorder %s241, 0
    %s244 = sadd.s32 %s243, 1
    %s245 = scalar_select %p242, %s243, %s244
    %p248 = pneg %p242
    %p249 = scmp.eq.s32.totalorder %s31, 1
    %p250 = por %p248, %p249
    %p251 = scmp.ne.s32.totalorder %s243, %s246
    %p252 = scmp.eq.s32.totalorder %s31, 0
    %p253 = por %p251, %p252
    %p254 = scmp.ne.s32.totalorder %s243, %s246
    %p255 = scmp.eq.s32.totalorder %s36, 1
    %p256 = por %p254, %p255
    %p257 = scmp.ne.s32.totalorder %s246, %s247
    %p258 = scmp.eq.s32.totalorder %s36, 0
    %p259 = por %p257, %p258
    %p260 = scmp.ne.s32.totalorder %s246, %s247
    %p261 = scmp.eq.s32.totalorder %s37, 1
    %p262 = por %p260, %p261
    %p264 = scmp.ne.s32.totalorder %s247, %s263
    %p265 = scmp.eq.s32.totalorder %s37, 0
    %p266 = por %p264, %p265
    %s267 = ssub.s32 %s38, %s50
    %s268 = ssub.s32 %s39, %s46
    %s269 = sor.u32 %s267, %s268
    %p270 = scmp.eq.s32.totalorder %s269, 0
    %s272 = sadd.s32 %s271, 1
    %s273 = scalar_select %p270, %s271, %s272
    %p276 = pneg %p270
    %p277 = scmp.eq.s32.totalorder %s31, 1
    %p278 = por %p276, %p277
    %p279 = scmp.ne.s32.totalorder %s271, %s274
    %p280 = scmp.eq.s32.totalorder %s31, 0
    %p281 = por %p279, %p280
    %p282 = scmp.ne.s32.totalorder %s271, %s274
    %p283 = scmp.eq.s32.totalorder %s36, 1
    %p284 = por %p282, %p283
    %p285 = scmp.ne.s32.totalorder %s274, %s275
    %p286 = scmp.eq.s32.totalorder %s36, 0
    %p287 = por %p285, %p286
    %p288 = scmp.ne.s32.totalorder %s274, %s275
    %p289 = scmp.eq.s32.totalorder %s37, 1
    %p290 = por %p288, %p289
    %p292 = scmp.ne.s32.totalorder %s275, %s291
    %p293 = scmp.eq.s32.totalorder %s37, 0
    %p294 = por %p292, %p293
    %s295 = ssub.s32 %s38, %s50
    %s296 = ssub.s32 %s39, %s46
    %s297 = sor.u32 %s295, %s296
    %p298 = scmp.eq.s32.totalorder %s297, 0
    %s300 = sadd.s32 %s299, 1
    %s301 = scalar_select %p298, %s299, %s300
    %p304 = pneg %p298
    %p305 = scmp.eq.s32.totalorder %s31, 1
    %p306 = por %p304, %p305
    %p307 = scmp.ne.s32.totalorder %s299, %s302
    %p308 = scmp.eq.s32.totalorder %s31, 0
    %p309 = por %p307, %p308
    %p310 = scmp.ne.s32.totalorder %s299, %s302
    %p311 = scmp.eq.s32.totalorder %s36, 1
    %p312 = por %p310, %p311
    %p313 = scmp.ne.s32.totalorder %s302, %s303
    %p314 = scmp.eq.s32.totalorder %s36, 0
    %p315 = por %p313, %p314
    %p316 = scmp.ne.s32.totalorder %s302, %s303
    %p317 = scmp.eq.s32.totalorder %s37, 1
    %p318 = por %p316, %p317
    %p320 = scmp.ne.s32.totalorder %s303, %s319
    %p321 = scmp.eq.s32.totalorder %s37, 0
    %p322 = por %p320, %p321
    %s323 = ssub.s32 %s38, %s50
    %s324 = ssub.s32 %s39, %s46
    %s325 = sor.u32 %s323, %s324
    %p326 = scmp.eq.s32.totalorder %s325, 0
    %s328 = sadd.s32 %s327, 1
    %s329 = scalar_select %p326, %s327, %s328
    %p332 = pneg %p326
    %p333 = scmp.eq.s32.totalorder %s31, 1
    %p334 = por %p332, %p333
    %p335 = scmp.ne.s32.totalorder %s327, %s330
    %p336 = scmp.eq.s32.totalorder %s31, 0
    %p337 = por %p335, %p336
    %p338 = scmp.ne.s32.totalorder %s327, %s330
    %p339 = scmp.eq.s32.totalorder %s36, 1
    %p340 = por %p338, %p339
    %p341 = scmp.ne.s32.totalorder %s330, %s331
    %p342 = scmp.eq.s32.totalorder %s36, 0
    %p343 = por %p341, %p342
    %p344 = scmp.ne.s32.totalorder %s330, %s331
    %p345 = scmp.eq.s32.totalorder %s37, 1
    %p346 = por %p344, %p345
    %p348 = scmp.ne.s32.totalorder %s331, %s347
    %p349 = scmp.eq.s32.totalorder %s37, 0
    %p350 = por %p348, %p349
    %s351 = ssub.s32 %s38, %s50
    %s352 = ssub.s32 %s39, %s46
    %s353 = sor.u32 %s351, %s352
    %p354 = scmp.eq.s32.totalorder %s353, 0
    %s356 = sadd.s32 %s355, 1
    %s357 = scalar_select %p354, %s355, %s356
    %p360 = pneg %p354
    %p361 = scmp.eq.s32.totalorder %s31, 1
    %p362 = por %p360, %p361
    %p363 = scmp.ne.s32.totalorder %s355, %s358
    %p364 = scmp.eq.s32.totalorder %s31, 0
    %p365 = por %p363, %p364
    %p366 = scmp.ne.s32.totalorder %s355, %s358
    %p367 = scmp.eq.s32.totalorder %s36, 1
    %p368 = por %p366, %p367
    %p369 = scmp.ne.s32.totalorder %s358, %s359
    %p370 = scmp.eq.s32.totalorder %s36, 0
    %p371 = por %p369, %p370
    %p372 = scmp.ne.s32.totalorder %s358, %s359
    %p373 = scmp.eq.s32.totalorder %s37, 1
    %p374 = por %p372, %p373
    %p376 = scmp.ne.s32.totalorder %s359, %s375
    %p377 = scmp.eq.s32.totalorder %s37, 0
    %p378 = por %p376, %p377
    %s379 = ssub.s32 %s38, %s50
    %s380 = ssub.s32 %s39, %s46
    %s381 = sor.u32 %s379, %s380
    %p382 = scmp.eq.s32.totalorder %s381, 0
    %s384 = sadd.s32 %s383, 1
    %s385 = scalar_select %p382, %s383, %s384
    %p388 = pneg %p382
    %p389 = scmp.eq.s32.totalorder %s31, 1
    %p390 = por %p388, %p389
    %p391 = scmp.ne.s32.totalorder %s383, %s386
    %p392 = scmp.eq.s32.totalorder %s31, 0
    %p393 = por %p391, %p392
    %p394 = scmp.ne.s32.totalorder %s383, %s386
    %p395 = scmp.eq.s32.totalorder %s36, 1
    %p396 = por %p394, %p395
    %p397 = scmp.ne.s32.totalorder %s386, %s387
    %p398 = scmp.eq.s32.totalorder %s36, 0
    %p399 = por %p397, %p398
    %p400 = scmp.ne.s32.totalorder %s386, %s387
    %p401 = scmp.eq.s32.totalorder %s37, 1
    %p402 = por %p400, %p401
    %p404 = scmp.ne.s32.totalorder %s387, %s403
    %p405 = scmp.eq.s32.totalorder %s37, 0
    %p406 = por %p404, %p405
    %p407 = scmp.le.s32.totalorder 1, %s31
    %p408 = scmp.lt.s32.totalorder %s31, 3
    %p409 = pnand %p407, %p408
    %p410 = pneg %p409
    // Predicated region
    $region9: #{ga_encoder_apply.20} parent=5 // pred_check
      _
    $region10: #{ga_encoder_apply.20} parent=5 // pred_check_branch
      %412 = sbr.rel (%p409) target = $region12
    $region11: #{ga_encoder_apply.20} parent=5 // pred_region
      %s413 = ssub.s32 %s31, 1
    $region12: #{ga_encoder_apply.20} parent=5 // pred_fallthru
      _
    %p414 = scmp.lt.s32.totalorder %s31, 2
    // Predicated region
    $region13: #{ga_encoder_apply.20} parent=5 // pred_check
      %p415 = pneg %p414
    $region14: #{ga_encoder_apply.20} parent=5 // pred_check_branch
      %417 = sbr.rel (%p415) target = $region16
    $region15: #{ga_encoder_apply.20} parent=5 // pred_region
      // Predicated region
      $region17: #{ga_encoder_apply.20} parent=15 // pred_check
        %p418 = pneg %p65
      $region18: #{ga_encoder_apply.20} parent=15 // pred_check_branch
        %420 = sbr.rel (%p418) target = $region20
      $region19: #{ga_encoder_apply.20} parent=15 // pred_region
        %p421 = scmp.lt.s32.totalorder %s38, 1
        %s422 = scalar_select %p421, %s38, 1
        %p423 = scmp.lt.s32.totalorder %s39, 0
        %s424 = scalar_select %p423, %s39, 0
        %s425 = smul.addr %s424, 2
        %s426 = smul.addr %s422, 2
        %s427 = sadd.s32 %s425, %s426
        %s428 = smul.addr %s427, 8
        %s429 = scalar_lea.vmem %s2, %s428
      $region20: #{ga_encoder_apply.20} parent=15 // pred_fallthru
        _
      // Predicated region
      $region21: #{ga_encoder_apply.20} parent=15 // pred_check
        %p430 = pneg %p91
      $region22: #{ga_encoder_apply.20} parent=15 // pred_check_branch
        %432 = sbr.rel (%p430) target = $region24
      $region23: #{ga_encoder_apply.20} parent=15 // pred_region
        %p433 = scmp.lt.s32.totalorder %s38, 1
        %s434 = scalar_select %p433, %s38, 1
        %s435 = smul.addr %s434, 2
        %s436 = smul.addr %s435, 8
        %s437 = scalar_lea.vmem %s3, %s436
      $region24: #{ga_encoder_apply.20} parent=15 // pred_fallthru
        _
      // Predicated region
      $region25: #{ga_encoder_apply.20} parent=15 // pred_check
        %p438 = pneg %p117
      $region26: #{ga_encoder_apply.20} parent=15 // pred_check_branch
        %440 = sbr.rel (%p438) target = $region28
      $region27: #{ga_encoder_apply.20} parent=15 // pred_region
        %p441 = scmp.lt.s32.totalorder %s38, 1
        %s442 = scalar_select %p441, %s38, 1
        %s443 = smul.addr %s442, 2
        %s444 = smul.addr %s443, 8
        %s445 = scalar_lea.vmem %s4, %s444
      $region28: #{ga_encoder_apply.20} parent=15 // pred_fallthru
        _
      // Predicated region
      $region29: #{ga_encoder_apply.20} parent=15 // pred_check
        %p446 = pneg %p145
      $region30: #{ga_encoder_apply.20} parent=15 // pred_check_branch
        %448 = sbr.rel (%p446) target = $region32
      $region31: #{ga_encoder_apply.20} parent=15 // pred_region
        %p449 = scmp.lt.s32.totalorder %s38, 1
        %s450 = scalar_select %p449, %s38, 1
        %p451 = scmp.lt.s32.totalorder %s39, 0
        %s452 = scalar_select %p451, %s39, 0
        %s453 = smul.addr %s452, 2
        %s454 = smul.addr %s450, 2
        %s455 = sadd.s32 %s453, %s454
        %s456 = smul.addr %s455, 8
        %s457 = scalar_lea.vmem %s5, %s456
      $region32: #{ga_encoder_apply.20} parent=15 // pred_fallthru
        _
      // Predicated region
      $region33: #{ga_encoder_apply.20} parent=15 // pred_check
        %p458 = pneg %p171
      $region34: #{ga_encoder_apply.20} parent=15 // pred_check_branch
        %460 = sbr.rel (%p458) target = $region36
      $region35: #{ga_encoder_apply.20} parent=15 // pred_region
        %p461 = scmp.lt.s32.totalorder %s38, 1
        %s462 = scalar_select %p461, %s38, 1
        %s463 = smul.addr %s462, 2
        %s464 = smul.addr %s463, 8
        %s465 = scalar_lea.vmem %s6, %s464
      $region36: #{ga_encoder_apply.20} parent=15 // pred_fallthru
        _
      // Predicated region
      $region37: #{ga_encoder_apply.20} parent=15 // pred_check
        %p466 = pneg %p197
      $region38: #{ga_encoder_apply.20} parent=15 // pred_check_branch
        %468 = sbr.rel (%p466) target = $region40
      $region39: #{ga_encoder_apply.20} parent=15 // pred_region
        %p469 = scmp.lt.s32.totalorder %s38, 1
        %s470 = scalar_select %p469, %s38, 1
        %s471 = smul.addr %s470, 2
        %s472 = smul.addr %s471, 8
        %s473 = scalar_lea.vmem %s7, %s472
      $region40: #{ga_encoder_apply.20} parent=15 // pred_fallthru
        _
      // Predicated region
      $region41: #{ga_encoder_apply.20} parent=15 // pred_check
        %p474 = pneg %p225
      $region42: #{ga_encoder_apply.20} parent=15 // pred_check_branch
        %476 = sbr.rel (%p474) target = $region44
      $region43: #{ga_encoder_apply.20} parent=15 // pred_region
        %p477 = scmp.lt.s32.totalorder %s38, 1
        %s478 = scalar_select %p477, %s38, 1
        %p479 = scmp.lt.s32.totalorder %s39, 0
        %s480 = scalar_select %p479, %s39, 0
        %s481 = smul.addr %s478, 8
        %s482 = sadd.s32 %s480, %s481
        %s483 = smul.addr %s482, 8
        %s484 = scalar_lea.vmem %s8, %s483
      $region44: #{ga_encoder_apply.20} parent=15 // pred_fallthru
        _
      // Predicated region
      $region45: #{ga_encoder_apply.20} parent=15 // pred_check
        %p485 = pneg %p253
      $region46: #{ga_encoder_apply.20} parent=15 // pred_check_branch
        %487 = sbr.rel (%p485) target = $region48
      $region47: #{ga_encoder_apply.20} parent=15 // pred_region
        %s488 = smul.u32 8, %s39
        %p489 = scmp.lt.s32.totalorder %s38, 1
        %s490 = scalar_select %p489, %s38, 1
        %p491 = scmp.lt.s32.totalorder %s488, 7
        %s492 = scalar_select %p491, %s488, 7
        %s493 = smul.addr %s490, 8
        %s494 = sadd.s32 %s492, %s493
        %s495 = smul.addr %s494, 8
        %s496 = scalar_lea.vmem %s9, %s495
        %s497 = smul.u32 8, %s39
      $region48: #{ga_encoder_apply.20} parent=15 // pred_fallthru
        _
      // Predicated region
      $region49: #{ga_encoder_apply.20} parent=15 // pred_check
        %p498 = pneg %p281
      $region50: #{ga_encoder_apply.20} parent=15 // pred_check_branch
        %500 = sbr.rel (%p498) target = $region52
      $region51: #{ga_encoder_apply.20} parent=15 // pred_region
        %p501 = scmp.lt.s32.totalorder %s38, 1
        %s502 = scalar_select %p501, %s38, 1
        %p503 = scmp.lt.s32.totalorder %s39, 0
        %s504 = scalar_select %p503, %s39, 0
        %s505 = sadd.s32 %s504, %s502
        %s506 = smul.addr %s505, 8
        %s507 = scalar_lea.vmem %s10, %s506
      $region52: #{ga_encoder_apply.20} parent=15 // pred_fallthru
        _
      // Predicated region
      $region53: #{ga_encoder_apply.20} parent=15 // pred_check
        %p508 = pneg %p309
      $region54: #{ga_encoder_apply.20} parent=15 // pred_check_branch
        %510 = sbr.rel (%p508) target = $region56
      $region55: #{ga_encoder_apply.20} parent=15 // pred_region
        %p511 = scmp.lt.s32.totalorder %s38, 1
        %s512 = scalar_select %p511, %s38, 1
        %p513 = scmp.lt.s32.totalorder %s39, 0
        %s514 = scalar_select %p513, %s39, 0
        %s515 = sadd.s32 %s514, %s512
        %s516 = smul.addr %s515, 8
        %s517 = scalar_lea.vmem %s11, %s516
      $region56: #{ga_encoder_apply.20} parent=15 // pred_fallthru
        _
    $region16: #{ga_encoder_apply.20} parent=5 // pred_fallthru
      _
    %p518 = scmp.le.s32.totalorder 1, %s31
    %p519 = scmp.lt.s32.totalorder %s31, 3
    %p520 = pnand %p518, %p519
    %p521 = pneg %p520
    // Predicated region
    $region57: #{ga_encoder_apply.20} parent=5 // pred_check
      _
    $region58: #{ga_encoder_apply.20} parent=5 // pred_check_branch
      %523 = sbr.rel (%p520) target = $region60
    $region59: #{ga_encoder_apply.20} parent=5 // pred_region
      %s524 = ssub.s32 %s31, 1
      %p525 = scmp.lt.s32.totalorder %s40, 1
      %s526 = scalar_select %p525, %s40, 1
      %p527 = scmp.lt.s32.totalorder %s41, 0
      %s528 = scalar_select %p527, %s41, 0
      %s529 = smul.addr %s528, 2
      %s530 = smul.addr %s526, 2
      %s531 = sadd.s32 %s529, %s530
      %s532 = smul.addr %s531, 8
      %s533 = scalar_lea.vmem %s2, %s532
      %p534 = pneg %p71
      %p535 = pneg %p68
      %p536 = scmp.lt.s32.totalorder %s40, 1
      %s537 = scalar_select %p536, %s40, 1
      %s538 = smul.addr %s537, 2
      %s539 = smul.addr %s538, 8
      %s540 = scalar_lea.vmem %s3, %s539
      %p541 = pneg %p97
      %p542 = pneg %p94
      %p543 = scmp.lt.s32.totalorder %s40, 1
      %s544 = scalar_select %p543, %s40, 1
      %s545 = smul.addr %s544, 2
      %s546 = smul.addr %s545, 8
      %s547 = scalar_lea.vmem %s4, %s546
      %p548 = pneg %p123
      %p549 = pneg %p120
      %p550 = scmp.lt.s32.totalorder %s40, 1
      %s551 = scalar_select %p550, %s40, 1
      %p552 = scmp.lt.s32.totalorder %s41, 0
      %s553 = scalar_select %p552, %s41, 0
      %s554 = smul.addr %s553, 2
      %s555 = smul.addr %s551, 2
      %s556 = sadd.s32 %s554, %s555
      %s557 = smul.addr %s556, 8
      %s558 = scalar_lea.vmem %s5, %s557
      %p559 = pneg %p151
      %p560 = pneg %p148
      %p561 = scmp.lt.s32.totalorder %s40, 1
      %s562 = scalar_select %p561, %s40, 1
      %s563 = smul.addr %s562, 2
      %s564 = smul.addr %s563, 8
      %s565 = scalar_lea.vmem %s6, %s564
      %p566 = pneg %p177
      %p567 = pneg %p174
      %p568 = scmp.lt.s32.totalorder %s40, 1
      %s569 = scalar_select %p568, %s40, 1
      %s570 = smul.addr %s569, 2
      %s571 = smul.addr %s570, 8
      %s572 = scalar_lea.vmem %s7, %s571
      %p573 = pneg %p203
      %p574 = pneg %p200
      %p575 = scmp.lt.s32.totalorder %s40, 1
      %s576 = scalar_select %p575, %s40, 1
      %p577 = scmp.lt.s32.totalorder %s41, 0
      %s578 = scalar_select %p577, %s41, 0
      %s579 = smul.addr %s576, 8
      %s580 = sadd.s32 %s578, %s579
      %s581 = smul.addr %s580, 8
      %s582 = scalar_lea.vmem %s8, %s581
      %p583 = pneg %p231
      %p584 = pneg %p228
      %s585 = smul.u32 8, %s41
      %p586 = scmp.lt.s32.totalorder %s40, 1
      %s587 = scalar_select %p586, %s40, 1
      %p588 = scmp.lt.s32.totalorder %s585, 7
      %s589 = scalar_select %p588, %s585, 7
      %s590 = smul.addr %s587, 8
      %s591 = sadd.s32 %s589, %s590
      %s592 = smul.addr %s591, 8
      %s593 = scalar_lea.vmem %s9, %s592
      %p594 = pneg %p259
      %p595 = pneg %p256
      %p596 = scmp.lt.s32.totalorder %s40, 1
      %s597 = scalar_select %p596, %s40, 1
      %p598 = scmp.lt.s32.totalorder %s41, 0
      %s599 = scalar_select %p598, %s41, 0
      %s600 = sadd.s32 %s599, %s597
      %s601 = smul.addr %s600, 8
      %s602 = scalar_lea.vmem %s10, %s601
      %p603 = pneg %p287
      %p604 = pneg %p284
      %p605 = scmp.lt.s32.totalorder %s40, 1
      %s606 = scalar_select %p605, %s40, 1
      %p607 = scmp.lt.s32.totalorder %s41, 0
      %s608 = scalar_select %p607, %s41, 0
      %s609 = sadd.s32 %s608, %s606
      %s610 = smul.addr %s609, 8
      %s611 = scalar_lea.vmem %s11, %s610
      %p612 = pneg %p315
      %p613 = pneg %p312
      %p614 = pneg %p343
      %p615 = pneg %p340
      %p616 = scmp.lt.s32.totalorder %s40, 1
      %s617 = scalar_select %p616, %s40, 1
      %p618 = scmp.lt.s32.totalorder %s41, 0
      %s619 = scalar_select %p618, %s41, 0
      %s620 = smul.addr %s619, 2
      %s621 = smul.addr %s617, 2
      %s622 = sadd.s32 %s620, %s621
      %s623 = smul.addr %s622, 8
      %s624 = scalar_lea.vmem %s12, %s623
      %p625 = pneg %p371
      %p626 = pneg %p368
      %p627 = scmp.lt.s32.totalorder %s40, 1
      %s628 = scalar_select %p627, %s40, 1
      %p629 = scmp.lt.s32.totalorder %s41, 0
      %s630 = scalar_select %p629, %s41, 0
      %s631 = sadd.s32 %s630, %s628
      %s632 = smul.addr %s631, 8
      %s633 = scalar_lea.vmem %s13, %s632
      %p634 = pneg %p399
      %p635 = pneg %p396
      %p636 = scmp.lt.s32.totalorder %s40, 1
      %s637 = scalar_select %p636, %s40, 1
      %p638 = scmp.lt.s32.totalorder %s41, 0
      %s639 = scalar_select %p638, %s41, 0
      %s640 = smul.addr %s639, 2
      %s641 = smul.addr %s637, 2
      %s642 = sadd.s32 %s640, %s641
      %s643 = smul.addr %s642, 8
      %s644 = scalar_lea.vmem %s14, %s643
      %p645 = scmp.lt.s32.totalorder %s40, 1
      %s646 = scalar_select %p645, %s40, 1
      %p647 = scmp.lt.s32.totalorder %s41, 0
      %s648 = scalar_select %p647, %s41, 0
      %s649 = smul.addr %s648, 2
      %s650 = smul.addr %s646, 2
      %s651 = sadd.s32 %s649, %s650
      %s652 = smul.addr %s651, 8
      %s653 = scalar_lea.vmem %s2, %s652
      %p654 = scmp.lt.s32.totalorder %s40, 1
      %s655 = scalar_select %p654, %s40, 1
      %s656 = smul.addr %s655, 2
      %s657 = smul.addr %s656, 8
      %s658 = scalar_lea.vmem %s3, %s657
      %p659 = scmp.lt.s32.totalorder %s40, 1
      %s660 = scalar_select %p659, %s40, 1
      %s661 = smul.addr %s660, 2
      %s662 = smul.addr %s661, 8
      %s663 = scalar_lea.vmem %s4, %s662
      %p664 = scmp.lt.s32.totalorder %s40, 1
      %s665 = scalar_select %p664, %s40, 1
      %p666 = scmp.lt.s32.totalorder %s41, 0
      %s667 = scalar_select %p666, %s41, 0
      %s668 = smul.addr %s667, 2
      %s669 = smul.addr %s665, 2
      %s670 = sadd.s32 %s668, %s669
      %s671 = smul.addr %s670, 8
      %s672 = scalar_lea.vmem %s5, %s671
      %p673 = scmp.lt.s32.totalorder %s40, 1
      %s674 = scalar_select %p673, %s40, 1
      %s675 = smul.addr %s674, 2
      %s676 = smul.addr %s675, 8
      %s677 = scalar_lea.vmem %s6, %s676
      %p678 = scmp.lt.s32.totalorder %s40, 1
      %s679 = scalar_select %p678, %s40, 1
      %s680 = smul.addr %s679, 2
      %s681 = smul.addr %s680, 8
      %s682 = scalar_lea.vmem %s7, %s681
      %p683 = scmp.lt.s32.totalorder %s40, 1
      %s684 = scalar_select %p683, %s40, 1
      %p685 = scmp.lt.s32.totalorder %s41, 0
      %s686 = scalar_select %p685, %s41, 0
      %s687 = smul.addr %s684, 8
      %s688 = sadd.s32 %s686, %s687
      %s689 = smul.addr %s688, 8
      %s690 = scalar_lea.vmem %s8, %s689
      %s691 = smul.u32 8, %s41
      %p692 = scmp.lt.s32.totalorder %s40, 1
      %s693 = scalar_select %p692, %s40, 1
      %p694 = scmp.lt.s32.totalorder %s691, 7
      %s695 = scalar_select %p694, %s691, 7
      %s696 = smul.addr %s693, 8
      %s697 = sadd.s32 %s695, %s696
      %s698 = smul.addr %s697, 8
      %s699 = scalar_lea.vmem %s9, %s698
      %s700 = smul.u32 8, %s41
      %p701 = scmp.lt.s32.totalorder %s40, 1
      %s702 = scalar_select %p701, %s40, 1
      %p703 = scmp.lt.s32.totalorder %s41, 0
      %s704 = scalar_select %p703, %s41, 0
      %s705 = sadd.s32 %s704, %s702
      %s706 = smul.addr %s705, 8
      %s707 = scalar_lea.vmem %s10, %s706
      %p708 = scmp.lt.s32.totalorder %s40, 1
      %s709 = scalar_select %p708, %s40, 1
      %p710 = scmp.lt.s32.totalorder %s41, 0
      %s711 = scalar_select %p710, %s41, 0
      %s712 = sadd.s32 %s711, %s709
      %s713 = smul.addr %s712, 8
      %s714 = scalar_lea.vmem %s11, %s713
      %p715 = scmp.lt.s32.totalorder %s40, 1
      %s716 = scalar_select %p715, %s40, 1
      %p717 = scmp.lt.s32.totalorder %s41, 0
      %s718 = scalar_select %p717, %s41, 0
      %s719 = smul.addr %s718, 2
      %s720 = smul.addr %s716, 2
      %s721 = sadd.s32 %s719, %s720
      %s722 = smul.addr %s721, 8
      %s723 = scalar_lea.vmem %s12, %s722
      %p724 = scmp.lt.s32.totalorder %s40, 1
      %s725 = scalar_select %p724, %s40, 1
      %p726 = scmp.lt.s32.totalorder %s41, 0
      %s727 = scalar_select %p726, %s41, 0
      %s728 = sadd.s32 %s727, %s725
      %s729 = smul.addr %s728, 8
      %s730 = scalar_lea.vmem %s13, %s729
      %p731 = scmp.lt.s32.totalorder %s40, 1
      %s732 = scalar_select %p731, %s40, 1
      %p733 = scmp.lt.s32.totalorder %s41, 0
      %s734 = scalar_select %p733, %s41, 0
      %s735 = smul.addr %s734, 2
      %s736 = smul.addr %s732, 2
      %s737 = sadd.s32 %s735, %s736
      %s738 = smul.addr %s737, 8
      %s739 = scalar_lea.vmem %s14, %s738
      %v740 = vld [vmem:[%s653] sm:$0xff]
      %v741 = vld [vmem:[%s653 + $0x8] sm:$0xff]
      %v742 = vld [vmem:[%s658] sm:$0xff]
      %v743 = vld [vmem:[%s658 + $0x8] sm:$0xff]
      %v744 = vld [vmem:[%s663] sm:$0xff]
      %v745 = vld [vmem:[%s663 + $0x8] sm:$0xff]
      %v746 = vld [vmem:[%s672] sm:$0xff]
      %v747 = vld [vmem:[%s672 + $0x8] sm:$0xff]
      %v748 = vld [vmem:[%s677] sm:$0xff]
      %v749 = vld [vmem:[%s677 + $0x8] sm:$0xff]
      %v750 = vld [vmem:[%s682] sm:$0xff]
      %v751 = vld [vmem:[%s682 + $0x8] sm:$0xff]
      %v752 = vld [vmem:[%s690] sm:$0xff]
      %v753 = vld [vmem:[%s690 + $0x8] sm:$0xff]
      %v754 = vld [vmem:[%s690 + $0x10] sm:$0xff]
      %v755 = vld [vmem:[%s690 + $0x18] sm:$0xff]
      %v756 = vld [vmem:[%s690 + $0x20] sm:$0xff]
      %v757 = vld [vmem:[%s690 + $0x28] sm:$0xff]
      %v758 = vld [vmem:[%s690 + $0x30] sm:$0xff]
      %v759 = vld [vmem:[%s690 + $0x38] sm:$0xff]
      %v760 = vld [vmem:[%s699] sm:$0xff]
      %v761 = vld [vmem:[%s699 + $0x8] sm:$0xff]
      %v762 = vld [vmem:[%s699 + $0x10] sm:$0xff]
      %v763 = vld [vmem:[%s699 + $0x18] sm:$0xff]
      %v764 = vld [vmem:[%s699 + $0x20] sm:$0xff]
      %v765 = vld [vmem:[%s699 + $0x28] sm:$0xff]
      %v766 = vld [vmem:[%s699 + $0x30] sm:$0xff]
      %v767 = vld [vmem:[%s699 + $0x38] sm:$0xff]
      %v768 = vld [vmem:[%s707] sm:$0xff]
      %v769 = vld [vmem:[%s714] sm:$0xff]
      %v770 = vmax.f32 %v768, %v769
      %v771 = vsub.f32 1.0, %v770
      %v772 = vmul.f32 %v771, 100000.0
      %s773 = sld [smem:[#allocation4 + %s40]]
      %s774 = ssub.f32 1.0, %s773
      %vm775 = vcmask 261120
      %v777 = vsel %vm775, %v740, 0
      %v780 = vsel %vm775, %v742, 0
      %782 = vmatprep.subr.mxu0 0.0
      %783 = vmatpush1.xpose.msra.mxu0 %v780
      %784 = vmatprep.subr.mxu0 0.0
      %785 = vmatpush1.xpose.msra.mxu0 0.0
      %786 = vmatprep.subr.mxu0 0.0
      %787 = vmatpush1.xpose.msra.mxu0 0.0
      %788 = vmatprep.subr.mxu0 0.0
      %789 = vmatpush1.xpose.msra.mxu0 0.0
      %790 = vmatprep.subr.mxu0 0.0
      %791 = vmatpush1.xpose.msra.mxu0 0.0
      %792 = vmatprep.subr.mxu0 0.0
      %793 = vmatpush1.xpose.msra.mxu0 0.0
      %794 = vmatprep.subr.mxu0 0.0
      %795 = vmatpush1.xpose.msra.mxu0 0.0
      %796 = vmatprep.subr.mxu0 0.0
      %797 = vmatpush1.xpose.msra.mxu0 0.0
      %798 = vmatprep.subr.mxu0 0.0
      %799 = vmatpush1.xpose.msra.mxu0 0.0
      %800 = vmatprep.subr.mxu0 0.0
      %801 = vmatpush1.xpose.msra.mxu0 0.0
      %802 = vmatprep.subr.mxu0 0.0
      %803 = vmatpush1.xpose.msra.mxu0 0.0
      %804 = vmatprep.subr.mxu0 0.0
      %805 = vmatpush1.xpose.msra.mxu0 0.0
      %806 = vmatprep.subr.mxu0 0.0
      %807 = vmatpush1.xpose.msra.mxu0 0.0
      %808 = vmatprep.subr.mxu0 0.0
      %809 = vmatpush1.xpose.msra.mxu0 0.0
      %810 = vmatprep.subr.mxu0 0.0
      %811 = vmatpush1.xpose.msra.mxu0 0.0
      %812 = vmatprep.subr.mxu0 0.0
      %813 = vmatpush1.xpose.msra.mxu0 0.0
      %814 = vmatprep.subr.mxu0 0.0
      %815 = vmatpush1.xpose.msra.mxu0 0.0
      %816 = vmatprep.subr.mxu0 0.0
      %817 = vmatpush1.xpose.msra.mxu0 0.0
      %818 = vmatprep.subr.mxu0 0.0
      %819 = vmatpush1.xpose.msra.mxu0 0.0
      %820 = vmatprep.subr.mxu0 0.0
      %821 = vmatpush1.xpose.msra.mxu0 0.0
      %822 = vmatprep.subr.mxu0 0.0
      %823 = vmatpush1.xpose.msra.mxu0 0.0
      %824 = vmatprep.subr.mxu0 0.0
      %825 = vmatpush1.xpose.msra.mxu0 0.0
      %826 = vmatprep.subr.mxu0 0.0
      %827 = vmatpush1.xpose.msra.mxu0 0.0
      %828 = vmatprep.subr.mxu0 0.0
      %829 = vmatpush1.xpose.msra.mxu0 0.0
      %830 = vmatprep.subr.mxu0 0.0
      %831 = vmatpush1.xpose.msra.mxu0 0.0
      %832 = vmatprep.subr.mxu0 0.0
      %833 = vmatpush1.xpose.msra.mxu0 0.0
      %834 = vmatprep.subr.mxu0 0.0
      %835 = vmatpush1.xpose.msra.mxu0 0.0
      %836 = vmatprep.subr.mxu0 0.0
      %837 = vmatpush1.xpose.msra.mxu0 0.0
      %838 = vmatprep.subr.mxu0 0.0
      %839 = vmatpush1.xpose.msra.mxu0 0.0
      %840 = vmatprep.subr.mxu0 0.0
      %841 = vmatpush1.xpose.msra.mxu0 0.0
      %842 = vmatprep.subr.mxu0 0.0
      %843 = vmatpush1.xpose.msra.mxu0 0.0
      %844 = vmatprep.subr.mxu0 0.0
      %845 = vmatpush1.xpose.msra.mxu0 0.0
      %846 = vmatprep.mubr.f32.mxu0 0.0
      %847 = vmatmul.mubr.f32.gmra.mrb[0].mxu0 %v777
      %v848 = vpop.f32.mrb[0].mxu0
      %v849 = vadd.f32 0.0, %v848
      %v850 = vpop.f32.mrb[0].mxu0
      %851 = vdwg.mxu0
      %v852 = vmul.f32 %v849, 0.17677669
      %vm853 = vcmask 195584
      %v855 = vsel %vm853, %v746, 0
      %v858 = vsel %vm853, %v748, 0
      %860 = vmatprep.subr.mxu0 0.0
      %861 = vmatpush1.xpose.msra.mxu0 %v858
      %862 = vmatprep.subr.mxu0 0.0
      %863 = vmatpush1.xpose.msra.mxu0 0.0
      %864 = vmatprep.subr.mxu0 0.0
      %865 = vmatpush1.xpose.msra.mxu0 0.0
      %866 = vmatprep.subr.mxu0 0.0
      %867 = vmatpush1.xpose.msra.mxu0 0.0
      %868 = vmatprep.subr.mxu0 0.0
      %869 = vmatpush1.xpose.msra.mxu0 0.0
      %870 = vmatprep.subr.mxu0 0.0
      %871 = vmatpush1.xpose.msra.mxu0 0.0
      %872 = vmatprep.subr.mxu0 0.0
      %873 = vmatpush1.xpose.msra.mxu0 0.0
      %874 = vmatprep.subr.mxu0 0.0
      %875 = vmatpush1.xpose.msra.mxu0 0.0
      %876 = vmatprep.subr.mxu0 0.0
      %877 = vmatpush1.xpose.msra.mxu0 0.0
      %878 = vmatprep.subr.mxu0 0.0
      %879 = vmatpush1.xpose.msra.mxu0 0.0
      %880 = vmatprep.subr.mxu0 0.0
      %881 = vmatpush1.xpose.msra.mxu0 0.0
      %882 = vmatprep.subr.mxu0 0.0
      %883 = vmatpush1.xpose.msra.mxu0 0.0
      %884 = vmatprep.subr.mxu0 0.0
      %885 = vmatpush1.xpose.msra.mxu0 0.0
      %886 = vmatprep.subr.mxu0 0.0
      %887 = vmatpush1.xpose.msra.mxu0 0.0
      %888 = vmatprep.subr.mxu0 0.0
      %889 = vmatpush1.xpose.msra.mxu0 0.0
      %890 = vmatprep.subr.mxu0 0.0
      %891 = vmatpush1.xpose.msra.mxu0 0.0
      %892 = vmatprep.subr.mxu0 0.0
      %893 = vmatpush1.xpose.msra.mxu0 0.0
      %894 = vmatprep.subr.mxu0 0.0
      %895 = vmatpush1.xpose.msra.mxu0 0.0
      %896 = vmatprep.subr.mxu0 0.0
      %897 = vmatpush1.xpose.msra.mxu0 0.0
      %898 = vmatprep.subr.mxu0 0.0
      %899 = vmatpush1.xpose.msra.mxu0 0.0
      %900 = vmatprep.subr.mxu0 0.0
      %901 = vmatpush1.xpose.msra.mxu0 0.0
      %902 = vmatprep.subr.mxu0 0.0
      %903 = vmatpush1.xpose.msra.mxu0 0.0
      %904 = vmatprep.subr.mxu0 0.0
      %905 = vmatpush1.xpose.msra.mxu0 0.0
      %906 = vmatprep.subr.mxu0 0.0
      %907 = vmatpush1.xpose.msra.mxu0 0.0
      %908 = vmatprep.subr.mxu0 0.0
      %909 = vmatpush1.xpose.msra.mxu0 0.0
      %910 = vmatprep.subr.mxu0 0.0
      %911 = vmatpush1.xpose.msra.mxu0 0.0
      %912 = vmatprep.subr.mxu0 0.0
      %913 = vmatpush1.xpose.msra.mxu0 0.0
      %914 = vmatprep.subr.mxu0 0.0
      %915 = vmatpush1.xpose.msra.mxu0 0.0
      %916 = vmatprep.subr.mxu0 0.0
      %917 = vmatpush1.xpose.msra.mxu0 0.0
      %918 = vmatprep.subr.mxu0 0.0
      %919 = vmatpush1.xpose.msra.mxu0 0.0
      %920 = vmatprep.subr.mxu0 0.0
      %921 = vmatpush1.xpose.msra.mxu0 0.0
      %922 = vmatprep.subr.mxu0 0.0
      %923 = vmatpush1.xpose.msra.mxu0 0.0
      %924 = vmatprep.mubr.f32.mxu0 0.0
      %925 = vmatmul.mubr.f32.gmra.mrb[0].mxu0 %v855
      %v926 = vpop.f32.mrb[0].mxu0
      %v927 = vadd.f32 0.0, %v926
      %v928 = vpop.f32.mrb[0].mxu0
      %929 = vdwg.mxu0
      %v930 = vmul.f32 %v746, %v746
      %v931 = vsel %vm853, %v930, 0.0
      %932 = vadd.xlane.f32.xlu0 %v931
      %v933 = vpop.xlane.xlu0 %932
      %v934 = vmul.f32 %v748, %v748
      %v936 = vsel %vm853, 1.0, 0
      %v939 = vsel %vm853, %v934, 0
      %941 = vmatprep.subr.mxu0 0.0
      %942 = vmatpush1.xpose.msra.mxu0 %v939
      %943 = vmatprep.subr.mxu0 0.0
      %944 = vmatpush1.xpose.msra.mxu0 0.0
      %945 = vmatprep.subr.mxu0 0.0
      %946 = vmatpush1.xpose.msra.mxu0 0.0
      %947 = vmatprep.subr.mxu0 0.0
      %948 = vmatpush1.xpose.msra.mxu0 0.0
      %949 = vmatprep.subr.mxu0 0.0
      %950 = vmatpush1.xpose.msra.mxu0 0.0
      %951 = vmatprep.subr.mxu0 0.0
      %952 = vmatpush1.xpose.msra.mxu0 0.0
      %953 = vmatprep.subr.mxu0 0.0
      %954 = vmatpush1.xpose.msra.mxu0 0.0
      %955 = vmatprep.subr.mxu0 0.0
      %956 = vmatpush1.xpose.msra.mxu0 0.0
      %957 = vmatprep.subr.mxu0 0.0
      %958 = vmatpush1.xpose.msra.mxu0 0.0
      %959 = vmatprep.subr.mxu0 0.0
      %960 = vmatpush1.xpose.msra.mxu0 0.0
      %961 = vmatprep.subr.mxu0 0.0
      %962 = vmatpush1.xpose.msra.mxu0 0.0
      %963 = vmatprep.subr.mxu0 0.0
      %964 = vmatpush1.xpose.msra.mxu0 0.0
      %965 = vmatprep.subr.mxu0 0.0
      %966 = vmatpush1.xpose.msra.mxu0 0.0
      %967 = vmatprep.subr.mxu0 0.0
      %968 = vmatpush1.xpose.msra.mxu0 0.0
      %969 = vmatprep.subr.mxu0 0.0
      %970 = vmatpush1.xpose.msra.mxu0 0.0
      %971 = vmatprep.subr.mxu0 0.0
      %972 = vmatpush1.xpose.msra.mxu0 0.0
      %973 = vmatprep.subr.mxu0 0.0
      %974 = vmatpush1.xpose.msra.mxu0 0.0
      %975 = vmatprep.subr.mxu0 0.0
      %976 = vmatpush1.xpose.msra.mxu0 0.0
      %977 = vmatprep.subr.mxu0 0.0
      %978 = vmatpush1.xpose.msra.mxu0 0.0
      %979 = vmatprep.subr.mxu0 0.0
      %980 = vmatpush1.xpose.msra.mxu0 0.0
      %981 = vmatprep.subr.mxu0 0.0
      %982 = vmatpush1.xpose.msra.mxu0 0.0
      %983 = vmatprep.subr.mxu0 0.0
      %984 = vmatpush1.xpose.msra.mxu0 0.0
      %985 = vmatprep.subr.mxu0 0.0
      %986 = vmatpush1.xpose.msra.mxu0 0.0
      %987 = vmatprep.subr.mxu0 0.0
      %988 = vmatpush1.xpose.msra.mxu0 0.0
      %989 = vmatprep.subr.mxu0 0.0
      %990 = vmatpush1.xpose.msra.mxu0 0.0
      %991 = vmatprep.subr.mxu0 0.0
      %992 = vmatpush1.xpose.msra.mxu0 0.0
      %993 = vmatprep.subr.mxu0 0.0
      %994 = vmatpush1.xpose.msra.mxu0 0.0
      %995 = vmatprep.subr.mxu0 0.0
      %996 = vmatpush1.xpose.msra.mxu0 0.0
      %997 = vmatprep.subr.mxu0 0.0
      %998 = vmatpush1.xpose.msra.mxu0 0.0
      %999 = vmatprep.subr.mxu0 0.0
      %1000 = vmatpush1.xpose.msra.mxu0 0.0
      %1001 = vmatprep.subr.mxu0 0.0
      %1002 = vmatpush1.xpose.msra.mxu0 0.0
      %1003 = vmatprep.subr.mxu0 0.0
      %1004 = vmatpush1.xpose.msra.mxu0 0.0
      %1005 = vmatprep.mubr.f32.mxu0 0.0
      %1006 = vmatmul.mubr.f32.gmra.mrb[0].mxu0 %v936
      %v1007 = vpop.f32.mrb[0].mxu0
      %v1008 = vadd.f32 0.0, %v1007
      %v1009 = vpop.f32.mrb[0].mxu0
      %1010 = vdwg.mxu0
      %v1011 = vlaneseq
      %v1012 = vshrl.u32 %v1011, 7
      %v1013 = vsub.s32 0, %v1012
      %v1014 = vrot.slane %v1008, %v1013
      %v1015 = vadd.f32 %v933, %v1014
      %v1016 = vmul.f32 %v927, 2.0
      %v1017 = vsub.f32 %v1015, %v1016
      %v1018 = vadd.f32 %v852, %v752
      %s1019 = sld [smem:[#allocation5]]
      %v1020 = vstv %s1019
      %v1021 = vmul.f32 %v1017, %v1020
      %v1022 = vadd.f32 %v1018, %v1021
      %v1023 = vmul.f32 %v1022, 0.57735026
      %v1024 = vsub.f32 %v1023, %v772
      %vm1025 = vcmask 64512
      %v1026 = vsel %vm1025, %v1024, -inf
      %1027 = vmax.xlane.f32.xlu0 %v1026
      %v1028 = vpop.xlane.xlu0 %1027
      %v1029 = vsub.f32 %v1024, %v1028
      %v1030 = vmul.f32 %v1029, 1.442695
      %v1031 = vpow.pop %v1030
      %v1032 = vmul.f32 %v1031, %v768
      %v1033 = vmul.f32 %v1031, %v769
      %v1034 = vsel %vm1025, %v1032, 0.0
      %1035 = vadd.xlane.f32.xlu0 %v1034
      %v1036 = vpop.xlane.xlu0 %1035
      %v1037 = vsel %vm1025, %v1033, 0.0
      %1038 = vadd.xlane.f32.xlu0 %v1037
      %v1039 = vpop.xlane.xlu0 %1038
      %vm1040 = vcmp.gt.f32.partialorder %v1036, 0.0
      %v1041 = vsel %vm1040, %v1036, 1.0
      %v1042 = vrcp.pop %v1041
      %vm1043 = vcmp.gt.f32.partialorder %v1039, 0.0
      %v1044 = vsel %vm1043, %v1039, 1.0
      %v1045 = vrcp.pop %v1044
      %v1046 = vstv %s773
      %v1047 = vmul.f32 %v1042, %v1046
      %v1048 = vmul.f32 %v1032, %v1047
      %v1049 = vstv %s774
      %v1050 = vmul.f32 %v1045, %v1049
      %v1051 = vmul.f32 %v1033, %v1050
      %v1052 = vadd.f32 %v1048, %v1051
      %v1054 = vcombine.high %v1052, %v1052
      %v1056 = vunpack.c.l.s4 1966171168
      %v1057 = vunpack.c.0.s8 %v1056
      %v1058 = vlaneseq
      %v1059 = vshrl.u32 %v1058, 7
      %v1060 = vsub.s32 %v1057, %v1059
      %v1061 = vrot.slane %v1052, %v1060
      %v1063 = vunpack.c.l.s4 1966171168
      %v1064 = vunpack.c.0.s8 %v1063
      %v1065 = vlaneseq
      %v1066 = vshrl.u32 %v1065, 7
      %v1067 = vsub.s32 %v1064, %v1066
      %v1068 = vrot.slane %v1054, %v1067
      %v1069 = vcombine.high %v1061, %v1061
      %v1070 = vcombine.high %v1068, %v1068
      %v1072 = vunpack.c.l.s4 1966171168
      %v1073 = vunpack.c.0.s8 %v1072
      %v1074 = vlaneseq
      %v1075 = vshrl.u32 %v1074, 7
      %v1076 = vsub.s32 %v1073, %v1075
      %v1077 = vrot.slane %v1061, %v1076
      %v1079 = vunpack.c.l.s4 1966171168
      %v1080 = vunpack.c.0.s8 %v1079
      %v1081 = vlaneseq
      %v1082 = vshrl.u32 %v1081, 7
      %v1083 = vsub.s32 %v1080, %v1082
      %v1084 = vrot.slane %v1068, %v1083
      %v1086 = vunpack.c.l.s4 1966171168
      %v1087 = vunpack.c.0.s8 %v1086
      %v1088 = vlaneseq
      %v1089 = vshrl.u32 %v1088, 7
      %v1090 = vsub.s32 %v1087, %v1089
      %v1091 = vrot.slane %v1069, %v1090
      %v1093 = vunpack.c.l.s4 1966171168
      %v1094 = vunpack.c.0.s8 %v1093
      %v1095 = vlaneseq
      %v1096 = vshrl.u32 %v1095, 7
      %v1097 = vsub.s32 %v1094, %v1096
      %v1098 = vrot.slane %v1070, %v1097
      %v1099 = vcombine.high %v1077, %v1077
      %v1100 = vcombine.high %v1084, %v1084
      %v1101 = vcombine.high %v1091, %v1091
      %v1102 = vcombine.high %v1098, %v1098
      %vm1111 = vcmask 57344
      %1112 = vst.msk [vmem:[#allocation2] sm:$0x1] %vm1111, %v1077
      %1113 = vst.msk [vmem:[#allocation2 + $0x8] sm:$0x1] %vm1111, %v1091
      %1114 = vst.msk [vmem:[#allocation2 + $0x10] sm:$0x1] %vm1111, %v1099
      %1115 = vst.msk [vmem:[#allocation2 + $0x18] sm:$0x1] %vm1111, %v1101
      %1116 = vst.msk [vmem:[#allocation2 + $0x20] sm:$0x1] %vm1111, %v1084
      %1117 = vst.msk [vmem:[#allocation2 + $0x28] sm:$0x1] %vm1111, %v1098
      %1118 = vst.msk [vmem:[#allocation2 + $0x30] sm:$0x1] %vm1111, %v1100
      %1119 = vst.msk [vmem:[#allocation2 + $0x38] sm:$0x1] %vm1111, %v1102
      %v1120 = vsel %vm1025, %v1052, 0
      %1122 = vmatprep.subr.mxu0 0.0
      %1123 = vmatpush1.msra.mxu0 %v744
      %1124 = vmatprep.subr.mxu0 0.0
      %1125 = vmatpush1.msra.mxu0 0.0
      %1126 = vmatprep.subr.mxu0 0.0
      %1127 = vmatpush1.msra.mxu0 0.0
      %1128 = vmatprep.subr.mxu0 0.0
      %1129 = vmatpush1.msra.mxu0 0.0
      %1130 = vmatprep.subr.mxu0 0.0
      %1131 = vmatpush1.msra.mxu0 0.0
      %1132 = vmatprep.subr.mxu0 0.0
      %1133 = vmatpush1.msra.mxu0 0.0
      %1134 = vmatprep.subr.mxu0 0.0
      %1135 = vmatpush1.msra.mxu0 0.0
      %1136 = vmatprep.subr.mxu0 0.0
      %1137 = vmatpush1.msra.mxu0 0.0
      %1138 = vmatprep.subr.mxu0 0.0
      %1139 = vmatpush1.msra.mxu0 0.0
      %1140 = vmatprep.subr.mxu0 0.0
      %1141 = vmatpush1.msra.mxu0 0.0
      %1142 = vmatprep.subr.mxu0 0.0
      %1143 = vmatpush1.msra.mxu0 0.0
      %1144 = vmatprep.subr.mxu0 0.0
      %1145 = vmatpush1.msra.mxu0 0.0
      %1146 = vmatprep.subr.mxu0 0.0
      %1147 = vmatpush1.msra.mxu0 0.0
      %1148 = vmatprep.subr.mxu0 0.0
      %1149 = vmatpush1.msra.mxu0 0.0
      %1150 = vmatprep.subr.mxu0 0.0
      %1151 = vmatpush1.msra.mxu0 0.0
      %1152 = vmatprep.subr.mxu0 0.0
      %1153 = vmatpush1.msra.mxu0 0.0
      %1154 = vmatprep.subr.mxu0 0.0
      %1155 = vmatpush1.msra.mxu0 0.0
      %1156 = vmatprep.subr.mxu0 0.0
      %1157 = vmatpush1.msra.mxu0 0.0
      %1158 = vmatprep.subr.mxu0 0.0
      %1159 = vmatpush1.msra.mxu0 0.0
      %1160 = vmatprep.subr.mxu0 0.0
      %1161 = vmatpush1.msra.mxu0 0.0
      %1162 = vmatprep.subr.mxu0 0.0
      %1163 = vmatpush1.msra.mxu0 0.0
      %1164 = vmatprep.subr.mxu0 0.0
      %1165 = vmatpush1.msra.mxu0 0.0
      %1166 = vmatprep.subr.mxu0 0.0
      %1167 = vmatpush1.msra.mxu0 0.0
      %1168 = vmatprep.subr.mxu0 0.0
      %1169 = vmatpush1.msra.mxu0 0.0
      %1170 = vmatprep.subr.mxu0 0.0
      %1171 = vmatpush1.msra.mxu0 0.0
      %1172 = vmatprep.subr.mxu0 0.0
      %1173 = vmatpush1.msra.mxu0 0.0
      %1174 = vmatprep.subr.mxu0 0.0
      %1175 = vmatpush1.msra.mxu0 0.0
      %1176 = vmatprep.subr.mxu0 0.0
      %1177 = vmatpush1.msra.mxu0 0.0
      %1178 = vmatprep.subr.mxu0 0.0
      %1179 = vmatpush1.msra.mxu0 0.0
      %1180 = vmatprep.subr.mxu0 0.0
      %1181 = vmatpush1.msra.mxu0 0.0
      %1182 = vmatprep.subr.mxu0 0.0
      %1183 = vmatpush1.msra.mxu0 0.0
      %1184 = vmatprep.subr.mxu0 0.0
      %1185 = vmatpush1.msra.mxu0 0.0
      %1186 = vmatprep.mubr.f32.mxu0 0.0
      %1187 = vmatmul.mubr.f32.gmra.mrb[0].mxu0 %v1120
      %v1188 = vpop.f32.mrb[0].mxu0
      %v1189 = vadd.f32 0.0, %v1188
      %v1190 = vpop.f32.mrb[0].mxu0
      %1191 = vdwg.mxu0
      %1192 = vst.msk [vmem:[%s723] sm:$0xff] %vm775, %v1189
      %1193 = vmatprep.subr.mxu0 0.0
      %1194 = vmatpush1.msra.mxu0 %v750
      %1195 = vmatprep.subr.mxu0 0.0
      %1196 = vmatpush1.msra.mxu0 0.0
      %1197 = vmatprep.subr.mxu0 0.0
      %1198 = vmatpush1.msra.mxu0 0.0
      %1199 = vmatprep.subr.mxu0 0.0
      %1200 = vmatpush1.msra.mxu0 0.0
      %1201 = vmatprep.subr.mxu0 0.0
      %1202 = vmatpush1.msra.mxu0 0.0
      %1203 = vmatprep.subr.mxu0 0.0
      %1204 = vmatpush1.msra.mxu0 0.0
      %1205 = vmatprep.subr.mxu0 0.0
      %1206 = vmatpush1.msra.mxu0 0.0
      %1207 = vmatprep.subr.mxu0 0.0
      %1208 = vmatpush1.msra.mxu0 0.0
      %1209 = vmatprep.subr.mxu0 0.0
      %1210 = vmatpush1.msra.mxu0 0.0
      %1211 = vmatprep.subr.mxu0 0.0
      %1212 = vmatpush1.msra.mxu0 0.0
      %1213 = vmatprep.subr.mxu0 0.0
      %1214 = vmatpush1.msra.mxu0 0.0
      %1215 = vmatprep.subr.mxu0 0.0
      %1216 = vmatpush1.msra.mxu0 0.0
      %1217 = vmatprep.subr.mxu0 0.0
      %1218 = vmatpush1.msra.mxu0 0.0
      %1219 = vmatprep.subr.mxu0 0.0
      %1220 = vmatpush1.msra.mxu0 0.0
      %1221 = vmatprep.subr.mxu0 0.0
      %1222 = vmatpush1.msra.mxu0 0.0
      %1223 = vmatprep.subr.mxu0 0.0
      %1224 = vmatpush1.msra.mxu0 0.0
      %1225 = vmatprep.subr.mxu0 0.0
      %1226 = vmatpush1.msra.mxu0 0.0
      %1227 = vmatprep.subr.mxu0 0.0
      %1228 = vmatpush1.msra.mxu0 0.0
      %1229 = vmatprep.subr.mxu0 0.0
      %1230 = vmatpush1.msra.mxu0 0.0
      %1231 = vmatprep.subr.mxu0 0.0
      %1232 = vmatpush1.msra.mxu0 0.0
      %1233 = vmatprep.subr.mxu0 0.0
      %1234 = vmatpush1.msra.mxu0 0.0
      %1235 = vmatprep.subr.mxu0 0.0
      %1236 = vmatpush1.msra.mxu0 0.0
      %1237 = vmatprep.subr.mxu0 0.0
      %1238 = vmatpush1.msra.mxu0 0.0
      %1239 = vmatprep.subr.mxu0 0.0
      %1240 = vmatpush1.msra.mxu0 0.0
      %1241 = vmatprep.subr.mxu0 0.0
      %1242 = vmatpush1.msra.mxu0 0.0
      %1243 = vmatprep.subr.mxu0 0.0
      %1244 = vmatpush1.msra.mxu0 0.0
      %1245 = vmatprep.subr.mxu0 0.0
      %1246 = vmatpush1.msra.mxu0 0.0
      %1247 = vmatprep.subr.mxu0 0.0
      %1248 = vmatpush1.msra.mxu0 0.0
      %1249 = vmatprep.subr.mxu0 0.0
      %1250 = vmatpush1.msra.mxu0 0.0
      %1251 = vmatprep.subr.mxu0 0.0
      %1252 = vmatpush1.msra.mxu0 0.0
      %1253 = vmatprep.subr.mxu0 0.0
      %1254 = vmatpush1.msra.mxu0 0.0
      %1255 = vmatprep.subr.mxu0 0.0
      %1256 = vmatpush1.msra.mxu0 0.0
      %1257 = vmatprep.mubr.f32.mxu0 0.0
      %1258 = vmatmul.mubr.f32.gmra.mrb[0].mxu0 %v1120
      %v1259 = vpop.f32.mrb[0].mxu0
      %v1260 = vadd.f32 0.0, %v1259
      %v1261 = vpop.f32.mrb[0].mxu0
      %1262 = vdwg.mxu0
      %1263 = vst.msk [vmem:[%s739] sm:$0xff] %vm853, %v1260
      %1264 = vrot.lane.b32.xlu0 %v740, 96
      %v1265 = vpop.permute.xlu0 %1264
      %1266 = vrot.lane.b32.xlu0 %v742, 96
      %v1267 = vpop.permute.xlu0 %1266
      %v1268 = vsel %vm775, %v1265, 0
      %v1270 = vsel %vm775, %v1267, 0
      %1272 = vmatprep.subr.mxu0 0.0
      %1273 = vmatpush1.xpose.msra.mxu0 %v1270
      %1274 = vmatprep.subr.mxu0 0.0
      %1275 = vmatpush1.xpose.msra.mxu0 0.0
      %1276 = vmatprep.subr.mxu0 0.0
      %1277 = vmatpush1.xpose.msra.mxu0 0.0
      %1278 = vmatprep.subr.mxu0 0.0
      %1279 = vmatpush1.xpose.msra.mxu0 0.0
      %1280 = vmatprep.subr.mxu0 0.0
      %1281 = vmatpush1.xpose.msra.mxu0 0.0
      %1282 = vmatprep.subr.mxu0 0.0
      %1283 = vmatpush1.xpose.msra.mxu0 0.0
      %1284 = vmatprep.subr.mxu0 0.0
      %1285 = vmatpush1.xpose.msra.mxu0 0.0
      %1286 = vmatprep.subr.mxu0 0.0
      %1287 = vmatpush1.xpose.msra.mxu0 0.0
      %1288 = vmatprep.subr.mxu0 0.0
      %1289 = vmatpush1.xpose.msra.mxu0 0.0
      %1290 = vmatprep.subr.mxu0 0.0
      %1291 = vmatpush1.xpose.msra.mxu0 0.0
      %1292 = vmatprep.subr.mxu0 0.0
      %1293 = vmatpush1.xpose.msra.mxu0 0.0
      %1294 = vmatprep.subr.mxu0 0.0
      %1295 = vmatpush1.xpose.msra.mxu0 0.0
      %1296 = vmatprep.subr.mxu0 0.0
      %1297 = vmatpush1.xpose.msra.mxu0 0.0
      %1298 = vmatprep.subr.mxu0 0.0
      %1299 = vmatpush1.xpose.msra.mxu0 0.0
      %1300 = vmatprep.subr.mxu0 0.0
      %1301 = vmatpush1.xpose.msra.mxu0 0.0
      %1302 = vmatprep.subr.mxu0 0.0
      %1303 = vmatpush1.xpose.msra.mxu0 0.0
      %1304 = vmatprep.subr.mxu0 0.0
      %1305 = vmatpush1.xpose.msra.mxu0 0.0
      %1306 = vmatprep.subr.mxu0 0.0
      %1307 = vmatpush1.xpose.msra.mxu0 0.0
      %1308 = vmatprep.subr.mxu0 0.0
      %1309 = vmatpush1.xpose.msra.mxu0 0.0
      %1310 = vmatprep.subr.mxu0 0.0
      %1311 = vmatpush1.xpose.msra.mxu0 0.0
      %1312 = vmatprep.subr.mxu0 0.0
      %1313 = vmatpush1.xpose.msra.mxu0 0.0
      %1314 = vmatprep.subr.mxu0 0.0
      %1315 = vmatpush1.xpose.msra.mxu0 0.0
      %1316 = vmatprep.subr.mxu0 0.0
      %1317 = vmatpush1.xpose.msra.mxu0 0.0
      %1318 = vmatprep.subr.mxu0 0.0
      %1319 = vmatpush1.xpose.msra.mxu0 0.0
      %1320 = vmatprep.subr.mxu0 0.0
      %1321 = vmatpush1.xpose.msra.mxu0 0.0
      %1322 = vmatprep.subr.mxu0 0.0
      %1323 = vmatpush1.xpose.msra.mxu0 0.0
      %1324 = vmatprep.subr.mxu0 0.0
      %1325 = vmatpush1.xpose.msra.mxu0 0.0
      %1326 = vmatprep.subr.mxu0 0.0
      %1327 = vmatpush1.xpose.msra.mxu0 0.0
      %1328 = vmatprep.subr.mxu0 0.0
      %1329 = vmatpush1.xpose.msra.mxu0 0.0
      %1330 = vmatprep.subr.mxu0 0.0
      %1331 = vmatpush1.xpose.msra.mxu0 0.0
      %1332 = vmatprep.subr.mxu0 0.0
      %1333 = vmatpush1.xpose.msra.mxu0 0.0
      %1334 = vmatprep.subr.mxu0 0.0
      %1335 = vmatpush1.xpose.msra.mxu0 0.0
      %1336 = vmatprep.mubr.f32.mxu0 0.0
      %1337 = vmatmul.mubr.f32.gmra.mrb[0].mxu0 %v1268
      %v1338 = vpop.f32.mrb[0].mxu0
      %v1339 = vadd.f32 0.0, %v1338
      %v1340 = vpop.f32.mrb[0].mxu0
      %1341 = vdwg.mxu0
      %v1342 = vmul.f32 %v1339, 0.17677669
      %1343 = vrot.lane.b32.xlu0 %v746, 104
      %v1344 = vpop.permute.xlu0 %1343
      %1345 = vrot.lane.b32.xlu0 %v748, 104
      %v1346 = vpop.permute.xlu0 %1345
      %v1347 = vsel %vm853, %v1344, 0
      %v1349 = vsel %vm853, %v1346, 0
      %1351 = vmatprep.subr.mxu0 0.0
      %1352 = vmatpush1.xpose.msra.mxu0 %v1349
      %1353 = vmatprep.subr.mxu0 0.0
      %1354 = vmatpush1.xpose.msra.mxu0 0.0
      %1355 = vmatprep.subr.mxu0 0.0
      %1356 = vmatpush1.xpose.msra.mxu0 0.0
      %1357 = vmatprep.subr.mxu0 0.0
      %1358 = vmatpush1.xpose.msra.mxu0 0.0
      %1359 = vmatprep.subr.mxu0 0.0
      %1360 = vmatpush1.xpose.msra.mxu0 0.0
      %1361 = vmatprep.subr.mxu0 0.0
      %1362 = vmatpush1.xpose.msra.mxu0 0.0
      %1363 = vmatprep.subr.mxu0 0.0
      %1364 = vmatpush1.xpose.msra.mxu0 0.0
      %1365 = vmatprep.subr.mxu0 0.0
      %1366 = vmatpush1.xpose.msra.mxu0 0.0
      %1367 = vmatprep.subr.mxu0 0.0
      %1368 = vmatpush1.xpose.msra.mxu0 0.0
      %1369 = vmatprep.subr.mxu0 0.0
      %1370 = vmatpush1.xpose.msra.mxu0 0.0
      %1371 = vmatprep.subr.mxu0 0.0
      %1372 = vmatpush1.xpose.msra.mxu0 0.0
      %1373 = vmatprep.subr.mxu0 0.0
      %1374 = vmatpush1.xpose.msra.mxu0 0.0
      %1375 = vmatprep.subr.mxu0 0.0
      %1376 = vmatpush1.xpose.msra.mxu0 0.0
      %1377 = vmatprep.subr.mxu0 0.0
      %1378 = vmatpush1.xpose.msra.mxu0 0.0
      %1379 = vmatprep.subr.mxu0 0.0
      %1380 = vmatpush1.xpose.msra.mxu0 0.0
      %1381 = vmatprep.subr.mxu0 0.0
      %1382 = vmatpush1.xpose.msra.mxu0 0.0
      %1383 = vmatprep.subr.mxu0 0.0
      %1384 = vmatpush1.xpose.msra.mxu0 0.0
      %1385 = vmatprep.subr.mxu0 0.0
      %1386 = vmatpush1.xpose.msra.mxu0 0.0
      %1387 = vmatprep.subr.mxu0 0.0
      %1388 = vmatpush1.xpose.msra.mxu0 0.0
      %1389 = vmatprep.subr.mxu0 0.0
      %1390 = vmatpush1.xpose.msra.mxu0 0.0
      %1391 = vmatprep.subr.mxu0 0.0
      %1392 = vmatpush1.xpose.msra.mxu0 0.0
      %1393 = vmatprep.subr.mxu0 0.0
      %1394 = vmatpush1.xpose.msra.mxu0 0.0
      %1395 = vmatprep.subr.mxu0 0.0
      %1396 = vmatpush1.xpose.msra.mxu0 0.0
      %1397 = vmatprep.subr.mxu0 0.0
      %1398 = vmatpush1.xpose.msra.mxu0 0.0
      %1399 = vmatprep.subr.mxu0 0.0
      %1400 = vmatpush1.xpose.msra.mxu0 0.0
      %1401 = vmatprep.subr.mxu0 0.0
      %1402 = vmatpush1.xpose.msra.mxu0 0.0
      %1403 = vmatprep.subr.mxu0 0.0
      %1404 = vmatpush1.xpose.msra.mxu0 0.0
      %1405 = vmatprep.subr.mxu0 0.0
      %1406 = vmatpush1.xpose.msra.mxu0 0.0
      %1407 = vmatprep.subr.mxu0 0.0
      %1408 = vmatpush1.xpose.msra.mxu0 0.0
      %1409 = vmatprep.subr.mxu0 0.0
      %1410 = vmatpush1.xpose.msra.mxu0 0.0
      %1411 = vmatprep.subr.mxu0 0.0
      %1412 = vmatpush1.xpose.msra.mxu0 0.0
      %1413 = vmatprep.subr.mxu0 0.0
      %1414 = vmatpush1.xpose.msra.mxu0 0.0
      %1415 = vmatprep.mubr.f32.mxu0 0.0
      %1416 = vmatmul.mubr.f32.gmra.mrb[0].mxu0 %v1347
      %v1417 = vpop.f32.mrb[0].mxu0
      %v1418 = vadd.f32 0.0, %v1417
      %v1419 = vpop.f32.mrb[0].mxu0
      %1420 = vdwg.mxu0
      %1422 = vrot.lane.b32.xlu0 %v930, 104
      %v1423 = vpop.permute.xlu0 %1422
      %v1425 = vsel %vm853, %v1423, 0.0
      %1426 = vadd.xlane.f32.xlu0 %v1425
      %v1427 = vpop.xlane.xlu0 %1426
      %1428 = vrot.lane.b32.xlu0 %v934, 104
      %v1429 = vpop.permute.xlu0 %1428
      %v1430 = vsel %vm853, %v1429, 0
      %1432 = vmatprep.subr.mxu0 0.0
      %1433 = vmatpush1.xpose.msra.mxu0 %v1430
      %1434 = vmatprep.subr.mxu0 0.0
      %1435 = vmatpush1.xpose.msra.mxu0 0.0
      %1436 = vmatprep.subr.mxu0 0.0
      %1437 = vmatpush1.xpose.msra.mxu0 0.0
      %1438 = vmatprep.subr.mxu0 0.0
      %1439 = vmatpush1.xpose.msra.mxu0 0.0
      %1440 = vmatprep.subr.mxu0 0.0
      %1441 = vmatpush1.xpose.msra.mxu0 0.0
      %1442 = vmatprep.subr.mxu0 0.0
      %1443 = vmatpush1.xpose.msra.mxu0 0.0
      %1444 = vmatprep.subr.mxu0 0.0
      %1445 = vmatpush1.xpose.msra.mxu0 0.0
      %1446 = vmatprep.subr.mxu0 0.0
      %1447 = vmatpush1.xpose.msra.mxu0 0.0
      %1448 = vmatprep.subr.mxu0 0.0
      %1449 = vmatpush1.xpose.msra.mxu0 0.0
      %1450 = vmatprep.subr.mxu0 0.0
      %1451 = vmatpush1.xpose.msra.mxu0 0.0
      %1452 = vmatprep.subr.mxu0 0.0
      %1453 = vmatpush1.xpose.msra.mxu0 0.0
      %1454 = vmatprep.subr.mxu0 0.0
      %1455 = vmatpush1.xpose.msra.mxu0 0.0
      %1456 = vmatprep.subr.mxu0 0.0
      %1457 = vmatpush1.xpose.msra.mxu0 0.0
      %1458 = vmatprep.subr.mxu0 0.0
      %1459 = vmatpush1.xpose.msra.mxu0 0.0
      %1460 = vmatprep.subr.mxu0 0.0
      %1461 = vmatpush1.xpose.msra.mxu0 0.0
      %1462 = vmatprep.subr.mxu0 0.0
      %1463 = vmatpush1.xpose.msra.mxu0 0.0
      %1464 = vmatprep.subr.mxu0 0.0
      %1465 = vmatpush1.xpose.msra.mxu0 0.0
      %1466 = vmatprep.subr.mxu0 0.0
      %1467 = vmatpush1.xpose.msra.mxu0 0.0
      %1468 = vmatprep.subr.mxu0 0.0
      %1469 = vmatpush1.xpose.msra.mxu0 0.0
      %1470 = vmatprep.subr.mxu0 0.0
      %1471 = vmatpush1.xpose.msra.mxu0 0.0
      %1472 = vmatprep.subr.mxu0 0.0
      %1473 = vmatpush1.xpose.msra.mxu0 0.0
      %1474 = vmatprep.subr.mxu0 0.0
      %1475 = vmatpush1.xpose.msra.mxu0 0.0
      %1476 = vmatprep.subr.mxu0 0.0
      %1477 = vmatpush1.xpose.msra.mxu0 0.0
      %1478 = vmatprep.subr.mxu0 0.0
      %1479 = vmatpush1.xpose.msra.mxu0 0.0
      %1480 = vmatprep.subr.mxu0 0.0
      %1481 = vmatpush1.xpose.msra.mxu0 0.0
      %1482 = vmatprep.subr.mxu0 0.0
      %1483 = vmatpush1.xpose.msra.mxu0 0.0
      %1484 = vmatprep.subr.mxu0 0.0
      %1485 = vmatpush1.xpose.msra.mxu0 0.0
      %1486 = vmatprep.subr.mxu0 0.0
      %1487 = vmatpush1.xpose.msra.mxu0 0.0
      %1488 = vmatprep.subr.mxu0 0.0
      %1489 = vmatpush1.xpose.msra.mxu0 0.0
      %1490 = vmatprep.subr.mxu0 0.0
      %1491 = vmatpush1.xpose.msra.mxu0 0.0
      %1492 = vmatprep.subr.mxu0 0.0
      %1493 = vmatpush1.xpose.msra.mxu0 0.0
      %1494 = vmatprep.subr.mxu0 0.0
      %1495 = vmatpush1.xpose.msra.mxu0 0.0
      %1496 = vmatprep.mubr.f32.mxu0 0.0
      %1497 = vmatmul.mubr.f32.gmra.mrb[0].mxu0 %v936
      %v1498 = vpop.f32.mrb[0].mxu0
      %v1499 = vadd.f32 0.0, %v1498
      %v1500 = vpop.f32.mrb[0].mxu0
      %1501 = vdwg.mxu0
      %v1502 = vlaneseq
      %v1503 = vshrl.u32 %v1502, 7
      %v1504 = vsub.s32 0, %v1503
      %v1505 = vrot.slane %v1499, %v1504
      %v1506 = vadd.f32 %v1427, %v1505
      %v1507 = vmul.f32 %v1418, 2.0
      %v1508 = vsub.f32 %v1506, %v1507
      %v1509 = vadd.f32 %v1342, %v753
      %s1510 = sld [smem:[#allocation5 + $0x1]]
      %v1511 = vstv %s1510
      %v1512 = vmul.f32 %v1508, %v1511
      %v1513 = vadd.f32 %v1509, %v1512
      %v1514 = vmul.f32 %v1513, 0.57735026
      %v1515 = vsub.f32 %v1514, %v772
      %v1516 = vsel %vm1025, %v1515, -inf
      %1517 = vmax.xlane.f32.xlu0 %v1516
      %v1518 = vpop.xlane.xlu0 %1517
      %v1519 = vsub.f32 %v1515, %v1518
      %v1520 = vmul.f32 %v1519, 1.442695
      %v1521 = vpow.pop %v1520
      %v1522 = vmul.f32 %v1521, %v768
      %v1523 = vmul.f32 %v1521, %v769
      %v1524 = vsel %vm1025, %v1522, 0.0
      %1525 = vadd.xlane.f32.xlu0 %v1524
      %v1526 = vpop.xlane.xlu0 %1525
      %v1527 = vsel %vm1025, %v1523, 0.0
      %1528 = vadd.xlane.f32.xlu0 %v1527
      %v1529 = vpop.xlane.xlu0 %1528
      %vm1530 = vcmp.gt.f32.partialorder %v1526, 0.0
      %v1531 = vsel %vm1530, %v1526, 1.0
      %v1532 = vrcp.pop %v1531
      %vm1533 = vcmp.gt.f32.partialorder %v1529, 0.0
      %v1534 = vsel %vm1533, %v1529, 1.0
      %v1535 = vrcp.pop %v1534
      %v1536 = vmul.f32 %v1532, %v1046
      %v1537 = vmul.f32 %v1522, %v1536
      %v1538 = vmul.f32 %v1535, %v1049
      %v1539 = vmul.f32 %v1523, %v1538
      %v1540 = vadd.f32 %v1537, %v1539
      %v1542 = vcombine.high %v1540, %v1540
      %v1544 = vunpack.c.l.s4 1966171168
      %v1545 = vunpack.c.0.s8 %v1544
      %v1546 = vlaneseq
      %v1547 = vshrl.u32 %v1546, 7
      %v1548 = vsub.s32 %v1545, %v1547
      %v1549 = vrot.slane %v1540, %v1548
      %v1551 = vunpack.c.l.s4 1966171168
      %v1552 = vunpack.c.0.s8 %v1551
      %v1553 = vlaneseq
      %v1554 = vshrl.u32 %v1553, 7
      %v1555 = vsub.s32 %v1552, %v1554
      %v1556 = vrot.slane %v1542, %v1555
      %v1557 = vcombine.high %v1549, %v1549
      %v1558 = vcombine.high %v1556, %v1556
      %v1560 = vunpack.c.l.s4 1966171168
      %v1561 = vunpack.c.0.s8 %v1560
      %v1562 = vlaneseq
      %v1563 = vshrl.u32 %v1562, 7
      %v1564 = vsub.s32 %v1561, %v1563
      %v1565 = vrot.slane %v1549, %v1564
      %v1567 = vunpack.c.l.s4 1966171168
      %v1568 = vunpack.c.0.s8 %v1567
      %v1569 = vlaneseq
      %v1570 = vshrl.u32 %v1569, 7
      %v1571 = vsub.s32 %v1568, %v1570
      %v1572 = vrot.slane %v1556, %v1571
      %v1574 = vunpack.c.l.s4 1966171168
      %v1575 = vunpack.c.0.s8 %v1574
      %v1576 = vlaneseq
      %v1577 = vshrl.u32 %v1576, 7
      %v1578 = vsub.s32 %v1575, %v1577
      %v1579 = vrot.slane %v1557, %v1578
      %v1581 = vunpack.c.l.s4 1966171168
      %v1582 = vunpack.c.0.s8 %v1581
      %v1583 = vlaneseq
      %v1584 = vshrl.u32 %v1583, 7
      %v1585 = vsub.s32 %v1582, %v1584
      %v1586 = vrot.slane %v1558, %v1585
      %v1587 = vcombine.high %v1565, %v1565
      %v1588 = vcombine.high %v1572, %v1572
      %v1589 = vcombine.high %v1579, %v1579
      %v1590 = vcombine.high %v1586, %v1586
      %1599 = vst.msk [vmem:[#allocation2 + $0x1] sm:$0x1] %vm1111, %v1565
      %1600 = vst.msk [vmem:[#allocation2 + $0x9] sm:$0x1] %vm1111, %v1579
      %1601 = vst.msk [vmem:[#allocation2 + $0x11] sm:$0x1] %vm1111, %v1587
      %1602 = vst.msk [vmem:[#allocation2 + $0x19] sm:$0x1] %vm1111, %v1589
      %1603 = vst.msk [vmem:[#allocation2 + $0x21] sm:$0x1] %vm1111, %v1572
      %1604 = vst.msk [vmem:[#allocation2 + $0x29] sm:$0x1] %vm1111, %v1586
      %1605 = vst.msk [vmem:[#allocation2 + $0x31] sm:$0x1] %vm1111, %v1588
      %1606 = vst.msk [vmem:[#allocation2 + $0x39] sm:$0x1] %vm1111, %v1590
      %1608 = vrot.lane.b32.xlu0 %v744, 96
      %v1609 = vpop.permute.xlu0 %1608
      %v1611 = vsel %vm1025, %v1540, 0
      %1613 = vmatprep.subr.mxu0 0.0
      %1614 = vmatpush1.msra.mxu0 %v1609
      %1615 = vmatprep.subr.mxu0 0.0
      %1616 = vmatpush1.msra.mxu0 0.0
      %1617 = vmatprep.subr.mxu0 0.0
      %1618 = vmatpush1.msra.mxu0 0.0
      %1619 = vmatprep.subr.mxu0 0.0
      %1620 = vmatpush1.msra.mxu0 0.0
      %1621 = vmatprep.subr.mxu0 0.0
      %1622 = vmatpush1.msra.mxu0 0.0
      %1623 = vmatprep.subr.mxu0 0.0
      %1624 = vmatpush1.msra.mxu0 0.0
      %1625 = vmatprep.subr.mxu0 0.0
      %1626 = vmatpush1.msra.mxu0 0.0
      %1627 = vmatprep.subr.mxu0 0.0
      %1628 = vmatpush1.msra.mxu0 0.0
      %1629 = vmatprep.subr.mxu0 0.0
      %1630 = vmatpush1.msra.mxu0 0.0
      %1631 = vmatprep.subr.mxu0 0.0
      %1632 = vmatpush1.msra.mxu0 0.0
      %1633 = vmatprep.subr.mxu0 0.0
      %1634 = vmatpush1.msra.mxu0 0.0
      %1635 = vmatprep.subr.mxu0 0.0
      %1636 = vmatpush1.msra.mxu0 0.0
      %1637 = vmatprep.subr.mxu0 0.0
      %1638 = vmatpush1.msra.mxu0 0.0
      %1639 = vmatprep.subr.mxu0 0.0
      %1640 = vmatpush1.msra.mxu0 0.0
      %1641 = vmatprep.subr.mxu0 0.0
      %1642 = vmatpush1.msra.mxu0 0.0
      %1643 = vmatprep.subr.mxu0 0.0
      %1644 = vmatpush1.msra.mxu0 0.0
      %1645 = vmatprep.subr.mxu0 0.0
      %1646 = vmatpush1.msra.mxu0 0.0
      %1647 = vmatprep.subr.mxu0 0.0
      %1648 = vmatpush1.msra.mxu0 0.0
      %1649 = vmatprep.subr.mxu0 0.0
      %1650 = vmatpush1.msra.mxu0 0.0
      %1651 = vmatprep.subr.mxu0 0.0
      %1652 = vmatpush1.msra.mxu0 0.0
      %1653 = vmatprep.subr.mxu0 0.0
      %1654 = vmatpush1.msra.mxu0 0.0
      %1655 = vmatprep.subr.mxu0 0.0
      %1656 = vmatpush1.msra.mxu0 0.0
      %1657 = vmatprep.subr.mxu0 0.0
      %1658 = vmatpush1.msra.mxu0 0.0
      %1659 = vmatprep.subr.mxu0 0.0
      %1660 = vmatpush1.msra.mxu0 0.0
      %1661 = vmatprep.subr.mxu0 0.0
      %1662 = vmatpush1.msra.mxu0 0.0
      %1663 = vmatprep.subr.mxu0 0.0
      %1664 = vmatpush1.msra.mxu0 0.0
      %1665 = vmatprep.subr.mxu0 0.0
      %1666 = vmatpush1.msra.mxu0 0.0
      %1667 = vmatprep.subr.mxu0 0.0
      %1668 = vmatpush1.msra.mxu0 0.0
      %1669 = vmatprep.subr.mxu0 0.0
      %1670 = vmatpush1.msra.mxu0 0.0
      %1671 = vmatprep.subr.mxu0 0.0
      %1672 = vmatpush1.msra.mxu0 0.0
      %1673 = vmatprep.subr.mxu0 0.0
      %1674 = vmatpush1.msra.mxu0 0.0
      %1675 = vmatprep.subr.mxu0 0.0
      %1676 = vmatpush1.msra.mxu0 0.0
      %1677 = vmatprep.mubr.f32.mxu0 0.0
      %1678 = vmatmul.mubr.f32.gmra.mrb[0].mxu0 %v1611
      %v1679 = vpop.f32.mrb[0].mxu0
      %v1680 = vadd.f32 0.0, %v1679
      %v1681 = vpop.f32.mrb[0].mxu0
      %1682 = vdwg.mxu0
      %1684 = vrot.lane.b32.xlu0 %v1680, 32
      %v1685 = vpop.permute.xlu0 %1684
      %vm1687 = vcmask 523520
      %1688 = vst.msk [vmem:[%s723] sm:$0xff] %vm1687, %v1685
      %1690 = vrot.lane.b32.xlu0 %v750, 104
      %v1691 = vpop.permute.xlu0 %1690
      %1693 = vmatprep.subr.mxu0 0.0
      %1694 = vmatpush1.msra.mxu0 %v1691
      %1695 = vmatprep.subr.mxu0 0.0
      %1696 = vmatpush1.msra.mxu0 0.0
      %1697 = vmatprep.subr.mxu0 0.0
      %1698 = vmatpush1.msra.mxu0 0.0
      %1699 = vmatprep.subr.mxu0 0.0
      %1700 = vmatpush1.msra.mxu0 0.0
      %1701 = vmatprep.subr.mxu0 0.0
      %1702 = vmatpush1.msra.mxu0 0.0
      %1703 = vmatprep.subr.mxu0 0.0
      %1704 = vmatpush1.msra.mxu0 0.0
      %1705 = vmatprep.subr.mxu0 0.0
      %1706 = vmatpush1.msra.mxu0 0.0
      %1707 = vmatprep.subr.mxu0 0.0
      %1708 = vmatpush1.msra.mxu0 0.0
      %1709 = vmatprep.subr.mxu0 0.0
      %1710 = vmatpush1.msra.mxu0 0.0
      %1711 = vmatprep.subr.mxu0 0.0
      %1712 = vmatpush1.msra.mxu0 0.0
      %1713 = vmatprep.subr.mxu0 0.0
      %1714 = vmatpush1.msra.mxu0 0.0
      %1715 = vmatprep.subr.mxu0 0.0
      %1716 = vmatpush1.msra.mxu0 0.0
      %1717 = vmatprep.subr.mxu0 0.0
      %1718 = vmatpush1.msra.mxu0 0.0
      %1719 = vmatprep.subr.mxu0 0.0
      %1720 = vmatpush1.msra.mxu0 0.0
      %1721 = vmatprep.subr.mxu0 0.0
      %1722 = vmatpush1.msra.mxu0 0.0
      %1723 = vmatprep.subr.mxu0 0.0
      %1724 = vmatpush1.msra.mxu0 0.0
      %1725 = vmatprep.subr.mxu0 0.0
      %1726 = vmatpush1.msra.mxu0 0.0
      %1727 = vmatprep.subr.mxu0 0.0
      %1728 = vmatpush1.msra.mxu0 0.0
      %1729 = vmatprep.subr.mxu0 0.0
      %1730 = vmatpush1.msra.mxu0 0.0
      %1731 = vmatprep.subr.mxu0 0.0
      %1732 = vmatpush1.msra.mxu0 0.0
      %1733 = vmatprep.subr.mxu0 0.0
      %1734 = vmatpush1.msra.mxu0 0.0
      %1735 = vmatprep.subr.mxu0 0.0
      %1736 = vmatpush1.msra.mxu0 0.0
      %1737 = vmatprep.subr.mxu0 0.0
      %1738 = vmatpush1.msra.mxu0 0.0
      %1739 = vmatprep.subr.mxu0 0.0
      %1740 = vmatpush1.msra.mxu0 0.0
      %1741 = vmatprep.subr.mxu0 0.0
      %1742 = vmatpush1.msra.mxu0 0.0
      %1743 = vmatprep.subr.mxu0 0.0
      %1744 = vmatpush1.msra.mxu0 0.0
      %1745 = vmatprep.subr.mxu0 0.0
      %1746 = vmatpush1.msra.mxu0 0.0
      %1747 = vmatprep.subr.mxu0 0.0
      %1748 = vmatpush1.msra.mxu0 0.0
      %1749 = vmatprep.subr.mxu0 0.0
      %1750 = vmatpush1.msra.mxu0 0.0
      %1751 = vmatprep.subr.mxu0 0.0
      %1752 = vmatpush1.msra.mxu0 0.0
      %1753 = vmatprep.subr.mxu0 0.0
      %1754 = vmatpush1.msra.mxu0 0.0
      %1755 = vmatprep.subr.mxu0 0.0
      %1756 = vmatpush1.msra.mxu0 0.0
      %1757 = vmatprep.mubr.f32.mxu0 0.0
      %1758 = vmatmul.mubr.f32.gmra.mrb[0].mxu0 %v1611
      %v1759 = vpop.f32.mrb[0].mxu0
      %v1760 = vadd.f32 0.0, %v1759
      %v1761 = vpop.f32.mrb[0].mxu0
      %1762 = vdwg.mxu0
      %1764 = vrot.lane.b32.xlu0 %v1760, 24
      %v1765 = vpop.permute.xlu0 %1764
      %vm1767 = vcmask 392384
      %1768 = vst.msk [vmem:[%s739] sm:$0xff] %vm1767, %v1765
      %1769 = vrot.lane.b32.xlu0 %v740, 64
      %v1770 = vpop.permute.xlu0 %1769
      %1771 = vrot.lane.b32.xlu0 %v742, 64
      %v1772 = vpop.permute.xlu0 %1771
      %v1773 = vsel %vm775, %v1770, 0
      %v1775 = vsel %vm775, %v1772, 0
      %1777 = vmatprep.subr.mxu0 0.0
      %1778 = vmatpush1.xpose.msra.mxu0 %v1775
      %1779 = vmatprep.subr.mxu0 0.0
      %1780 = vmatpush1.xpose.msra.mxu0 0.0
      %1781 = vmatprep.subr.mxu0 0.0
      %1782 = vmatpush1.xpose.msra.mxu0 0.0
      %1783 = vmatprep.subr.mxu0 0.0
      %1784 = vmatpush1.xpose.msra.mxu0 0.0
      %1785 = vmatprep.subr.mxu0 0.0
      %1786 = vmatpush1.xpose.msra.mxu0 0.0
      %1787 = vmatprep.subr.mxu0 0.0
      %1788 = vmatpush1.xpose.msra.mxu0 0.0
      %1789 = vmatprep.subr.mxu0 0.0
      %1790 = vmatpush1.xpose.msra.mxu0 0.0
      %1791 = vmatprep.subr.mxu0 0.0
      %1792 = vmatpush1.xpose.msra.mxu0 0.0
      %1793 = vmatprep.subr.mxu0 0.0
      %1794 = vmatpush1.xpose.msra.mxu0 0.0
      %1795 = vmatprep.subr.mxu0 0.0
      %1796 = vmatpush1.xpose.msra.mxu0 0.0
      %1797 = vmatprep.subr.mxu0 0.0
      %1798 = vmatpush1.xpose.msra.mxu0 0.0
      %1799 = vmatprep.subr.mxu0 0.0
      %1800 = vmatpush1.xpose.msra.mxu0 0.0
      %1801 = vmatprep.subr.mxu0 0.0
      %1802 = vmatpush1.xpose.msra.mxu0 0.0
      %1803 = vmatprep.subr.mxu0 0.0
      %1804 = vmatpush1.xpose.msra.mxu0 0.0
      %1805 = vmatprep.subr.mxu0 0.0
      %1806 = vmatpush1.xpose.msra.mxu0 0.0
      %1807 = vmatprep.subr.mxu0 0.0
      %1808 = vmatpush1.xpose.msra.mxu0 0.0
      %1809 = vmatprep.subr.mxu0 0.0
      %1810 = vmatpush1.xpose.msra.mxu0 0.0
      %1811 = vmatprep.subr.mxu0 0.0
      %1812 = vmatpush1.xpose.msra.mxu0 0.0
      %1813 = vmatprep.subr.mxu0 0.0
      %1814 = vmatpush1.xpose.msra.mxu0 0.0
      %1815 = vmatprep.subr.mxu0 0.0
      %1816 = vmatpush1.xpose.msra.mxu0 0.0
      %1817 = vmatprep.subr.mxu0 0.0
      %1818 = vmatpush1.xpose.msra.mxu0 0.0
      %1819 = vmatprep.subr.mxu0 0.0
      %1820 = vmatpush1.xpose.msra.mxu0 0.0
      %1821 = vmatprep.subr.mxu0 0.0
      %1822 = vmatpush1.xpose.msra.mxu0 0.0
      %1823 = vmatprep.subr.mxu0 0.0
      %1824 = vmatpush1.xpose.msra.mxu0 0.0
      %1825 = vmatprep.subr.mxu0 0.0
      %1826 = vmatpush1.xpose.msra.mxu0 0.0
      %1827 = vmatprep.subr.mxu0 0.0
      %1828 = vmatpush1.xpose.msra.mxu0 0.0
      %1829 = vmatprep.subr.mxu0 0.0
      %1830 = vmatpush1.xpose.msra.mxu0 0.0
      %1831 = vmatprep.subr.mxu0 0.0
      %1832 = vmatpush1.xpose.msra.mxu0 0.0
      %1833 = vmatprep.subr.mxu0 0.0
      %1834 = vmatpush1.xpose.msra.mxu0 0.0
      %1835 = vmatprep.subr.mxu0 0.0
      %1836 = vmatpush1.xpose.msra.mxu0 0.0
      %1837 = vmatprep.subr.mxu0 0.0
      %1838 = vmatpush1.xpose.msra.mxu0 0.0
      %1839 = vmatprep.subr.mxu0 0.0
      %1840 = vmatpush1.xpose.msra.mxu0 0.0
      %1841 = vmatprep.mubr.f32.mxu0 0.0
      %1842 = vmatmul.mubr.f32.gmra.mrb[0].mxu0 %v1773
      %v1843 = vpop.f32.mrb[0].mxu0
      %v1844 = vadd.f32 0.0, %v1843
      %v1845 = vpop.f32.mrb[0].mxu0
      %1846 = vdwg.mxu0
      %v1847 = vmul.f32 %v1844, 0.17677669
      %1848 = vrot.lane.b32.xlu0 %v746, 80
      %v1849 = vpop.permute.xlu0 %1848
      %1850 = vrot.lane.b32.xlu0 %v748, 80
      %v1851 = vpop.permute.xlu0 %1850
      %v1852 = vsel %vm853, %v1849, 0
      %v1854 = vsel %vm853, %v1851, 0
      %1856 = vmatprep.subr.mxu0 0.0
      %1857 = vmatpush1.xpose.msra.mxu0 %v1854
      %1858 = vmatprep.subr.mxu0 0.0
      %1859 = vmatpush1.xpose.msra.mxu0 0.0
      %1860 = vmatprep.subr.mxu0 0.0
      %1861 = vmatpush1.xpose.msra.mxu0 0.0
      %1862 = vmatprep.subr.mxu0 0.0
      %1863 = vmatpush1.xpose.msra.mxu0 0.0
      %1864 = vmatprep.subr.mxu0 0.0
      %1865 = vmatpush1.xpose.msra.mxu0 0.0
      %1866 = vmatprep.subr.mxu0 0.0
      %1867 = vmatpush1.xpose.msra.mxu0 0.0
      %1868 = vmatprep.subr.mxu0 0.0
      %1869 = vmatpush1.xpose.msra.mxu0 0.0
      %1870 = vmatprep.subr.mxu0 0.0
      %1871 = vmatpush1.xpose.msra.mxu0 0.0
      %1872 = vmatprep.subr.mxu0 0.0
      %1873 = vmatpush1.xpose.msra.mxu0 0.0
      %1874 = vmatprep.subr.mxu0 0.0
      %1875 = vmatpush1.xpose.msra.mxu0 0.0
      %1876 = vmatprep.subr.mxu0 0.0
      %1877 = vmatpush1.xpose.msra.mxu0 0.0
      %1878 = vmatprep.subr.mxu0 0.0
      %1879 = vmatpush1.xpose.msra.mxu0 0.0
      %1880 = vmatprep.subr.mxu0 0.0
      %1881 = vmatpush1.xpose.msra.mxu0 0.0
      %1882 = vmatprep.subr.mxu0 0.0
      %1883 = vmatpush1.xpose.msra.mxu0 0.0
      %1884 = vmatprep.subr.mxu0 0.0
      %1885 = vmatpush1.xpose.msra.mxu0 0.0
      %1886 = vmatprep.subr.mxu0 0.0
      %1887 = vmatpush1.xpose.msra.mxu0 0.0
      %1888 = vmatprep.subr.mxu0 0.0
      %1889 = vmatpush1.xpose.msra.mxu0 0.0
      %1890 = vmatprep.subr.mxu0 0.0
      %1891 = vmatpush1.xpose.msra.mxu0 0.0
      %1892 = vmatprep.subr.mxu0 0.0
      %1893 = vmatpush1.xpose.msra.mxu0 0.0
      %1894 = vmatprep.subr.mxu0 0.0
      %1895 = vmatpush1.xpose.msra.mxu0 0.0
      %1896 = vmatprep.subr.mxu0 0.0
      %1897 = vmatpush1.xpose.msra.mxu0 0.0
      %1898 = vmatprep.subr.mxu0 0.0
      %1899 = vmatpush1.xpose.msra.mxu0 0.0
      %1900 = vmatprep.subr.mxu0 0.0
      %1901 = vmatpush1.xpose.msra.mxu0 0.0
      %1902 = vmatprep.subr.mxu0 0.0
      %1903 = vmatpush1.xpose.msra.mxu0 0.0
      %1904 = vmatprep.subr.mxu0 0.0
      %1905 = vmatpush1.xpose.msra.mxu0 0.0
      %1906 = vmatprep.subr.mxu0 0.0
      %1907 = vmatpush1.xpose.msra.mxu0 0.0
      %1908 = vmatprep.subr.mxu0 0.0
      %1909 = vmatpush1.xpose.msra.mxu0 0.0
      %1910 = vmatprep.subr.mxu0 0.0
      %1911 = vmatpush1.xpose.msra.mxu0 0.0
      %1912 = vmatprep.subr.mxu0 0.0
      %1913 = vmatpush1.xpose.msra.mxu0 0.0
      %1914 = vmatprep.subr.mxu0 0.0
      %1915 = vmatpush1.xpose.msra.mxu0 0.0
      %1916 = vmatprep.subr.mxu0 0.0
      %1917 = vmatpush1.xpose.msra.mxu0 0.0
      %1918 = vmatprep.subr.mxu0 0.0
      %1919 = vmatpush1.xpose.msra.mxu0 0.0
      %1920 = vmatprep.mubr.f32.mxu0 0.0
      %1921 = vmatmul.mubr.f32.gmra.mrb[0].mxu0 %v1852
      %v1922 = vpop.f32.mrb[0].mxu0
      %v1923 = vadd.f32 0.0, %v1922
      %v1924 = vpop.f32.mrb[0].mxu0
      %1925 = vdwg.mxu0
      %1926 = vrot.lane.b32.xlu0 %v930, 80
      %v1927 = vpop.permute.xlu0 %1926
      %v1929 = vsel %vm853, %v1927, 0.0
      %1930 = vadd.xlane.f32.xlu0 %v1929
      %v1931 = vpop.xlane.xlu0 %1930
      %1932 = vrot.lane.b32.xlu0 %v934, 80
      %v1933 = vpop.permute.xlu0 %1932
      %v1934 = vsel %vm853, %v1933, 0
      %1936 = vmatprep.subr.mxu0 0.0
      %1937 = vmatpush1.xpose.msra.mxu0 %v1934
      %1938 = vmatprep.subr.mxu0 0.0
      %1939 = vmatpush1.xpose.msra.mxu0 0.0
      %1940 = vmatprep.subr.mxu0 0.0
      %1941 = vmatpush1.xpose.msra.mxu0 0.0
      %1942 = vmatprep.subr.mxu0 0.0
      %1943 = vmatpush1.xpose.msra.mxu0 0.0
      %1944 = vmatprep.subr.mxu0 0.0
      %1945 = vmatpush1.xpose.msra.mxu0 0.0
      %1946 = vmatprep.subr.mxu0 0.0
      %1947 = vmatpush1.xpose.msra.mxu0 0.0
      %1948 = vmatprep.subr.mxu0 0.0
      %1949 = vmatpush1.xpose.msra.mxu0 0.0
      %1950 = vmatprep.subr.mxu0 0.0
      %1951 = vmatpush1.xpose.msra.mxu0 0.0
      %1952 = vmatprep.subr.mxu0 0.0
      %1953 = vmatpush1.xpose.msra.mxu0 0.0
      %1954 = vmatprep.subr.mxu0 0.0
      %1955 = vmatpush1.xpose.msra.mxu0 0.0
      %1956 = vmatprep.subr.mxu0 0.0
      %1957 = vmatpush1.xpose.msra.mxu0 0.0
      %1958 = vmatprep.subr.mxu0 0.0
      %1959 = vmatpush1.xpose.msra.mxu0 0.0
      %1960 = vmatprep.subr.mxu0 0.0
      %1961 = vmatpush1.xpose.msra.mxu0 0.0
      %1962 = vmatprep.subr.mxu0 0.0
      %1963 = vmatpush1.xpose.msra.mxu0 0.0
      %1964 = vmatprep.subr.mxu0 0.0
      %1965 = vmatpush1.xpose.msra.mxu0 0.0
      %1966 = vmatprep.subr.mxu0 0.0
      %1967 = vmatpush1.xpose.msra.mxu0 0.0
      %1968 = vmatprep.subr.mxu0 0.0
      %1969 = vmatpush1.xpose.msra.mxu0 0.0
      %1970 = vmatprep.subr.mxu0 0.0
      %1971 = vmatpush1.xpose.msra.mxu0 0.0
      %1972 = vmatprep.subr.mxu0 0.0
      %1973 = vmatpush1.xpose.msra.mxu0 0.0
      %1974 = vmatprep.subr.mxu0 0.0
      %1975 = vmatpush1.xpose.msra.mxu0 0.0
      %1976 = vmatprep.subr.mxu0 0.0
      %1977 = vmatpush1.xpose.msra.mxu0 0.0
      %1978 = vmatprep.subr.mxu0 0.0
      %1979 = vmatpush1.xpose.msra.mxu0 0.0
      %1980 = vmatprep.subr.mxu0 0.0
      %1981 = vmatpush1.xpose.msra.mxu0 0.0
      %1982 = vmatprep.subr.mxu0 0.0
      %1983 = vmatpush1.xpose.msra.mxu0 0.0
      %1984 = vmatprep.subr.mxu0 0.0
      %1985 = vmatpush1.xpose.msra.mxu0 0.0
      %1986 = vmatprep.subr.mxu0 0.0
      %1987 = vmatpush1.xpose.msra.mxu0 0.0
      %1988 = vmatprep.subr.mxu0 0.0
      %1989 = vmatpush1.xpose.msra.mxu0 0.0
      %1990 = vmatprep.subr.mxu0 0.0
      %1991 = vmatpush1.xpose.msra.mxu0 0.0
      %1992 = vmatprep.subr.mxu0 0.0
      %1993 = vmatpush1.xpose.msra.mxu0 0.0
      %1994 = vmatprep.subr.mxu0 0.0
      %1995 = vmatpush1.xpose.msra.mxu0 0.0
      %1996 = vmatprep.subr.mxu0 0.0
      %1997 = vmatpush1.xpose.msra.mxu0 0.0
      %1998 = vmatprep.subr.mxu0 0.0
      %1999 = vmatpush1.xpose.msra.mxu0 0.0
      %2000 = vmatprep.mubr.f32.mxu0 0.0
      %2001 = vmatmul.mubr.f32.gmra.mrb[0].mxu0 %v936
      %v2002 = vpop.f32.mrb[0].mxu0
      %v2003 = vadd.f32 0.0, %v2002
      %v2004 = vpop.f32.mrb[0].mxu0
      %2005 = vdwg.mxu0
      %v2006 = vlaneseq
      %v2007 = vshrl.u32 %v2006, 7
      %v2008 = vsub.s32 0, %v2007
      %v2009 = vrot.slane %v2003, %v2008
      %v2010 = vadd.f32 %v1931, %v2009
      %v2011 = vmul.f32 %v1923, 2.0
      %v2012 = vsub.f32 %v2010, %v2011
      %v2013 = vadd.f32 %v1847, %v754
      %s2014 = sld [smem:[#allocation5 + $0x2]]
      %v2015 = vstv %s2014
      %v2016 = vmul.f32 %v2012, %v2015
      %v2017 = vadd.f32 %v2013, %v2016
      %v2018 = vmul.f32 %v2017, 0.57735026
      %v2019 = vsub.f32 %v2018, %v772
      %v2020 = vsel %vm1025, %v2019, -inf
      %2021 = vmax.xlane.f32.xlu0 %v2020
      %v2022 = vpop.xlane.xlu0 %2021
      %v2023 = vsub.f32 %v2019, %v2022
      %v2024 = vmul.f32 %v2023, 1.442695
      %v2025 = vpow.pop %v2024
      %v2026 = vmul.f32 %v2025, %v768
      %v2027 = vmul.f32 %v2025, %v769
      %v2028 = vsel %vm1025, %v2026, 0.0
      %2029 = vadd.xlane.f32.xlu0 %v2028
      %v2030 = vpop.xlane.xlu0 %2029
      %v2031 = vsel %vm1025, %v2027, 0.0
      %2032 = vadd.xlane.f32.xlu0 %v2031
      %v2033 = vpop.xlane.xlu0 %2032
      %vm2034 = vcmp.gt.f32.partialorder %v2030, 0.0
      %v2035 = vsel %vm2034, %v2030, 1.0
      %v2036 = vrcp.pop %v2035
      %vm2037 = vcmp.gt.f32.partialorder %v2033, 0.0
      %v2038 = vsel %vm2037, %v2033, 1.0
      %v2039 = vrcp.pop %v2038
      %v2040 = vmul.f32 %v2036, %v1046
      %v2041 = vmul.f32 %v2026, %v2040
      %v2042 = vmul.f32 %v2039, %v1049
      %v2043 = vmul.f32 %v2027, %v2042
      %v2044 = vadd.f32 %v2041, %v2043
      %v2046 = vcombine.high %v2044, %v2044
      %v2048 = vunpack.c.l.s4 1966171168
      %v2049 = vunpack.c.0.s8 %v2048
      %v2050 = vlaneseq
      %v2051 = vshrl.u32 %v2050, 7
      %v2052 = vsub.s32 %v2049, %v2051
      %v2053 = vrot.slane %v2044, %v2052
      %v2055 = vunpack.c.l.s4 1966171168
      %v2056 = vunpack.c.0.s8 %v2055
      %v2057 = vlaneseq
      %v2058 = vshrl.u32 %v2057, 7
      %v2059 = vsub.s32 %v2056, %v2058
      %v2060 = vrot.slane %v2046, %v2059
      %v2061 = vcombine.high %v2053, %v2053
      %v2062 = vcombine.high %v2060, %v2060
      %v2064 = vunpack.c.l.s4 1966171168
      %v2065 = vunpack.c.0.s8 %v2064
      %v2066 = vlaneseq
      %v2067 = vshrl.u32 %v2066, 7
      %v2068 = vsub.s32 %v2065, %v2067
      %v2069 = vrot.slane %v2053, %v2068
      %v2071 = vunpack.c.l.s4 1966171168
      %v2072 = vunpack.c.0.s8 %v2071
      %v2073 = vlaneseq
      %v2074 = vshrl.u32 %v2073, 7
      %v2075 = vsub.s32 %v2072, %v2074
      %v2076 = vrot.slane %v2060, %v2075
      %v2078 = vunpack.c.l.s4 1966171168
      %v2079 = vunpack.c.0.s8 %v2078
      %v2080 = vlaneseq
      %v2081 = vshrl.u32 %v2080, 7
      %v2082 = vsub.s32 %v2079, %v2081
      %v2083 = vrot.slane %v2061, %v2082
      %v2085 = vunpack.c.l.s4 1966171168
      %v2086 = vunpack.c.0.s8 %v2085
      %v2087 = vlaneseq
      %v2088 = vshrl.u32 %v2087, 7
      %v2089 = vsub.s32 %v2086, %v2088
      %v2090 = vrot.slane %v2062, %v2089
      %v2091 = vcombine.high %v2069, %v2069
      %v2092 = vcombine.high %v2076, %v2076
      %v2093 = vcombine.high %v2083, %v2083
      %v2094 = vcombine.high %v2090, %v2090
      %2103 = vst.msk [vmem:[#allocation2 + $0x2] sm:$0x1] %vm1111, %v2069
      %2104 = vst.msk [vmem:[#allocation2 + $0xa] sm:$0x1] %vm1111, %v2083
      %2105 = vst.msk [vmem:[#allocation2 + $0x12] sm:$0x1] %vm1111, %v2091
      %2106 = vst.msk [vmem:[#allocation2 + $0x1a] sm:$0x1] %vm1111, %v2093
      %2107 = vst.msk [vmem:[#allocation2 + $0x22] sm:$0x1] %vm1111, %v2076
      %2108 = vst.msk [vmem:[#allocation2 + $0x2a] sm:$0x1] %vm1111, %v2090
      %2109 = vst.msk [vmem:[#allocation2 + $0x32] sm:$0x1] %vm1111, %v2092
      %2110 = vst.msk [vmem:[#allocation2 + $0x3a] sm:$0x1] %vm1111, %v2094
      %2111 = vrot.lane.b32.xlu0 %v744, 64
      %v2112 = vpop.permute.xlu0 %2111
      %v2114 = vsel %vm1025, %v2044, 0
      %2116 = vmatprep.subr.mxu0 0.0
      %2117 = vmatpush1.msra.mxu0 %v2112
      %2118 = vmatprep.subr.mxu0 0.0
      %2119 = vmatpush1.msra.mxu0 0.0
      %2120 = vmatprep.subr.mxu0 0.0
      %2121 = vmatpush1.msra.mxu0 0.0
      %2122 = vmatprep.subr.mxu0 0.0
      %2123 = vmatpush1.msra.mxu0 0.0
      %2124 = vmatprep.subr.mxu0 0.0
      %2125 = vmatpush1.msra.mxu0 0.0
      %2126 = vmatprep.subr.mxu0 0.0
      %2127 = vmatpush1.msra.mxu0 0.0
      %2128 = vmatprep.subr.mxu0 0.0
      %2129 = vmatpush1.msra.mxu0 0.0
      %2130 = vmatprep.subr.mxu0 0.0
      %2131 = vmatpush1.msra.mxu0 0.0
      %2132 = vmatprep.subr.mxu0 0.0
      %2133 = vmatpush1.msra.mxu0 0.0
      %2134 = vmatprep.subr.mxu0 0.0
      %2135 = vmatpush1.msra.mxu0 0.0
      %2136 = vmatprep.subr.mxu0 0.0
      %2137 = vmatpush1.msra.mxu0 0.0
      %2138 = vmatprep.subr.mxu0 0.0
      %2139 = vmatpush1.msra.mxu0 0.0
      %2140 = vmatprep.subr.mxu0 0.0
      %2141 = vmatpush1.msra.mxu0 0.0
      %2142 = vmatprep.subr.mxu0 0.0
      %2143 = vmatpush1.msra.mxu0 0.0
      %2144 = vmatprep.subr.mxu0 0.0
      %2145 = vmatpush1.msra.mxu0 0.0
      %2146 = vmatprep.subr.mxu0 0.0
      %2147 = vmatpush1.msra.mxu0 0.0
      %2148 = vmatprep.subr.mxu0 0.0
      %2149 = vmatpush1.msra.mxu0 0.0
      %2150 = vmatprep.subr.mxu0 0.0
      %2151 = vmatpush1.msra.mxu0 0.0
      %2152 = vmatprep.subr.mxu0 0.0
      %2153 = vmatpush1.msra.mxu0 0.0
      %2154 = vmatprep.subr.mxu0 0.0
      %2155 = vmatpush1.msra.mxu0 0.0
      %2156 = vmatprep.subr.mxu0 0.0
      %2157 = vmatpush1.msra.mxu0 0.0
      %2158 = vmatprep.subr.mxu0 0.0
      %2159 = vmatpush1.msra.mxu0 0.0
      %2160 = vmatprep.subr.mxu0 0.0
      %2161 = vmatpush1.msra.mxu0 0.0
      %2162 = vmatprep.subr.mxu0 0.0
      %2163 = vmatpush1.msra.mxu0 0.0
      %2164 = vmatprep.subr.mxu0 0.0
      %2165 = vmatpush1.msra.mxu0 0.0
      %2166 = vmatprep.subr.mxu0 0.0
      %2167 = vmatpush1.msra.mxu0 0.0
      %2168 = vmatprep.subr.mxu0 0.0
      %2169 = vmatpush1.msra.mxu0 0.0
      %2170 = vmatprep.subr.mxu0 0.0
      %2171 = vmatpush1.msra.mxu0 0.0
      %2172 = vmatprep.subr.mxu0 0.0
      %2173 = vmatpush1.msra.mxu0 0.0
      %2174 = vmatprep.subr.mxu0 0.0
      %2175 = vmatpush1.msra.mxu0 0.0
      %2176 = vmatprep.subr.mxu0 0.0
      %2177 = vmatpush1.msra.mxu0 0.0
      %2178 = vmatprep.subr.mxu0 0.0
      %2179 = vmatpush1.msra.mxu0 0.0
      %2180 = vmatprep.mubr.f32.mxu0 0.0
      %2181 = vmatmul.mubr.f32.gmra.mrb[0].mxu0 %v2114
      %v2182 = vpop.f32.mrb[0].mxu0
      %v2183 = vadd.f32 0.0, %v2182
      %v2184 = vpop.f32.mrb[0].mxu0
      %2185 = vdwg.mxu0
      %2187 = vrot.lane.b32.xlu0 %v2183, 64
      %v2188 = vpop.permute.xlu0 %2187
      %vm2190 = vcmask 785920
      %2191 = vst.msk [vmem:[%s723] sm:$0xff] %vm2190, %v2188
      %2192 = vrot.lane.b32.xlu0 %v750, 80
      %v2193 = vpop.permute.xlu0 %2192
      %2195 = vmatprep.subr.mxu0 0.0
      %2196 = vmatpush1.msra.mxu0 %v2193
      %2197 = vmatprep.subr.mxu0 0.0
      %2198 = vmatpush1.msra.mxu0 0.0
      %2199 = vmatprep.subr.mxu0 0.0
      %2200 = vmatpush1.msra.mxu0 0.0
      %2201 = vmatprep.subr.mxu0 0.0
      %2202 = vmatpush1.msra.mxu0 0.0
      %2203 = vmatprep.subr.mxu0 0.0
      %2204 = vmatpush1.msra.mxu0 0.0
      %2205 = vmatprep.subr.mxu0 0.0
      %2206 = vmatpush1.msra.mxu0 0.0
      %2207 = vmatprep.subr.mxu0 0.0
      %2208 = vmatpush1.msra.mxu0 0.0
      %2209 = vmatprep.subr.mxu0 0.0
      %2210 = vmatpush1.msra.mxu0 0.0
      %2211 = vmatprep.subr.mxu0 0.0
      %2212 = vmatpush1.msra.mxu0 0.0
      %2213 = vmatprep.subr.mxu0 0.0
      %2214 = vmatpush1.msra.mxu0 0.0
      %2215 = vmatprep.subr.mxu0 0.0
      %2216 = vmatpush1.msra.mxu0 0.0
      %2217 = vmatprep.subr.mxu0 0.0
      %2218 = vmatpush1.msra.mxu0 0.0
      %2219 = vmatprep.subr.mxu0 0.0
      %2220 = vmatpush1.msra.mxu0 0.0
      %2221 = vmatprep.subr.mxu0 0.0
      %2222 = vmatpush1.msra.mxu0 0.0
      %2223 = vmatprep.subr.mxu0 0.0
      %2224 = vmatpush1.msra.mxu0 0.0
      %2225 = vmatprep.subr.mxu0 0.0
      %2226 = vmatpush1.msra.mxu0 0.0
      %2227 = vmatprep.subr.mxu0 0.0
      %2228 = vmatpush1.msra.mxu0 0.0
      %2229 = vmatprep.subr.mxu0 0.0
      %2230 = vmatpush1.msra.mxu0 0.0
      %2231 = vmatprep.subr.mxu0 0.0
      %2232 = vmatpush1.msra.mxu0 0.0
      %2233 = vmatprep.subr.mxu0 0.0
      %2234 = vmatpush1.msra.mxu0 0.0
      %2235 = vmatprep.subr.mxu0 0.0
      %2236 = vmatpush1.msra.mxu0 0.0
      %2237 = vmatprep.subr.mxu0 0.0
      %2238 = vmatpush1.msra.mxu0 0.0
      %2239 = vmatprep.subr.mxu0 0.0
      %2240 = vmatpush1.msra.mxu0 0.0
      %2241 = vmatprep.subr.mxu0 0.0
      %2242 = vmatpush1.msra.mxu0 0.0
      %2243 = vmatprep.subr.mxu0 0.0
      %2244 = vmatpush1.msra.mxu0 0.0
      %2245 = vmatprep.subr.mxu0 0.0
      %2246 = vmatpush1.msra.mxu0 0.0
      %2247 = vmatprep.subr.mxu0 0.0
      %2248 = vmatpush1.msra.mxu0 0.0
      %2249 = vmatprep.subr.mxu0 0.0
      %2250 = vmatpush1.msra.mxu0 0.0
      %2251 = vmatprep.subr.mxu0 0.0
      %2252 = vmatpush1.msra.mxu0 0.0
      %2253 = vmatprep.subr.mxu0 0.0
      %2254 = vmatpush1.msra.mxu0 0.0
      %2255 = vmatprep.subr.mxu0 0.0
      %2256 = vmatpush1.msra.mxu0 0.0
      %2257 = vmatprep.subr.mxu0 0.0
      %2258 = vmatpush1.msra.mxu0 0.0
      %2259 = vmatprep.mubr.f32.mxu0 0.0
      %2260 = vmatmul.mubr.f32.gmra.mrb[0].mxu0 %v2114
      %v2261 = vpop.f32.mrb[0].mxu0
      %v2262 = vadd.f32 0.0, %v2261
      %v2263 = vpop.f32.mrb[0].mxu0
      %2264 = vdwg.mxu0
      %2266 = vrot.lane.b32.xlu0 %v2262, 48
      %v2267 = vpop.permute.xlu0 %2266
      %vm2269 = vcmask 589184
      %2270 = vst.msk [vmem:[%s739] sm:$0xff] %vm2269, %v2267
      %2271 = vrot.lane.b32.xlu0 %v740, 32
      %v2272 = vpop.permute.xlu0 %2271
      %2273 = vrot.lane.b32.xlu0 %v742, 32
      %v2274 = vpop.permute.xlu0 %2273
      %v2275 = vsel %vm775, %v2272, 0
      %v2277 = vsel %vm775, %v2274, 0
      %2279 = vmatprep.subr.mxu0 0.0
      %2280 = vmatpush1.xpose.msra.mxu0 %v2277
      %2281 = vmatprep.subr.mxu0 0.0
      %2282 = vmatpush1.xpose.msra.mxu0 0.0
      %2283 = vmatprep.subr.mxu0 0.0
      %2284 = vmatpush1.xpose.msra.mxu0 0.0
      %2285 = vmatprep.subr.mxu0 0.0
      %2286 = vmatpush1.xpose.msra.mxu0 0.0
      %2287 = vmatprep.subr.mxu0 0.0
      %2288 = vmatpush1.xpose.msra.mxu0 0.0
      %2289 = vmatprep.subr.mxu0 0.0
      %2290 = vmatpush1.xpose.msra.mxu0 0.0
      %2291 = vmatprep.subr.mxu0 0.0
      %2292 = vmatpush1.xpose.msra.mxu0 0.0
      %2293 = vmatprep.subr.mxu0 0.0
      %2294 = vmatpush1.xpose.msra.mxu0 0.0
      %2295 = vmatprep.subr.mxu0 0.0
      %2296 = vmatpush1.xpose.msra.mxu0 0.0
      %2297 = vmatprep.subr.mxu0 0.0
      %2298 = vmatpush1.xpose.msra.mxu0 0.0
      %2299 = vmatprep.subr.mxu0 0.0
      %2300 = vmatpush1.xpose.msra.mxu0 0.0
      %2301 = vmatprep.subr.mxu0 0.0
      %2302 = vmatpush1.xpose.msra.mxu0 0.0
      %2303 = vmatprep.subr.mxu0 0.0
      %2304 = vmatpush1.xpose.msra.mxu0 0.0
      %2305 = vmatprep.subr.mxu0 0.0
      %2306 = vmatpush1.xpose.msra.mxu0 0.0
      %2307 = vmatprep.subr.mxu0 0.0
      %2308 = vmatpush1.xpose.msra.mxu0 0.0
      %2309 = vmatprep.subr.mxu0 0.0
      %2310 = vmatpush1.xpose.msra.mxu0 0.0
      %2311 = vmatprep.subr.mxu0 0.0
      %2312 = vmatpush1.xpose.msra.mxu0 0.0
      %2313 = vmatprep.subr.mxu0 0.0
      %2314 = vmatpush1.xpose.msra.mxu0 0.0
      %2315 = vmatprep.subr.mxu0 0.0
      %2316 = vmatpush1.xpose.msra.mxu0 0.0
      %2317 = vmatprep.subr.mxu0 0.0
      %2318 = vmatpush1.xpose.msra.mxu0 0.0
      %2319 = vmatprep.subr.mxu0 0.0
      %2320 = vmatpush1.xpose.msra.mxu0 0.0
      %2321 = vmatprep.subr.mxu0 0.0
      %2322 = vmatpush1.xpose.msra.mxu0 0.0
      %2323 = vmatprep.subr.mxu0 0.0
      %2324 = vmatpush1.xpose.msra.mxu0 0.0
      %2325 = vmatprep.subr.mxu0 0.0
      %2326 = vmatpush1.xpose.msra.mxu0 0.0
      %2327 = vmatprep.subr.mxu0 0.0
      %2328 = vmatpush1.xpose.msra.mxu0 0.0
      %2329 = vmatprep.subr.mxu0 0.0
      %2330 = vmatpush1.xpose.msra.mxu0 0.0
      %2331 = vmatprep.subr.mxu0 0.0
      %2332 = vmatpush1.xpose.msra.mxu0 0.0
      %2333 = vmatprep.subr.mxu0 0.0
      %2334 = vmatpush1.xpose.msra.mxu0 0.0
      %2335 = vmatprep.subr.mxu0 0.0
      %2336 = vmatpush1.xpose.msra.mxu0 0.0
      %2337 = vmatprep.subr.mxu0 0.0
      %2338 = vmatpush1.xpose.msra.mxu0 0.0
      %2339 = vmatprep.subr.mxu0 0.0
      %2340 = vmatpush1.xpose.msra.mxu0 0.0
      %2341 = vmatprep.subr.mxu0 0.0
      %2342 = vmatpush1.xpose.msra.mxu0 0.0
      %2343 = vmatprep.mubr.f32.mxu0 0.0
      %2344 = vmatmul.mubr.f32.gmra.mrb[0].mxu0 %v2275
      %v2345 = vpop.f32.mrb[0].mxu0
      %v2346 = vadd.f32 0.0, %v2345
      %v2347 = vpop.f32.mrb[0].mxu0
      %2348 = vdwg.mxu0
      %v2349 = vmul.f32 %v2346, 0.17677669
      %2350 = vrot.lane.b32.xlu0 %v746, 56
      %v2351 = vpop.permute.xlu0 %2350
      %2352 = vrot.lane.b32.xlu0 %v748, 56
      %v2353 = vpop.permute.xlu0 %2352
      %v2354 = vsel %vm853, %v2351, 0
      %v2356 = vsel %vm853, %v2353, 0
      %2358 = vmatprep.subr.mxu0 0.0
      %2359 = vmatpush1.xpose.msra.mxu0 %v2356
      %2360 = vmatprep.subr.mxu0 0.0
      %2361 = vmatpush1.xpose.msra.mxu0 0.0
      %2362 = vmatprep.subr.mxu0 0.0
      %2363 = vmatpush1.xpose.msra.mxu0 0.0
      %2364 = vmatprep.subr.mxu0 0.0
      %2365 = vmatpush1.xpose.msra.mxu0 0.0
      %2366 = vmatprep.subr.mxu0 0.0
      %2367 = vmatpush1.xpose.msra.mxu0 0.0
      %2368 = vmatprep.subr.mxu0 0.0
      %2369 = vmatpush1.xpose.msra.mxu0 0.0
      %2370 = vmatprep.subr.mxu0 0.0
      %2371 = vmatpush1.xpose.msra.mxu0 0.0
      %2372 = vmatprep.subr.mxu0 0.0
      %2373 = vmatpush1.xpose.msra.mxu0 0.0
      %2374 = vmatprep.subr.mxu0 0.0
      %2375 = vmatpush1.xpose.msra.mxu0 0.0
      %2376 = vmatprep.subr.mxu0 0.0
      %2377 = vmatpush1.xpose.msra.mxu0 0.0
      %2378 = vmatprep.subr.mxu0 0.0
      %2379 = vmatpush1.xpose.msra.mxu0 0.0
      %2380 = vmatprep.subr.mxu0 0.0
      %2381 = vmatpush1.xpose.msra.mxu0 0.0
      %2382 = vmatprep.subr.mxu0 0.0
      %2383 = vmatpush1.xpose.msra.mxu0 0.0
      %2384 = vmatprep.subr.mxu0 0.0
      %2385 = vmatpush1.xpose.msra.mxu0 0.0
      %2386 = vmatprep.subr.mxu0 0.0
      %2387 = vmatpush1.xpose.msra.mxu0 0.0
      %2388 = vmatprep.subr.mxu0 0.0
      %2389 = vmatpush1.xpose.msra.mxu0 0.0
      %2390 = vmatprep.subr.mxu0 0.0
      %2391 = vmatpush1.xpose.msra.mxu0 0.0
      %2392 = vmatprep.subr.mxu0 0.0
      %2393 = vmatpush1.xpose.msra.mxu0 0.0
      %2394 = vmatprep.subr.mxu0 0.0
      %2395 = vmatpush1.xpose.msra.mxu0 0.0
      %2396 = vmatprep.subr.mxu0 0.0
      %2397 = vmatpush1.xpose.msra.mxu0 0.0
      %2398 = vmatprep.subr.mxu0 0.0
      %2399 = vmatpush1.xpose.msra.mxu0 0.0
      %2400 = vmatprep.subr.mxu0 0.0
      %2401 = vmatpush1.xpose.msra.mxu0 0.0
      %2402 = vmatprep.subr.mxu0 0.0
      %2403 = vmatpush1.xpose.msra.mxu0 0.0
      %2404 = vmatprep.subr.mxu0 0.0
      %2405 = vmatpush1.xpose.msra.mxu0 0.0
      %2406 = vmatprep.subr.mxu0 0.0
      %2407 = vmatpush1.xpose.msra.mxu0 0.0
      %2408 = vmatprep.subr.mxu0 0.0
      %2409 = vmatpush1.xpose.msra.mxu0 0.0
      %2410 = vmatprep.subr.mxu0 0.0
      %2411 = vmatpush1.xpose.msra.mxu0 0.0
      %2412 = vmatprep.subr.mxu0 0.0
      %2413 = vmatpush1.xpose.msra.mxu0 0.0
      %2414 = vmatprep.subr.mxu0 0.0
      %2415 = vmatpush1.xpose.msra.mxu0 0.0
      %2416 = vmatprep.subr.mxu0 0.0
      %2417 = vmatpush1.xpose.msra.mxu0 0.0
      %2418 = vmatprep.subr.mxu0 0.0
      %2419 = vmatpush1.xpose.msra.mxu0 0.0
      %2420 = vmatprep.subr.mxu0 0.0
      %2421 = vmatpush1.xpose.msra.mxu0 0.0
      %2422 = vmatprep.mubr.f32.mxu0 0.0
      %2423 = vmatmul.mubr.f32.gmra.mrb[0].mxu0 %v2354
      %v2424 = vpop.f32.mrb[0].mxu0
      %v2425 = vadd.f32 0.0, %v2424
      %v2426 = vpop.f32.mrb[0].mxu0
      %2427 = vdwg.mxu0
      %2428 = vrot.lane.b32.xlu0 %v930, 56
      %v2429 = vpop.permute.xlu0 %2428
      %v2431 = vsel %vm853, %v2429, 0.0
      %2432 = vadd.xlane.f32.xlu0 %v2431
      %v2433 = vpop.xlane.xlu0 %2432
      %2434 = vrot.lane.b32.xlu0 %v934, 56
      %v2435 = vpop.permute.xlu0 %2434
      %v2436 = vsel %vm853, %v2435, 0
      %2438 = vmatprep.subr.mxu0 0.0
      %2439 = vmatpush1.xpose.msra.mxu0 %v2436
      %2440 = vmatprep.subr.mxu0 0.0
      %2441 = vmatpush1.xpose.msra.mxu0 0.0
      %2442 = vmatprep.subr.mxu0 0.0
      %2443 = vmatpush1.xpose.msra.mxu0 0.0
      %2444 = vmatprep.subr.mxu0 0.0
      %2445 = vmatpush1.xpose.msra.mxu0 0.0
      %2446 = vmatprep.subr.mxu0 0.0
      %2447 = vmatpush1.xpose.msra.mxu0 0.0
      %2448 = vmatprep.subr.mxu0 0.0
      %2449 = vmatpush1.xpose.msra.mxu0 0.0
      %2450 = vmatprep.subr.mxu0 0.0
      %2451 = vmatpush1.xpose.msra.mxu0 0.0
      %2452 = vmatprep.subr.mxu0 0.0
      %2453 = vmatpush1.xpose.msra.mxu0 0.0
      %2454 = vmatprep.subr.mxu0 0.0
      %2455 = vmatpush1.xpose.msra.mxu0 0.0
      %2456 = vmatprep.subr.mxu0 0.0
      %2457 = vmatpush1.xpose.msra.mxu0 0.0
      %2458 = vmatprep.subr.mxu0 0.0
      %2459 = vmatpush1.xpose.msra.mxu0 0.0
      %2460 = vmatprep.subr.mxu0 0.0
      %2461 = vmatpush1.xpose.msra.mxu0 0.0
      %2462 = vmatprep.subr.mxu0 0.0
      %2463 = vmatpush1.xpose.msra.mxu0 0.0
      %2464 = vmatprep.subr.mxu0 0.0
      %2465 = vmatpush1.xpose.msra.mxu0 0.0
      %2466 = vmatprep.subr.mxu0 0.0
      %2467 = vmatpush1.xpose.msra.mxu0 0.0
      %2468 = vmatprep.subr.mxu0 0.0
      %2469 = vmatpush1.xpose.msra.mxu0 0.0
      %2470 = vmatprep.subr.mxu0 0.0
      %2471 = vmatpush1.xpose.msra.mxu0 0.0
      %2472 = vmatprep.subr.mxu0 0.0
      %2473 = vmatpush1.xpose.msra.mxu0 0.0
      %2474 = vmatprep.subr.mxu0 0.0
      %2475 = vmatpush1.xpose.msra.mxu0 0.0
      %2476 = vmatprep.subr.mxu0 0.0
      %2477 = vmatpush1.xpose.msra.mxu0 0.0
      %2478 = vmatprep.subr.mxu0 0.0
      %2479 = vmatpush1.xpose.msra.mxu0 0.0
      %2480 = vmatprep.subr.mxu0 0.0
      %2481 = vmatpush1.xpose.msra.mxu0 0.0
      %2482 = vmatprep.subr.mxu0 0.0
      %2483 = vmatpush1.xpose.msra.mxu0 0.0
      %2484 = vmatprep.subr.mxu0 0.0
      %2485 = vmatpush1.xpose.msra.mxu0 0.0
      %2486 = vmatprep.subr.mxu0 0.0
      %2487 = vmatpush1.xpose.msra.mxu0 0.0
      %2488 = vmatprep.subr.mxu0 0.0
      %2489 = vmatpush1.xpose.msra.mxu0 0.0
      %2490 = vmatprep.subr.mxu0 0.0
      %2491 = vmatpush1.xpose.msra.mxu0 0.0
      %2492 = vmatprep.subr.mxu0 0.0
      %2493 = vmatpush1.xpose.msra.mxu0 0.0
      %2494 = vmatprep.subr.mxu0 0.0
      %2495 = vmatpush1.xpose.msra.mxu0 0.0
      %2496 = vmatprep.subr.mxu0 0.0
      %2497 = vmatpush1.xpose.msra.mxu0 0.0
      %2498 = vmatprep.subr.mxu0 0.0
      %2499 = vmatpush1.xpose.msra.mxu0 0.0
      %2500 = vmatprep.subr.mxu0 0.0
      %2501 = vmatpush1.xpose.msra.mxu0 0.0
      %2502 = vmatprep.mubr.f32.mxu0 0.0
      %2503 = vmatmul.mubr.f32.gmra.mrb[0].mxu0 %v936
      %v2504 = vpop.f32.mrb[0].mxu0
      %v2505 = vadd.f32 0.0, %v2504
      %v2506 = vpop.f32.mrb[0].mxu0
      %2507 = vdwg.mxu0
      %v2508 = vlaneseq
      %v2509 = vshrl.u32 %v2508, 7
      %v2510 = vsub.s32 0, %v2509
      %v2511 = vrot.slane %v2505, %v2510
      %v2512 = vadd.f32 %v2433, %v2511
      %v2513 = vmul.f32 %v2425, 2.0
      %v2514 = vsub.f32 %v2512, %v2513
      %v2515 = vadd.f32 %v2349, %v755
      %s2516 = sld [smem:[#allocation5 + $0x3]]
      %v2517 = vstv %s2516
      %v2518 = vmul.f32 %v2514, %v2517
      %v2519 = vadd.f32 %v2515, %v2518
      %v2520 = vmul.f32 %v2519, 0.57735026
      %v2521 = vsub.f32 %v2520, %v772
      %v2522 = vsel %vm1025, %v2521, -inf
      %2523 = vmax.xlane.f32.xlu0 %v2522
      %v2524 = vpop.xlane.xlu0 %2523
      %v2525 = vsub.f32 %v2521, %v2524
      %v2526 = vmul.f32 %v2525, 1.442695
      %v2527 = vpow.pop %v2526
      %v2528 = vmul.f32 %v2527, %v768
      %v2529 = vmul.f32 %v2527, %v769
      %v2530 = vsel %vm1025, %v2528, 0.0
      %2531 = vadd.xlane.f32.xlu0 %v2530
      %v2532 = vpop.xlane.xlu0 %2531
      %v2533 = vsel %vm1025, %v2529, 0.0
      %2534 = vadd.xlane.f32.xlu0 %v2533
      %v2535 = vpop.xlane.xlu0 %2534
      %vm2536 = vcmp.gt.f32.partialorder %v2532, 0.0
      %v2537 = vsel %vm2536, %v2532, 1.0
      %v2538 = vrcp.pop %v2537
      %vm2539 = vcmp.gt.f32.partialorder %v2535, 0.0
      %v2540 = vsel %vm2539, %v2535, 1.0
      %v2541 = vrcp.pop %v2540
      %v2542 = vmul.f32 %v2538, %v1046
      %v2543 = vmul.f32 %v2528, %v2542
      %v2544 = vmul.f32 %v2541, %v1049
      %v2545 = vmul.f32 %v2529, %v2544
      %v2546 = vadd.f32 %v2543, %v2545
      %v2548 = vcombine.high %v2546, %v2546
      %v2550 = vunpack.c.l.s4 1966171168
      %v2551 = vunpack.c.0.s8 %v2550
      %v2552 = vlaneseq
      %v2553 = vshrl.u32 %v2552, 7
      %v2554 = vsub.s32 %v2551, %v2553
      %v2555 = vrot.slane %v2546, %v2554
      %v2557 = vunpack.c.l.s4 1966171168
      %v2558 = vunpack.c.0.s8 %v2557
      %v2559 = vlaneseq
      %v2560 = vshrl.u32 %v2559, 7
      %v2561 = vsub.s32 %v2558, %v2560
      %v2562 = vrot.slane %v2548, %v2561
      %v2563 = vcombine.high %v2555, %v2555
      %v2564 = vcombine.high %v2562, %v2562
      %v2566 = vunpack.c.l.s4 1966171168
      %v2567 = vunpack.c.0.s8 %v2566
      %v2568 = vlaneseq
      %v2569 = vshrl.u32 %v2568, 7
      %v2570 = vsub.s32 %v2567, %v2569
      %v2571 = vrot.slane %v2555, %v2570
      %v2573 = vunpack.c.l.s4 1966171168
      %v2574 = vunpack.c.0.s8 %v2573
      %v2575 = vlaneseq
      %v2576 = vshrl.u32 %v2575, 7
      %v2577 = vsub.s32 %v2574, %v2576
      %v2578 = vrot.slane %v2562, %v2577
      %v2580 = vunpack.c.l.s4 1966171168
      %v2581 = vunpack.c.0.s8 %v2580
      %v2582 = vlaneseq
      %v2583 = vshrl.u32 %v2582, 7
      %v2584 = vsub.s32 %v2581, %v2583
      %v2585 = vrot.slane %v2563, %v2584
      %v2587 = vunpack.c.l.s4 1966171168
      %v2588 = vunpack.c.0.s8 %v2587
      %v2589 = vlaneseq
      %v2590 = vshrl.u32 %v2589, 7
      %v2591 = vsub.s32 %v2588, %v2590
      %v2592 = vrot.slane %v2564, %v2591
      %v2593 = vcombine.high %v2571, %v2571
      %v2594 = vcombine.high %v2578, %v2578
      %v2595 = vcombine.high %v2585, %v2585
      %v2596 = vcombine.high %v2592, %v2592
      %2605 = vst.msk [vmem:[#allocation2 + $0x3] sm:$0x1] %vm1111, %v2571
      %2606 = vst.msk [vmem:[#allocation2 + $0xb] sm:$0x1] %vm1111, %v2585
      %2607 = vst.msk [vmem:[#allocation2 + $0x13] sm:$0x1] %vm1111, %v2593
      %2608 = vst.msk [vmem:[#allocation2 + $0x1b] sm:$0x1] %vm1111, %v2595
      %2609 = vst.msk [vmem:[#allocation2 + $0x23] sm:$0x1] %vm1111, %v2578
      %2610 = vst.msk [vmem:[#allocation2 + $0x2b] sm:$0x1] %vm1111, %v2592
      %2611 = vst.msk [vmem:[#allocation2 + $0x33] sm:$0x1] %vm1111, %v2594
      %2612 = vst.msk [vmem:[#allocation2 + $0x3b] sm:$0x1] %vm1111, %v2596
      %2613 = vrot.lane.b32.xlu0 %v744, 32
      %v2614 = vpop.permute.xlu0 %2613
      %v2616 = vsel %vm1025, %v2546, 0
      %2618 = vmatprep.subr.mxu0 0.0
      %2619 = vmatpush1.msra.mxu0 %v2614
      %2620 = vmatprep.subr.mxu0 0.0
      %2621 = vmatpush1.msra.mxu0 0.0
      %2622 = vmatprep.subr.mxu0 0.0
      %2623 = vmatpush1.msra.mxu0 0.0
      %2624 = vmatprep.subr.mxu0 0.0
      %2625 = vmatpush1.msra.mxu0 0.0
      %2626 = vmatprep.subr.mxu0 0.0
      %2627 = vmatpush1.msra.mxu0 0.0
      %2628 = vmatprep.subr.mxu0 0.0
      %2629 = vmatpush1.msra.mxu0 0.0
      %2630 = vmatprep.subr.mxu0 0.0
      %2631 = vmatpush1.msra.mxu0 0.0
      %2632 = vmatprep.subr.mxu0 0.0
      %2633 = vmatpush1.msra.mxu0 0.0
      %2634 = vmatprep.subr.mxu0 0.0
      %2635 = vmatpush1.msra.mxu0 0.0
      %2636 = vmatprep.subr.mxu0 0.0
      %2637 = vmatpush1.msra.mxu0 0.0
      %2638 = vmatprep.subr.mxu0 0.0
      %2639 = vmatpush1.msra.mxu0 0.0
      %2640 = vmatprep.subr.mxu0 0.0
      %2641 = vmatpush1.msra.mxu0 0.0
      %2642 = vmatprep.subr.mxu0 0.0
      %2643 = vmatpush1.msra.mxu0 0.0
      %2644 = vmatprep.subr.mxu0 0.0
      %2645 = vmatpush1.msra.mxu0 0.0
      %2646 = vmatprep.subr.mxu0 0.0
      %2647 = vmatpush1.msra.mxu0 0.0
      %2648 = vmatprep.subr.mxu0 0.0
      %2649 = vmatpush1.msra.mxu0 0.0
      %2650 = vmatprep.subr.mxu0 0.0
      %2651 = vmatpush1.msra.mxu0 0.0
      %2652 = vmatprep.subr.mxu0 0.0
      %2653 = vmatpush1.msra.mxu0 0.0
      %2654 = vmatprep.subr.mxu0 0.0
      %2655 = vmatpush1.msra.mxu0 0.0
      %2656 = vmatprep.subr.mxu0 0.0
      %2657 = vmatpush1.msra.mxu0 0.0
      %2658 = vmatprep.subr.mxu0 0.0
      %2659 = vmatpush1.msra.mxu0 0.0
      %2660 = vmatprep.subr.mxu0 0.0
      %2661 = vmatpush1.msra.mxu0 0.0
      %2662 = vmatprep.subr.mxu0 0.0
      %2663 = vmatpush1.msra.mxu0 0.0
      %2664 = vmatprep.subr.mxu0 0.0
      %2665 = vmatpush1.msra.mxu0 0.0
      %2666 = vmatprep.subr.mxu0 0.0
      %2667 = vmatpush1.msra.mxu0 0.0
      %2668 = vmatprep.subr.mxu0 0.0
      %2669 = vmatpush1.msra.mxu0 0.0
      %2670 = vmatprep.subr.mxu0 0.0
      %2671 = vmatpush1.msra.mxu0 0.0
      %2672 = vmatprep.subr.mxu0 0.0
      %2673 = vmatpush1.msra.mxu0 0.0
      %2674 = vmatprep.subr.mxu0 0.0
      %2675 = vmatpush1.msra.mxu0 0.0
      %2676 = vmatprep.subr.mxu0 0.0
      %2677 = vmatpush1.msra.mxu0 0.0
      %2678 = vmatprep.subr.mxu0 0.0
      %2679 = vmatpush1.msra.mxu0 0.0
      %2680 = vmatprep.subr.mxu0 0.0
      %2681 = vmatpush1.msra.mxu0 0.0
      %2682 = vmatprep.mubr.f32.mxu0 0.0
      %2683 = vmatmul.mubr.f32.gmra.mrb[0].mxu0 %v2616
      %v2684 = vpop.f32.mrb[0].mxu0
      %v2685 = vadd.f32 0.0, %v2684
      %v2686 = vpop.f32.mrb[0].mxu0
      %2687 = vdwg.mxu0
      %2689 = vrot.lane.b32.xlu0 %v2685, 96
      %v2690 = vpop.permute.xlu0 %2689
      %vm2692 = vcmask 1048320
      %2693 = vst.msk [vmem:[%s723] sm:$0xff] %vm2692, %v2690
      %2694 = vrot.lane.b32.xlu0 %v750, 56
      %v2695 = vpop.permute.xlu0 %2694
      %2697 = vmatprep.subr.mxu0 0.0
      %2698 = vmatpush1.msra.mxu0 %v2695
      %2699 = vmatprep.subr.mxu0 0.0
      %2700 = vmatpush1.msra.mxu0 0.0
      %2701 = vmatprep.subr.mxu0 0.0
      %2702 = vmatpush1.msra.mxu0 0.0
      %2703 = vmatprep.subr.mxu0 0.0
      %2704 = vmatpush1.msra.mxu0 0.0
      %2705 = vmatprep.subr.mxu0 0.0
      %2706 = vmatpush1.msra.mxu0 0.0
      %2707 = vmatprep.subr.mxu0 0.0
      %2708 = vmatpush1.msra.mxu0 0.0
      %2709 = vmatprep.subr.mxu0 0.0
      %2710 = vmatpush1.msra.mxu0 0.0
      %2711 = vmatprep.subr.mxu0 0.0
      %2712 = vmatpush1.msra.mxu0 0.0
      %2713 = vmatprep.subr.mxu0 0.0
      %2714 = vmatpush1.msra.mxu0 0.0
      %2715 = vmatprep.subr.mxu0 0.0
      %2716 = vmatpush1.msra.mxu0 0.0
      %2717 = vmatprep.subr.mxu0 0.0
      %2718 = vmatpush1.msra.mxu0 0.0
      %2719 = vmatprep.subr.mxu0 0.0
      %2720 = vmatpush1.msra.mxu0 0.0
      %2721 = vmatprep.subr.mxu0 0.0
      %2722 = vmatpush1.msra.mxu0 0.0
      %2723 = vmatprep.subr.mxu0 0.0
      %2724 = vmatpush1.msra.mxu0 0.0
      %2725 = vmatprep.subr.mxu0 0.0
      %2726 = vmatpush1.msra.mxu0 0.0
      %2727 = vmatprep.subr.mxu0 0.0
      %2728 = vmatpush1.msra.mxu0 0.0
      %2729 = vmatprep.subr.mxu0 0.0
      %2730 = vmatpush1.msra.mxu0 0.0
      %2731 = vmatprep.subr.mxu0 0.0
      %2732 = vmatpush1.msra.mxu0 0.0
      %2733 = vmatprep.subr.mxu0 0.0
      %2734 = vmatpush1.msra.mxu0 0.0
      %2735 = vmatprep.subr.mxu0 0.0
      %2736 = vmatpush1.msra.mxu0 0.0
      %2737 = vmatprep.subr.mxu0 0.0
      %2738 = vmatpush1.msra.mxu0 0.0
      %2739 = vmatprep.subr.mxu0 0.0
      %2740 = vmatpush1.msra.mxu0 0.0
      %2741 = vmatprep.subr.mxu0 0.0
      %2742 = vmatpush1.msra.mxu0 0.0
      %2743 = vmatprep.subr.mxu0 0.0
      %2744 = vmatpush1.msra.mxu0 0.0
      %2745 = vmatprep.subr.mxu0 0.0
      %2746 = vmatpush1.msra.mxu0 0.0
      %2747 = vmatprep.subr.mxu0 0.0
      %2748 = vmatpush1.msra.mxu0 0.0
      %2749 = vmatprep.subr.mxu0 0.0
      %2750 = vmatpush1.msra.mxu0 0.0
      %2751 = vmatprep.subr.mxu0 0.0
      %2752 = vmatpush1.msra.mxu0 0.0
      %2753 = vmatprep.subr.mxu0 0.0
      %2754 = vmatpush1.msra.mxu0 0.0
      %2755 = vmatprep.subr.mxu0 0.0
      %2756 = vmatpush1.msra.mxu0 0.0
      %2757 = vmatprep.subr.mxu0 0.0
      %2758 = vmatpush1.msra.mxu0 0.0
      %2759 = vmatprep.subr.mxu0 0.0
      %2760 = vmatpush1.msra.mxu0 0.0
      %2761 = vmatprep.mubr.f32.mxu0 0.0
      %2762 = vmatmul.mubr.f32.gmra.mrb[0].mxu0 %v2616
      %v2763 = vpop.f32.mrb[0].mxu0
      %v2764 = vadd.f32 0.0, %v2763
      %v2765 = vpop.f32.mrb[0].mxu0
      %2766 = vdwg.mxu0
      %2768 = vrot.lane.b32.xlu0 %v2764, 72
      %v2769 = vpop.permute.xlu0 %2768
      %vm2771 = vcmask 785984
      %2772 = vst.msk [vmem:[%s739] sm:$0xff] %vm2771, %v2769
      %v2774 = vsel %vm775, %v741, 0
      %v2777 = vsel %vm775, %v743, 0
      %2779 = vmatprep.subr.mxu0 0.0
      %2780 = vmatpush1.xpose.msra.mxu0 %v2777
      %2781 = vmatprep.subr.mxu0 0.0
      %2782 = vmatpush1.xpose.msra.mxu0 0.0
      %2783 = vmatprep.subr.mxu0 0.0
      %2784 = vmatpush1.xpose.msra.mxu0 0.0
      %2785 = vmatprep.subr.mxu0 0.0
      %2786 = vmatpush1.xpose.msra.mxu0 0.0
      %2787 = vmatprep.subr.mxu0 0.0
      %2788 = vmatpush1.xpose.msra.mxu0 0.0
      %2789 = vmatprep.subr.mxu0 0.0
      %2790 = vmatpush1.xpose.msra.mxu0 0.0
      %2791 = vmatprep.subr.mxu0 0.0
      %2792 = vmatpush1.xpose.msra.mxu0 0.0
      %2793 = vmatprep.subr.mxu0 0.0
      %2794 = vmatpush1.xpose.msra.mxu0 0.0
      %2795 = vmatprep.subr.mxu0 0.0
      %2796 = vmatpush1.xpose.msra.mxu0 0.0
      %2797 = vmatprep.subr.mxu0 0.0
      %2798 = vmatpush1.xpose.msra.mxu0 0.0
      %2799 = vmatprep.subr.mxu0 0.0
      %2800 = vmatpush1.xpose.msra.mxu0 0.0
      %2801 = vmatprep.subr.mxu0 0.0
      %2802 = vmatpush1.xpose.msra.mxu0 0.0
      %2803 = vmatprep.subr.mxu0 0.0
      %2804 = vmatpush1.xpose.msra.mxu0 0.0
      %2805 = vmatprep.subr.mxu0 0.0
      %2806 = vmatpush1.xpose.msra.mxu0 0.0
      %2807 = vmatprep.subr.mxu0 0.0
      %2808 = vmatpush1.xpose.msra.mxu0 0.0
      %2809 = vmatprep.subr.mxu0 0.0
      %2810 = vmatpush1.xpose.msra.mxu0 0.0
      %2811 = vmatprep.subr.mxu0 0.0
      %2812 = vmatpush1.xpose.msra.mxu0 0.0
      %2813 = vmatprep.subr.mxu0 0.0
      %2814 = vmatpush1.xpose.msra.mxu0 0.0
      %2815 = vmatprep.subr.mxu0 0.0
      %2816 = vmatpush1.xpose.msra.mxu0 0.0
      %2817 = vmatprep.subr.mxu0 0.0
      %2818 = vmatpush1.xpose.msra.mxu0 0.0
      %2819 = vmatprep.subr.mxu0 0.0
      %2820 = vmatpush1.xpose.msra.mxu0 0.0
      %2821 = vmatprep.subr.mxu0 0.0
      %2822 = vmatpush1.xpose.msra.mxu0 0.0
      %2823 = vmatprep.subr.mxu0 0.0
      %2824 = vmatpush1.xpose.msra.mxu0 0.0
      %2825 = vmatprep.subr.mxu0 0.0
      %2826 = vmatpush1.xpose.msra.mxu0 0.0
      %2827 = vmatprep.subr.mxu0 0.0
      %2828 = vmatpush1.xpose.msra.mxu0 0.0
      %2829 = vmatprep.subr.mxu0 0.0
      %2830 = vmatpush1.xpose.msra.mxu0 0.0
      %2831 = vmatprep.subr.mxu0 0.0
      %2832 = vmatpush1.xpose.msra.mxu0 0.0
      %2833 = vmatprep.subr.mxu0 0.0
      %2834 = vmatpush1.xpose.msra.mxu0 0.0
      %2835 = vmatprep.subr.mxu0 0.0
      %2836 = vmatpush1.xpose.msra.mxu0 0.0
      %2837 = vmatprep.subr.mxu0 0.0
      %2838 = vmatpush1.xpose.msra.mxu0 0.0
      %2839 = vmatprep.subr.mxu0 0.0
      %2840 = vmatpush1.xpose.msra.mxu0 0.0
      %2841 = vmatprep.subr.mxu0 0.0
      %2842 = vmatpush1.xpose.msra.mxu0 0.0
      %2843 = vmatprep.mubr.f32.mxu0 0.0
      %2844 = vmatmul.mubr.f32.gmra.mrb[0].mxu0 %v2774
      %v2845 = vpop.f32.mrb[0].mxu0
      %v2846 = vadd.f32 0.0, %v2845
      %v2847 = vpop.f32.mrb[0].mxu0
      %2848 = vdwg.mxu0
      %v2849 = vmul.f32 %v2846, 0.17677669
      %2850 = vrot.lane.b32.xlu0 %v746, 32
      %v2851 = vpop.permute.xlu0 %2850
      %2852 = vrot.lane.b32.xlu0 %v748, 32
      %v2853 = vpop.permute.xlu0 %2852
      %v2854 = vsel %vm853, %v2851, 0
      %v2856 = vsel %vm853, %v2853, 0
      %2858 = vmatprep.subr.mxu0 0.0
      %2859 = vmatpush1.xpose.msra.mxu0 %v2856
      %2860 = vmatprep.subr.mxu0 0.0
      %2861 = vmatpush1.xpose.msra.mxu0 0.0
      %2862 = vmatprep.subr.mxu0 0.0
      %2863 = vmatpush1.xpose.msra.mxu0 0.0
      %2864 = vmatprep.subr.mxu0 0.0
      %2865 = vmatpush1.xpose.msra.mxu0 0.0
      %2866 = vmatprep.subr.mxu0 0.0
      %2867 = vmatpush1.xpose.msra.mxu0 0.0
      %2868 = vmatprep.subr.mxu0 0.0
      %2869 = vmatpush1.xpose.msra.mxu0 0.0
      %2870 = vmatprep.subr.mxu0 0.0
      %2871 = vmatpush1.xpose.msra.mxu0 0.0
      %2872 = vmatprep.subr.mxu0 0.0
      %2873 = vmatpush1.xpose.msra.mxu0 0.0
      %2874 = vmatprep.subr.mxu0 0.0
      %2875 = vmatpush1.xpose.msra.mxu0 0.0
      %2876 = vmatprep.subr.mxu0 0.0
      %2877 = vmatpush1.xpose.msra.mxu0 0.0
      %2878 = vmatprep.subr.mxu0 0.0
      %2879 = vmatpush1.xpose.msra.mxu0 0.0
      %2880 = vmatprep.subr.mxu0 0.0
      %2881 = vmatpush1.xpose.msra.mxu0 0.0
      %2882 = vmatprep.subr.mxu0 0.0
      %2883 = vmatpush1.xpose.msra.mxu0 0.0
      %2884 = vmatprep.subr.mxu0 0.0
      %2885 = vmatpush1.xpose.msra.mxu0 0.0
      %2886 = vmatprep.subr.mxu0 0.0
      %2887 = vmatpush1.xpose.msra.mxu0 0.0
      %2888 = vmatprep.subr.mxu0 0.0
      %2889 = vmatpush1.xpose.msra.mxu0 0.0
      %2890 = vmatprep.subr.mxu0 0.0
      %2891 = vmatpush1.xpose.msra.mxu0 0.0
      %2892 = vmatprep.subr.mxu0 0.0
      %2893 = vmatpush1.xpose.msra.mxu0 0.0
      %2894 = vmatprep.subr.mxu0 0.0
      %2895 = vmatpush1.xpose.msra.mxu0 0.0
      %2896 = vmatprep.subr.mxu0 0.0
      %2897 = vmatpush1.xpose.msra.mxu0 0.0
      %2898 = vmatprep.subr.mxu0 0.0
      %2899 = vmatpush1.xpose.msra.mxu0 0.0
      %2900 = vmatprep.subr.mxu0 0.0
      %2901 = vmatpush1.xpose.msra.mxu0 0.0
      %2902 = vmatprep.subr.mxu0 0.0
      %2903 = vmatpush1.xpose.msra.mxu0 0.0
      %2904 = vmatprep.subr.mxu0 0.0
      %2905 = vmatpush1.xpose.msra.mxu0 0.0
      %2906 = vmatprep.subr.mxu0 0.0
      %2907 = vmatpush1.xpose.msra.mxu0 0.0
      %2908 = vmatprep.subr.mxu0 0.0
      %2909 = vmatpush1.xpose.msra.mxu0 0.0
      %2910 = vmatprep.subr.mxu0 0.0
      %2911 = vmatpush1.xpose.msra.mxu0 0.0
      %2912 = vmatprep.subr.mxu0 0.0
      %2913 = vmatpush1.xpose.msra.mxu0 0.0
      %2914 = vmatprep.subr.mxu0 0.0
      %2915 = vmatpush1.xpose.msra.mxu0 0.0
      %2916 = vmatprep.subr.mxu0 0.0
      %2917 = vmatpush1.xpose.msra.mxu0 0.0
      %2918 = vmatprep.subr.mxu0 0.0
      %2919 = vmatpush1.xpose.msra.mxu0 0.0
      %2920 = vmatprep.subr.mxu0 0.0
      %2921 = vmatpush1.xpose.msra.mxu0 0.0
      %2922 = vmatprep.mubr.f32.mxu0 0.0
      %2923 = vmatmul.mubr.f32.gmra.mrb[0].mxu0 %v2854
      %v2924 = vpop.f32.mrb[0].mxu0
      %v2925 = vadd.f32 0.0, %v2924
      %v2926 = vpop.f32.mrb[0].mxu0
      %2927 = vdwg.mxu0
      %2928 = vrot.lane.b32.xlu0 %v930, 32
      %v2929 = vpop.permute.xlu0 %2928
      %v2931 = vsel %vm853, %v2929, 0.0
      %2932 = vadd.xlane.f32.xlu0 %v2931
      %v2933 = vpop.xlane.xlu0 %2932
      %2934 = vrot.lane.b32.xlu0 %v934, 32
      %v2935 = vpop.permute.xlu0 %2934
      %v2936 = vsel %vm853, %v2935, 0
      %2938 = vmatprep.subr.mxu0 0.0
      %2939 = vmatpush1.xpose.msra.mxu0 %v2936
      %2940 = vmatprep.subr.mxu0 0.0
      %2941 = vmatpush1.xpose.msra.mxu0 0.0
      %2942 = vmatprep.subr.mxu0 0.0
      %2943 = vmatpush1.xpose.msra.mxu0 0.0
      %2944 = vmatprep.subr.mxu0 0.0
      %2945 = vmatpush1.xpose.msra.mxu0 0.0
      %2946 = vmatprep.subr.mxu0 0.0
      %2947 = vmatpush1.xpose.msra.mxu0 0.0
      %2948 = vmatprep.subr.mxu0 0.0
      %2949 = vmatpush1.xpose.msra.mxu0 0.0
      %2950 = vmatprep.subr.mxu0 0.0
      %2951 = vmatpush1.xpose.msra.mxu0 0.0
      %2952 = vmatprep.subr.mxu0 0.0
      %2953 = vmatpush1.xpose.msra.mxu0 0.0
      %2954 = vmatprep.subr.mxu0 0.0
      %2955 = vmatpush1.xpose.msra.mxu0 0.0
      %2956 = vmatprep.subr.mxu0 0.0
      %2957 = vmatpush1.xpose.msra.mxu0 0.0
      %2958 = vmatprep.subr.mxu0 0.0
      %2959 = vmatpush1.xpose.msra.mxu0 0.0
      %2960 = vmatprep.subr.mxu0 0.0
      %2961 = vmatpush1.xpose.msra.mxu0 0.0
      %2962 = vmatprep.subr.mxu0 0.0
      %2963 = vmatpush1.xpose.msra.mxu0 0.0
      %2964 = vmatprep.subr.mxu0 0.0
      %2965 = vmatpush1.xpose.msra.mxu0 0.0
      %2966 = vmatprep.subr.mxu0 0.0
      %2967 = vmatpush1.xpose.msra.mxu0 0.0
      %2968 = vmatprep.subr.mxu0 0.0
      %2969 = vmatpush1.xpose.msra.mxu0 0.0
      %2970 = vmatprep.subr.mxu0 0.0
      %2971 = vmatpush1.xpose.msra.mxu0 0.0
      %2972 = vmatprep.subr.mxu0 0.0
      %2973 = vmatpush1.xpose.msra.mxu0 0.0
      %2974 = vmatprep.subr.mxu0 0.0
      %2975 = vmatpush1.xpose.msra.mxu0 0.0
      %2976 = vmatprep.subr.mxu0 0.0
      %2977 = vmatpush1.xpose.msra.mxu0 0.0
      %2978 = vmatprep.subr.mxu0 0.0
      %2979 = vmatpush1.xpose.msra.mxu0 0.0
      %2980 = vmatprep.subr.mxu0 0.0
      %2981 = vmatpush1.xpose.msra.mxu0 0.0
      %2982 = vmatprep.subr.mxu0 0.0
      %2983 = vmatpush1.xpose.msra.mxu0 0.0
      %2984 = vmatprep.subr.mxu0 0.0
      %2985 = vmatpush1.xpose.msra.mxu0 0.0
      %2986 = vmatprep.subr.mxu0 0.0
      %2987 = vmatpush1.xpose.msra.mxu0 0.0
      %2988 = vmatprep.subr.mxu0 0.0
      %2989 = vmatpush1.xpose.msra.mxu0 0.0
      %2990 = vmatprep.subr.mxu0 0.0
      %2991 = vmatpush1.xpose.msra.mxu0 0.0
      %2992 = vmatprep.subr.mxu0 0.0
      %2993 = vmatpush1.xpose.msra.mxu0 0.0
      %2994 = vmatprep.subr.mxu0 0.0
      %2995 = vmatpush1.xpose.msra.mxu0 0.0
      %2996 = vmatprep.subr.mxu0 0.0
      %2997 = vmatpush1.xpose.msra.mxu0 0.0
      %2998 = vmatprep.subr.mxu0 0.0
      %2999 = vmatpush1.xpose.msra.mxu0 0.0
      %3000 = vmatprep.subr.mxu0 0.0
      %3001 = vmatpush1.xpose.msra.mxu0 0.0
      %3002 = vmatprep.mubr.f32.mxu0 0.0
      %3003 = vmatmul.mubr.f32.gmra.mrb[0].mxu0 %v936
      %v3004 = vpop.f32.mrb[0].mxu0
      %v3005 = vadd.f32 0.0, %v3004
      %v3006 = vpop.f32.mrb[0].mxu0
      %3007 = vdwg.mxu0
      %v3008 = vlaneseq
      %v3009 = vshrl.u32 %v3008, 7
      %v3010 = vsub.s32 0, %v3009
      %v3011 = vrot.slane %v3005, %v3010
      %v3012 = vadd.f32 %v2933, %v3011
      %v3013 = vmul.f32 %v2925, 2.0
      %v3014 = vsub.f32 %v3012, %v3013
      %v3015 = vadd.f32 %v2849, %v756
      %s3016 = sld [smem:[#allocation5 + $0x4]]
      %v3017 = vstv %s3016
      %v3018 = vmul.f32 %v3014, %v3017
      %v3019 = vadd.f32 %v3015, %v3018
      %v3020 = vmul.f32 %v3019, 0.57735026
      %v3021 = vsub.f32 %v3020, %v772
      %v3022 = vsel %vm1025, %v3021, -inf
      %3023 = vmax.xlane.f32.xlu0 %v3022
      %v3024 = vpop.xlane.xlu0 %3023
      %v3025 = vsub.f32 %v3021, %v3024
      %v3026 = vmul.f32 %v3025, 1.442695
      %v3027 = vpow.pop %v3026
      %v3028 = vmul.f32 %v3027, %v768
      %v3029 = vmul.f32 %v3027, %v769
      %v3030 = vsel %vm1025, %v3028, 0.0
      %3031 = vadd.xlane.f32.xlu0 %v3030
      %v3032 = vpop.xlane.xlu0 %3031
      %v3033 = vsel %vm1025, %v3029, 0.0
      %3034 = vadd.xlane.f32.xlu0 %v3033
      %v3035 = vpop.xlane.xlu0 %3034
      %vm3036 = vcmp.gt.f32.partialorder %v3032, 0.0
      %v3037 = vsel %vm3036, %v3032, 1.0
      %v3038 = vrcp.pop %v3037
      %vm3039 = vcmp.gt.f32.partialorder %v3035, 0.0
      %v3040 = vsel %vm3039, %v3035, 1.0
      %v3041 = vrcp.pop %v3040
      %v3042 = vmul.f32 %v3038, %v1046
      %v3043 = vmul.f32 %v3028, %v3042
      %v3044 = vmul.f32 %v3041, %v1049
      %v3045 = vmul.f32 %v3029, %v3044
      %v3046 = vadd.f32 %v3043, %v3045
      %v3048 = vcombine.high %v3046, %v3046
      %v3050 = vunpack.c.l.s4 1966171168
      %v3051 = vunpack.c.0.s8 %v3050
      %v3052 = vlaneseq
      %v3053 = vshrl.u32 %v3052, 7
      %v3054 = vsub.s32 %v3051, %v3053
      %v3055 = vrot.slane %v3046, %v3054
      %v3057 = vunpack.c.l.s4 1966171168
      %v3058 = vunpack.c.0.s8 %v3057
      %v3059 = vlaneseq
      %v3060 = vshrl.u32 %v3059, 7
      %v3061 = vsub.s32 %v3058, %v3060
      %v3062 = vrot.slane %v3048, %v3061
      %v3063 = vcombine.high %v3055, %v3055
      %v3064 = vcombine.high %v3062, %v3062
      %v3066 = vunpack.c.l.s4 1966171168
      %v3067 = vunpack.c.0.s8 %v3066
      %v3068 = vlaneseq
      %v3069 = vshrl.u32 %v3068, 7
      %v3070 = vsub.s32 %v3067, %v3069
      %v3071 = vrot.slane %v3055, %v3070
      %v3073 = vunpack.c.l.s4 1966171168
      %v3074 = vunpack.c.0.s8 %v3073
      %v3075 = vlaneseq
      %v3076 = vshrl.u32 %v3075, 7
      %v3077 = vsub.s32 %v3074, %v3076
      %v3078 = vrot.slane %v3062, %v3077
      %v3080 = vunpack.c.l.s4 1966171168
      %v3081 = vunpack.c.0.s8 %v3080
      %v3082 = vlaneseq
      %v3083 = vshrl.u32 %v3082, 7
      %v3084 = vsub.s32 %v3081, %v3083
      %v3085 = vrot.slane %v3063, %v3084
      %v3087 = vunpack.c.l.s4 1966171168
      %v3088 = vunpack.c.0.s8 %v3087
      %v3089 = vlaneseq
      %v3090 = vshrl.u32 %v3089, 7
      %v3091 = vsub.s32 %v3088, %v3090
      %v3092 = vrot.slane %v3064, %v3091
      %v3093 = vcombine.high %v3071, %v3071
      %v3094 = vcombine.high %v3078, %v3078
      %v3095 = vcombine.high %v3085, %v3085
      %v3096 = vcombine.high %v3092, %v3092
      %3105 = vst.msk [vmem:[#allocation2 + $0x4] sm:$0x1] %vm1111, %v3071
      %3106 = vst.msk [vmem:[#allocation2 + $0xc] sm:$0x1] %vm1111, %v3085
      %3107 = vst.msk [vmem:[#allocation2 + $0x14] sm:$0x1] %vm1111, %v3093
      %3108 = vst.msk [vmem:[#allocation2 + $0x1c] sm:$0x1] %vm1111, %v3095
      %3109 = vst.msk [vmem:[#allocation2 + $0x24] sm:$0x1] %vm1111, %v3078
      %3110 = vst.msk [vmem:[#allocation2 + $0x2c] sm:$0x1] %vm1111, %v3092
      %3111 = vst.msk [vmem:[#allocation2 + $0x34] sm:$0x1] %vm1111, %v3094
      %3112 = vst.msk [vmem:[#allocation2 + $0x3c] sm:$0x1] %vm1111, %v3096
      %v3113 = vsel %vm1025, %v3046, 0
      %3115 = vmatprep.subr.mxu0 0.0
      %3116 = vmatpush1.msra.mxu0 %v745
      %3117 = vmatprep.subr.mxu0 0.0
      %3118 = vmatpush1.msra.mxu0 0.0
      %3119 = vmatprep.subr.mxu0 0.0
      %3120 = vmatpush1.msra.mxu0 0.0
      %3121 = vmatprep.subr.mxu0 0.0
      %3122 = vmatpush1.msra.mxu0 0.0
      %3123 = vmatprep.subr.mxu0 0.0
      %3124 = vmatpush1.msra.mxu0 0.0
      %3125 = vmatprep.subr.mxu0 0.0
      %3126 = vmatpush1.msra.mxu0 0.0
      %3127 = vmatprep.subr.mxu0 0.0
      %3128 = vmatpush1.msra.mxu0 0.0
      %3129 = vmatprep.subr.mxu0 0.0
      %3130 = vmatpush1.msra.mxu0 0.0
      %3131 = vmatprep.subr.mxu0 0.0
      %3132 = vmatpush1.msra.mxu0 0.0
      %3133 = vmatprep.subr.mxu0 0.0
      %3134 = vmatpush1.msra.mxu0 0.0
      %3135 = vmatprep.subr.mxu0 0.0
      %3136 = vmatpush1.msra.mxu0 0.0
      %3137 = vmatprep.subr.mxu0 0.0
      %3138 = vmatpush1.msra.mxu0 0.0
      %3139 = vmatprep.subr.mxu0 0.0
      %3140 = vmatpush1.msra.mxu0 0.0
      %3141 = vmatprep.subr.mxu0 0.0
      %3142 = vmatpush1.msra.mxu0 0.0
      %3143 = vmatprep.subr.mxu0 0.0
      %3144 = vmatpush1.msra.mxu0 0.0
      %3145 = vmatprep.subr.mxu0 0.0
      %3146 = vmatpush1.msra.mxu0 0.0
      %3147 = vmatprep.subr.mxu0 0.0
      %3148 = vmatpush1.msra.mxu0 0.0
      %3149 = vmatprep.subr.mxu0 0.0
      %3150 = vmatpush1.msra.mxu0 0.0
      %3151 = vmatprep.subr.mxu0 0.0
      %3152 = vmatpush1.msra.mxu0 0.0
      %3153 = vmatprep.subr.mxu0 0.0
      %3154 = vmatpush1.msra.mxu0 0.0
      %3155 = vmatprep.subr.mxu0 0.0
      %3156 = vmatpush1.msra.mxu0 0.0
      %3157 = vmatprep.subr.mxu0 0.0
      %3158 = vmatpush1.msra.mxu0 0.0
      %3159 = vmatprep.subr.mxu0 0.0
      %3160 = vmatpush1.msra.mxu0 0.0
      %3161 = vmatprep.subr.mxu0 0.0
      %3162 = vmatpush1.msra.mxu0 0.0
      %3163 = vmatprep.subr.mxu0 0.0
      %3164 = vmatpush1.msra.mxu0 0.0
      %3165 = vmatprep.subr.mxu0 0.0
      %3166 = vmatpush1.msra.mxu0 0.0
      %3167 = vmatprep.subr.mxu0 0.0
      %3168 = vmatpush1.msra.mxu0 0.0
      %3169 = vmatprep.subr.mxu0 0.0
      %3170 = vmatpush1.msra.mxu0 0.0
      %3171 = vmatprep.subr.mxu0 0.0
      %3172 = vmatpush1.msra.mxu0 0.0
      %3173 = vmatprep.subr.mxu0 0.0
      %3174 = vmatpush1.msra.mxu0 0.0
      %3175 = vmatprep.subr.mxu0 0.0
      %3176 = vmatpush1.msra.mxu0 0.0
      %3177 = vmatprep.subr.mxu0 0.0
      %3178 = vmatpush1.msra.mxu0 0.0
      %3179 = vmatprep.mubr.f32.mxu0 0.0
      %3180 = vmatmul.mubr.f32.gmra.mrb[0].mxu0 %v3113
      %v3181 = vpop.f32.mrb[0].mxu0
      %v3182 = vadd.f32 0.0, %v3181
      %v3183 = vpop.f32.mrb[0].mxu0
      %3184 = vdwg.mxu0
      %3185 = vst.msk [vmem:[%s723 + $0x8] sm:$0xff] %vm775, %v3182
      %3186 = vrot.lane.b32.xlu0 %v750, 32
      %v3187 = vpop.permute.xlu0 %3186
      %3189 = vmatprep.subr.mxu0 0.0
      %3190 = vmatpush1.msra.mxu0 %v3187
      %3191 = vmatprep.subr.mxu0 0.0
      %3192 = vmatpush1.msra.mxu0 0.0
      %3193 = vmatprep.subr.mxu0 0.0
      %3194 = vmatpush1.msra.mxu0 0.0
      %3195 = vmatprep.subr.mxu0 0.0
      %3196 = vmatpush1.msra.mxu0 0.0
      %3197 = vmatprep.subr.mxu0 0.0
      %3198 = vmatpush1.msra.mxu0 0.0
      %3199 = vmatprep.subr.mxu0 0.0
      %3200 = vmatpush1.msra.mxu0 0.0
      %3201 = vmatprep.subr.mxu0 0.0
      %3202 = vmatpush1.msra.mxu0 0.0
      %3203 = vmatprep.subr.mxu0 0.0
      %3204 = vmatpush1.msra.mxu0 0.0
      %3205 = vmatprep.subr.mxu0 0.0
      %3206 = vmatpush1.msra.mxu0 0.0
      %3207 = vmatprep.subr.mxu0 0.0
      %3208 = vmatpush1.msra.mxu0 0.0
      %3209 = vmatprep.subr.mxu0 0.0
      %3210 = vmatpush1.msra.mxu0 0.0
      %3211 = vmatprep.subr.mxu0 0.0
      %3212 = vmatpush1.msra.mxu0 0.0
      %3213 = vmatprep.subr.mxu0 0.0
      %3214 = vmatpush1.msra.mxu0 0.0
      %3215 = vmatprep.subr.mxu0 0.0
      %3216 = vmatpush1.msra.mxu0 0.0
      %3217 = vmatprep.subr.mxu0 0.0
      %3218 = vmatpush1.msra.mxu0 0.0
      %3219 = vmatprep.subr.mxu0 0.0
      %3220 = vmatpush1.msra.mxu0 0.0
      %3221 = vmatprep.subr.mxu0 0.0
      %3222 = vmatpush1.msra.mxu0 0.0
      %3223 = vmatprep.subr.mxu0 0.0
      %3224 = vmatpush1.msra.mxu0 0.0
      %3225 = vmatprep.subr.mxu0 0.0
      %3226 = vmatpush1.msra.mxu0 0.0
      %3227 = vmatprep.subr.mxu0 0.0
      %3228 = vmatpush1.msra.mxu0 0.0
      %3229 = vmatprep.subr.mxu0 0.0
      %3230 = vmatpush1.msra.mxu0 0.0
      %3231 = vmatprep.subr.mxu0 0.0
      %3232 = vmatpush1.msra.mxu0 0.0
      %3233 = vmatprep.subr.mxu0 0.0
      %3234 = vmatpush1.msra.mxu0 0.0
      %3235 = vmatprep.subr.mxu0 0.0
      %3236 = vmatpush1.msra.mxu0 0.0
      %3237 = vmatprep.subr.mxu0 0.0
      %3238 = vmatpush1.msra.mxu0 0.0
      %3239 = vmatprep.subr.mxu0 0.0
      %3240 = vmatpush1.msra.mxu0 0.0
      %3241 = vmatprep.subr.mxu0 0.0
      %3242 = vmatpush1.msra.mxu0 0.0
      %3243 = vmatprep.subr.mxu0 0.0
      %3244 = vmatpush1.msra.mxu0 0.0
      %3245 = vmatprep.subr.mxu0 0.0
      %3246 = vmatpush1.msra.mxu0 0.0
      %3247 = vmatprep.subr.mxu0 0.0
      %3248 = vmatpush1.msra.mxu0 0.0
      %3249 = vmatprep.subr.mxu0 0.0
      %3250 = vmatpush1.msra.mxu0 0.0
      %3251 = vmatprep.subr.mxu0 0.0
      %3252 = vmatpush1.msra.mxu0 0.0
      %3253 = vmatprep.mubr.f32.mxu0 0.0
      %3254 = vmatmul.mubr.f32.gmra.mrb[0].mxu0 %v3113
      %v3255 = vpop.f32.mrb[0].mxu0
      %v3256 = vadd.f32 0.0, %v3255
      %v3257 = vpop.f32.mrb[0].mxu0
      %3258 = vdwg.mxu0
      %3260 = vrot.lane.b32.xlu0 %v3256, 96
      %v3261 = vpop.permute.xlu0 %3260
      %vm3263 = vcmask 982784
      %3264 = vst.msk [vmem:[%s739] sm:$0xff] %vm3263, %v3261
      %3265 = vrot.lane.b32.xlu0 %v741, 96
      %v3266 = vpop.permute.xlu0 %3265
      %3267 = vrot.lane.b32.xlu0 %v743, 96
      %v3268 = vpop.permute.xlu0 %3267
      %v3269 = vsel %vm775, %v3266, 0
      %v3271 = vsel %vm775, %v3268, 0
      %3273 = vmatprep.subr.mxu0 0.0
      %3274 = vmatpush1.xpose.msra.mxu0 %v3271
      %3275 = vmatprep.subr.mxu0 0.0
      %3276 = vmatpush1.xpose.msra.mxu0 0.0
      %3277 = vmatprep.subr.mxu0 0.0
      %3278 = vmatpush1.xpose.msra.mxu0 0.0
      %3279 = vmatprep.subr.mxu0 0.0
      %3280 = vmatpush1.xpose.msra.mxu0 0.0
      %3281 = vmatprep.subr.mxu0 0.0
      %3282 = vmatpush1.xpose.msra.mxu0 0.0
      %3283 = vmatprep.subr.mxu0 0.0
      %3284 = vmatpush1.xpose.msra.mxu0 0.0
      %3285 = vmatprep.subr.mxu0 0.0
      %3286 = vmatpush1.xpose.msra.mxu0 0.0
      %3287 = vmatprep.subr.mxu0 0.0
      %3288 = vmatpush1.xpose.msra.mxu0 0.0
      %3289 = vmatprep.subr.mxu0 0.0
      %3290 = vmatpush1.xpose.msra.mxu0 0.0
      %3291 = vmatprep.subr.mxu0 0.0
      %3292 = vmatpush1.xpose.msra.mxu0 0.0
      %3293 = vmatprep.subr.mxu0 0.0
      %3294 = vmatpush1.xpose.msra.mxu0 0.0
      %3295 = vmatprep.subr.mxu0 0.0
      %3296 = vmatpush1.xpose.msra.mxu0 0.0
      %3297 = vmatprep.subr.mxu0 0.0
      %3298 = vmatpush1.xpose.msra.mxu0 0.0
      %3299 = vmatprep.subr.mxu0 0.0
      %3300 = vmatpush1.xpose.msra.mxu0 0.0
      %3301 = vmatprep.subr.mxu0 0.0
      %3302 = vmatpush1.xpose.msra.mxu0 0.0
      %3303 = vmatprep.subr.mxu0 0.0
      %3304 = vmatpush1.xpose.msra.mxu0 0.0
      %3305 = vmatprep.subr.mxu0 0.0
      %3306 = vmatpush1.xpose.msra.mxu0 0.0
      %3307 = vmatprep.subr.mxu0 0.0
      %3308 = vmatpush1.xpose.msra.mxu0 0.0
      %3309 = vmatprep.subr.mxu0 0.0
      %3310 = vmatpush1.xpose.msra.mxu0 0.0
      %3311 = vmatprep.subr.mxu0 0.0
      %3312 = vmatpush1.xpose.msra.mxu0 0.0
      %3313 = vmatprep.subr.mxu0 0.0
      %3314 = vmatpush1.xpose.msra.mxu0 0.0
      %3315 = vmatprep.subr.mxu0 0.0
      %3316 = vmatpush1.xpose.msra.mxu0 0.0
      %3317 = vmatprep.subr.mxu0 0.0
      %3318 = vmatpush1.xpose.msra.mxu0 0.0
      %3319 = vmatprep.subr.mxu0 0.0
      %3320 = vmatpush1.xpose.msra.mxu0 0.0
      %3321 = vmatprep.subr.mxu0 0.0
      %3322 = vmatpush1.xpose.msra.mxu0 0.0
      %3323 = vmatprep.subr.mxu0 0.0
      %3324 = vmatpush1.xpose.msra.mxu0 0.0
      %3325 = vmatprep.subr.mxu0 0.0
      %3326 = vmatpush1.xpose.msra.mxu0 0.0
      %3327 = vmatprep.subr.mxu0 0.0
      %3328 = vmatpush1.xpose.msra.mxu0 0.0
      %3329 = vmatprep.subr.mxu0 0.0
      %3330 = vmatpush1.xpose.msra.mxu0 0.0
      %3331 = vmatprep.subr.mxu0 0.0
      %3332 = vmatpush1.xpose.msra.mxu0 0.0
      %3333 = vmatprep.subr.mxu0 0.0
      %3334 = vmatpush1.xpose.msra.mxu0 0.0
      %3335 = vmatprep.subr.mxu0 0.0
      %3336 = vmatpush1.xpose.msra.mxu0 0.0
      %3337 = vmatprep.mubr.f32.mxu0 0.0
      %3338 = vmatmul.mubr.f32.gmra.mrb[0].mxu0 %v3269
      %v3339 = vpop.f32.mrb[0].mxu0
      %v3340 = vadd.f32 0.0, %v3339
      %v3341 = vpop.f32.mrb[0].mxu0
      %3342 = vdwg.mxu0
      %v3343 = vmul.f32 %v3340, 0.17677669
      %3345 = vrot.lane.b32.xlu0 %v746, 8
      %v3346 = vpop.permute.xlu0 %3345
      %3347 = vrot.lane.b32.xlu0 %v747, 8
      %v3348 = vpop.permute.xlu0 %3347
      %v3349 = vsel %vm1025, %v3346, %v3348
      %3351 = vrot.lane.b32.xlu0 %v748, 8
      %v3352 = vpop.permute.xlu0 %3351
      %3353 = vrot.lane.b32.xlu0 %v749, 8
      %v3354 = vpop.permute.xlu0 %3353
      %v3355 = vsel %vm1025, %v3352, %v3354
      %v3356 = vsel %vm853, %v3349, 0
      %v3358 = vsel %vm853, %v3355, 0
      %3360 = vmatprep.subr.mxu0 0.0
      %3361 = vmatpush1.xpose.msra.mxu0 %v3358
      %3362 = vmatprep.subr.mxu0 0.0
      %3363 = vmatpush1.xpose.msra.mxu0 0.0
      %3364 = vmatprep.subr.mxu0 0.0
      %3365 = vmatpush1.xpose.msra.mxu0 0.0
      %3366 = vmatprep.subr.mxu0 0.0
      %3367 = vmatpush1.xpose.msra.mxu0 0.0
      %3368 = vmatprep.subr.mxu0 0.0
      %3369 = vmatpush1.xpose.msra.mxu0 0.0
      %3370 = vmatprep.subr.mxu0 0.0
      %3371 = vmatpush1.xpose.msra.mxu0 0.0
      %3372 = vmatprep.subr.mxu0 0.0
      %3373 = vmatpush1.xpose.msra.mxu0 0.0
      %3374 = vmatprep.subr.mxu0 0.0
      %3375 = vmatpush1.xpose.msra.mxu0 0.0
      %3376 = vmatprep.subr.mxu0 0.0
      %3377 = vmatpush1.xpose.msra.mxu0 0.0
      %3378 = vmatprep.subr.mxu0 0.0
      %3379 = vmatpush1.xpose.msra.mxu0 0.0
      %3380 = vmatprep.subr.mxu0 0.0
      %3381 = vmatpush1.xpose.msra.mxu0 0.0
      %3382 = vmatprep.subr.mxu0 0.0
      %3383 = vmatpush1.xpose.msra.mxu0 0.0
      %3384 = vmatprep.subr.mxu0 0.0
      %3385 = vmatpush1.xpose.msra.mxu0 0.0
      %3386 = vmatprep.subr.mxu0 0.0
      %3387 = vmatpush1.xpose.msra.mxu0 0.0
      %3388 = vmatprep.subr.mxu0 0.0
      %3389 = vmatpush1.xpose.msra.mxu0 0.0
      %3390 = vmatprep.subr.mxu0 0.0
      %3391 = vmatpush1.xpose.msra.mxu0 0.0
      %3392 = vmatprep.subr.mxu0 0.0
      %3393 = vmatpush1.xpose.msra.mxu0 0.0
      %3394 = vmatprep.subr.mxu0 0.0
      %3395 = vmatpush1.xpose.msra.mxu0 0.0
      %3396 = vmatprep.subr.mxu0 0.0
      %3397 = vmatpush1.xpose.msra.mxu0 0.0
      %3398 = vmatprep.subr.mxu0 0.0
      %3399 = vmatpush1.xpose.msra.mxu0 0.0
      %3400 = vmatprep.subr.mxu0 0.0
      %3401 = vmatpush1.xpose.msra.mxu0 0.0
      %3402 = vmatprep.subr.mxu0 0.0
      %3403 = vmatpush1.xpose.msra.mxu0 0.0
      %3404 = vmatprep.subr.mxu0 0.0
      %3405 = vmatpush1.xpose.msra.mxu0 0.0
      %3406 = vmatprep.subr.mxu0 0.0
      %3407 = vmatpush1.xpose.msra.mxu0 0.0
      %3408 = vmatprep.subr.mxu0 0.0
      %3409 = vmatpush1.xpose.msra.mxu0 0.0
      %3410 = vmatprep.subr.mxu0 0.0
      %3411 = vmatpush1.xpose.msra.mxu0 0.0
      %3412 = vmatprep.subr.mxu0 0.0
      %3413 = vmatpush1.xpose.msra.mxu0 0.0
      %3414 = vmatprep.subr.mxu0 0.0
      %3415 = vmatpush1.xpose.msra.mxu0 0.0
      %3416 = vmatprep.subr.mxu0 0.0
      %3417 = vmatpush1.xpose.msra.mxu0 0.0
      %3418 = vmatprep.subr.mxu0 0.0
      %3419 = vmatpush1.xpose.msra.mxu0 0.0
      %3420 = vmatprep.subr.mxu0 0.0
      %3421 = vmatpush1.xpose.msra.mxu0 0.0
      %3422 = vmatprep.subr.mxu0 0.0
      %3423 = vmatpush1.xpose.msra.mxu0 0.0
      %3424 = vmatprep.mubr.f32.mxu0 0.0
      %3425 = vmatmul.mubr.f32.gmra.mrb[0].mxu0 %v3356
      %v3426 = vpop.f32.mrb[0].mxu0
      %v3427 = vadd.f32 0.0, %v3426
      %v3428 = vpop.f32.mrb[0].mxu0
      %3429 = vdwg.mxu0
      %v3430 = vmul.f32 %v747, %v747
      %3432 = vrot.lane.b32.xlu0 %v930, 8
      %v3433 = vpop.permute.xlu0 %3432
      %3434 = vrot.lane.b32.xlu0 %v3430, 8
      %v3435 = vpop.permute.xlu0 %3434
      %v3436 = vsel %vm1025, %v3433, %v3435
      %v3438 = vsel %vm853, %v3436, 0.0
      %3439 = vadd.xlane.f32.xlu0 %v3438
      %v3440 = vpop.xlane.xlu0 %3439
      %v3441 = vmul.f32 %v749, %v749
      %3443 = vrot.lane.b32.xlu0 %v934, 8
      %v3444 = vpop.permute.xlu0 %3443
      %3445 = vrot.lane.b32.xlu0 %v3441, 8
      %v3446 = vpop.permute.xlu0 %3445
      %v3447 = vsel %vm1025, %v3444, %v3446
      %v3448 = vsel %vm853, %v3447, 0
      %3450 = vmatprep.subr.mxu0 0.0
      %3451 = vmatpush1.xpose.msra.mxu0 %v3448
      %3452 = vmatprep.subr.mxu0 0.0
      %3453 = vmatpush1.xpose.msra.mxu0 0.0
      %3454 = vmatprep.subr.mxu0 0.0
      %3455 = vmatpush1.xpose.msra.mxu0 0.0
      %3456 = vmatprep.subr.mxu0 0.0
      %3457 = vmatpush1.xpose.msra.mxu0 0.0
      %3458 = vmatprep.subr.mxu0 0.0
      %3459 = vmatpush1.xpose.msra.mxu0 0.0
      %3460 = vmatprep.subr.mxu0 0.0
      %3461 = vmatpush1.xpose.msra.mxu0 0.0
      %3462 = vmatprep.subr.mxu0 0.0
      %3463 = vmatpush1.xpose.msra.mxu0 0.0
      %3464 = vmatprep.subr.mxu0 0.0
      %3465 = vmatpush1.xpose.msra.mxu0 0.0
      %3466 = vmatprep.subr.mxu0 0.0
      %3467 = vmatpush1.xpose.msra.mxu0 0.0
      %3468 = vmatprep.subr.mxu0 0.0
      %3469 = vmatpush1.xpose.msra.mxu0 0.0
      %3470 = vmatprep.subr.mxu0 0.0
      %3471 = vmatpush1.xpose.msra.mxu0 0.0
      %3472 = vmatprep.subr.mxu0 0.0
      %3473 = vmatpush1.xpose.msra.mxu0 0.0
      %3474 = vmatprep.subr.mxu0 0.0
      %3475 = vmatpush1.xpose.msra.mxu0 0.0
      %3476 = vmatprep.subr.mxu0 0.0
      %3477 = vmatpush1.xpose.msra.mxu0 0.0
      %3478 = vmatprep.subr.mxu0 0.0
      %3479 = vmatpush1.xpose.msra.mxu0 0.0
      %3480 = vmatprep.subr.mxu0 0.0
      %3481 = vmatpush1.xpose.msra.mxu0 0.0
      %3482 = vmatprep.subr.mxu0 0.0
      %3483 = vmatpush1.xpose.msra.mxu0 0.0
      %3484 = vmatprep.subr.mxu0 0.0
      %3485 = vmatpush1.xpose.msra.mxu0 0.0
      %3486 = vmatprep.subr.mxu0 0.0
      %3487 = vmatpush1.xpose.msra.mxu0 0.0
      %3488 = vmatprep.subr.mxu0 0.0
      %3489 = vmatpush1.xpose.msra.mxu0 0.0
      %3490 = vmatprep.subr.mxu0 0.0
      %3491 = vmatpush1.xpose.msra.mxu0 0.0
      %3492 = vmatprep.subr.mxu0 0.0
      %3493 = vmatpush1.xpose.msra.mxu0 0.0
      %3494 = vmatprep.subr.mxu0 0.0
      %3495 = vmatpush1.xpose.msra.mxu0 0.0
      %3496 = vmatprep.subr.mxu0 0.0
      %3497 = vmatpush1.xpose.msra.mxu0 0.0
      %3498 = vmatprep.subr.mxu0 0.0
      %3499 = vmatpush1.xpose.msra.mxu0 0.0
      %3500 = vmatprep.subr.mxu0 0.0
      %3501 = vmatpush1.xpose.msra.mxu0 0.0
      %3502 = vmatprep.subr.mxu0 0.0
      %3503 = vmatpush1.xpose.msra.mxu0 0.0
      %3504 = vmatprep.subr.mxu0 0.0
      %3505 = vmatpush1.xpose.msra.mxu0 0.0
      %3506 = vmatprep.subr.mxu0 0.0
      %3507 = vmatpush1.xpose.msra.mxu0 0.0
      %3508 = vmatprep.subr.mxu0 0.0
      %3509 = vmatpush1.xpose.msra.mxu0 0.0
      %3510 = vmatprep.subr.mxu0 0.0
      %3511 = vmatpush1.xpose.msra.mxu0 0.0
      %3512 = vmatprep.subr.mxu0 0.0
      %3513 = vmatpush1.xpose.msra.mxu0 0.0
      %3514 = vmatprep.mubr.f32.mxu0 0.0
      %3515 = vmatmul.mubr.f32.gmra.mrb[0].mxu0 %v936
      %v3516 = vpop.f32.mrb[0].mxu0
      %v3517 = vadd.f32 0.0, %v3516
      %v3518 = vpop.f32.mrb[0].mxu0
      %3519 = vdwg.mxu0
      %v3520 = vlaneseq
      %v3521 = vshrl.u32 %v3520, 7
      %v3522 = vsub.s32 0, %v3521
      %v3523 = vrot.slane %v3517, %v3522
      %v3524 = vadd.f32 %v3440, %v3523
      %v3525 = vmul.f32 %v3427, 2.0
      %v3526 = vsub.f32 %v3524, %v3525
      %v3527 = vadd.f32 %v3343, %v757
      %s3528 = sld [smem:[#allocation5 + $0x5]]
      %v3529 = vstv %s3528
      %v3530 = vmul.f32 %v3526, %v3529
      %v3531 = vadd.f32 %v3527, %v3530
      %v3532 = vmul.f32 %v3531, 0.57735026
      %v3533 = vsub.f32 %v3532, %v772
      %v3534 = vsel %vm1025, %v3533, -inf
      %3535 = vmax.xlane.f32.xlu0 %v3534
      %v3536 = vpop.xlane.xlu0 %3535
      %v3537 = vsub.f32 %v3533, %v3536
      %v3538 = vmul.f32 %v3537, 1.442695
      %v3539 = vpow.pop %v3538
      %v3540 = vmul.f32 %v3539, %v768
      %v3541 = vmul.f32 %v3539, %v769
      %v3542 = vsel %vm1025, %v3540, 0.0
      %3543 = vadd.xlane.f32.xlu0 %v3542
      %v3544 = vpop.xlane.xlu0 %3543
      %v3545 = vsel %vm1025, %v3541, 0.0
      %3546 = vadd.xlane.f32.xlu0 %v3545
      %v3547 = vpop.xlane.xlu0 %3546
      %vm3548 = vcmp.gt.f32.partialorder %v3544, 0.0
      %v3549 = vsel %vm3548, %v3544, 1.0
      %v3550 = vrcp.pop %v3549
      %vm3551 = vcmp.gt.f32.partialorder %v3547, 0.0
      %v3552 = vsel %vm3551, %v3547, 1.0
      %v3553 = vrcp.pop %v3552
      %v3554 = vmul.f32 %v3550, %v1046
      %v3555 = vmul.f32 %v3540, %v3554
      %v3556 = vmul.f32 %v3553, %v1049
      %v3557 = vmul.f32 %v3541, %v3556
      %v3558 = vadd.f32 %v3555, %v3557
      %v3560 = vcombine.high %v3558, %v3558
      %v3562 = vunpack.c.l.s4 1966171168
      %v3563 = vunpack.c.0.s8 %v3562
      %v3564 = vlaneseq
      %v3565 = vshrl.u32 %v3564, 7
      %v3566 = vsub.s32 %v3563, %v3565
      %v3567 = vrot.slane %v3558, %v3566
      %v3569 = vunpack.c.l.s4 1966171168
      %v3570 = vunpack.c.0.s8 %v3569
      %v3571 = vlaneseq
      %v3572 = vshrl.u32 %v3571, 7
      %v3573 = vsub.s32 %v3570, %v3572
      %v3574 = vrot.slane %v3560, %v3573
      %v3575 = vcombine.high %v3567, %v3567
      %v3576 = vcombine.high %v3574, %v3574
      %v3578 = vunpack.c.l.s4 1966171168
      %v3579 = vunpack.c.0.s8 %v3578
      %v3580 = vlaneseq
      %v3581 = vshrl.u32 %v3580, 7
      %v3582 = vsub.s32 %v3579, %v3581
      %v3583 = vrot.slane %v3567, %v3582
      %v3585 = vunpack.c.l.s4 1966171168
      %v3586 = vunpack.c.0.s8 %v3585
      %v3587 = vlaneseq
      %v3588 = vshrl.u32 %v3587, 7
      %v3589 = vsub.s32 %v3586, %v3588
      %v3590 = vrot.slane %v3574, %v3589
      %v3592 = vunpack.c.l.s4 1966171168
      %v3593 = vunpack.c.0.s8 %v3592
      %v3594 = vlaneseq
      %v3595 = vshrl.u32 %v3594, 7
      %v3596 = vsub.s32 %v3593, %v3595
      %v3597 = vrot.slane %v3575, %v3596
      %v3599 = vunpack.c.l.s4 1966171168
      %v3600 = vunpack.c.0.s8 %v3599
      %v3601 = vlaneseq
      %v3602 = vshrl.u32 %v3601, 7
      %v3603 = vsub.s32 %v3600, %v3602
      %v3604 = vrot.slane %v3576, %v3603
      %v3605 = vcombine.high %v3583, %v3583
      %v3606 = vcombine.high %v3590, %v3590
      %v3607 = vcombine.high %v3597, %v3597
      %v3608 = vcombine.high %v3604, %v3604
      %3617 = vst.msk [vmem:[#allocation2 + $0x5] sm:$0x1] %vm1111, %v3583
      %3618 = vst.msk [vmem:[#allocation2 + $0xd] sm:$0x1] %vm1111, %v3597
      %3619 = vst.msk [vmem:[#allocation2 + $0x15] sm:$0x1] %vm1111, %v3605
      %3620 = vst.msk [vmem:[#allocation2 + $0x1d] sm:$0x1] %vm1111, %v3607
      %3621 = vst.msk [vmem:[#allocation2 + $0x25] sm:$0x1] %vm1111, %v3590
      %3622 = vst.msk [vmem:[#allocation2 + $0x2d] sm:$0x1] %vm1111, %v3604
      %3623 = vst.msk [vmem:[#allocation2 + $0x35] sm:$0x1] %vm1111, %v3606
      %3624 = vst.msk [vmem:[#allocation2 + $0x3d] sm:$0x1] %vm1111, %v3608
      %3626 = vrot.lane.b32.xlu0 %v745, 96
      %v3627 = vpop.permute.xlu0 %3626
      %v3629 = vsel %vm1025, %v3558, 0
      %3631 = vmatprep.subr.mxu0 0.0
      %3632 = vmatpush1.msra.mxu0 %v3627
      %3633 = vmatprep.subr.mxu0 0.0
      %3634 = vmatpush1.msra.mxu0 0.0
      %3635 = vmatprep.subr.mxu0 0.0
      %3636 = vmatpush1.msra.mxu0 0.0
      %3637 = vmatprep.subr.mxu0 0.0
      %3638 = vmatpush1.msra.mxu0 0.0
      %3639 = vmatprep.subr.mxu0 0.0
      %3640 = vmatpush1.msra.mxu0 0.0
      %3641 = vmatprep.subr.mxu0 0.0
      %3642 = vmatpush1.msra.mxu0 0.0
      %3643 = vmatprep.subr.mxu0 0.0
      %3644 = vmatpush1.msra.mxu0 0.0
      %3645 = vmatprep.subr.mxu0 0.0
      %3646 = vmatpush1.msra.mxu0 0.0
      %3647 = vmatprep.subr.mxu0 0.0
      %3648 = vmatpush1.msra.mxu0 0.0
      %3649 = vmatprep.subr.mxu0 0.0
      %3650 = vmatpush1.msra.mxu0 0.0
      %3651 = vmatprep.subr.mxu0 0.0
      %3652 = vmatpush1.msra.mxu0 0.0
      %3653 = vmatprep.subr.mxu0 0.0
      %3654 = vmatpush1.msra.mxu0 0.0
      %3655 = vmatprep.subr.mxu0 0.0
      %3656 = vmatpush1.msra.mxu0 0.0
      %3657 = vmatprep.subr.mxu0 0.0
      %3658 = vmatpush1.msra.mxu0 0.0
      %3659 = vmatprep.subr.mxu0 0.0
      %3660 = vmatpush1.msra.mxu0 0.0
      %3661 = vmatprep.subr.mxu0 0.0
      %3662 = vmatpush1.msra.mxu0 0.0
      %3663 = vmatprep.subr.mxu0 0.0
      %3664 = vmatpush1.msra.mxu0 0.0
      %3665 = vmatprep.subr.mxu0 0.0
      %3666 = vmatpush1.msra.mxu0 0.0
      %3667 = vmatprep.subr.mxu0 0.0
      %3668 = vmatpush1.msra.mxu0 0.0
      %3669 = vmatprep.subr.mxu0 0.0
      %3670 = vmatpush1.msra.mxu0 0.0
      %3671 = vmatprep.subr.mxu0 0.0
      %3672 = vmatpush1.msra.mxu0 0.0
      %3673 = vmatprep.subr.mxu0 0.0
      %3674 = vmatpush1.msra.mxu0 0.0
      %3675 = vmatprep.subr.mxu0 0.0
      %3676 = vmatpush1.msra.mxu0 0.0
      %3677 = vmatprep.subr.mxu0 0.0
      %3678 = vmatpush1.msra.mxu0 0.0
      %3679 = vmatprep.subr.mxu0 0.0
      %3680 = vmatpush1.msra.mxu0 0.0
      %3681 = vmatprep.subr.mxu0 0.0
      %3682 = vmatpush1.msra.mxu0 0.0
      %3683 = vmatprep.subr.mxu0 0.0
      %3684 = vmatpush1.msra.mxu0 0.0
      %3685 = vmatprep.subr.mxu0 0.0
      %3686 = vmatpush1.msra.mxu0 0.0
      %3687 = vmatprep.subr.mxu0 0.0
      %3688 = vmatpush1.msra.mxu0 0.0
      %3689 = vmatprep.subr.mxu0 0.0
      %3690 = vmatpush1.msra.mxu0 0.0
      %3691 = vmatprep.subr.mxu0 0.0
      %3692 = vmatpush1.msra.mxu0 0.0
      %3693 = vmatprep.subr.mxu0 0.0
      %3694 = vmatpush1.msra.mxu0 0.0
      %3695 = vmatprep.mubr.f32.mxu0 0.0
      %3696 = vmatmul.mubr.f32.gmra.mrb[0].mxu0 %v3629
      %v3697 = vpop.f32.mrb[0].mxu0
      %v3698 = vadd.f32 0.0, %v3697
      %v3699 = vpop.f32.mrb[0].mxu0
      %3700 = vdwg.mxu0
      %3702 = vrot.lane.b32.xlu0 %v3698, 32
      %v3703 = vpop.permute.xlu0 %3702
      %3705 = vst.msk [vmem:[%s723 + $0x8] sm:$0xff] %vm1687, %v3703
      %3707 = vrot.lane.b32.xlu0 %v750, 8
      %v3708 = vpop.permute.xlu0 %3707
      %3709 = vrot.lane.b32.xlu0 %v751, 8
      %v3710 = vpop.permute.xlu0 %3709
      %v3711 = vsel %vm1025, %v3708, %v3710
      %3713 = vmatprep.subr.mxu0 0.0
      %3714 = vmatpush1.msra.mxu0 %v3711
      %3715 = vmatprep.subr.mxu0 0.0
      %3716 = vmatpush1.msra.mxu0 0.0
      %3717 = vmatprep.subr.mxu0 0.0
      %3718 = vmatpush1.msra.mxu0 0.0
      %3719 = vmatprep.subr.mxu0 0.0
      %3720 = vmatpush1.msra.mxu0 0.0
      %3721 = vmatprep.subr.mxu0 0.0
      %3722 = vmatpush1.msra.mxu0 0.0
      %3723 = vmatprep.subr.mxu0 0.0
      %3724 = vmatpush1.msra.mxu0 0.0
      %3725 = vmatprep.subr.mxu0 0.0
      %3726 = vmatpush1.msra.mxu0 0.0
      %3727 = vmatprep.subr.mxu0 0.0
      %3728 = vmatpush1.msra.mxu0 0.0
      %3729 = vmatprep.subr.mxu0 0.0
      %3730 = vmatpush1.msra.mxu0 0.0
      %3731 = vmatprep.subr.mxu0 0.0
      %3732 = vmatpush1.msra.mxu0 0.0
      %3733 = vmatprep.subr.mxu0 0.0
      %3734 = vmatpush1.msra.mxu0 0.0
      %3735 = vmatprep.subr.mxu0 0.0
      %3736 = vmatpush1.msra.mxu0 0.0
      %3737 = vmatprep.subr.mxu0 0.0
      %3738 = vmatpush1.msra.mxu0 0.0
      %3739 = vmatprep.subr.mxu0 0.0
      %3740 = vmatpush1.msra.mxu0 0.0
      %3741 = vmatprep.subr.mxu0 0.0
      %3742 = vmatpush1.msra.mxu0 0.0
      %3743 = vmatprep.subr.mxu0 0.0
      %3744 = vmatpush1.msra.mxu0 0.0
      %3745 = vmatprep.subr.mxu0 0.0
      %3746 = vmatpush1.msra.mxu0 0.0
      %3747 = vmatprep.subr.mxu0 0.0
      %3748 = vmatpush1.msra.mxu0 0.0
      %3749 = vmatprep.subr.mxu0 0.0
      %3750 = vmatpush1.msra.mxu0 0.0
      %3751 = vmatprep.subr.mxu0 0.0
      %3752 = vmatpush1.msra.mxu0 0.0
      %3753 = vmatprep.subr.mxu0 0.0
      %3754 = vmatpush1.msra.mxu0 0.0
      %3755 = vmatprep.subr.mxu0 0.0
      %3756 = vmatpush1.msra.mxu0 0.0
      %3757 = vmatprep.subr.mxu0 0.0
      %3758 = vmatpush1.msra.mxu0 0.0
      %3759 = vmatprep.subr.mxu0 0.0
      %3760 = vmatpush1.msra.mxu0 0.0
      %3761 = vmatprep.subr.mxu0 0.0
      %3762 = vmatpush1.msra.mxu0 0.0
      %3763 = vmatprep.subr.mxu0 0.0
      %3764 = vmatpush1.msra.mxu0 0.0
      %3765 = vmatprep.subr.mxu0 0.0
      %3766 = vmatpush1.msra.mxu0 0.0
      %3767 = vmatprep.subr.mxu0 0.0
      %3768 = vmatpush1.msra.mxu0 0.0
      %3769 = vmatprep.subr.mxu0 0.0
      %3770 = vmatpush1.msra.mxu0 0.0
      %3771 = vmatprep.subr.mxu0 0.0
      %3772 = vmatpush1.msra.mxu0 0.0
      %3773 = vmatprep.subr.mxu0 0.0
      %3774 = vmatpush1.msra.mxu0 0.0
      %3775 = vmatprep.subr.mxu0 0.0
      %3776 = vmatpush1.msra.mxu0 0.0
      %3777 = vmatprep.mubr.f32.mxu0 0.0
      %3778 = vmatmul.mubr.f32.gmra.mrb[0].mxu0 %v3629
      %v3779 = vpop.f32.mrb[0].mxu0
      %v3780 = vadd.f32 0.0, %v3779
      %v3781 = vpop.f32.mrb[0].mxu0
      %3782 = vdwg.mxu0
      %3784 = vrot.lane.b32.xlu0 %v3780, 120
      %v3785 = vpop.permute.xlu0 %3784
      %vm3787 = vcmask 1048512
      %3788 = vst.msk [vmem:[%s739] sm:$0xff] %vm3787, %v3785
      %vm3789 = vcmask 130048
      %3790 = vst.msk [vmem:[%s739 + $0x8] sm:$0xff] %vm3789, %v3785
      %3791 = vrot.lane.b32.xlu0 %v741, 64
      %v3792 = vpop.permute.xlu0 %3791
      %3793 = vrot.lane.b32.xlu0 %v743, 64
      %v3794 = vpop.permute.xlu0 %3793
      %v3795 = vsel %vm775, %v3792, 0
      %v3797 = vsel %vm775, %v3794, 0
      %3799 = vmatprep.subr.mxu0 0.0
      %3800 = vmatpush1.xpose.msra.mxu0 %v3797
      %3801 = vmatprep.subr.mxu0 0.0
      %3802 = vmatpush1.xpose.msra.mxu0 0.0
      %3803 = vmatprep.subr.mxu0 0.0
      %3804 = vmatpush1.xpose.msra.mxu0 0.0
      %3805 = vmatprep.subr.mxu0 0.0
      %3806 = vmatpush1.xpose.msra.mxu0 0.0
      %3807 = vmatprep.subr.mxu0 0.0
      %3808 = vmatpush1.xpose.msra.mxu0 0.0
      %3809 = vmatprep.subr.mxu0 0.0
      %3810 = vmatpush1.xpose.msra.mxu0 0.0
      %3811 = vmatprep.subr.mxu0 0.0
      %3812 = vmatpush1.xpose.msra.mxu0 0.0
      %3813 = vmatprep.subr.mxu0 0.0
      %3814 = vmatpush1.xpose.msra.mxu0 0.0
      %3815 = vmatprep.subr.mxu0 0.0
      %3816 = vmatpush1.xpose.msra.mxu0 0.0
      %3817 = vmatprep.subr.mxu0 0.0
      %3818 = vmatpush1.xpose.msra.mxu0 0.0
      %3819 = vmatprep.subr.mxu0 0.0
      %3820 = vmatpush1.xpose.msra.mxu0 0.0
      %3821 = vmatprep.subr.mxu0 0.0
      %3822 = vmatpush1.xpose.msra.mxu0 0.0
      %3823 = vmatprep.subr.mxu0 0.0
      %3824 = vmatpush1.xpose.msra.mxu0 0.0
      %3825 = vmatprep.subr.mxu0 0.0
      %3826 = vmatpush1.xpose.msra.mxu0 0.0
      %3827 = vmatprep.subr.mxu0 0.0
      %3828 = vmatpush1.xpose.msra.mxu0 0.0
      %3829 = vmatprep.subr.mxu0 0.0
      %3830 = vmatpush1.xpose.msra.mxu0 0.0
      %3831 = vmatprep.subr.mxu0 0.0
      %3832 = vmatpush1.xpose.msra.mxu0 0.0
      %3833 = vmatprep.subr.mxu0 0.0
      %3834 = vmatpush1.xpose.msra.mxu0 0.0
      %3835 = vmatprep.subr.mxu0 0.0
      %3836 = vmatpush1.xpose.msra.mxu0 0.0
      %3837 = vmatprep.subr.mxu0 0.0
      %3838 = vmatpush1.xpose.msra.mxu0 0.0
      %3839 = vmatprep.subr.mxu0 0.0
      %3840 = vmatpush1.xpose.msra.mxu0 0.0
      %3841 = vmatprep.subr.mxu0 0.0
      %3842 = vmatpush1.xpose.msra.mxu0 0.0
      %3843 = vmatprep.subr.mxu0 0.0
      %3844 = vmatpush1.xpose.msra.mxu0 0.0
      %3845 = vmatprep.subr.mxu0 0.0
      %3846 = vmatpush1.xpose.msra.mxu0 0.0
      %3847 = vmatprep.subr.mxu0 0.0
      %3848 = vmatpush1.xpose.msra.mxu0 0.0
      %3849 = vmatprep.subr.mxu0 0.0
      %3850 = vmatpush1.xpose.msra.mxu0 0.0
      %3851 = vmatprep.subr.mxu0 0.0
      %3852 = vmatpush1.xpose.msra.mxu0 0.0
      %3853 = vmatprep.subr.mxu0 0.0
      %3854 = vmatpush1.xpose.msra.mxu0 0.0
      %3855 = vmatprep.subr.mxu0 0.0
      %3856 = vmatpush1.xpose.msra.mxu0 0.0
      %3857 = vmatprep.subr.mxu0 0.0
      %3858 = vmatpush1.xpose.msra.mxu0 0.0
      %3859 = vmatprep.subr.mxu0 0.0
      %3860 = vmatpush1.xpose.msra.mxu0 0.0
      %3861 = vmatprep.subr.mxu0 0.0
      %3862 = vmatpush1.xpose.msra.mxu0 0.0
      %3863 = vmatprep.mubr.f32.mxu0 0.0
      %3864 = vmatmul.mubr.f32.gmra.mrb[0].mxu0 %v3795
      %v3865 = vpop.f32.mrb[0].mxu0
      %v3866 = vadd.f32 0.0, %v3865
      %v3867 = vpop.f32.mrb[0].mxu0
      %3868 = vdwg.mxu0
      %v3869 = vmul.f32 %v3866, 0.17677669
      %3870 = vrot.lane.b32.xlu0 %v747, 112
      %v3871 = vpop.permute.xlu0 %3870
      %3872 = vrot.lane.b32.xlu0 %v749, 112
      %v3873 = vpop.permute.xlu0 %3872
      %v3874 = vsel %vm853, %v3871, 0
      %v3876 = vsel %vm853, %v3873, 0
      %3878 = vmatprep.subr.mxu0 0.0
      %3879 = vmatpush1.xpose.msra.mxu0 %v3876
      %3880 = vmatprep.subr.mxu0 0.0
      %3881 = vmatpush1.xpose.msra.mxu0 0.0
      %3882 = vmatprep.subr.mxu0 0.0
      %3883 = vmatpush1.xpose.msra.mxu0 0.0
      %3884 = vmatprep.subr.mxu0 0.0
      %3885 = vmatpush1.xpose.msra.mxu0 0.0
      %3886 = vmatprep.subr.mxu0 0.0
      %3887 = vmatpush1.xpose.msra.mxu0 0.0
      %3888 = vmatprep.subr.mxu0 0.0
      %3889 = vmatpush1.xpose.msra.mxu0 0.0
      %3890 = vmatprep.subr.mxu0 0.0
      %3891 = vmatpush1.xpose.msra.mxu0 0.0
      %3892 = vmatprep.subr.mxu0 0.0
      %3893 = vmatpush1.xpose.msra.mxu0 0.0
      %3894 = vmatprep.subr.mxu0 0.0
      %3895 = vmatpush1.xpose.msra.mxu0 0.0
      %3896 = vmatprep.subr.mxu0 0.0
      %3897 = vmatpush1.xpose.msra.mxu0 0.0
      %3898 = vmatprep.subr.mxu0 0.0
      %3899 = vmatpush1.xpose.msra.mxu0 0.0
      %3900 = vmatprep.subr.mxu0 0.0
      %3901 = vmatpush1.xpose.msra.mxu0 0.0
      %3902 = vmatprep.subr.mxu0 0.0
      %3903 = vmatpush1.xpose.msra.mxu0 0.0
      %3904 = vmatprep.subr.mxu0 0.0
      %3905 = vmatpush1.xpose.msra.mxu0 0.0
      %3906 = vmatprep.subr.mxu0 0.0
      %3907 = vmatpush1.xpose.msra.mxu0 0.0
      %3908 = vmatprep.subr.mxu0 0.0
      %3909 = vmatpush1.xpose.msra.mxu0 0.0
      %3910 = vmatprep.subr.mxu0 0.0
      %3911 = vmatpush1.xpose.msra.mxu0 0.0
      %3912 = vmatprep.subr.mxu0 0.0
      %3913 = vmatpush1.xpose.msra.mxu0 0.0
      %3914 = vmatprep.subr.mxu0 0.0
      %3915 = vmatpush1.xpose.msra.mxu0 0.0
      %3916 = vmatprep.subr.mxu0 0.0
      %3917 = vmatpush1.xpose.msra.mxu0 0.0
      %3918 = vmatprep.subr.mxu0 0.0
      %3919 = vmatpush1.xpose.msra.mxu0 0.0
      %3920 = vmatprep.subr.mxu0 0.0
      %3921 = vmatpush1.xpose.msra.mxu0 0.0
      %3922 = vmatprep.subr.mxu0 0.0
      %3923 = vmatpush1.xpose.msra.mxu0 0.0
      %3924 = vmatprep.subr.mxu0 0.0
      %3925 = vmatpush1.xpose.msra.mxu0 0.0
      %3926 = vmatprep.subr.mxu0 0.0
      %3927 = vmatpush1.xpose.msra.mxu0 0.0
      %3928 = vmatprep.subr.mxu0 0.0
      %3929 = vmatpush1.xpose.msra.mxu0 0.0
      %3930 = vmatprep.subr.mxu0 0.0
      %3931 = vmatpush1.xpose.msra.mxu0 0.0
      %3932 = vmatprep.subr.mxu0 0.0
      %3933 = vmatpush1.xpose.msra.mxu0 0.0
      %3934 = vmatprep.subr.mxu0 0.0
      %3935 = vmatpush1.xpose.msra.mxu0 0.0
      %3936 = vmatprep.subr.mxu0 0.0
      %3937 = vmatpush1.xpose.msra.mxu0 0.0
      %3938 = vmatprep.subr.mxu0 0.0
      %3939 = vmatpush1.xpose.msra.mxu0 0.0
      %3940 = vmatprep.subr.mxu0 0.0
      %3941 = vmatpush1.xpose.msra.mxu0 0.0
      %3942 = vmatprep.mubr.f32.mxu0 0.0
      %3943 = vmatmul.mubr.f32.gmra.mrb[0].mxu0 %v3874
      %v3944 = vpop.f32.mrb[0].mxu0
      %v3945 = vadd.f32 0.0, %v3944
      %v3946 = vpop.f32.mrb[0].mxu0
      %3947 = vdwg.mxu0
      %3948 = vrot.lane.b32.xlu0 %v3430, 112
      %v3949 = vpop.permute.xlu0 %3948
      %v3951 = vsel %vm853, %v3949, 0.0
      %3952 = vadd.xlane.f32.xlu0 %v3951
      %v3953 = vpop.xlane.xlu0 %3952
      %3954 = vrot.lane.b32.xlu0 %v3441, 112
      %v3955 = vpop.permute.xlu0 %3954
      %v3956 = vsel %vm853, %v3955, 0
      %3958 = vmatprep.subr.mxu0 0.0
      %3959 = vmatpush1.xpose.msra.mxu0 %v3956
      %3960 = vmatprep.subr.mxu0 0.0
      %3961 = vmatpush1.xpose.msra.mxu0 0.0
      %3962 = vmatprep.subr.mxu0 0.0
      %3963 = vmatpush1.xpose.msra.mxu0 0.0
      %3964 = vmatprep.subr.mxu0 0.0
      %3965 = vmatpush1.xpose.msra.mxu0 0.0
      %3966 = vmatprep.subr.mxu0 0.0
      %3967 = vmatpush1.xpose.msra.mxu0 0.0
      %3968 = vmatprep.subr.mxu0 0.0
      %3969 = vmatpush1.xpose.msra.mxu0 0.0
      %3970 = vmatprep.subr.mxu0 0.0
      %3971 = vmatpush1.xpose.msra.mxu0 0.0
      %3972 = vmatprep.subr.mxu0 0.0
      %3973 = vmatpush1.xpose.msra.mxu0 0.0
      %3974 = vmatprep.subr.mxu0 0.0
      %3975 = vmatpush1.xpose.msra.mxu0 0.0
      %3976 = vmatprep.subr.mxu0 0.0
      %3977 = vmatpush1.xpose.msra.mxu0 0.0
      %3978 = vmatprep.subr.mxu0 0.0
      %3979 = vmatpush1.xpose.msra.mxu0 0.0
      %3980 = vmatprep.subr.mxu0 0.0
      %3981 = vmatpush1.xpose.msra.mxu0 0.0
      %3982 = vmatprep.subr.mxu0 0.0
      %3983 = vmatpush1.xpose.msra.mxu0 0.0
      %3984 = vmatprep.subr.mxu0 0.0
      %3985 = vmatpush1.xpose.msra.mxu0 0.0
      %3986 = vmatprep.subr.mxu0 0.0
      %3987 = vmatpush1.xpose.msra.mxu0 0.0
      %3988 = vmatprep.subr.mxu0 0.0
      %3989 = vmatpush1.xpose.msra.mxu0 0.0
      %3990 = vmatprep.subr.mxu0 0.0
      %3991 = vmatpush1.xpose.msra.mxu0 0.0
      %3992 = vmatprep.subr.mxu0 0.0
      %3993 = vmatpush1.xpose.msra.mxu0 0.0
      %3994 = vmatprep.subr.mxu0 0.0
      %3995 = vmatpush1.xpose.msra.mxu0 0.0
      %3996 = vmatprep.subr.mxu0 0.0
      %3997 = vmatpush1.xpose.msra.mxu0 0.0
      %3998 = vmatprep.subr.mxu0 0.0
      %3999 = vmatpush1.xpose.msra.mxu0 0.0
      %4000 = vmatprep.subr.mxu0 0.0
      %4001 = vmatpush1.xpose.msra.mxu0 0.0
      %4002 = vmatprep.subr.mxu0 0.0
      %4003 = vmatpush1.xpose.msra.mxu0 0.0
      %4004 = vmatprep.subr.mxu0 0.0
      %4005 = vmatpush1.xpose.msra.mxu0 0.0
      %4006 = vmatprep.subr.mxu0 0.0
      %4007 = vmatpush1.xpose.msra.mxu0 0.0
      %4008 = vmatprep.subr.mxu0 0.0
      %4009 = vmatpush1.xpose.msra.mxu0 0.0
      %4010 = vmatprep.subr.mxu0 0.0
      %4011 = vmatpush1.xpose.msra.mxu0 0.0
      %4012 = vmatprep.subr.mxu0 0.0
      %4013 = vmatpush1.xpose.msra.mxu0 0.0
      %4014 = vmatprep.subr.mxu0 0.0
      %4015 = vmatpush1.xpose.msra.mxu0 0.0
      %4016 = vmatprep.subr.mxu0 0.0
      %4017 = vmatpush1.xpose.msra.mxu0 0.0
      %4018 = vmatprep.subr.mxu0 0.0
      %4019 = vmatpush1.xpose.msra.mxu0 0.0
      %4020 = vmatprep.subr.mxu0 0.0
      %4021 = vmatpush1.xpose.msra.mxu0 0.0
      %4022 = vmatprep.mubr.f32.mxu0 0.0
      %4023 = vmatmul.mubr.f32.gmra.mrb[0].mxu0 %v936
      %v4024 = vpop.f32.mrb[0].mxu0
      %v4025 = vadd.f32 0.0, %v4024
      %v4026 = vpop.f32.mrb[0].mxu0
      %4027 = vdwg.mxu0
      %v4028 = vlaneseq
      %v4029 = vshrl.u32 %v4028, 7
      %v4030 = vsub.s32 0, %v4029
      %v4031 = vrot.slane %v4025, %v4030
      %v4032 = vadd.f32 %v3953, %v4031
      %v4033 = vmul.f32 %v3945, 2.0
      %v4034 = vsub.f32 %v4032, %v4033
      %v4035 = vadd.f32 %v3869, %v758
      %s4036 = sld [smem:[#allocation5 + $0x6]]
      %v4037 = vstv %s4036
      %v4038 = vmul.f32 %v4034, %v4037
      %v4039 = vadd.f32 %v4035, %v4038
      %v4040 = vmul.f32 %v4039, 0.57735026
      %v4041 = vsub.f32 %v4040, %v772
      %v4042 = vsel %vm1025, %v4041, -inf
      %4043 = vmax.xlane.f32.xlu0 %v4042
      %v4044 = vpop.xlane.xlu0 %4043
      %v4045 = vsub.f32 %v4041, %v4044
      %v4046 = vmul.f32 %v4045, 1.442695
      %v4047 = vpow.pop %v4046
      %v4048 = vmul.f32 %v4047, %v768
      %v4049 = vmul.f32 %v4047, %v769
      %v4050 = vsel %vm1025, %v4048, 0.0
      %4051 = vadd.xlane.f32.xlu0 %v4050
      %v4052 = vpop.xlane.xlu0 %4051
      %v4053 = vsel %vm1025, %v4049, 0.0
      %4054 = vadd.xlane.f32.xlu0 %v4053
      %v4055 = vpop.xlane.xlu0 %4054
      %vm4056 = vcmp.gt.f32.partialorder %v4052, 0.0
      %v4057 = vsel %vm4056, %v4052, 1.0
      %v4058 = vrcp.pop %v4057
      %vm4059 = vcmp.gt.f32.partialorder %v4055, 0.0
      %v4060 = vsel %vm4059, %v4055, 1.0
      %v4061 = vrcp.pop %v4060
      %v4062 = vmul.f32 %v4058, %v1046
      %v4063 = vmul.f32 %v4048, %v4062
      %v4064 = vmul.f32 %v4061, %v1049
      %v4065 = vmul.f32 %v4049, %v4064
      %v4066 = vadd.f32 %v4063, %v4065
      %v4068 = vcombine.high %v4066, %v4066
      %v4070 = vunpack.c.l.s4 1966171168
      %v4071 = vunpack.c.0.s8 %v4070
      %v4072 = vlaneseq
      %v4073 = vshrl.u32 %v4072, 7
      %v4074 = vsub.s32 %v4071, %v4073
      %v4075 = vrot.slane %v4066, %v4074
      %v4077 = vunpack.c.l.s4 1966171168
      %v4078 = vunpack.c.0.s8 %v4077
      %v4079 = vlaneseq
      %v4080 = vshrl.u32 %v4079, 7
      %v4081 = vsub.s32 %v4078, %v4080
      %v4082 = vrot.slane %v4068, %v4081
      %v4083 = vcombine.high %v4075, %v4075
      %v4084 = vcombine.high %v4082, %v4082
      %v4086 = vunpack.c.l.s4 1966171168
      %v4087 = vunpack.c.0.s8 %v4086
      %v4088 = vlaneseq
      %v4089 = vshrl.u32 %v4088, 7
      %v4090 = vsub.s32 %v4087, %v4089
      %v4091 = vrot.slane %v4075, %v4090
      %v4093 = vunpack.c.l.s4 1966171168
      %v4094 = vunpack.c.0.s8 %v4093
      %v4095 = vlaneseq
      %v4096 = vshrl.u32 %v4095, 7
      %v4097 = vsub.s32 %v4094, %v4096
      %v4098 = vrot.slane %v4082, %v4097
      %v4100 = vunpack.c.l.s4 1966171168
      %v4101 = vunpack.c.0.s8 %v4100
      %v4102 = vlaneseq
      %v4103 = vshrl.u32 %v4102, 7
      %v4104 = vsub.s32 %v4101, %v4103
      %v4105 = vrot.slane %v4083, %v4104
      %v4107 = vunpack.c.l.s4 1966171168
      %v4108 = vunpack.c.0.s8 %v4107
      %v4109 = vlaneseq
      %v4110 = vshrl.u32 %v4109, 7
      %v4111 = vsub.s32 %v4108, %v4110
      %v4112 = vrot.slane %v4084, %v4111
      %v4113 = vcombine.high %v4091, %v4091
      %v4114 = vcombine.high %v4098, %v4098
      %v4115 = vcombine.high %v4105, %v4105
      %v4116 = vcombine.high %v4112, %v4112
      %4125 = vst.msk [vmem:[#allocation2 + $0x6] sm:$0x1] %vm1111, %v4091
      %4126 = vst.msk [vmem:[#allocation2 + $0xe] sm:$0x1] %vm1111, %v4105
      %4127 = vst.msk [vmem:[#allocation2 + $0x16] sm:$0x1] %vm1111, %v4113
      %4128 = vst.msk [vmem:[#allocation2 + $0x1e] sm:$0x1] %vm1111, %v4115
      %4129 = vst.msk [vmem:[#allocation2 + $0x26] sm:$0x1] %vm1111, %v4098
      %4130 = vst.msk [vmem:[#allocation2 + $0x2e] sm:$0x1] %vm1111, %v4112
      %4131 = vst.msk [vmem:[#allocation2 + $0x36] sm:$0x1] %vm1111, %v4114
      %4132 = vst.msk [vmem:[#allocation2 + $0x3e] sm:$0x1] %vm1111, %v4116
      %4133 = vrot.lane.b32.xlu0 %v745, 64
      %v4134 = vpop.permute.xlu0 %4133
      %v4136 = vsel %vm1025, %v4066, 0
      %4138 = vmatprep.subr.mxu0 0.0
      %4139 = vmatpush1.msra.mxu0 %v4134
      %4140 = vmatprep.subr.mxu0 0.0
      %4141 = vmatpush1.msra.mxu0 0.0
      %4142 = vmatprep.subr.mxu0 0.0
      %4143 = vmatpush1.msra.mxu0 0.0
      %4144 = vmatprep.subr.mxu0 0.0
      %4145 = vmatpush1.msra.mxu0 0.0
      %4146 = vmatprep.subr.mxu0 0.0
      %4147 = vmatpush1.msra.mxu0 0.0
      %4148 = vmatprep.subr.mxu0 0.0
      %4149 = vmatpush1.msra.mxu0 0.0
      %4150 = vmatprep.subr.mxu0 0.0
      %4151 = vmatpush1.msra.mxu0 0.0
      %4152 = vmatprep.subr.mxu0 0.0
      %4153 = vmatpush1.msra.mxu0 0.0
      %4154 = vmatprep.subr.mxu0 0.0
      %4155 = vmatpush1.msra.mxu0 0.0
      %4156 = vmatprep.subr.mxu0 0.0
      %4157 = vmatpush1.msra.mxu0 0.0
      %4158 = vmatprep.subr.mxu0 0.0
      %4159 = vmatpush1.msra.mxu0 0.0
      %4160 = vmatprep.subr.mxu0 0.0
      %4161 = vmatpush1.msra.mxu0 0.0
      %4162 = vmatprep.subr.mxu0 0.0
      %4163 = vmatpush1.msra.mxu0 0.0
      %4164 = vmatprep.subr.mxu0 0.0
      %4165 = vmatpush1.msra.mxu0 0.0
      %4166 = vmatprep.subr.mxu0 0.0
      %4167 = vmatpush1.msra.mxu0 0.0
      %4168 = vmatprep.subr.mxu0 0.0
      %4169 = vmatpush1.msra.mxu0 0.0
      %4170 = vmatprep.subr.mxu0 0.0
      %4171 = vmatpush1.msra.mxu0 0.0
      %4172 = vmatprep.subr.mxu0 0.0
      %4173 = vmatpush1.msra.mxu0 0.0
      %4174 = vmatprep.subr.mxu0 0.0
      %4175 = vmatpush1.msra.mxu0 0.0
      %4176 = vmatprep.subr.mxu0 0.0
      %4177 = vmatpush1.msra.mxu0 0.0
      %4178 = vmatprep.subr.mxu0 0.0
      %4179 = vmatpush1.msra.mxu0 0.0
      %4180 = vmatprep.subr.mxu0 0.0
      %4181 = vmatpush1.msra.mxu0 0.0
      %4182 = vmatprep.subr.mxu0 0.0
      %4183 = vmatpush1.msra.mxu0 0.0
      %4184 = vmatprep.subr.mxu0 0.0
      %4185 = vmatpush1.msra.mxu0 0.0
      %4186 = vmatprep.subr.mxu0 0.0
      %4187 = vmatpush1.msra.mxu0 0.0
      %4188 = vmatprep.subr.mxu0 0.0
      %4189 = vmatpush1.msra.mxu0 0.0
      %4190 = vmatprep.subr.mxu0 0.0
      %4191 = vmatpush1.msra.mxu0 0.0
      %4192 = vmatprep.subr.mxu0 0.0
      %4193 = vmatpush1.msra.mxu0 0.0
      %4194 = vmatprep.subr.mxu0 0.0
      %4195 = vmatpush1.msra.mxu0 0.0
      %4196 = vmatprep.subr.mxu0 0.0
      %4197 = vmatpush1.msra.mxu0 0.0
      %4198 = vmatprep.subr.mxu0 0.0
      %4199 = vmatpush1.msra.mxu0 0.0
      %4200 = vmatprep.subr.mxu0 0.0
      %4201 = vmatpush1.msra.mxu0 0.0
      %4202 = vmatprep.mubr.f32.mxu0 0.0
      %4203 = vmatmul.mubr.f32.gmra.mrb[0].mxu0 %v4136
      %v4204 = vpop.f32.mrb[0].mxu0
      %v4205 = vadd.f32 0.0, %v4204
      %v4206 = vpop.f32.mrb[0].mxu0
      %4207 = vdwg.mxu0
      %4209 = vrot.lane.b32.xlu0 %v4205, 64
      %v4210 = vpop.permute.xlu0 %4209
      %4212 = vst.msk [vmem:[%s723 + $0x8] sm:$0xff] %vm2190, %v4210
      %4213 = vrot.lane.b32.xlu0 %v751, 112
      %v4214 = vpop.permute.xlu0 %4213
      %4216 = vmatprep.subr.mxu0 0.0
      %4217 = vmatpush1.msra.mxu0 %v4214
      %4218 = vmatprep.subr.mxu0 0.0
      %4219 = vmatpush1.msra.mxu0 0.0
      %4220 = vmatprep.subr.mxu0 0.0
      %4221 = vmatpush1.msra.mxu0 0.0
      %4222 = vmatprep.subr.mxu0 0.0
      %4223 = vmatpush1.msra.mxu0 0.0
      %4224 = vmatprep.subr.mxu0 0.0
      %4225 = vmatpush1.msra.mxu0 0.0
      %4226 = vmatprep.subr.mxu0 0.0
      %4227 = vmatpush1.msra.mxu0 0.0
      %4228 = vmatprep.subr.mxu0 0.0
      %4229 = vmatpush1.msra.mxu0 0.0
      %4230 = vmatprep.subr.mxu0 0.0
      %4231 = vmatpush1.msra.mxu0 0.0
      %4232 = vmatprep.subr.mxu0 0.0
      %4233 = vmatpush1.msra.mxu0 0.0
      %4234 = vmatprep.subr.mxu0 0.0
      %4235 = vmatpush1.msra.mxu0 0.0
      %4236 = vmatprep.subr.mxu0 0.0
      %4237 = vmatpush1.msra.mxu0 0.0
      %4238 = vmatprep.subr.mxu0 0.0
      %4239 = vmatpush1.msra.mxu0 0.0
      %4240 = vmatprep.subr.mxu0 0.0
      %4241 = vmatpush1.msra.mxu0 0.0
      %4242 = vmatprep.subr.mxu0 0.0
      %4243 = vmatpush1.msra.mxu0 0.0
      %4244 = vmatprep.subr.mxu0 0.0
      %4245 = vmatpush1.msra.mxu0 0.0
      %4246 = vmatprep.subr.mxu0 0.0
      %4247 = vmatpush1.msra.mxu0 0.0
      %4248 = vmatprep.subr.mxu0 0.0
      %4249 = vmatpush1.msra.mxu0 0.0
      %4250 = vmatprep.subr.mxu0 0.0
      %4251 = vmatpush1.msra.mxu0 0.0
      %4252 = vmatprep.subr.mxu0 0.0
      %4253 = vmatpush1.msra.mxu0 0.0
      %4254 = vmatprep.subr.mxu0 0.0
      %4255 = vmatpush1.msra.mxu0 0.0
      %4256 = vmatprep.subr.mxu0 0.0
      %4257 = vmatpush1.msra.mxu0 0.0
      %4258 = vmatprep.subr.mxu0 0.0
      %4259 = vmatpush1.msra.mxu0 0.0
      %4260 = vmatprep.subr.mxu0 0.0
      %4261 = vmatpush1.msra.mxu0 0.0
      %4262 = vmatprep.subr.mxu0 0.0
      %4263 = vmatpush1.msra.mxu0 0.0
      %4264 = vmatprep.subr.mxu0 0.0
      %4265 = vmatpush1.msra.mxu0 0.0
      %4266 = vmatprep.subr.mxu0 0.0
      %4267 = vmatpush1.msra.mxu0 0.0
      %4268 = vmatprep.subr.mxu0 0.0
      %4269 = vmatpush1.msra.mxu0 0.0
      %4270 = vmatprep.subr.mxu0 0.0
      %4271 = vmatpush1.msra.mxu0 0.0
      %4272 = vmatprep.subr.mxu0 0.0
      %4273 = vmatpush1.msra.mxu0 0.0
      %4274 = vmatprep.subr.mxu0 0.0
      %4275 = vmatpush1.msra.mxu0 0.0
      %4276 = vmatprep.subr.mxu0 0.0
      %4277 = vmatpush1.msra.mxu0 0.0
      %4278 = vmatprep.subr.mxu0 0.0
      %4279 = vmatpush1.msra.mxu0 0.0
      %4280 = vmatprep.mubr.f32.mxu0 0.0
      %4281 = vmatmul.mubr.f32.gmra.mrb[0].mxu0 %v4136
      %v4282 = vpop.f32.mrb[0].mxu0
      %v4283 = vadd.f32 0.0, %v4282
      %v4284 = vpop.f32.mrb[0].mxu0
      %4285 = vdwg.mxu0
      %4287 = vrot.lane.b32.xlu0 %v4283, 16
      %v4288 = vpop.permute.xlu0 %4287
      %vm4290 = vcmask 326784
      %4291 = vst.msk [vmem:[%s739 + $0x8] sm:$0xff] %vm4290, %v4288
      %4292 = vrot.lane.b32.xlu0 %v741, 32
      %v4293 = vpop.permute.xlu0 %4292
      %4294 = vrot.lane.b32.xlu0 %v743, 32
      %v4295 = vpop.permute.xlu0 %4294
      %v4296 = vsel %vm775, %v4293, 0
      %v4298 = vsel %vm775, %v4295, 0
      %4300 = vmatprep.subr.mxu0 0.0
      %4301 = vmatpush1.xpose.msra.mxu0 %v4298
      %4302 = vmatprep.subr.mxu0 0.0
      %4303 = vmatpush1.xpose.msra.mxu0 0.0
      %4304 = vmatprep.subr.mxu0 0.0
      %4305 = vmatpush1.xpose.msra.mxu0 0.0
      %4306 = vmatprep.subr.mxu0 0.0
      %4307 = vmatpush1.xpose.msra.mxu0 0.0
      %4308 = vmatprep.subr.mxu0 0.0
      %4309 = vmatpush1.xpose.msra.mxu0 0.0
      %4310 = vmatprep.subr.mxu0 0.0
      %4311 = vmatpush1.xpose.msra.mxu0 0.0
      %4312 = vmatprep.subr.mxu0 0.0
      %4313 = vmatpush1.xpose.msra.mxu0 0.0
      %4314 = vmatprep.subr.mxu0 0.0
      %4315 = vmatpush1.xpose.msra.mxu0 0.0
      %4316 = vmatprep.subr.mxu0 0.0
      %4317 = vmatpush1.xpose.msra.mxu0 0.0
      %4318 = vmatprep.subr.mxu0 0.0
      %4319 = vmatpush1.xpose.msra.mxu0 0.0
      %4320 = vmatprep.subr.mxu0 0.0
      %4321 = vmatpush1.xpose.msra.mxu0 0.0
      %4322 = vmatprep.subr.mxu0 0.0
      %4323 = vmatpush1.xpose.msra.mxu0 0.0
      %4324 = vmatprep.subr.mxu0 0.0
      %4325 = vmatpush1.xpose.msra.mxu0 0.0
      %4326 = vmatprep.subr.mxu0 0.0
      %4327 = vmatpush1.xpose.msra.mxu0 0.0
      %4328 = vmatprep.subr.mxu0 0.0
      %4329 = vmatpush1.xpose.msra.mxu0 0.0
      %4330 = vmatprep.subr.mxu0 0.0
      %4331 = vmatpush1.xpose.msra.mxu0 0.0
      %4332 = vmatprep.subr.mxu0 0.0
      %4333 = vmatpush1.xpose.msra.mxu0 0.0
      %4334 = vmatprep.subr.mxu0 0.0
      %4335 = vmatpush1.xpose.msra.mxu0 0.0
      %4336 = vmatprep.subr.mxu0 0.0
      %4337 = vmatpush1.xpose.msra.mxu0 0.0
      %4338 = vmatprep.subr.mxu0 0.0
      %4339 = vmatpush1.xpose.msra.mxu0 0.0
      %4340 = vmatprep.subr.mxu0 0.0
      %4341 = vmatpush1.xpose.msra.mxu0 0.0
      %4342 = vmatprep.subr.mxu0 0.0
      %4343 = vmatpush1.xpose.msra.mxu0 0.0
      %4344 = vmatprep.subr.mxu0 0.0
      %4345 = vmatpush1.xpose.msra.mxu0 0.0
      %4346 = vmatprep.subr.mxu0 0.0
      %4347 = vmatpush1.xpose.msra.mxu0 0.0
      %4348 = vmatprep.subr.mxu0 0.0
      %4349 = vmatpush1.xpose.msra.mxu0 0.0
      %4350 = vmatprep.subr.mxu0 0.0
      %4351 = vmatpush1.xpose.msra.mxu0 0.0
      %4352 = vmatprep.subr.mxu0 0.0
      %4353 = vmatpush1.xpose.msra.mxu0 0.0
      %4354 = vmatprep.subr.mxu0 0.0
      %4355 = vmatpush1.xpose.msra.mxu0 0.0
      %4356 = vmatprep.subr.mxu0 0.0
      %4357 = vmatpush1.xpose.msra.mxu0 0.0
      %4358 = vmatprep.subr.mxu0 0.0
      %4359 = vmatpush1.xpose.msra.mxu0 0.0
      %4360 = vmatprep.subr.mxu0 0.0
      %4361 = vmatpush1.xpose.msra.mxu0 0.0
      %4362 = vmatprep.subr.mxu0 0.0
      %4363 = vmatpush1.xpose.msra.mxu0 0.0
      %4364 = vmatprep.mubr.f32.mxu0 0.0
      %4365 = vmatmul.mubr.f32.gmra.mrb[0].mxu0 %v4296
      %v4366 = vpop.f32.mrb[0].mxu0
      %v4367 = vadd.f32 0.0, %v4366
      %v4368 = vpop.f32.mrb[0].mxu0
      %4369 = vdwg.mxu0
      %v4370 = vmul.f32 %v4367, 0.17677669
      %4371 = vrot.lane.b32.xlu0 %v747, 88
      %v4372 = vpop.permute.xlu0 %4371
      %4373 = vrot.lane.b32.xlu0 %v749, 88
      %v4374 = vpop.permute.xlu0 %4373
      %v4375 = vsel %vm853, %v4372, 0
      %v4377 = vsel %vm853, %v4374, 0
      %4379 = vmatprep.subr.mxu0 0.0
      %4380 = vmatpush1.xpose.msra.mxu0 %v4377
      %4381 = vmatprep.subr.mxu0 0.0
      %4382 = vmatpush1.xpose.msra.mxu0 0.0
      %4383 = vmatprep.subr.mxu0 0.0
      %4384 = vmatpush1.xpose.msra.mxu0 0.0
      %4385 = vmatprep.subr.mxu0 0.0
      %4386 = vmatpush1.xpose.msra.mxu0 0.0
      %4387 = vmatprep.subr.mxu0 0.0
      %4388 = vmatpush1.xpose.msra.mxu0 0.0
      %4389 = vmatprep.subr.mxu0 0.0
      %4390 = vmatpush1.xpose.msra.mxu0 0.0
      %4391 = vmatprep.subr.mxu0 0.0
      %4392 = vmatpush1.xpose.msra.mxu0 0.0
      %4393 = vmatprep.subr.mxu0 0.0
      %4394 = vmatpush1.xpose.msra.mxu0 0.0
      %4395 = vmatprep.subr.mxu0 0.0
      %4396 = vmatpush1.xpose.msra.mxu0 0.0
      %4397 = vmatprep.subr.mxu0 0.0
      %4398 = vmatpush1.xpose.msra.mxu0 0.0
      %4399 = vmatprep.subr.mxu0 0.0
      %4400 = vmatpush1.xpose.msra.mxu0 0.0
      %4401 = vmatprep.subr.mxu0 0.0
      %4402 = vmatpush1.xpose.msra.mxu0 0.0
      %4403 = vmatprep.subr.mxu0 0.0
      %4404 = vmatpush1.xpose.msra.mxu0 0.0
      %4405 = vmatprep.subr.mxu0 0.0
      %4406 = vmatpush1.xpose.msra.mxu0 0.0
      %4407 = vmatprep.subr.mxu0 0.0
      %4408 = vmatpush1.xpose.msra.mxu0 0.0
      %4409 = vmatprep.subr.mxu0 0.0
      %4410 = vmatpush1.xpose.msra.mxu0 0.0
      %4411 = vmatprep.subr.mxu0 0.0
      %4412 = vmatpush1.xpose.msra.mxu0 0.0
      %4413 = vmatprep.subr.mxu0 0.0
      %4414 = vmatpush1.xpose.msra.mxu0 0.0
      %4415 = vmatprep.subr.mxu0 0.0
      %4416 = vmatpush1.xpose.msra.mxu0 0.0
      %4417 = vmatprep.subr.mxu0 0.0
      %4418 = vmatpush1.xpose.msra.mxu0 0.0
      %4419 = vmatprep.subr.mxu0 0.0
      %4420 = vmatpush1.xpose.msra.mxu0 0.0
      %4421 = vmatprep.subr.mxu0 0.0
      %4422 = vmatpush1.xpose.msra.mxu0 0.0
      %4423 = vmatprep.subr.mxu0 0.0
      %4424 = vmatpush1.xpose.msra.mxu0 0.0
      %4425 = vmatprep.subr.mxu0 0.0
      %4426 = vmatpush1.xpose.msra.mxu0 0.0
      %4427 = vmatprep.subr.mxu0 0.0
      %4428 = vmatpush1.xpose.msra.mxu0 0.0
      %4429 = vmatprep.subr.mxu0 0.0
      %4430 = vmatpush1.xpose.msra.mxu0 0.0
      %4431 = vmatprep.subr.mxu0 0.0
      %4432 = vmatpush1.xpose.msra.mxu0 0.0
      %4433 = vmatprep.subr.mxu0 0.0
      %4434 = vmatpush1.xpose.msra.mxu0 0.0
      %4435 = vmatprep.subr.mxu0 0.0
      %4436 = vmatpush1.xpose.msra.mxu0 0.0
      %4437 = vmatprep.subr.mxu0 0.0
      %4438 = vmatpush1.xpose.msra.mxu0 0.0
      %4439 = vmatprep.subr.mxu0 0.0
      %4440 = vmatpush1.xpose.msra.mxu0 0.0
      %4441 = vmatprep.subr.mxu0 0.0
      %4442 = vmatpush1.xpose.msra.mxu0 0.0
      %4443 = vmatprep.mubr.f32.mxu0 0.0
      %4444 = vmatmul.mubr.f32.gmra.mrb[0].mxu0 %v4375
      %v4445 = vpop.f32.mrb[0].mxu0
      %v4446 = vadd.f32 0.0, %v4445
      %v4447 = vpop.f32.mrb[0].mxu0
      %4448 = vdwg.mxu0
      %4449 = vrot.lane.b32.xlu0 %v3430, 88
      %v4450 = vpop.permute.xlu0 %4449
      %v4452 = vsel %vm853, %v4450, 0.0
      %4453 = vadd.xlane.f32.xlu0 %v4452
      %v4454 = vpop.xlane.xlu0 %4453
      %4455 = vrot.lane.b32.xlu0 %v3441, 88
      %v4456 = vpop.permute.xlu0 %4455
      %v4457 = vsel %vm853, %v4456, 0
      %4459 = vmatprep.subr.mxu0 0.0
      %4460 = vmatpush1.xpose.msra.mxu0 %v4457
      %4461 = vmatprep.subr.mxu0 0.0
      %4462 = vmatpush1.xpose.msra.mxu0 0.0
      %4463 = vmatprep.subr.mxu0 0.0
      %4464 = vmatpush1.xpose.msra.mxu0 0.0
      %4465 = vmatprep.subr.mxu0 0.0
      %4466 = vmatpush1.xpose.msra.mxu0 0.0
      %4467 = vmatprep.subr.mxu0 0.0
      %4468 = vmatpush1.xpose.msra.mxu0 0.0
      %4469 = vmatprep.subr.mxu0 0.0
      %4470 = vmatpush1.xpose.msra.mxu0 0.0
      %4471 = vmatprep.subr.mxu0 0.0
      %4472 = vmatpush1.xpose.msra.mxu0 0.0
      %4473 = vmatprep.subr.mxu0 0.0
      %4474 = vmatpush1.xpose.msra.mxu0 0.0
      %4475 = vmatprep.subr.mxu0 0.0
      %4476 = vmatpush1.xpose.msra.mxu0 0.0
      %4477 = vmatprep.subr.mxu0 0.0
      %4478 = vmatpush1.xpose.msra.mxu0 0.0
      %4479 = vmatprep.subr.mxu0 0.0
      %4480 = vmatpush1.xpose.msra.mxu0 0.0
      %4481 = vmatprep.subr.mxu0 0.0
      %4482 = vmatpush1.xpose.msra.mxu0 0.0
      %4483 = vmatprep.subr.mxu0 0.0
      %4484 = vmatpush1.xpose.msra.mxu0 0.0
      %4485 = vmatprep.subr.mxu0 0.0
      %4486 = vmatpush1.xpose.msra.mxu0 0.0
      %4487 = vmatprep.subr.mxu0 0.0
      %4488 = vmatpush1.xpose.msra.mxu0 0.0
      %4489 = vmatprep.subr.mxu0 0.0
      %4490 = vmatpush1.xpose.msra.mxu0 0.0
      %4491 = vmatprep.subr.mxu0 0.0
      %4492 = vmatpush1.xpose.msra.mxu0 0.0
      %4493 = vmatprep.subr.mxu0 0.0
      %4494 = vmatpush1.xpose.msra.mxu0 0.0
      %4495 = vmatprep.subr.mxu0 0.0
      %4496 = vmatpush1.xpose.msra.mxu0 0.0
      %4497 = vmatprep.subr.mxu0 0.0
      %4498 = vmatpush1.xpose.msra.mxu0 0.0
      %4499 = vmatprep.subr.mxu0 0.0
      %4500 = vmatpush1.xpose.msra.mxu0 0.0
      %4501 = vmatprep.subr.mxu0 0.0
      %4502 = vmatpush1.xpose.msra.mxu0 0.0
      %4503 = vmatprep.subr.mxu0 0.0
      %4504 = vmatpush1.xpose.msra.mxu0 0.0
      %4505 = vmatprep.subr.mxu0 0.0
      %4506 = vmatpush1.xpose.msra.mxu0 0.0
      %4507 = vmatprep.subr.mxu0 0.0
      %4508 = vmatpush1.xpose.msra.mxu0 0.0
      %4509 = vmatprep.subr.mxu0 0.0
      %4510 = vmatpush1.xpose.msra.mxu0 0.0
      %4511 = vmatprep.subr.mxu0 0.0
      %4512 = vmatpush1.xpose.msra.mxu0 0.0
      %4513 = vmatprep.subr.mxu0 0.0
      %4514 = vmatpush1.xpose.msra.mxu0 0.0
      %4515 = vmatprep.subr.mxu0 0.0
      %4516 = vmatpush1.xpose.msra.mxu0 0.0
      %4517 = vmatprep.subr.mxu0 0.0
      %4518 = vmatpush1.xpose.msra.mxu0 0.0
      %4519 = vmatprep.subr.mxu0 0.0
      %4520 = vmatpush1.xpose.msra.mxu0 0.0
      %4521 = vmatprep.subr.mxu0 0.0
      %4522 = vmatpush1.xpose.msra.mxu0 0.0
      %4523 = vmatprep.mubr.f32.mxu0 0.0
      %4524 = vmatmul.mubr.f32.gmra.mrb[0].mxu0 %v936
      %v4525 = vpop.f32.mrb[0].mxu0
      %v4526 = vadd.f32 0.0, %v4525
      %v4527 = vpop.f32.mrb[0].mxu0
      %4528 = vdwg.mxu0
      %v4529 = vlaneseq
      %v4530 = vshrl.u32 %v4529, 7
      %v4531 = vsub.s32 0, %v4530
      %v4532 = vrot.slane %v4526, %v4531
      %v4533 = vadd.f32 %v4454, %v4532
      %v4534 = vmul.f32 %v4446, 2.0
      %v4535 = vsub.f32 %v4533, %v4534
      %v4536 = vadd.f32 %v4370, %v759
      %s4537 = sld [smem:[#allocation5 + $0x7]]
      %v4538 = vstv %s4537
      %v4539 = vmul.f32 %v4535, %v4538
      %v4540 = vadd.f32 %v4536, %v4539
      %v4541 = vmul.f32 %v4540, 0.57735026
      %v4542 = vsub.f32 %v4541, %v772
      %v4543 = vsel %vm1025, %v4542, -inf
      %4544 = vmax.xlane.f32.xlu0 %v4543
      %v4545 = vpop.xlane.xlu0 %4544
      %v4546 = vsub.f32 %v4542, %v4545
      %v4547 = vmul.f32 %v4546, 1.442695
      %v4548 = vpow.pop %v4547
      %v4549 = vmul.f32 %v4548, %v768
      %v4550 = vmul.f32 %v4548, %v769
      %v4551 = vsel %vm1025, %v4549, 0.0
      %4552 = vadd.xlane.f32.xlu0 %v4551
      %v4553 = vpop.xlane.xlu0 %4552
      %v4554 = vsel %vm1025, %v4550, 0.0
      %4555 = vadd.xlane.f32.xlu0 %v4554
      %v4556 = vpop.xlane.xlu0 %4555
      %vm4557 = vcmp.gt.f32.partialorder %v4553, 0.0
      %v4558 = vsel %vm4557, %v4553, 1.0
      %v4559 = vrcp.pop %v4558
      %vm4560 = vcmp.gt.f32.partialorder %v4556, 0.0
      %v4561 = vsel %vm4560, %v4556, 1.0
      %v4562 = vrcp.pop %v4561
      %v4563 = vmul.f32 %v4559, %v1046
      %v4564 = vmul.f32 %v4549, %v4563
      %v4565 = vmul.f32 %v4562, %v1049
      %v4566 = vmul.f32 %v4550, %v4565
      %v4567 = vadd.f32 %v4564, %v4566
      %v4569 = vcombine.high %v4567, %v4567
      %v4571 = vunpack.c.l.s4 1966171168
      %v4572 = vunpack.c.0.s8 %v4571
      %v4573 = vlaneseq
      %v4574 = vshrl.u32 %v4573, 7
      %v4575 = vsub.s32 %v4572, %v4574
      %v4576 = vrot.slane %v4567, %v4575
      %v4578 = vunpack.c.l.s4 1966171168
      %v4579 = vunpack.c.0.s8 %v4578
      %v4580 = vlaneseq
      %v4581 = vshrl.u32 %v4580, 7
      %v4582 = vsub.s32 %v4579, %v4581
      %v4583 = vrot.slane %v4569, %v4582
      %v4584 = vcombine.high %v4576, %v4576
      %v4585 = vcombine.high %v4583, %v4583
      %v4587 = vunpack.c.l.s4 1966171168
      %v4588 = vunpack.c.0.s8 %v4587
      %v4589 = vlaneseq
      %v4590 = vshrl.u32 %v4589, 7
      %v4591 = vsub.s32 %v4588, %v4590
      %v4592 = vrot.slane %v4576, %v4591
      %v4594 = vunpack.c.l.s4 1966171168
      %v4595 = vunpack.c.0.s8 %v4594
      %v4596 = vlaneseq
      %v4597 = vshrl.u32 %v4596, 7
      %v4598 = vsub.s32 %v4595, %v4597
      %v4599 = vrot.slane %v4583, %v4598
      %v4601 = vunpack.c.l.s4 1966171168
      %v4602 = vunpack.c.0.s8 %v4601
      %v4603 = vlaneseq
      %v4604 = vshrl.u32 %v4603, 7
      %v4605 = vsub.s32 %v4602, %v4604
      %v4606 = vrot.slane %v4584, %v4605
      %v4608 = vunpack.c.l.s4 1966171168
      %v4609 = vunpack.c.0.s8 %v4608
      %v4610 = vlaneseq
      %v4611 = vshrl.u32 %v4610, 7
      %v4612 = vsub.s32 %v4609, %v4611
      %v4613 = vrot.slane %v4585, %v4612
      %v4614 = vcombine.high %v4592, %v4592
      %v4615 = vcombine.high %v4599, %v4599
      %v4616 = vcombine.high %v4606, %v4606
      %v4617 = vcombine.high %v4613, %v4613
      %4626 = vst.msk [vmem:[#allocation2 + $0x7] sm:$0x1] %vm1111, %v4592
      %4627 = vst.msk [vmem:[#allocation2 + $0xf] sm:$0x1] %vm1111, %v4606
      %4628 = vst.msk [vmem:[#allocation2 + $0x17] sm:$0x1] %vm1111, %v4614
      %4629 = vst.msk [vmem:[#allocation2 + $0x1f] sm:$0x1] %vm1111, %v4616
      %4630 = vst.msk [vmem:[#allocation2 + $0x27] sm:$0x1] %vm1111, %v4599
      %4631 = vst.msk [vmem:[#allocation2 + $0x2f] sm:$0x1] %vm1111, %v4613
      %4632 = vst.msk [vmem:[#allocation2 + $0x37] sm:$0x1] %vm1111, %v4615
      %4633 = vst.msk [vmem:[#allocation2 + $0x3f] sm:$0x1] %vm1111, %v4617
      %4634 = vrot.lane.b32.xlu0 %v745, 32
      %v4635 = vpop.permute.xlu0 %4634
      %v4637 = vsel %vm1025, %v4567, 0
      %4639 = vmatprep.subr.mxu0 0.0
      %4640 = vmatpush1.msra.mxu0 %v4635
      %4641 = vmatprep.subr.mxu0 0.0
      %4642 = vmatpush1.msra.mxu0 0.0
      %4643 = vmatprep.subr.mxu0 0.0
      %4644 = vmatpush1.msra.mxu0 0.0
      %4645 = vmatprep.subr.mxu0 0.0
      %4646 = vmatpush1.msra.mxu0 0.0
      %4647 = vmatprep.subr.mxu0 0.0
      %4648 = vmatpush1.msra.mxu0 0.0
      %4649 = vmatprep.subr.mxu0 0.0
      %4650 = vmatpush1.msra.mxu0 0.0
      %4651 = vmatprep.subr.mxu0 0.0
      %4652 = vmatpush1.msra.mxu0 0.0
      %4653 = vmatprep.subr.mxu0 0.0
      %4654 = vmatpush1.msra.mxu0 0.0
      %4655 = vmatprep.subr.mxu0 0.0
      %4656 = vmatpush1.msra.mxu0 0.0
      %4657 = vmatprep.subr.mxu0 0.0
      %4658 = vmatpush1.msra.mxu0 0.0
      %4659 = vmatprep.subr.mxu0 0.0
      %4660 = vmatpush1.msra.mxu0 0.0
      %4661 = vmatprep.subr.mxu0 0.0
      %4662 = vmatpush1.msra.mxu0 0.0
      %4663 = vmatprep.subr.mxu0 0.0
      %4664 = vmatpush1.msra.mxu0 0.0
      %4665 = vmatprep.subr.mxu0 0.0
      %4666 = vmatpush1.msra.mxu0 0.0
      %4667 = vmatprep.subr.mxu0 0.0
      %4668 = vmatpush1.msra.mxu0 0.0
      %4669 = vmatprep.subr.mxu0 0.0
      %4670 = vmatpush1.msra.mxu0 0.0
      %4671 = vmatprep.subr.mxu0 0.0
      %4672 = vmatpush1.msra.mxu0 0.0
      %4673 = vmatprep.subr.mxu0 0.0
      %4674 = vmatpush1.msra.mxu0 0.0
      %4675 = vmatprep.subr.mxu0 0.0
      %4676 = vmatpush1.msra.mxu0 0.0
      %4677 = vmatprep.subr.mxu0 0.0
      %4678 = vmatpush1.msra.mxu0 0.0
      %4679 = vmatprep.subr.mxu0 0.0
      %4680 = vmatpush1.msra.mxu0 0.0
      %4681 = vmatprep.subr.mxu0 0.0
      %4682 = vmatpush1.msra.mxu0 0.0
      %4683 = vmatprep.subr.mxu0 0.0
      %4684 = vmatpush1.msra.mxu0 0.0
      %4685 = vmatprep.subr.mxu0 0.0
      %4686 = vmatpush1.msra.mxu0 0.0
      %4687 = vmatprep.subr.mxu0 0.0
      %4688 = vmatpush1.msra.mxu0 0.0
      %4689 = vmatprep.subr.mxu0 0.0
      %4690 = vmatpush1.msra.mxu0 0.0
      %4691 = vmatprep.subr.mxu0 0.0
      %4692 = vmatpush1.msra.mxu0 0.0
      %4693 = vmatprep.subr.mxu0 0.0
      %4694 = vmatpush1.msra.mxu0 0.0
      %4695 = vmatprep.subr.mxu0 0.0
      %4696 = vmatpush1.msra.mxu0 0.0
      %4697 = vmatprep.subr.mxu0 0.0
      %4698 = vmatpush1.msra.mxu0 0.0
      %4699 = vmatprep.subr.mxu0 0.0
      %4700 = vmatpush1.msra.mxu0 0.0
      %4701 = vmatprep.subr.mxu0 0.0
      %4702 = vmatpush1.msra.mxu0 0.0
      %4703 = vmatprep.mubr.f32.mxu0 0.0
      %4704 = vmatmul.mubr.f32.gmra.mrb[0].mxu0 %v4637
      %v4705 = vpop.f32.mrb[0].mxu0
      %v4706 = vadd.f32 0.0, %v4705
      %v4707 = vpop.f32.mrb[0].mxu0
      %4708 = vdwg.mxu0
      %4710 = vrot.lane.b32.xlu0 %v4706, 96
      %v4711 = vpop.permute.xlu0 %4710
      %4713 = vst.msk [vmem:[%s723 + $0x8] sm:$0xff] %vm2692, %v4711
      %4714 = vrot.lane.b32.xlu0 %v751, 88
      %v4715 = vpop.permute.xlu0 %4714
      %4717 = vmatprep.subr.mxu0 0.0
      %4718 = vmatpush1.msra.mxu0 %v4715
      %4719 = vmatprep.subr.mxu0 0.0
      %4720 = vmatpush1.msra.mxu0 0.0
      %4721 = vmatprep.subr.mxu0 0.0
      %4722 = vmatpush1.msra.mxu0 0.0
      %4723 = vmatprep.subr.mxu0 0.0
      %4724 = vmatpush1.msra.mxu0 0.0
      %4725 = vmatprep.subr.mxu0 0.0
      %4726 = vmatpush1.msra.mxu0 0.0
      %4727 = vmatprep.subr.mxu0 0.0
      %4728 = vmatpush1.msra.mxu0 0.0
      %4729 = vmatprep.subr.mxu0 0.0
      %4730 = vmatpush1.msra.mxu0 0.0
      %4731 = vmatprep.subr.mxu0 0.0
      %4732 = vmatpush1.msra.mxu0 0.0
      %4733 = vmatprep.subr.mxu0 0.0
      %4734 = vmatpush1.msra.mxu0 0.0
      %4735 = vmatprep.subr.mxu0 0.0
      %4736 = vmatpush1.msra.mxu0 0.0
      %4737 = vmatprep.subr.mxu0 0.0
      %4738 = vmatpush1.msra.mxu0 0.0
      %4739 = vmatprep.subr.mxu0 0.0
      %4740 = vmatpush1.msra.mxu0 0.0
      %4741 = vmatprep.subr.mxu0 0.0
      %4742 = vmatpush1.msra.mxu0 0.0
      %4743 = vmatprep.subr.mxu0 0.0
      %4744 = vmatpush1.msra.mxu0 0.0
      %4745 = vmatprep.subr.mxu0 0.0
      %4746 = vmatpush1.msra.mxu0 0.0
      %4747 = vmatprep.subr.mxu0 0.0
      %4748 = vmatpush1.msra.mxu0 0.0
      %4749 = vmatprep.subr.mxu0 0.0
      %4750 = vmatpush1.msra.mxu0 0.0
      %4751 = vmatprep.subr.mxu0 0.0
      %4752 = vmatpush1.msra.mxu0 0.0
      %4753 = vmatprep.subr.mxu0 0.0
      %4754 = vmatpush1.msra.mxu0 0.0
      %4755 = vmatprep.subr.mxu0 0.0
      %4756 = vmatpush1.msra.mxu0 0.0
      %4757 = vmatprep.subr.mxu0 0.0
      %4758 = vmatpush1.msra.mxu0 0.0
      %4759 = vmatprep.subr.mxu0 0.0
      %4760 = vmatpush1.msra.mxu0 0.0
      %4761 = vmatprep.subr.mxu0 0.0
      %4762 = vmatpush1.msra.mxu0 0.0
      %4763 = vmatprep.subr.mxu0 0.0
      %4764 = vmatpush1.msra.mxu0 0.0
      %4765 = vmatprep.subr.mxu0 0.0
      %4766 = vmatpush1.msra.mxu0 0.0
      %4767 = vmatprep.subr.mxu0 0.0
      %4768 = vmatpush1.msra.mxu0 0.0
      %4769 = vmatprep.subr.mxu0 0.0
      %4770 = vmatpush1.msra.mxu0 0.0
      %4771 = vmatprep.subr.mxu0 0.0
      %4772 = vmatpush1.msra.mxu0 0.0
      %4773 = vmatprep.subr.mxu0 0.0
      %4774 = vmatpush1.msra.mxu0 0.0
      %4775 = vmatprep.subr.mxu0 0.0
      %4776 = vmatpush1.msra.mxu0 0.0
      %4777 = vmatprep.subr.mxu0 0.0
      %4778 = vmatpush1.msra.mxu0 0.0
      %4779 = vmatprep.subr.mxu0 0.0
      %4780 = vmatpush1.msra.mxu0 0.0
      %4781 = vmatprep.mubr.f32.mxu0 0.0
      %4782 = vmatmul.mubr.f32.gmra.mrb[0].mxu0 %v4637
      %v4783 = vpop.f32.mrb[0].mxu0
      %v4784 = vadd.f32 0.0, %v4783
      %v4785 = vpop.f32.mrb[0].mxu0
      %4786 = vdwg.mxu0
      %4788 = vrot.lane.b32.xlu0 %v4784, 40
      %v4789 = vpop.permute.xlu0 %4788
      %vm4791 = vcmask 523584
      %4792 = vst.msk [vmem:[%s739 + $0x8] sm:$0xff] %vm4791, %v4789
      %v4793 = vld [vmem:[#allocation2] sm:$0xff]
      %v4794 = vld [vmem:[#allocation2 + $0x8] sm:$0xff]
      %v4795 = vld [vmem:[#allocation2 + $0x10] sm:$0xff]
      %v4796 = vld [vmem:[#allocation2 + $0x18] sm:$0xff]
      %v4797 = vld [vmem:[#allocation2 + $0x20] sm:$0xff]
      %v4798 = vld [vmem:[#allocation2 + $0x28] sm:$0xff]
      %v4799 = vld [vmem:[#allocation2 + $0x30] sm:$0xff]
      %v4800 = vld [vmem:[#allocation2 + $0x38] sm:$0xff]
      %v4802 = vsel %vm1025, %v4793, 0
      %4804 = vmatprep.subr.mxu0 0.0
      %4805 = vmatpush1.msra.mxu0 %v760
      %4806 = vmatprep.subr.mxu0 0.0
      %4807 = vmatpush1.msra.mxu0 0.0
      %4808 = vmatprep.subr.mxu0 0.0
      %4809 = vmatpush1.msra.mxu0 0.0
      %4810 = vmatprep.subr.mxu0 0.0
      %4811 = vmatpush1.msra.mxu0 0.0
      %4812 = vmatprep.subr.mxu0 0.0
      %4813 = vmatpush1.msra.mxu0 0.0
      %4814 = vmatprep.subr.mxu0 0.0
      %4815 = vmatpush1.msra.mxu0 0.0
      %4816 = vmatprep.subr.mxu0 0.0
      %4817 = vmatpush1.msra.mxu0 0.0
      %4818 = vmatprep.subr.mxu0 0.0
      %4819 = vmatpush1.msra.mxu0 0.0
      %4820 = vmatprep.subr.mxu0 0.0
      %4821 = vmatpush1.msra.mxu0 0.0
      %4822 = vmatprep.subr.mxu0 0.0
      %4823 = vmatpush1.msra.mxu0 0.0
      %4824 = vmatprep.subr.mxu0 0.0
      %4825 = vmatpush1.msra.mxu0 0.0
      %4826 = vmatprep.subr.mxu0 0.0
      %4827 = vmatpush1.msra.mxu0 0.0
      %4828 = vmatprep.subr.mxu0 0.0
      %4829 = vmatpush1.msra.mxu0 0.0
      %4830 = vmatprep.subr.mxu0 0.0
      %4831 = vmatpush1.msra.mxu0 0.0
      %4832 = vmatprep.subr.mxu0 0.0
      %4833 = vmatpush1.msra.mxu0 0.0
      %4834 = vmatprep.subr.mxu0 0.0
      %4835 = vmatpush1.msra.mxu0 0.0
      %4836 = vmatprep.subr.mxu0 0.0
      %4837 = vmatpush1.msra.mxu0 0.0
      %4838 = vmatprep.subr.mxu0 0.0
      %4839 = vmatpush1.msra.mxu0 0.0
      %4840 = vmatprep.subr.mxu0 0.0
      %4841 = vmatpush1.msra.mxu0 0.0
      %4842 = vmatprep.subr.mxu0 0.0
      %4843 = vmatpush1.msra.mxu0 0.0
      %4844 = vmatprep.subr.mxu0 0.0
      %4845 = vmatpush1.msra.mxu0 0.0
      %4846 = vmatprep.subr.mxu0 0.0
      %4847 = vmatpush1.msra.mxu0 0.0
      %4848 = vmatprep.subr.mxu0 0.0
      %4849 = vmatpush1.msra.mxu0 0.0
      %4850 = vmatprep.subr.mxu0 0.0
      %4851 = vmatpush1.msra.mxu0 0.0
      %4852 = vmatprep.subr.mxu0 0.0
      %4853 = vmatpush1.msra.mxu0 0.0
      %4854 = vmatprep.subr.mxu0 0.0
      %4855 = vmatpush1.msra.mxu0 0.0
      %4856 = vmatprep.subr.mxu0 0.0
      %4857 = vmatpush1.msra.mxu0 0.0
      %4858 = vmatprep.subr.mxu0 0.0
      %4859 = vmatpush1.msra.mxu0 0.0
      %4860 = vmatprep.subr.mxu0 0.0
      %4861 = vmatpush1.msra.mxu0 0.0
      %4862 = vmatprep.subr.mxu0 0.0
      %4863 = vmatpush1.msra.mxu0 0.0
      %4864 = vmatprep.subr.mxu0 0.0
      %4865 = vmatpush1.msra.mxu0 0.0
      %4866 = vmatprep.subr.mxu0 0.0
      %4867 = vmatpush1.msra.mxu0 0.0
      %4868 = vmatprep.mubr.f32.mxu0 0.0
      %4869 = vmatmul.mubr.f32.gmra.mrb[0].mxu0 %v4802
      %v4870 = vpop.f32.mrb[0].mxu0
      %v4871 = vadd.f32 0.0, %v4870
      %v4872 = vpop.f32.mrb[0].mxu0
      %4873 = vdwg.mxu0
      %v4875 = vsel %vm1025, %v4794, 0
      %4877 = vmatprep.subr.mxu0 0.0
      %4878 = vmatpush1.msra.mxu0 %v761
      %4879 = vmatprep.subr.mxu0 0.0
      %4880 = vmatpush1.msra.mxu0 0.0
      %4881 = vmatprep.subr.mxu0 0.0
      %4882 = vmatpush1.msra.mxu0 0.0
      %4883 = vmatprep.subr.mxu0 0.0
      %4884 = vmatpush1.msra.mxu0 0.0
      %4885 = vmatprep.subr.mxu0 0.0
      %4886 = vmatpush1.msra.mxu0 0.0
      %4887 = vmatprep.subr.mxu0 0.0
      %4888 = vmatpush1.msra.mxu0 0.0
      %4889 = vmatprep.subr.mxu0 0.0
      %4890 = vmatpush1.msra.mxu0 0.0
      %4891 = vmatprep.subr.mxu0 0.0
      %4892 = vmatpush1.msra.mxu0 0.0
      %4893 = vmatprep.subr.mxu0 0.0
      %4894 = vmatpush1.msra.mxu0 0.0
      %4895 = vmatprep.subr.mxu0 0.0
      %4896 = vmatpush1.msra.mxu0 0.0
      %4897 = vmatprep.subr.mxu0 0.0
      %4898 = vmatpush1.msra.mxu0 0.0
      %4899 = vmatprep.subr.mxu0 0.0
      %4900 = vmatpush1.msra.mxu0 0.0
      %4901 = vmatprep.subr.mxu0 0.0
      %4902 = vmatpush1.msra.mxu0 0.0
      %4903 = vmatprep.subr.mxu0 0.0
      %4904 = vmatpush1.msra.mxu0 0.0
      %4905 = vmatprep.subr.mxu0 0.0
      %4906 = vmatpush1.msra.mxu0 0.0
      %4907 = vmatprep.subr.mxu0 0.0
      %4908 = vmatpush1.msra.mxu0 0.0
      %4909 = vmatprep.subr.mxu0 0.0
      %4910 = vmatpush1.msra.mxu0 0.0
      %4911 = vmatprep.subr.mxu0 0.0
      %4912 = vmatpush1.msra.mxu0 0.0
      %4913 = vmatprep.subr.mxu0 0.0
      %4914 = vmatpush1.msra.mxu0 0.0
      %4915 = vmatprep.subr.mxu0 0.0
      %4916 = vmatpush1.msra.mxu0 0.0
      %4917 = vmatprep.subr.mxu0 0.0
      %4918 = vmatpush1.msra.mxu0 0.0
      %4919 = vmatprep.subr.mxu0 0.0
      %4920 = vmatpush1.msra.mxu0 0.0
      %4921 = vmatprep.subr.mxu0 0.0
      %4922 = vmatpush1.msra.mxu0 0.0
      %4923 = vmatprep.subr.mxu0 0.0
      %4924 = vmatpush1.msra.mxu0 0.0
      %4925 = vmatprep.subr.mxu0 0.0
      %4926 = vmatpush1.msra.mxu0 0.0
      %4927 = vmatprep.subr.mxu0 0.0
      %4928 = vmatpush1.msra.mxu0 0.0
      %4929 = vmatprep.subr.mxu0 0.0
      %4930 = vmatpush1.msra.mxu0 0.0
      %4931 = vmatprep.subr.mxu0 0.0
      %4932 = vmatpush1.msra.mxu0 0.0
      %4933 = vmatprep.subr.mxu0 0.0
      %4934 = vmatpush1.msra.mxu0 0.0
      %4935 = vmatprep.subr.mxu0 0.0
      %4936 = vmatpush1.msra.mxu0 0.0
      %4937 = vmatprep.subr.mxu0 0.0
      %4938 = vmatpush1.msra.mxu0 0.0
      %4939 = vmatprep.subr.mxu0 0.0
      %4940 = vmatpush1.msra.mxu0 0.0
      %4941 = vmatprep.mubr.f32.mxu0 0.0
      %4942 = vmatmul.mubr.f32.gmra.mrb[0].mxu0 %v4875
      %v4943 = vpop.f32.mrb[0].mxu0
      %v4944 = vadd.f32 0.0, %v4943
      %v4945 = vpop.f32.mrb[0].mxu0
      %4946 = vdwg.mxu0
      %v4948 = vsel %vm1025, %v4795, 0
      %4950 = vmatprep.subr.mxu0 0.0
      %4951 = vmatpush1.msra.mxu0 %v762
      %4952 = vmatprep.subr.mxu0 0.0
      %4953 = vmatpush1.msra.mxu0 0.0
      %4954 = vmatprep.subr.mxu0 0.0
      %4955 = vmatpush1.msra.mxu0 0.0
      %4956 = vmatprep.subr.mxu0 0.0
      %4957 = vmatpush1.msra.mxu0 0.0
      %4958 = vmatprep.subr.mxu0 0.0
      %4959 = vmatpush1.msra.mxu0 0.0
      %4960 = vmatprep.subr.mxu0 0.0
      %4961 = vmatpush1.msra.mxu0 0.0
      %4962 = vmatprep.subr.mxu0 0.0
      %4963 = vmatpush1.msra.mxu0 0.0
      %4964 = vmatprep.subr.mxu0 0.0
      %4965 = vmatpush1.msra.mxu0 0.0
      %4966 = vmatprep.subr.mxu0 0.0
      %4967 = vmatpush1.msra.mxu0 0.0
      %4968 = vmatprep.subr.mxu0 0.0
      %4969 = vmatpush1.msra.mxu0 0.0
      %4970 = vmatprep.subr.mxu0 0.0
      %4971 = vmatpush1.msra.mxu0 0.0
      %4972 = vmatprep.subr.mxu0 0.0
      %4973 = vmatpush1.msra.mxu0 0.0
      %4974 = vmatprep.subr.mxu0 0.0
      %4975 = vmatpush1.msra.mxu0 0.0
      %4976 = vmatprep.subr.mxu0 0.0
      %4977 = vmatpush1.msra.mxu0 0.0
      %4978 = vmatprep.subr.mxu0 0.0
      %4979 = vmatpush1.msra.mxu0 0.0
      %4980 = vmatprep.subr.mxu0 0.0
      %4981 = vmatpush1.msra.mxu0 0.0
      %4982 = vmatprep.subr.mxu0 0.0
      %4983 = vmatpush1.msra.mxu0 0.0
      %4984 = vmatprep.subr.mxu0 0.0
      %4985 = vmatpush1.msra.mxu0 0.0
      %4986 = vmatprep.subr.mxu0 0.0
      %4987 = vmatpush1.msra.mxu0 0.0
      %4988 = vmatprep.subr.mxu0 0.0
      %4989 = vmatpush1.msra.mxu0 0.0
      %4990 = vmatprep.subr.mxu0 0.0
      %4991 = vmatpush1.msra.mxu0 0.0
      %4992 = vmatprep.subr.mxu0 0.0
      %4993 = vmatpush1.msra.mxu0 0.0
      %4994 = vmatprep.subr.mxu0 0.0
      %4995 = vmatpush1.msra.mxu0 0.0
      %4996 = vmatprep.subr.mxu0 0.0
      %4997 = vmatpush1.msra.mxu0 0.0
      %4998 = vmatprep.subr.mxu0 0.0
      %4999 = vmatpush1.msra.mxu0 0.0
      %5000 = vmatprep.subr.mxu0 0.0
      %5001 = vmatpush1.msra.mxu0 0.0
      %5002 = vmatprep.subr.mxu0 0.0
      %5003 = vmatpush1.msra.mxu0 0.0
      %5004 = vmatprep.subr.mxu0 0.0
      %5005 = vmatpush1.msra.mxu0 0.0
      %5006 = vmatprep.subr.mxu0 0.0
      %5007 = vmatpush1.msra.mxu0 0.0
      %5008 = vmatprep.subr.mxu0 0.0
      %5009 = vmatpush1.msra.mxu0 0.0
      %5010 = vmatprep.subr.mxu0 0.0
      %5011 = vmatpush1.msra.mxu0 0.0
      %5012 = vmatprep.subr.mxu0 0.0
      %5013 = vmatpush1.msra.mxu0 0.0
      %5014 = vmatprep.mubr.f32.mxu0 0.0
      %5015 = vmatmul.mubr.f32.gmra.mrb[0].mxu0 %v4948
      %v5016 = vpop.f32.mrb[0].mxu0
      %v5017 = vadd.f32 0.0, %v5016
      %v5018 = vpop.f32.mrb[0].mxu0
      %5019 = vdwg.mxu0
      %v5021 = vsel %vm1025, %v4796, 0
      %5023 = vmatprep.subr.mxu0 0.0
      %5024 = vmatpush1.msra.mxu0 %v763
      %5025 = vmatprep.subr.mxu0 0.0
      %5026 = vmatpush1.msra.mxu0 0.0
      %5027 = vmatprep.subr.mxu0 0.0
      %5028 = vmatpush1.msra.mxu0 0.0
      %5029 = vmatprep.subr.mxu0 0.0
      %5030 = vmatpush1.msra.mxu0 0.0
      %5031 = vmatprep.subr.mxu0 0.0
      %5032 = vmatpush1.msra.mxu0 0.0
      %5033 = vmatprep.subr.mxu0 0.0
      %5034 = vmatpush1.msra.mxu0 0.0
      %5035 = vmatprep.subr.mxu0 0.0
      %5036 = vmatpush1.msra.mxu0 0.0
      %5037 = vmatprep.subr.mxu0 0.0
      %5038 = vmatpush1.msra.mxu0 0.0
      %5039 = vmatprep.subr.mxu0 0.0
      %5040 = vmatpush1.msra.mxu0 0.0
      %5041 = vmatprep.subr.mxu0 0.0
      %5042 = vmatpush1.msra.mxu0 0.0
      %5043 = vmatprep.subr.mxu0 0.0
      %5044 = vmatpush1.msra.mxu0 0.0
      %5045 = vmatprep.subr.mxu0 0.0
      %5046 = vmatpush1.msra.mxu0 0.0
      %5047 = vmatprep.subr.mxu0 0.0
      %5048 = vmatpush1.msra.mxu0 0.0
      %5049 = vmatprep.subr.mxu0 0.0
      %5050 = vmatpush1.msra.mxu0 0.0
      %5051 = vmatprep.subr.mxu0 0.0
      %5052 = vmatpush1.msra.mxu0 0.0
      %5053 = vmatprep.subr.mxu0 0.0
      %5054 = vmatpush1.msra.mxu0 0.0
      %5055 = vmatprep.subr.mxu0 0.0
      %5056 = vmatpush1.msra.mxu0 0.0
      %5057 = vmatprep.subr.mxu0 0.0
      %5058 = vmatpush1.msra.mxu0 0.0
      %5059 = vmatprep.subr.mxu0 0.0
      %5060 = vmatpush1.msra.mxu0 0.0
      %5061 = vmatprep.subr.mxu0 0.0
      %5062 = vmatpush1.msra.mxu0 0.0
      %5063 = vmatprep.subr.mxu0 0.0
      %5064 = vmatpush1.msra.mxu0 0.0
      %5065 = vmatprep.subr.mxu0 0.0
      %5066 = vmatpush1.msra.mxu0 0.0
      %5067 = vmatprep.subr.mxu0 0.0
      %5068 = vmatpush1.msra.mxu0 0.0
      %5069 = vmatprep.subr.mxu0 0.0
      %5070 = vmatpush1.msra.mxu0 0.0
      %5071 = vmatprep.subr.mxu0 0.0
      %5072 = vmatpush1.msra.mxu0 0.0
      %5073 = vmatprep.subr.mxu0 0.0
      %5074 = vmatpush1.msra.mxu0 0.0
      %5075 = vmatprep.subr.mxu0 0.0
      %5076 = vmatpush1.msra.mxu0 0.0
      %5077 = vmatprep.subr.mxu0 0.0
      %5078 = vmatpush1.msra.mxu0 0.0
      %5079 = vmatprep.subr.mxu0 0.0
      %5080 = vmatpush1.msra.mxu0 0.0
      %5081 = vmatprep.subr.mxu0 0.0
      %5082 = vmatpush1.msra.mxu0 0.0
      %5083 = vmatprep.subr.mxu0 0.0
      %5084 = vmatpush1.msra.mxu0 0.0
      %5085 = vmatprep.subr.mxu0 0.0
      %5086 = vmatpush1.msra.mxu0 0.0
      %5087 = vmatprep.mubr.f32.mxu0 0.0
      %5088 = vmatmul.mubr.f32.gmra.mrb[0].mxu0 %v5021
      %v5089 = vpop.f32.mrb[0].mxu0
      %v5090 = vadd.f32 0.0, %v5089
      %v5091 = vpop.f32.mrb[0].mxu0
      %5092 = vdwg.mxu0
      %v5094 = vsel %vm1025, %v4797, 0
      %5096 = vmatprep.subr.mxu0 0.0
      %5097 = vmatpush1.msra.mxu0 %v764
      %5098 = vmatprep.subr.mxu0 0.0
      %5099 = vmatpush1.msra.mxu0 0.0
      %5100 = vmatprep.subr.mxu0 0.0
      %5101 = vmatpush1.msra.mxu0 0.0
      %5102 = vmatprep.subr.mxu0 0.0
      %5103 = vmatpush1.msra.mxu0 0.0
      %5104 = vmatprep.subr.mxu0 0.0
      %5105 = vmatpush1.msra.mxu0 0.0
      %5106 = vmatprep.subr.mxu0 0.0
      %5107 = vmatpush1.msra.mxu0 0.0
      %5108 = vmatprep.subr.mxu0 0.0
      %5109 = vmatpush1.msra.mxu0 0.0
      %5110 = vmatprep.subr.mxu0 0.0
      %5111 = vmatpush1.msra.mxu0 0.0
      %5112 = vmatprep.subr.mxu0 0.0
      %5113 = vmatpush1.msra.mxu0 0.0
      %5114 = vmatprep.subr.mxu0 0.0
      %5115 = vmatpush1.msra.mxu0 0.0
      %5116 = vmatprep.subr.mxu0 0.0
      %5117 = vmatpush1.msra.mxu0 0.0
      %5118 = vmatprep.subr.mxu0 0.0
      %5119 = vmatpush1.msra.mxu0 0.0
      %5120 = vmatprep.subr.mxu0 0.0
      %5121 = vmatpush1.msra.mxu0 0.0
      %5122 = vmatprep.subr.mxu0 0.0
      %5123 = vmatpush1.msra.mxu0 0.0
      %5124 = vmatprep.subr.mxu0 0.0
      %5125 = vmatpush1.msra.mxu0 0.0
      %5126 = vmatprep.subr.mxu0 0.0
      %5127 = vmatpush1.msra.mxu0 0.0
      %5128 = vmatprep.subr.mxu0 0.0
      %5129 = vmatpush1.msra.mxu0 0.0
      %5130 = vmatprep.subr.mxu0 0.0
      %5131 = vmatpush1.msra.mxu0 0.0
      %5132 = vmatprep.subr.mxu0 0.0
      %5133 = vmatpush1.msra.mxu0 0.0
      %5134 = vmatprep.subr.mxu0 0.0
      %5135 = vmatpush1.msra.mxu0 0.0
      %5136 = vmatprep.subr.mxu0 0.0
      %5137 = vmatpush1.msra.mxu0 0.0
      %5138 = vmatprep.subr.mxu0 0.0
      %5139 = vmatpush1.msra.mxu0 0.0
      %5140 = vmatprep.subr.mxu0 0.0
      %5141 = vmatpush1.msra.mxu0 0.0
      %5142 = vmatprep.subr.mxu0 0.0
      %5143 = vmatpush1.msra.mxu0 0.0
      %5144 = vmatprep.subr.mxu0 0.0
      %5145 = vmatpush1.msra.mxu0 0.0
      %5146 = vmatprep.subr.mxu0 0.0
      %5147 = vmatpush1.msra.mxu0 0.0
      %5148 = vmatprep.subr.mxu0 0.0
      %5149 = vmatpush1.msra.mxu0 0.0
      %5150 = vmatprep.subr.mxu0 0.0
      %5151 = vmatpush1.msra.mxu0 0.0
      %5152 = vmatprep.subr.mxu0 0.0
      %5153 = vmatpush1.msra.mxu0 0.0
      %5154 = vmatprep.subr.mxu0 0.0
      %5155 = vmatpush1.msra.mxu0 0.0
      %5156 = vmatprep.subr.mxu0 0.0
      %5157 = vmatpush1.msra.mxu0 0.0
      %5158 = vmatprep.subr.mxu0 0.0
      %5159 = vmatpush1.msra.mxu0 0.0
      %5160 = vmatprep.mubr.f32.mxu0 0.0
      %5161 = vmatmul.mubr.f32.gmra.mrb[0].mxu0 %v5094
      %v5162 = vpop.f32.mrb[0].mxu0
      %v5163 = vadd.f32 0.0, %v5162
      %v5164 = vpop.f32.mrb[0].mxu0
      %5165 = vdwg.mxu0
      %v5167 = vsel %vm1025, %v4798, 0
      %5169 = vmatprep.subr.mxu0 0.0
      %5170 = vmatpush1.msra.mxu0 %v765
      %5171 = vmatprep.subr.mxu0 0.0
      %5172 = vmatpush1.msra.mxu0 0.0
      %5173 = vmatprep.subr.mxu0 0.0
      %5174 = vmatpush1.msra.mxu0 0.0
      %5175 = vmatprep.subr.mxu0 0.0
      %5176 = vmatpush1.msra.mxu0 0.0
      %5177 = vmatprep.subr.mxu0 0.0
      %5178 = vmatpush1.msra.mxu0 0.0
      %5179 = vmatprep.subr.mxu0 0.0
      %5180 = vmatpush1.msra.mxu0 0.0
      %5181 = vmatprep.subr.mxu0 0.0
      %5182 = vmatpush1.msra.mxu0 0.0
      %5183 = vmatprep.subr.mxu0 0.0
      %5184 = vmatpush1.msra.mxu0 0.0
      %5185 = vmatprep.subr.mxu0 0.0
      %5186 = vmatpush1.msra.mxu0 0.0
      %5187 = vmatprep.subr.mxu0 0.0
      %5188 = vmatpush1.msra.mxu0 0.0
      %5189 = vmatprep.subr.mxu0 0.0
      %5190 = vmatpush1.msra.mxu0 0.0
      %5191 = vmatprep.subr.mxu0 0.0
      %5192 = vmatpush1.msra.mxu0 0.0
      %5193 = vmatprep.subr.mxu0 0.0
      %5194 = vmatpush1.msra.mxu0 0.0
      %5195 = vmatprep.subr.mxu0 0.0
      %5196 = vmatpush1.msra.mxu0 0.0
      %5197 = vmatprep.subr.mxu0 0.0
      %5198 = vmatpush1.msra.mxu0 0.0
      %5199 = vmatprep.subr.mxu0 0.0
      %5200 = vmatpush1.msra.mxu0 0.0
      %5201 = vmatprep.subr.mxu0 0.0
      %5202 = vmatpush1.msra.mxu0 0.0
      %5203 = vmatprep.subr.mxu0 0.0
      %5204 = vmatpush1.msra.mxu0 0.0
      %5205 = vmatprep.subr.mxu0 0.0
      %5206 = vmatpush1.msra.mxu0 0.0
      %5207 = vmatprep.subr.mxu0 0.0
      %5208 = vmatpush1.msra.mxu0 0.0
      %5209 = vmatprep.subr.mxu0 0.0
      %5210 = vmatpush1.msra.mxu0 0.0
      %5211 = vmatprep.subr.mxu0 0.0
      %5212 = vmatpush1.msra.mxu0 0.0
      %5213 = vmatprep.subr.mxu0 0.0
      %5214 = vmatpush1.msra.mxu0 0.0
      %5215 = vmatprep.subr.mxu0 0.0
      %5216 = vmatpush1.msra.mxu0 0.0
      %5217 = vmatprep.subr.mxu0 0.0
      %5218 = vmatpush1.msra.mxu0 0.0
      %5219 = vmatprep.subr.mxu0 0.0
      %5220 = vmatpush1.msra.mxu0 0.0
      %5221 = vmatprep.subr.mxu0 0.0
      %5222 = vmatpush1.msra.mxu0 0.0
      %5223 = vmatprep.subr.mxu0 0.0
      %5224 = vmatpush1.msra.mxu0 0.0
      %5225 = vmatprep.subr.mxu0 0.0
      %5226 = vmatpush1.msra.mxu0 0.0
      %5227 = vmatprep.subr.mxu0 0.0
      %5228 = vmatpush1.msra.mxu0 0.0
      %5229 = vmatprep.subr.mxu0 0.0
      %5230 = vmatpush1.msra.mxu0 0.0
      %5231 = vmatprep.subr.mxu0 0.0
      %5232 = vmatpush1.msra.mxu0 0.0
      %5233 = vmatprep.mubr.f32.mxu0 0.0
      %5234 = vmatmul.mubr.f32.gmra.mrb[0].mxu0 %v5167
      %v5235 = vpop.f32.mrb[0].mxu0
      %v5236 = vadd.f32 0.0, %v5235
      %v5237 = vpop.f32.mrb[0].mxu0
      %5238 = vdwg.mxu0
      %v5240 = vsel %vm1025, %v4799, 0
      %5242 = vmatprep.subr.mxu0 0.0
      %5243 = vmatpush1.msra.mxu0 %v766
      %5244 = vmatprep.subr.mxu0 0.0
      %5245 = vmatpush1.msra.mxu0 0.0
      %5246 = vmatprep.subr.mxu0 0.0
      %5247 = vmatpush1.msra.mxu0 0.0
      %5248 = vmatprep.subr.mxu0 0.0
      %5249 = vmatpush1.msra.mxu0 0.0
      %5250 = vmatprep.subr.mxu0 0.0
      %5251 = vmatpush1.msra.mxu0 0.0
      %5252 = vmatprep.subr.mxu0 0.0
      %5253 = vmatpush1.msra.mxu0 0.0
      %5254 = vmatprep.subr.mxu0 0.0
      %5255 = vmatpush1.msra.mxu0 0.0
      %5256 = vmatprep.subr.mxu0 0.0
      %5257 = vmatpush1.msra.mxu0 0.0
      %5258 = vmatprep.subr.mxu0 0.0
      %5259 = vmatpush1.msra.mxu0 0.0
      %5260 = vmatprep.subr.mxu0 0.0
      %5261 = vmatpush1.msra.mxu0 0.0
      %5262 = vmatprep.subr.mxu0 0.0
      %5263 = vmatpush1.msra.mxu0 0.0
      %5264 = vmatprep.subr.mxu0 0.0
      %5265 = vmatpush1.msra.mxu0 0.0
      %5266 = vmatprep.subr.mxu0 0.0
      %5267 = vmatpush1.msra.mxu0 0.0
      %5268 = vmatprep.subr.mxu0 0.0
      %5269 = vmatpush1.msra.mxu0 0.0
      %5270 = vmatprep.subr.mxu0 0.0
      %5271 = vmatpush1.msra.mxu0 0.0
      %5272 = vmatprep.subr.mxu0 0.0
      %5273 = vmatpush1.msra.mxu0 0.0
      %5274 = vmatprep.subr.mxu0 0.0
      %5275 = vmatpush1.msra.mxu0 0.0
      %5276 = vmatprep.subr.mxu0 0.0
      %5277 = vmatpush1.msra.mxu0 0.0
      %5278 = vmatprep.subr.mxu0 0.0
      %5279 = vmatpush1.msra.mxu0 0.0
      %5280 = vmatprep.subr.mxu0 0.0
      %5281 = vmatpush1.msra.mxu0 0.0
      %5282 = vmatprep.subr.mxu0 0.0
      %5283 = vmatpush1.msra.mxu0 0.0
      %5284 = vmatprep.subr.mxu0 0.0
      %5285 = vmatpush1.msra.mxu0 0.0
      %5286 = vmatprep.subr.mxu0 0.0
      %5287 = vmatpush1.msra.mxu0 0.0
      %5288 = vmatprep.subr.mxu0 0.0
      %5289 = vmatpush1.msra.mxu0 0.0
      %5290 = vmatprep.subr.mxu0 0.0
      %5291 = vmatpush1.msra.mxu0 0.0
      %5292 = vmatprep.subr.mxu0 0.0
      %5293 = vmatpush1.msra.mxu0 0.0
      %5294 = vmatprep.subr.mxu0 0.0
      %5295 = vmatpush1.msra.mxu0 0.0
      %5296 = vmatprep.subr.mxu0 0.0
      %5297 = vmatpush1.msra.mxu0 0.0
      %5298 = vmatprep.subr.mxu0 0.0
      %5299 = vmatpush1.msra.mxu0 0.0
      %5300 = vmatprep.subr.mxu0 0.0
      %5301 = vmatpush1.msra.mxu0 0.0
      %5302 = vmatprep.subr.mxu0 0.0
      %5303 = vmatpush1.msra.mxu0 0.0
      %5304 = vmatprep.subr.mxu0 0.0
      %5305 = vmatpush1.msra.mxu0 0.0
      %5306 = vmatprep.mubr.f32.mxu0 0.0
      %5307 = vmatmul.mubr.f32.gmra.mrb[0].mxu0 %v5240
      %v5308 = vpop.f32.mrb[0].mxu0
      %v5309 = vadd.f32 0.0, %v5308
      %v5310 = vpop.f32.mrb[0].mxu0
      %5311 = vdwg.mxu0
      %v5313 = vsel %vm1025, %v4800, 0
      %5315 = vmatprep.subr.mxu0 0.0
      %5316 = vmatpush1.msra.mxu0 %v767
      %5317 = vmatprep.subr.mxu0 0.0
      %5318 = vmatpush1.msra.mxu0 0.0
      %5319 = vmatprep.subr.mxu0 0.0
      %5320 = vmatpush1.msra.mxu0 0.0
      %5321 = vmatprep.subr.mxu0 0.0
      %5322 = vmatpush1.msra.mxu0 0.0
      %5323 = vmatprep.subr.mxu0 0.0
      %5324 = vmatpush1.msra.mxu0 0.0
      %5325 = vmatprep.subr.mxu0 0.0
      %5326 = vmatpush1.msra.mxu0 0.0
      %5327 = vmatprep.subr.mxu0 0.0
      %5328 = vmatpush1.msra.mxu0 0.0
      %5329 = vmatprep.subr.mxu0 0.0
      %5330 = vmatpush1.msra.mxu0 0.0
      %5331 = vmatprep.subr.mxu0 0.0
      %5332 = vmatpush1.msra.mxu0 0.0
      %5333 = vmatprep.subr.mxu0 0.0
      %5334 = vmatpush1.msra.mxu0 0.0
      %5335 = vmatprep.subr.mxu0 0.0
      %5336 = vmatpush1.msra.mxu0 0.0
      %5337 = vmatprep.subr.mxu0 0.0
      %5338 = vmatpush1.msra.mxu0 0.0
      %5339 = vmatprep.subr.mxu0 0.0
      %5340 = vmatpush1.msra.mxu0 0.0
      %5341 = vmatprep.subr.mxu0 0.0
      %5342 = vmatpush1.msra.mxu0 0.0
      %5343 = vmatprep.subr.mxu0 0.0
      %5344 = vmatpush1.msra.mxu0 0.0
      %5345 = vmatprep.subr.mxu0 0.0
      %5346 = vmatpush1.msra.mxu0 0.0
      %5347 = vmatprep.subr.mxu0 0.0
      %5348 = vmatpush1.msra.mxu0 0.0
      %5349 = vmatprep.subr.mxu0 0.0
      %5350 = vmatpush1.msra.mxu0 0.0
      %5351 = vmatprep.subr.mxu0 0.0
      %5352 = vmatpush1.msra.mxu0 0.0
      %5353 = vmatprep.subr.mxu0 0.0
      %5354 = vmatpush1.msra.mxu0 0.0
      %5355 = vmatprep.subr.mxu0 0.0
      %5356 = vmatpush1.msra.mxu0 0.0
      %5357 = vmatprep.subr.mxu0 0.0
      %5358 = vmatpush1.msra.mxu0 0.0
      %5359 = vmatprep.subr.mxu0 0.0
      %5360 = vmatpush1.msra.mxu0 0.0
      %5361 = vmatprep.subr.mxu0 0.0
      %5362 = vmatpush1.msra.mxu0 0.0
      %5363 = vmatprep.subr.mxu0 0.0
      %5364 = vmatpush1.msra.mxu0 0.0
      %5365 = vmatprep.subr.mxu0 0.0
      %5366 = vmatpush1.msra.mxu0 0.0
      %5367 = vmatprep.subr.mxu0 0.0
      %5368 = vmatpush1.msra.mxu0 0.0
      %5369 = vmatprep.subr.mxu0 0.0
      %5370 = vmatpush1.msra.mxu0 0.0
      %5371 = vmatprep.subr.mxu0 0.0
      %5372 = vmatpush1.msra.mxu0 0.0
      %5373 = vmatprep.subr.mxu0 0.0
      %5374 = vmatpush1.msra.mxu0 0.0
      %5375 = vmatprep.subr.mxu0 0.0
      %5376 = vmatpush1.msra.mxu0 0.0
      %5377 = vmatprep.subr.mxu0 0.0
      %5378 = vmatpush1.msra.mxu0 0.0
      %5379 = vmatprep.mubr.f32.mxu0 0.0
      %5380 = vmatmul.mubr.f32.gmra.mrb[0].mxu0 %v5313
      %v5381 = vpop.f32.mrb[0].mxu0
      %v5382 = vadd.f32 0.0, %v5381
      %v5383 = vpop.f32.mrb[0].mxu0
      %5384 = vdwg.mxu0
      %v5393 = vrot.slane %v4944, 7
      %vm5394 = vcmask 1041409
      %v5395 = vsel %vm5394, %v5393, %v4871
      %v5396 = vrot.slane %v5017, 6
      %vm5397 = vcmask 1042434
      %v5398 = vsel %vm5397, %v5396, %v5395
      %v5399 = vrot.slane %v5090, 5
      %vm5400 = vcmask 1043459
      %v5401 = vsel %vm5400, %v5399, %v5398
      %v5402 = vrot.slane %v5163, 4
      %vm5403 = vcmask 1044484
      %v5404 = vsel %vm5403, %v5402, %v5401
      %v5405 = vrot.slane %v5236, 3
      %vm5406 = vcmask 1045509
      %v5407 = vsel %vm5406, %v5405, %v5404
      %v5408 = vrot.slane %v5309, 2
      %vm5409 = vcmask 1046534
      %v5410 = vsel %vm5409, %v5408, %v5407
      %v5411 = vrot.slane %v5382, 1
      %vm5412 = vcmask 1047559
      %v5413 = vsel %vm5412, %v5411, %v5410
      %5415 = vst.msk [vmem:[%s730] sm:$0xff] %vm3789, %v5413
      %v5416 = vsel %vm5397, %v5393, %v4871
      %v5417 = vsel %vm5400, %v5396, %v5416
      %v5418 = vsel %vm5403, %v5399, %v5417
      %v5419 = vsel %vm5406, %v5402, %v5418
      %v5420 = vsel %vm5409, %v5405, %v5419
      %v5421 = vsel %vm5412, %v5408, %v5420
      %5422 = vrot.lane.b32.xlu0 %v5421, 16
      %v5423 = vpop.permute.xlu0 %5422
      %5424 = vrot.lane.b32.xlu0 %v5411, 16
      %v5425 = vpop.permute.xlu0 %5424
      %vm5428 = vcmask 261249
      %5429 = vst.msk [vmem:[%s730 - $0x1] sm:$0xfe] %vm5428, %v5423
      %vm5430 = vcmask 254080
      %5431 = vst.msk [vmem:[%s730 + $0x7] sm:$0x1] %vm5430, %v5425
      %v5432 = vsel %vm5400, %v5393, %v4871
      %v5433 = vsel %vm5403, %v5396, %v5432
      %v5434 = vsel %vm5406, %v5399, %v5433
      %v5435 = vsel %vm5409, %v5402, %v5434
      %v5436 = vsel %vm5412, %v5405, %v5435
      %v5437 = vsel %vm5394, %v5411, %v5408
      %5438 = vrot.lane.b32.xlu0 %v5436, 32
      %v5439 = vpop.permute.xlu0 %5438
      %5440 = vrot.lane.b32.xlu0 %v5437, 32
      %v5441 = vpop.permute.xlu0 %5440
      %vm5444 = vcmask 392450
      %5445 = vst.msk [vmem:[%s730 - $0x2] sm:$0xfc] %vm5444, %v5439
      %vm5446 = vcmask 386304
      %5447 = vst.msk [vmem:[%s730 + $0x6] sm:$0x3] %vm5446, %v5441
      %v5448 = vsel %vm5403, %v5393, %v4871
      %v5449 = vsel %vm5406, %v5396, %v5448
      %v5450 = vsel %vm5409, %v5399, %v5449
      %v5451 = vsel %vm5412, %v5402, %v5450
      %v5452 = vsel %vm5394, %v5408, %v5405
      %v5453 = vsel %vm5397, %v5411, %v5452
      %5454 = vrot.lane.b32.xlu0 %v5451, 48
      %v5455 = vpop.permute.xlu0 %5454
      %5456 = vrot.lane.b32.xlu0 %v5453, 48
      %v5457 = vpop.permute.xlu0 %5456
      %vm5460 = vcmask 523651
      %5461 = vst.msk [vmem:[%s730 - $0x3] sm:$0xf8] %vm5460, %v5455
      %vm5462 = vcmask 518528
      %5463 = vst.msk [vmem:[%s730 + $0x5] sm:$0x7] %vm5462, %v5457
      %v5464 = vsel %vm5406, %v5393, %v4871
      %v5465 = vsel %vm5409, %v5396, %v5464
      %v5466 = vsel %vm5412, %v5399, %v5465
      %v5467 = vsel %vm5394, %v5405, %v5402
      %v5468 = vsel %vm5397, %v5408, %v5467
      %v5469 = vsel %vm5400, %v5411, %v5468
      %5470 = vrot.lane.b32.xlu0 %v5466, 64
      %v5471 = vpop.permute.xlu0 %5470
      %5472 = vrot.lane.b32.xlu0 %v5469, 64
      %v5473 = vpop.permute.xlu0 %5472
      %vm5476 = vcmask 654852
      %5477 = vst.msk [vmem:[%s730 - $0x4] sm:$0xf0] %vm5476, %v5471
      %vm5478 = vcmask 650752
      %5479 = vst.msk [vmem:[%s730 + $0x4] sm:$0xf] %vm5478, %v5473
      %v5480 = vsel %vm5409, %v5393, %v4871
      %v5481 = vsel %vm5412, %v5396, %v5480
      %v5482 = vsel %vm5394, %v5402, %v5399
      %v5483 = vsel %vm5397, %v5405, %v5482
      %v5484 = vsel %vm5400, %v5408, %v5483
      %v5485 = vsel %vm5403, %v5411, %v5484
      %5486 = vrot.lane.b32.xlu0 %v5481, 80
      %v5487 = vpop.permute.xlu0 %5486
      %5488 = vrot.lane.b32.xlu0 %v5485, 80
      %v5489 = vpop.permute.xlu0 %5488
      %vm5492 = vcmask 786053
      %5493 = vst.msk [vmem:[%s730 - $0x5] sm:$0xe0] %vm5492, %v5487
      %vm5494 = vcmask 782976
      %5495 = vst.msk [vmem:[%s730 + $0x3] sm:$0x1f] %vm5494, %v5489
      %v5496 = vsel %vm5412, %v5393, %v4871
      %v5497 = vsel %vm5394, %v5399, %v5396
      %v5498 = vsel %vm5397, %v5402, %v5497
      %v5499 = vsel %vm5400, %v5405, %v5498
      %v5500 = vsel %vm5403, %v5408, %v5499
      %v5501 = vsel %vm5406, %v5411, %v5500
      %5502 = vrot.lane.b32.xlu0 %v5496, 96
      %v5503 = vpop.permute.xlu0 %5502
      %5504 = vrot.lane.b32.xlu0 %v5501, 96
      %v5505 = vpop.permute.xlu0 %5504
      %vm5508 = vcmask 917254
      %5509 = vst.msk [vmem:[%s730 - $0x6] sm:$0xc0] %vm5508, %v5503
      %vm5510 = vcmask 915200
      %5511 = vst.msk [vmem:[%s730 + $0x2] sm:$0x3f] %vm5510, %v5505
      %v5512 = vsel %vm5394, %v5396, %v5393
      %v5513 = vsel %vm5397, %v5399, %v5512
      %v5514 = vsel %vm5400, %v5402, %v5513
      %v5515 = vsel %vm5403, %v5405, %v5514
      %v5516 = vsel %vm5406, %v5408, %v5515
      %v5517 = vsel %vm5409, %v5411, %v5516
      %5518 = vrot.lane.b32.xlu0 %v4871, 112
      %v5519 = vpop.permute.xlu0 %5518
      %5520 = vrot.lane.b32.xlu0 %v5517, 112
      %v5521 = vpop.permute.xlu0 %5520
      %vm5524 = vcmask 1048455
      %5525 = vst.msk [vmem:[%s730 - $0x7] sm:$0x80] %vm5524, %v5519
      %vm5526 = vcmask 1047424
      %5527 = vst.msk [vmem:[%s730 + $0x1] sm:$0x7f] %vm5526, %v5521
      %p5528 = scmp.lt.s32.totalorder %s40, 1
      %s5529 = scalar_select %p5528, %s40, 1
      %p5530 = scmp.lt.s32.totalorder %s41, 0
      %s5531 = scalar_select %p5530, %s41, 0
      %s5532 = smul.addr %s5531, 2
      %s5533 = smul.addr %s5529, 2
      %s5534 = sadd.s32 %s5532, %s5533
      %s5535 = smul.addr %s5534, 8
      %s5536 = scalar_lea.vmem %s12, %s5535
      %p5537 = scmp.lt.s32.totalorder %s40, 1
      %s5538 = scalar_select %p5537, %s40, 1
      %p5539 = scmp.lt.s32.totalorder %s41, 0
      %s5540 = scalar_select %p5539, %s41, 0
      %s5541 = sadd.s32 %s5540, %s5538
      %s5542 = smul.addr %s5541, 8
      %s5543 = scalar_lea.vmem %s13, %s5542
      %p5544 = scmp.lt.s32.totalorder %s40, 1
      %s5545 = scalar_select %p5544, %s40, 1
      %p5546 = scmp.lt.s32.totalorder %s41, 0
      %s5547 = scalar_select %p5546, %s41, 0
      %s5548 = smul.addr %s5547, 2
      %s5549 = smul.addr %s5545, 2
      %s5550 = sadd.s32 %s5548, %s5549
      %s5551 = smul.addr %s5550, 8
      %s5552 = scalar_lea.vmem %s14, %s5551
      // Predicated region
      $region61: #{ga_encoder_apply.20} parent=59 // pred_check
        %p5553 = pneg %p340
      $region62: #{ga_encoder_apply.20} parent=59 // pred_check_branch
        %5555 = sbr.rel (%p5553) target = $region64
      $region63: #{ga_encoder_apply.20} parent=59 // pred_region
        _
      $region64: #{ga_encoder_apply.20} parent=59 // pred_fallthru
        _
      // Predicated region
      $region65: #{ga_encoder_apply.20} parent=59 // pred_check
        %p5556 = pneg %p368
      $region66: #{ga_encoder_apply.20} parent=59 // pred_check_branch
        %5558 = sbr.rel (%p5556) target = $region68
      $region67: #{ga_encoder_apply.20} parent=59 // pred_region
        _
      $region68: #{ga_encoder_apply.20} parent=59 // pred_fallthru
        _
      // Predicated region
      $region69: #{ga_encoder_apply.20} parent=59 // pred_check
        %p5559 = pneg %p396
      $region70: #{ga_encoder_apply.20} parent=59 // pred_check_branch
        %5561 = sbr.rel (%p5559) target = $region72
      $region71: #{ga_encoder_apply.20} parent=59 // pred_region
        _
      $region72: #{ga_encoder_apply.20} parent=59 // pred_fallthru
        _
    $region60: #{ga_encoder_apply.20} parent=5 // pred_fallthru
      _
    %p5562 = scmp.le.s32.totalorder 2, %s31
    // Predicated region
    $region73: #{ga_encoder_apply.20} parent=5 // pred_check
      %p5563 = pneg %p5562
    $region74: #{ga_encoder_apply.20} parent=5 // pred_check_branch
      %5565 = sbr.rel (%p5563) target = $region76
    $region75: #{ga_encoder_apply.20} parent=5 // pred_region
      %s5566 = ssub.s32 %s31, 2
      // Predicated region
      $region77: #{ga_encoder_apply.20} parent=75 // pred_check
        %p5567 = pneg %p346
      $region78: #{ga_encoder_apply.20} parent=75 // pred_check_branch
        %5569 = sbr.rel (%p5567) target = $region80
      $region79: #{ga_encoder_apply.20} parent=75 // pred_region
        %p5570 = scmp.lt.s32.totalorder %s42, 1
        %s5571 = scalar_select %p5570, %s42, 1
        %p5572 = scmp.lt.s32.totalorder %s43, 0
        %s5573 = scalar_select %p5572, %s43, 0
        %s5574 = smul.addr %s5573, 2
        %s5575 = smul.addr %s5571, 2
        %s5576 = sadd.s32 %s5574, %s5575
        %s5577 = smul.addr %s5576, 8
        %s5578 = scalar_lea.vmem %s12, %s5577
      $region80: #{ga_encoder_apply.20} parent=75 // pred_fallthru
        _
      // Predicated region
      $region81: #{ga_encoder_apply.20} parent=75 // pred_check
        %p5579 = pneg %p374
      $region82: #{ga_encoder_apply.20} parent=75 // pred_check_branch
        %5581 = sbr.rel (%p5579) target = $region84
      $region83: #{ga_encoder_apply.20} parent=75 // pred_region
        %p5582 = scmp.lt.s32.totalorder %s42, 1
        %s5583 = scalar_select %p5582, %s42, 1
        %p5584 = scmp.lt.s32.totalorder %s43, 0
        %s5585 = scalar_select %p5584, %s43, 0
        %s5586 = sadd.s32 %s5585, %s5583
        %s5587 = smul.addr %s5586, 8
        %s5588 = scalar_lea.vmem %s13, %s5587
      $region84: #{ga_encoder_apply.20} parent=75 // pred_fallthru
        _
      // Predicated region
      $region85: #{ga_encoder_apply.20} parent=75 // pred_check
        %p5589 = pneg %p402
      $region86: #{ga_encoder_apply.20} parent=75 // pred_check_branch
        %5591 = sbr.rel (%p5589) target = $region88
      $region87: #{ga_encoder_apply.20} parent=75 // pred_region
        %p5592 = scmp.lt.s32.totalorder %s42, 1
        %s5593 = scalar_select %p5592, %s42, 1
        %p5594 = scmp.lt.s32.totalorder %s43, 0
        %s5595 = scalar_select %p5594, %s43, 0
        %s5596 = smul.addr %s5595, 2
        %s5597 = smul.addr %s5593, 2
        %s5598 = sadd.s32 %s5596, %s5597
        %s5599 = smul.addr %s5598, 8
        %s5600 = scalar_lea.vmem %s14, %s5599
      $region88: #{ga_encoder_apply.20} parent=75 // pred_fallthru
        _
    $region76: #{ga_encoder_apply.20} parent=5 // pred_fallthru
      _
  $region6: #{ga_encoder_apply.20} parent=0 // loop_footer
    %s35 = sadd.s32 1, %s31
  $region7: #{ga_encoder_apply.20} parent=0 // loop_footer_branch
    %30 = sbr.rel target = $region3
  $region8: #{ga_encoder_apply.20} parent=0 // loop_exit
    _

</llo_original>
